<compile_context>
chip_gen: v7x
topology: tpu7x:2x2x1
jax: 0.10.0
libtpu: 0.0.40
codegen_flags: <defaults>
</compile_context>

<pallas_src>
import functools

import jax
import jax.numpy as jnp
from jax import lax
from jax.experimental import pallas as pl
from jax.experimental.pallas import tpu as pltpu


# Contract the last axis of both operands (A @ B^T) without materializing a
# transpose: the MXU consumes the operands in their stored layout.
_CONTRACT_LAST = (((1,), (1,)), ((), ()))


def _output_layer_kernel(x_ref, wlat_ref, blat_ref, wprior_ref, emb_ref,
                         out_ref, lat_ref, m_ref, l_ref, scale_ref,
                         *, num_softmax: int, emb_size: int, exp_dtype):
    """Two-pass mixture-of-softmaxes over one (batch tile, vocab tile).

    Grid = (batch tiles, 2 passes, vocab tiles).
      pass 0: accumulate per-component online max `m` and sum-of-exp `l`
      pass 1: out[:, tile] = sum_s exp(logit_s - m_s) * prior_s / l_s

    x_ref:      (tb, D)          input states (compute dtype)
    wlat_ref:   (S*E, D)         latent_trans weight (fused GEMM operand)
    blat_ref:   (1, S*E)  f32    latent_trans bias
    wprior_ref: (S, D)           prior_trans weight (no bias)
    emb_ref:    (tv, E)          vocab tile of the embedding
    out_ref:    (tb, tv)         output mixture probabilities for this tile
    lat_ref:    (tb, S*E)        VMEM latent scratch (compute dtype)
    m_ref:      (S, tb, 1) f32   running max per component
    l_ref:      (S, tb, 1) f32   running sum-of-exp per component
    scale_ref:  (S, tb, 1) f32   prior_s / l_s  (pass-1 scale)
    """
    S, E = num_softmax, emb_size
    p = pl.program_id(1)
    j = pl.program_id(2)

    # --- once per batch tile: fused latent GEMM + stats init -----------------
    @pl.when(jnp.logical_and(p == 0, j == 0))
    def _init():
        x = x_ref[...]
        lat = lax.dot_general(x, wlat_ref[...], _CONTRACT_LAST,
                              preferred_element_type=jnp.float32)        # (tb, S*E)
        lat = jnp.tanh(lat + blat_ref[...])                              # dropout == 0
        lat_ref[...] = lat.astype(lat_ref.dtype)
        m_ref[...] = jnp.full_like(m_ref, -jnp.inf)
        l_ref[...] = jnp.zeros_like(l_ref)

    emb = emb_ref[...]                                                   # (tv, E)

    # --- pass 0: online softmax statistics over vocab tiles ------------------
    @pl.when(p == 0)
    def _stats():
        for s in range(S):                                               # static unroll
            lat_s = lat_ref[:, s * E:(s + 1) * E]                        # (tb, E)
            logit = lax.dot_general(lat_s, emb, _CONTRACT_LAST,
                                    preferred_element_type=jnp.float32)  # (tb, tv)
            m_prev = m_ref[s]                                            # (tb, 1)
            m_new = jnp.maximum(m_prev, jnp.max(logit, axis=-1, keepdims=True))
            e = jnp.exp((logit - m_new).astype(exp_dtype)).astype(jnp.float32)
            l_ref[s] = (l_ref[s] * jnp.exp(m_prev - m_new)
                        + jnp.sum(e, axis=-1, keepdims=True))
            m_ref[s] = m_new

    # --- once per batch tile: fold the prior softmax into per-component scales
    @pl.when(jnp.logical_and(p == 1, j == 0))
    def _scales():
        x = x_ref[...]
        prior_logit = lax.dot_general(x, wprior_ref[...], _CONTRACT_LAST,
                                      preferred_element_type=jnp.float32)  # (tb, S)
        prior_logit = prior_logit - jnp.max(prior_logit, axis=-1, keepdims=True)
        pe = jnp.exp(prior_logit)
        prior = pe / jnp.sum(pe, axis=-1, keepdims=True)                 # exact, tiny
        for s in range(S):
            # scale_s = prior_s / l_s : one exact (tb,1) divide per component,
            # off the hot path; removes per-(tb,tv) normalize + prior multiplies.
            scale_ref[s] = prior[:, s:s + 1] / l_ref[s]

    # --- pass 1: emit the prior-weighted, normalized probabilities -----------
    @pl.when(p == 1)
    def _emit():
        acc = None
        for s in range(S):
            lat_s = lat_ref[:, s * E:(s + 1) * E]
            logit = lax.dot_general(lat_s, emb, _CONTRACT_LAST,
                                    preferred_element_type=jnp.float32)
            e = jnp.exp((logit - m_ref[s]).astype(exp_dtype)).astype(jnp.float32)
            term = e * scale_ref[s]
            acc = term if acc is None else acc + term
        out_ref[...] = acc.astype(out_ref.dtype)                         # one store / tile


def _invariant_spec(block_shape, index_map):
    """Grid-invariant operand: request single buffering to halve its VMEM cost."""
    try:
        return pl.BlockSpec(block_shape, index_map, pipeline_mode=pl.Buffered(1))
    except (TypeError, ValueError):   # jax build without pipeline_mode support
        return pl.BlockSpec(block_shape, index_map)


def _vmem_limit_bytes():
    """Generation-aware VMEM budget: <= 3/4 of physical VMEM, capped at 64 MiB."""
    try:
        phys = pltpu.get_tpu_info().vmem_capacity_bytes
        return int(min(64 << 20, (phys * 3) // 4))
    except Exception:                 # info unavailable -> safe on every generation
        return 48 << 20


def output_layer_forward(x, w_latent, b_latent, w_prior, emb_weight, *,
                         num_softmax: int,
                         tile_b: int = 128,       # use 256 on v6e/v7x if VMEM allows
                         tile_v: int = 512,
                         compute_dtype=jnp.bfloat16,
                         exp_in_low_precision=None,   # False on v5e (no bf16 EUP)
                         out_dtype=jnp.float32):
    """Grid = (batch tiles, {stats, emit} passes, vocab tiles)."""
    B, D = x.shape
    V, E = emb_weight.shape
    S = num_softmax
    assert S > 1, "kernel implements the mixture-of-softmaxes path (num_softmax > 1)"
    assert w_latent.shape == (S * E, D)
    assert b_latent.shape == (S * E,)
    assert w_prior.shape == (S, D)

    tile_b = min(tile_b, B)
    tile_v = min(tile_v, V)
    assert B % tile_b == 0, "batch must be divisible by the batch tile"
    assert V % tile_v == 0, "vocab must be divisible by the vocab tile"

    if compute_dtype is None:
        compute_dtype = x.dtype
    if exp_in_low_precision is None:
        exp_in_low_precision = compute_dtype == jnp.bfloat16
    exp_dtype = jnp.bfloat16 if exp_in_low_precision else jnp.float32

    # Caller-side dtype plumbing: bf16 operands hit the full-rate MXU path and
    # halve embedding VMEM; accumulation stays f32 inside the kernel.
    x_c = x.astype(compute_dtype)
    wlat_c = w_latent.astype(compute_dtype)
    blat_2d = b_latent.reshape(1, S * E).astype(jnp.float32)
    wprior_c = w_prior.astype(compute_dtype)
    emb_c = emb_weight.astype(compute_dtype)

    kernel = functools.partial(_output_layer_kernel, num_softmax=S, emb_size=E,
                               exp_dtype=exp_dtype)

    nb, nv = B // tile_b, V // tile_v
    grid = (nb, 2, nv)

    return pl.pallas_call(
        kernel,
        out_shape=jax.ShapeDtypeStruct((B, V), out_dtype),
        grid_spec=pltpu.PrefetchScalarGridSpec(
            num_scalar_prefetch=0,
            grid=grid,
            in_specs=[
                pl.BlockSpec((tile_b, D), lambda i, p, j: (i, 0)),      # x (per batch tile)
                _invariant_spec((S * E, D), lambda i, p, j: (0, 0)),    # W_latent (resident)
                _invariant_spec((1, S * E), lambda i, p, j: (0, 0)),    # b_latent (resident)
                _invariant_spec((S, D), lambda i, p, j: (0, 0)),        # W_prior  (resident)
                pl.BlockSpec((tile_v, E), lambda i, p, j: (j, 0)),      # embedding V-tile
            ],
            # pass 0 parks on block (i, 0) and never writes it; pass 1 writes
            # every (i, j) block exactly once, so revisits stay consecutive.
            out_specs=pl.BlockSpec((tile_b, tile_v), lambda i, p, j: (i, j * p)),
            scratch_shapes=[
                pltpu.VMEM((tile_b, S * E), compute_dtype),   # latent (fused GEMM result)
                pltpu.VMEM((S, tile_b, 1), jnp.float32),      # running max
                pltpu.VMEM((S, tile_b, 1), jnp.float32),      # running sum-of-exp
                pltpu.VMEM((S, tile_b, 1), jnp.float32),      # prior_s / l_s
            ],
        ),
        compiler_params=pltpu.CompilerParams(
            dimension_semantics=("parallel", "arbitrary", "arbitrary"),
            vmem_limit_bytes=_vmem_limit_bytes(),
        ),
    )(x_c, wlat_c, blat_2d, wprior_c, emb_c)


def output_layer_reference(x, w_latent, b_latent, w_prior, emb_weight,
                           *, num_softmax: int):
    """Pure-JAX reference mirroring the PyTorch forward (num_softmax > 1)."""
    B, D = x.shape
    V, E = emb_weight.shape
    latent = jnp.tanh(x @ w_latent.T + b_latent)           # (B, S*E)
    latent = latent.reshape(-1, E)                          # (B*S, E)
    logit = latent @ emb_weight.T                           # (B*S, V)
    prob = jax.nn.softmax(logit, axis=1).reshape(B, num_softmax, V)
    prior_prob = jax.nn.softmax(x @ w_prior.T, axis=1)      # (B, S)
    return jnp.sum(prob * prior_prob[:, :, None], axis=1)   # (B, V)


if __name__ == "__main__":
    # Small deterministic configuration (E, D multiples of 128 for a full MXU K
    # dimension; V sized so the vocab grid axis has more than one tile).
    B, D = 256, 128          # batch, input_dim
    V, E = 512, 128          # num_vocab, emb_size
    S = 4                    # num_softmax (mixture of softmaxes)

    key = jax.random.PRNGKey(0)
    k_x, k_emb, k_wl, k_bl, k_wp = jax.random.split(key, 5)

    x = jax.random.normal(k_x, (B, D), dtype=jnp.float32)
    emb_weight = jax.random.normal(k_emb, (V, E), dtype=jnp.float32) * 0.1
    w_latent = jax.random.normal(k_wl, (S * E, D), dtype=jnp.float32) * 0.1
    b_latent = jax.random.normal(k_bl, (S * E,), dtype=jnp.float32) * 0.1
    w_prior = jax.random.normal(k_wp, (S, D), dtype=jnp.float32) * 0.1

    ref = output_layer_reference(x, w_latent, b_latent, w_prior, emb_weight,
                                 num_softmax=S)

    # f32 compute path: tight check of the two-pass / fused-GEMM algorithm.
    out_f32 = output_layer_forward(x, w_latent, b_latent, w_prior, emb_weight,
                                   num_softmax=S, tile_b=128, tile_v=256,
                                   compute_dtype=jnp.float32,
                                   out_dtype=jnp.float32)
    out_f32 = jax.block_until_ready(out_f32)
    assert out_f32.shape == (B, V)
    assert jnp.allclose(out_f32, ref, atol=5e-5, rtol=1e-4)

    # bf16 compute path (recommended production configuration).
    out = output_layer_forward(x, w_latent, b_latent, w_prior, emb_weight,
                               num_softmax=S, tile_b=128, tile_v=256,
                               compute_dtype=jnp.bfloat16,
                               out_dtype=jnp.float32)
    out = jax.block_until_ready(out)
    assert out.shape == (B, V)
    # rows are probability distributions -> sum to ~1
    assert jnp.allclose(jnp.sum(out, axis=-1), 1.0, atol=5e-3)
    # bf16 MXU / bf16 exp vs. the f32 reference
    assert jnp.allclose(out, ref, atol=5e-3, rtol=5e-2)

    print("KERNEL_OK")
</pallas_src>

<mosaic_0001>
module attributes {stable_mosaic.version = 11 : i64} {
  func.func @_output_layer_kernel(%arg0: i32, %arg1: i32, %arg2: i32, %arg3: memref<128x128xf32, #tpu.memory_space<vmem>>, %arg4: memref<512x128xf32, #tpu.memory_space<vmem>>, %arg5: memref<1x512xf32, #tpu.memory_space<vmem>>, %arg6: memref<4x128xf32, #tpu.memory_space<vmem>>, %arg7: memref<256x128xf32, #tpu.memory_space<vmem>>, %arg8: memref<128x256xf32, #tpu.memory_space<vmem>>, %arg9: memref<128x512xf32, #tpu.memory_space<vmem>>, %arg10: memref<4x128x1xf32, #tpu.memory_space<vmem>>, %arg11: memref<4x128x1xf32, #tpu.memory_space<vmem>>, %arg12: memref<4x128x1xf32, #tpu.memory_space<vmem>>) attributes {dimension_semantics = [#tpu.dimension_semantics<parallel>, #tpu.dimension_semantics<arbitrary>, #tpu.dimension_semantics<arbitrary>], iteration_bounds = array<i64: 2, 2, 2>, scalar_prefetch = 0 : i64, scratch_operands = 4 : i64, tpu.core_type = #tpu.core_type<tc>, window_params = [{transform_indices = @transform_0, window_bounds = array<i64: 128, 128>}, {pipeline_mode = #tpu.pipeline_mode<synchronous>, transform_indices = @transform_1, window_bounds = array<i64: 512, 128>}, {pipeline_mode = #tpu.pipeline_mode<synchronous>, transform_indices = @transform_2, window_bounds = array<i64: 1, 512>}, {pipeline_mode = #tpu.pipeline_mode<synchronous>, transform_indices = @transform_3, window_bounds = array<i64: 4, 128>}, {transform_indices = @transform_4, window_bounds = array<i64: 256, 128>}, {transform_indices = @transform_5, window_bounds = array<i64: 128, 256>}]} {
    %c0_i32 = arith.constant 0 : i32
    %0 = arith.cmpi eq, %arg1, %c0_i32 : i32
    %c0_i32_0 = arith.constant 0 : i32
    %1 = arith.cmpi eq, %arg2, %c0_i32_0 : i32
    %2 = arith.andi %0, %1 : i1
    %3 = arith.extui %2 : i1 to i32
    %c0_i32_1 = arith.constant 0 : i32
    %4 = arith.cmpi ne, %3, %c0_i32_1 : i32
    scf.if %4 {
      %c0_9 = arith.constant 0 : index
      %c0_10 = arith.constant 0 : index
      %17 = vector.load %arg3[%c0_9, %c0_10] : memref<128x128xf32, #tpu.memory_space<vmem>>, vector<128x128xf32>
      %c0_11 = arith.constant 0 : index
      %c0_12 = arith.constant 0 : index
      %18 = vector.load %arg4[%c0_11, %c0_12] : memref<512x128xf32, #tpu.memory_space<vmem>>, vector<512x128xf32>
      %cst = arith.constant dense<0.000000e+00> : vector<128x512xf32>
      %19 = tpu.matmul %17, %18, %cst {dimension_numbers = #tpu.dot_dimension_numbers<[1], [1], [0], [0], [0, 0, 1, 0], [], []>} : vector<128x128xf32>, vector<512x128xf32>, vector<128x512xf32> -> vector<128x512xf32>
      %c0_13 = arith.constant 0 : index
      %c0_14 = arith.constant 0 : index
      %20 = vector.load %arg5[%c0_13, %c0_14] : memref<1x512xf32, #tpu.memory_space<vmem>>, vector<1x512xf32>
      %21 = vector.broadcast %20 : vector<1x512xf32> to vector<128x512xf32>
      %22 = arith.addf %19, %21 : vector<128x512xf32>
      %23 = math.tanh %22 : vector<128x512xf32>
      %c0_15 = arith.constant 0 : index
      %c0_16 = arith.constant 0 : index
      %24 = vector.load %arg9[%c0_15, %c0_16] : memref<128x512xf32, #tpu.memory_space<vmem>>, vector<128x512xf32>
      tpu.vector_store %arg9[%c0_15, %c0_16], %23 {strides = array<i32>} : memref<128x512xf32, #tpu.memory_space<vmem>>, vector<128x512xf32>,
      %cst_17 = arith.constant 0xFF800000 : f32
      %25 = vector.broadcast %cst_17 : f32 to vector<4x128x1xf32>
      %c0_18 = arith.constant 0 : index
      %c0_19 = arith.constant 0 : index
      %c0_20 = arith.constant 0 : index
      %26 = vector.load %arg10[%c0_18, %c0_19, %c0_20] : memref<4x128x1xf32, #tpu.memory_space<vmem>>, vector<4x128x1xf32>
      tpu.vector_store %arg10[%c0_18, %c0_19, %c0_20], %25 {strides = array<i32>} : memref<4x128x1xf32, #tpu.memory_space<vmem>>, vector<4x128x1xf32>,
      %cst_21 = arith.constant 0.000000e+00 : f32
      %27 = vector.broadcast %cst_21 : f32 to vector<4x128x1xf32>
      %c0_22 = arith.constant 0 : index
      %c0_23 = arith.constant 0 : index
      %c0_24 = arith.constant 0 : index
      %28 = vector.load %arg11[%c0_22, %c0_23, %c0_24] : memref<4x128x1xf32, #tpu.memory_space<vmem>>, vector<4x128x1xf32>
      tpu.vector_store %arg11[%c0_22, %c0_23, %c0_24], %27 {strides = array<i32>} : memref<4x128x1xf32, #tpu.memory_space<vmem>>, vector<4x128x1xf32>,
    } else {
    }
    %c0 = arith.constant 0 : index
    %c0_2 = arith.constant 0 : index
    %5 = vector.load %arg7[%c0, %c0_2] : memref<256x128xf32, #tpu.memory_space<vmem>>, vector<256x128xf32>
    %c0_i32_3 = arith.constant 0 : i32
    %6 = arith.cmpi eq, %arg1, %c0_i32_3 : i32
    %7 = arith.extui %6 : i1 to i32
    %c0_i32_4 = arith.constant 0 : i32
    %8 = arith.cmpi ne, %7, %c0_i32_4 : i32
    scf.if %8 {
      %c0_9 = arith.constant 0 : index
      %c0_10 = arith.constant 0 : index
      %17 = vector.load %arg9[%c0_9, %c0_10] : memref<128x512xf32, #tpu.memory_space<vmem>>, vector<128x128xf32>
      %cst = arith.constant dense<0.000000e+00> : vector<128x256xf32>
      %18 = tpu.matmul %17, %5, %cst {dimension_numbers = #tpu.dot_dimension_numbers<[1], [1], [0], [0], [0, 0, 1, 0], [], []>} : vector<128x128xf32>, vector<256x128xf32>, vector<128x256xf32> -> vector<128x256xf32>
      %c0_11 = arith.constant 0 : index
      %c0_12 = arith.constant 0 : index
      %c0_13 = arith.constant 0 : index
      %19 = vector.load %arg10[%c0_11, %c0_12, %c0_13] : memref<4x128x1xf32, #tpu.memory_space<vmem>>, vector<1x128x1xf32>
      %20 = vector.shape_cast %19 : vector<1x128x1xf32> to vector<128x1xf32>
      %cst_14 = arith.constant dense<0xFF800000> : vector<128xf32>
      %21 = vector.multi_reduction <maximumf>, %18, %cst_14 [1] : vector<128x256xf32> to vector<128xf32>
      %22 = vector.shape_cast %21 : vector<128xf32> to vector<128x1xf32>
      %23 = arith.maximumf %20, %22 : vector<128x1xf32>
      %24 = vector.broadcast %23 : vector<128x1xf32> to vector<128x256xf32>
      %25 = arith.subf %18, %24 : vector<128x256xf32>
      %26 = math.exp %25 : vector<128x256xf32>
      %c0_15 = arith.constant 0 : index
      %c0_16 = arith.constant 0 : index
      %c0_17 = arith.constant 0 : index
      %27 = vector.load %arg11[%c0_15, %c0_16, %c0_17] : memref<4x128x1xf32, #tpu.memory_space<vmem>>, vector<1x128x1xf32>
      %28 = vector.shape_cast %27 : vector<1x128x1xf32> to vector<128x1xf32>
      %29 = arith.subf %20, %23 : vector<128x1xf32>
      %30 = math.exp %29 : vector<128x1xf32>
      %31 = arith.mulf %28, %30 : vector<128x1xf32>
      %cst_18 = arith.constant dense<0.000000e+00> : vector<128xf32>
      %32 = vector.multi_reduction <add>, %26, %cst_18 [1] : vector<128x256xf32> to vector<128xf32>
      %33 = vector.shape_cast %32 : vector<128xf32> to vector<128x1xf32>
      %34 = arith.addf %31, %33 : vector<128x1xf32>
      %c0_19 = arith.constant 0 : index
      %c0_20 = arith.constant 0 : index
      %c0_21 = arith.constant 0 : index
      %35 = vector.load %arg11[%c0_19, %c0_20, %c0_21] : memref<4x128x1xf32, #tpu.memory_space<vmem>>, vector<1x128x1xf32>
      %36 = vector.shape_cast %35 : vector<1x128x1xf32> to vector<128x1xf32>
      %37 = vector.shape_cast %34 : vector<128x1xf32> to vector<1x128x1xf32>
      tpu.vector_store %arg11[%c0_19, %c0_20, %c0_21], %37 {strides = array<i32>} : memref<4x128x1xf32, #tpu.memory_space<vmem>>, vector<1x128x1xf32>,
      %c0_22 = arith.constant 0 : index
      %c0_23 = arith.constant 0 : index
      %c0_24 = arith.constant 0 : index
      %38 = vector.load %arg10[%c0_22, %c0_23, %c0_24] : memref<4x128x1xf32, #tpu.memory_space<vmem>>, vector<1x128x1xf32>
      %39 = vector.shape_cast %38 : vector<1x128x1xf32> to vector<128x1xf32>
      %40 = vector.shape_cast %23 : vector<128x1xf32> to vector<1x128x1xf32>
      tpu.vector_store %arg10[%c0_22, %c0_23, %c0_24], %40 {strides = array<i32>} : memref<4x128x1xf32, #tpu.memory_space<vmem>>, vector<1x128x1xf32>,
      %c0_25 = arith.constant 0 : index
      %c128 = arith.constant 128 : index
      %41 = vector.load %arg9[%c0_25, %c128] : memref<128x512xf32, #tpu.memory_space<vmem>>, vector<128x128xf32>
      %cst_26 = arith.constant dense<0.000000e+00> : vector<128x256xf32>
      %42 = tpu.matmul %41, %5, %cst_26 {dimension_numbers = #tpu.dot_dimension_numbers<[1], [1], [0], [0], [0, 0, 1, 0], [], []>} : vector<128x128xf32>, vector<256x128xf32>, vector<128x256xf32> -> vector<128x256xf32>
      %c1 = arith.constant 1 : index
      %c0_27 = arith.constant 0 : index
      %c0_28 = arith.constant 0 : index
      %43 = vector.load %arg10[%c1, %c0_27, %c0_28] : memref<4x128x1xf32, #tpu.memory_space<vmem>>, vector<1x128x1xf32>
      %44 = vector.shape_cast %43 : vector<1x128x1xf32> to vector<128x1xf32>
      %cst_29 = arith.constant dense<0xFF800000> : vector<128xf32>
      %45 = vector.multi_reduction <maximumf>, %42, %cst_29 [1] : vector<128x256xf32> to vector<128xf32>
      %46 = vector.shape_cast %45 : vector<128xf32> to vector<128x1xf32>
      %47 = arith.maximumf %44, %46 : vector<128x1xf32>
      %48 = vector.broadcast %47 : vector<128x1xf32> to vector<128x256xf32>
      %49 = arith.subf %42, %48 : vector<128x256xf32>
      %50 = math.exp %49 : vector<128x256xf32>
      %c1_30 = arith.constant 1 : index
      %c0_31 = arith.constant 0 : index
      %c0_32 = arith.constant 0 : index
      %51 = vector.load %arg11[%c1_30, %c0_31, %c0_32] : memref<4x128x1xf32, #tpu.memory_space<vmem>>, vector<1x128x1xf32>
      %52 = vector.shape_cast %51 : vector<1x128x1xf32> to vector<128x1xf32>
      %53 = arith.subf %44, %47 : vector<128x1xf32>
      %54 = math.exp %53 : vector<128x1xf32>
      %55 = arith.mulf %52, %54 : vector<128x1xf32>
      %cst_33 = arith.constant dense<0.000000e+00> : vector<128xf32>
      %56 = vector.multi_reduction <add>, %50, %cst_33 [1] : vector<128x256xf32> to vector<128xf32>
      %57 = vector.shape_cast %56 : vector<128xf32> to vector<128x1xf32>
      %58 = arith.addf %55, %57 : vector<128x1xf32>
      %c1_34 = arith.constant 1 : index
      %c0_35 = arith.constant 0 : index
      %c0_36 = arith.constant 0 : index
      %59 = vector.load %arg11[%c1_34, %c0_35, %c0_36] : memref<4x128x1xf32, #tpu.memory_space<vmem>>, vector<1x128x1xf32>
      %60 = vector.shape_cast %59 : vector<1x128x1xf32> to vector<128x1xf32>
      %61 = vector.shape_cast %58 : vector<128x1xf32> to vector<1x128x1xf32>
      tpu.vector_store %arg11[%c1_34, %c0_35, %c0_36], %61 {strides = array<i32>} : memref<4x128x1xf32, #tpu.memory_space<vmem>>, vector<1x128x1xf32>,
      %c1_37 = arith.constant 1 : index
      %c0_38 = arith.constant 0 : index
      %c0_39 = arith.constant 0 : index
      %62 = vector.load %arg10[%c1_37, %c0_38, %c0_39] : memref<4x128x1xf32, #tpu.memory_space<vmem>>, vector<1x128x1xf32>
      %63 = vector.shape_cast %62 : vector<1x128x1xf32> to vector<128x1xf32>
      %64 = vector.shape_cast %47 : vector<128x1xf32> to vector<1x128x1xf32>
      tpu.vector_store %arg10[%c1_37, %c0_38, %c0_39], %64 {strides = array<i32>} : memref<4x128x1xf32, #tpu.memory_space<vmem>>, vector<1x128x1xf32>,
      %c0_40 = arith.constant 0 : index
      %c256 = arith.constant 256 : index
      %65 = vector.load %arg9[%c0_40, %c256] : memref<128x512xf32, #tpu.memory_space<vmem>>, vector<128x128xf32>
      %cst_41 = arith.constant dense<0.000000e+00> : vector<128x256xf32>
      %66 = tpu.matmul %65, %5, %cst_41 {dimension_numbers = #tpu.dot_dimension_numbers<[1], [1], [0], [0], [0, 0, 1, 0], [], []>} : vector<128x128xf32>, vector<256x128xf32>, vector<128x256xf32> -> vector<128x256xf32>
      %c2 = arith.constant 2 : index
      %c0_42 = arith.constant 0 : index
      %c0_43 = arith.constant 0 : index
      %67 = vector.load %arg10[%c2, %c0_42, %c0_43] : memref<4x128x1xf32, #tpu.memory_space<vmem>>, vector<1x128x1xf32>
      %68 = vector.shape_cast %67 : vector<1x128x1xf32> to vector<128x1xf32>
      %cst_44 = arith.constant dense<0xFF800000> : vector<128xf32>
      %69 = vector.multi_reduction <maximumf>, %66, %cst_44 [1] : vector<128x256xf32> to vector<128xf32>
      %70 = vector.shape_cast %69 : vector<128xf32> to vector<128x1xf32>
      %71 = arith.maximumf %68, %70 : vector<128x1xf32>
      %72 = vector.broadcast %71 : vector<128x1xf32> to vector<128x256xf32>
      %73 = arith.subf %66, %72 : vector<128x256xf32>
      %74 = math.exp %73 : vector<128x256xf32>
      %c2_45 = arith.constant 2 : index
      %c0_46 = arith.constant 0 : index
      %c0_47 = arith.constant 0 : index
      %75 = vector.load %arg11[%c2_45, %c0_46, %c0_47] : memref<4x128x1xf32, #tpu.memory_space<vmem>>, vector<1x128x1xf32>
      %76 = vector.shape_cast %75 : vector<1x128x1xf32> to vector<128x1xf32>
      %77 = arith.subf %68, %71 : vector<128x1xf32>
      %78 = math.exp %77 : vector<128x1xf32>
      %79 = arith.mulf %76, %78 : vector<128x1xf32>
      %cst_48 = arith.constant dense<0.000000e+00> : vector<128xf32>
      %80 = vector.multi_reduction <add>, %74, %cst_48 [1] : vector<128x256xf32> to vector<128xf32>
      %81 = vector.shape_cast %80 : vector<128xf32> to vector<128x1xf32>
      %82 = arith.addf %79, %81 : vector<128x1xf32>
      %c2_49 = arith.constant 2 : index
      %c0_50 = arith.constant 0 : index
      %c0_51 = arith.constant 0 : index
      %83 = vector.load %arg11[%c2_49, %c0_50, %c0_51] : memref<4x128x1xf32, #tpu.memory_space<vmem>>, vector<1x128x1xf32>
      %84 = vector.shape_cast %83 : vector<1x128x1xf32> to vector<128x1xf32>
      %85 = vector.shape_cast %82 : vector<128x1xf32> to vector<1x128x1xf32>
      tpu.vector_store %arg11[%c2_49, %c0_50, %c0_51], %85 {strides = array<i32>} : memref<4x128x1xf32, #tpu.memory_space<vmem>>, vector<1x128x1xf32>,
      %c2_52 = arith.constant 2 : index
      %c0_53 = arith.constant 0 : index
      %c0_54 = arith.constant 0 : index
      %86 = vector.load %arg10[%c2_52, %c0_53, %c0_54] : memref<4x128x1xf32, #tpu.memory_space<vmem>>, vector<1x128x1xf32>
      %87 = vector.shape_cast %86 : vector<1x128x1xf32> to vector<128x1xf32>
      %88 = vector.shape_cast %71 : vector<128x1xf32> to vector<1x128x1xf32>
      tpu.vector_store %arg10[%c2_52, %c0_53, %c0_54], %88 {strides = array<i32>} : memref<4x128x1xf32, #tpu.memory_space<vmem>>, vector<1x128x1xf32>,
      %c0_55 = arith.constant 0 : index
      %c384 = arith.constant 384 : index
      %89 = vector.load %arg9[%c0_55, %c384] : memref<128x512xf32, #tpu.memory_space<vmem>>, vector<128x128xf32>
      %cst_56 = arith.constant dense<0.000000e+00> : vector<128x256xf32>
      %90 = tpu.matmul %89, %5, %cst_56 {dimension_numbers = #tpu.dot_dimension_numbers<[1], [1], [0], [0], [0, 0, 1, 0], [], []>} : vector<128x128xf32>, vector<256x128xf32>, vector<128x256xf32> -> vector<128x256xf32>
      %c3 = arith.constant 3 : index
      %c0_57 = arith.constant 0 : index
      %c0_58 = arith.constant 0 : index
      %91 = vector.load %arg10[%c3, %c0_57, %c0_58] : memref<4x128x1xf32, #tpu.memory_space<vmem>>, vector<1x128x1xf32>
      %92 = vector.shape_cast %91 : vector<1x128x1xf32> to vector<128x1xf32>
      %cst_59 = arith.constant dense<0xFF800000> : vector<128xf32>
      %93 = vector.multi_reduction <maximumf>, %90, %cst_59 [1] : vector<128x256xf32> to vector<128xf32>
      %94 = vector.shape_cast %93 : vector<128xf32> to vector<128x1xf32>
      %95 = arith.maximumf %92, %94 : vector<128x1xf32>
      %96 = vector.broadcast %95 : vector<128x1xf32> to vector<128x256xf32>
      %97 = arith.subf %90, %96 : vector<128x256xf32>
      %98 = math.exp %97 : vector<128x256xf32>
      %c3_60 = arith.constant 3 : index
      %c0_61 = arith.constant 0 : index
      %c0_62 = arith.constant 0 : index
      %99 = vector.load %arg11[%c3_60, %c0_61, %c0_62] : memref<4x128x1xf32, #tpu.memory_space<vmem>>, vector<1x128x1xf32>
      %100 = vector.shape_cast %99 : vector<1x128x1xf32> to vector<128x1xf32>
      %101 = arith.subf %92, %95 : vector<128x1xf32>
      %102 = math.exp %101 : vector<128x1xf32>
      %103 = arith.mulf %100, %102 : vector<128x1xf32>
      %cst_63 = arith.constant dense<0.000000e+00> : vector<128xf32>
      %104 = vector.multi_reduction <add>, %98, %cst_63 [1] : vector<128x256xf32> to vector<128xf32>
      %105 = vector.shape_cast %104 : vector<128xf32> to vector<128x1xf32>
      %106 = arith.addf %103, %105 : vector<128x1xf32>
      %c3_64 = arith.constant 3 : index
      %c0_65 = arith.constant 0 : index
      %c0_66 = arith.constant 0 : index
      %107 = vector.load %arg11[%c3_64, %c0_65, %c0_66] : memref<4x128x1xf32, #tpu.memory_space<vmem>>, vector<1x128x1xf32>
      %108 = vector.shape_cast %107 : vector<1x128x1xf32> to vector<128x1xf32>
      %109 = vector.shape_cast %106 : vector<128x1xf32> to vector<1x128x1xf32>
      tpu.vector_store %arg11[%c3_64, %c0_65, %c0_66], %109 {strides = array<i32>} : memref<4x128x1xf32, #tpu.memory_space<vmem>>, vector<1x128x1xf32>,
      %c3_67 = arith.constant 3 : index
      %c0_68 = arith.constant 0 : index
      %c0_69 = arith.constant 0 : index
      %110 = vector.load %arg10[%c3_67, %c0_68, %c0_69] : memref<4x128x1xf32, #tpu.memory_space<vmem>>, vector<1x128x1xf32>
      %111 = vector.shape_cast %110 : vector<1x128x1xf32> to vector<128x1xf32>
      %112 = vector.shape_cast %95 : vector<128x1xf32> to vector<1x128x1xf32>
      tpu.vector_store %arg10[%c3_67, %c0_68, %c0_69], %112 {strides = array<i32>} : memref<4x128x1xf32, #tpu.memory_space<vmem>>, vector<1x128x1xf32>,
    } else {
    }
    %c1_i32 = arith.constant 1 : i32
    %9 = arith.cmpi eq, %arg1, %c1_i32 : i32
    %c0_i32_5 = arith.constant 0 : i32
    %10 = arith.cmpi eq, %arg2, %c0_i32_5 : i32
    %11 = arith.andi %9, %10 : i1
    %12 = arith.extui %11 : i1 to i32
    %c0_i32_6 = arith.constant 0 : i32
    %13 = arith.cmpi ne, %12, %c0_i32_6 : i32
    scf.if %13 {
      %c0_9 = arith.constant 0 : index
      %c0_10 = arith.constant 0 : index
      %17 = vector.load %arg3[%c0_9, %c0_10] : memref<128x128xf32, #tpu.memory_space<vmem>>, vector<128x128xf32>
      %c0_11 = arith.constant 0 : index
      %c0_12 = arith.constant 0 : index
      %18 = vector.load %arg6[%c0_11, %c0_12] : memref<4x128xf32, #tpu.memory_space<vmem>>, vector<4x128xf32>
      %cst = arith.constant dense<0.000000e+00> : vector<128x4xf32>
      %19 = tpu.matmul %17, %18, %cst {dimension_numbers = #tpu.dot_dimension_numbers<[1], [1], [0], [0], [0, 0, 1, 0], [], []>} : vector<128x128xf32>, vector<4x128xf32>, vector<128x4xf32> -> vector<128x4xf32>
      %cst_13 = arith.constant dense<0xFF800000> : vector<128xf32>
      %20 = vector.multi_reduction <maximumf>, %19, %cst_13 [1] : vector<128x4xf32> to vector<128xf32>
      %21 = vector.shape_cast %20 : vector<128xf32> to vector<128x1xf32>
      %22 = vector.broadcast %21 : vector<128x1xf32> to vector<128x4xf32>
      %23 = arith.subf %19, %22 : vector<128x4xf32>
      %24 = math.exp %23 : vector<128x4xf32>
      %cst_14 = arith.constant dense<0.000000e+00> : vector<128xf32>
      %25 = vector.multi_reduction <add>, %24, %cst_14 [1] : vector<128x4xf32> to vector<128xf32>
      %26 = vector.shape_cast %25 : vector<128xf32> to vector<128x1xf32>
      %27 = vector.broadcast %26 : vector<128x1xf32> to vector<128x4xf32>
      %28 = arith.divf %24, %27 : vector<128x4xf32>
      %29 = vector.extract_strided_slice %28 {offsets = [0, 0], sizes = [128, 1], strides = [1, 1]} : vector<128x4xf32> to vector<128x1xf32>
      %c0_15 = arith.constant 0 : index
      %c0_16 = arith.constant 0 : index
      %c0_17 = arith.constant 0 : index
      %30 = vector.load %arg11[%c0_15, %c0_16, %c0_17] : memref<4x128x1xf32, #tpu.memory_space<vmem>>, vector<1x128x1xf32>
      %31 = vector.shape_cast %30 : vector<1x128x1xf32> to vector<128x1xf32>
      %32 = arith.divf %29, %31 : vector<128x1xf32>
      %c0_18 = arith.constant 0 : index
      %c0_19 = arith.constant 0 : index
      %c0_20 = arith.constant 0 : index
      %33 = vector.load %arg12[%c0_18, %c0_19, %c0_20] : memref<4x128x1xf32, #tpu.memory_space<vmem>>, vector<1x128x1xf32>
      %34 = vector.shape_cast %33 : vector<1x128x1xf32> to vector<128x1xf32>
      %35 = vector.shape_cast %32 : vector<128x1xf32> to vector<1x128x1xf32>
      tpu.vector_store %arg12[%c0_18, %c0_19, %c0_20], %35 {strides = array<i32>} : memref<4x128x1xf32, #tpu.memory_space<vmem>>, vector<1x128x1xf32>,
      %36 = vector.extract_strided_slice %28 {offsets = [0, 1], sizes = [128, 1], strides = [1, 1]} : vector<128x4xf32> to vector<128x1xf32>
      %c1 = arith.constant 1 : index
      %c0_21 = arith.constant 0 : index
      %c0_22 = arith.constant 0 : index
      %37 = vector.load %arg11[%c1, %c0_21, %c0_22] : memref<4x128x1xf32, #tpu.memory_space<vmem>>, vector<1x128x1xf32>
      %38 = vector.shape_cast %37 : vector<1x128x1xf32> to vector<128x1xf32>
      %39 = arith.divf %36, %38 : vector<128x1xf32>
      %c1_23 = arith.constant 1 : index
      %c0_24 = arith.constant 0 : index
      %c0_25 = arith.constant 0 : index
      %40 = vector.load %arg12[%c1_23, %c0_24, %c0_25] : memref<4x128x1xf32, #tpu.memory_space<vmem>>, vector<1x128x1xf32>
      %41 = vector.shape_cast %40 : vector<1x128x1xf32> to vector<128x1xf32>
      %42 = vector.shape_cast %39 : vector<128x1xf32> to vector<1x128x1xf32>
      tpu.vector_store %arg12[%c1_23, %c0_24, %c0_25], %42 {strides = array<i32>} : memref<4x128x1xf32, #tpu.memory_space<vmem>>, vector<1x128x1xf32>,
      %43 = vector.extract_strided_slice %28 {offsets = [0, 2], sizes = [128, 1], strides = [1, 1]} : vector<128x4xf32> to vector<128x1xf32>
      %c2 = arith.constant 2 : index
      %c0_26 = arith.constant 0 : index
      %c0_27 = arith.constant 0 : index
      %44 = vector.load %arg11[%c2, %c0_26, %c0_27] : memref<4x128x1xf32, #tpu.memory_space<vmem>>, vector<1x128x1xf32>
      %45 = vector.shape_cast %44 : vector<1x128x1xf32> to vector<128x1xf32>
      %46 = arith.divf %43, %45 : vector<128x1xf32>
      %c2_28 = arith.constant 2 : index
      %c0_29 = arith.constant 0 : index
      %c0_30 = arith.constant 0 : index
      %47 = vector.load %arg12[%c2_28, %c0_29, %c0_30] : memref<4x128x1xf32, #tpu.memory_space<vmem>>, vector<1x128x1xf32>
      %48 = vector.shape_cast %47 : vector<1x128x1xf32> to vector<128x1xf32>
      %49 = vector.shape_cast %46 : vector<128x1xf32> to vector<1x128x1xf32>
      tpu.vector_store %arg12[%c2_28, %c0_29, %c0_30], %49 {strides = array<i32>} : memref<4x128x1xf32, #tpu.memory_space<vmem>>, vector<1x128x1xf32>,
      %50 = vector.extract_strided_slice %28 {offsets = [0, 3], sizes = [128, 1], strides = [1, 1]} : vector<128x4xf32> to vector<128x1xf32>
      %c3 = arith.constant 3 : index
      %c0_31 = arith.constant 0 : index
      %c0_32 = arith.constant 0 : index
      %51 = vector.load %arg11[%c3, %c0_31, %c0_32] : memref<4x128x1xf32, #tpu.memory_space<vmem>>, vector<1x128x1xf32>
      %52 = vector.shape_cast %51 : vector<1x128x1xf32> to vector<128x1xf32>
      %53 = arith.divf %50, %52 : vector<128x1xf32>
      %c3_33 = arith.constant 3 : index
      %c0_34 = arith.constant 0 : index
      %c0_35 = arith.constant 0 : index
      %54 = vector.load %arg12[%c3_33, %c0_34, %c0_35] : memref<4x128x1xf32, #tpu.memory_space<vmem>>, vector<1x128x1xf32>
      %55 = vector.shape_cast %54 : vector<1x128x1xf32> to vector<128x1xf32>
      %56 = vector.shape_cast %53 : vector<128x1xf32> to vector<1x128x1xf32>
      tpu.vector_store %arg12[%c3_33, %c0_34, %c0_35], %56 {strides = array<i32>} : memref<4x128x1xf32, #tpu.memory_space<vmem>>, vector<1x128x1xf32>,
    } else {
    }
    %c1_i32_7 = arith.constant 1 : i32
    %14 = arith.cmpi eq, %arg1, %c1_i32_7 : i32
    %15 = arith.extui %14 : i1 to i32
    %c0_i32_8 = arith.constant 0 : i32
    %16 = arith.cmpi ne, %15, %c0_i32_8 : i32
    scf.if %16 {
      %c0_9 = arith.constant 0 : index
      %c0_10 = arith.constant 0 : index
      %17 = vector.load %arg9[%c0_9, %c0_10] : memref<128x512xf32, #tpu.memory_space<vmem>>, vector<128x128xf32>
      %cst = arith.constant dense<0.000000e+00> : vector<128x256xf32>
      %18 = tpu.matmul %17, %5, %cst {dimension_numbers = #tpu.dot_dimension_numbers<[1], [1], [0], [0], [0, 0, 1, 0], [], []>} : vector<128x128xf32>, vector<256x128xf32>, vector<128x256xf32> -> vector<128x256xf32>
      %c0_11 = arith.constant 0 : index
      %c0_12 = arith.constant 0 : index
      %c0_13 = arith.constant 0 : index
      %19 = vector.load %arg10[%c0_11, %c0_12, %c0_13] : memref<4x128x1xf32, #tpu.memory_space<vmem>>, vector<1x128x1xf32>
      %20 = vector.shape_cast %19 : vector<1x128x1xf32> to vector<128x1xf32>
      %21 = vector.broadcast %20 : vector<128x1xf32> to vector<128x256xf32>
      %22 = arith.subf %18, %21 : vector<128x256xf32>
      %23 = math.exp %22 : vector<128x256xf32>
      %c0_14 = arith.constant 0 : index
      %c0_15 = arith.constant 0 : index
      %c0_16 = arith.constant 0 : index
      %24 = vector.load %arg12[%c0_14, %c0_15, %c0_16] : memref<4x128x1xf32, #tpu.memory_space<vmem>>, vector<1x128x1xf32>
      %25 = vector.shape_cast %24 : vector<1x128x1xf32> to vector<128x1xf32>
      %26 = vector.broadcast %25 : vector<128x1xf32> to vector<128x256xf32>
      %27 = arith.mulf %23, %26 : vector<128x256xf32>
      %c0_17 = arith.constant 0 : index
      %c128 = arith.constant 128 : index
      %28 = vector.load %arg9[%c0_17, %c128] : memref<128x512xf32, #tpu.memory_space<vmem>>, vector<128x128xf32>
      %cst_18 = arith.constant dense<0.000000e+00> : vector<128x256xf32>
      %29 = tpu.matmul %28, %5, %cst_18 {dimension_numbers = #tpu.dot_dimension_numbers<[1], [1], [0], [0], [0, 0, 1, 0], [], []>} : vector<128x128xf32>, vector<256x128xf32>, vector<128x256xf32> -> vector<128x256xf32>
      %c1 = arith.constant 1 : index
      %c0_19 = arith.constant 0 : index
      %c0_20 = arith.constant 0 : index
      %30 = vector.load %arg10[%c1, %c0_19, %c0_20] : memref<4x128x1xf32, #tpu.memory_space<vmem>>, vector<1x128x1xf32>
      %31 = vector.shape_cast %30 : vector<1x128x1xf32> to vector<128x1xf32>
      %32 = vector.broadcast %31 : vector<128x1xf32> to vector<128x256xf32>
      %33 = arith.subf %29, %32 : vector<128x256xf32>
      %34 = math.exp %33 : vector<128x256xf32>
      %c1_21 = arith.constant 1 : index
      %c0_22 = arith.constant 0 : index
      %c0_23 = arith.constant 0 : index
      %35 = vector.load %arg12[%c1_21, %c0_22, %c0_23] : memref<4x128x1xf32, #tpu.memory_space<vmem>>, vector<1x128x1xf32>
      %36 = vector.shape_cast %35 : vector<1x128x1xf32> to vector<128x1xf32>
      %37 = vector.broadcast %36 : vector<128x1xf32> to vector<128x256xf32>
      %38 = arith.mulf %34, %37 : vector<128x256xf32>
      %39 = arith.addf %27, %38 : vector<128x256xf32>
      %c0_24 = arith.constant 0 : index
      %c256 = arith.constant 256 : index
      %40 = vector.load %arg9[%c0_24, %c256] : memref<128x512xf32, #tpu.memory_space<vmem>>, vector<128x128xf32>
      %cst_25 = arith.constant dense<0.000000e+00> : vector<128x256xf32>
      %41 = tpu.matmul %40, %5, %cst_25 {dimension_numbers = #tpu.dot_dimension_numbers<[1], [1], [0], [0], [0, 0, 1, 0], [], []>} : vector<128x128xf32>, vector<256x128xf32>, vector<128x256xf32> -> vector<128x256xf32>
      %c2 = arith.constant 2 : index
      %c0_26 = arith.constant 0 : index
      %c0_27 = arith.constant 0 : index
      %42 = vector.load %arg10[%c2, %c0_26, %c0_27] : memref<4x128x1xf32, #tpu.memory_space<vmem>>, vector<1x128x1xf32>
      %43 = vector.shape_cast %42 : vector<1x128x1xf32> to vector<128x1xf32>
      %44 = vector.broadcast %43 : vector<128x1xf32> to vector<128x256xf32>
      %45 = arith.subf %41, %44 : vector<128x256xf32>
      %46 = math.exp %45 : vector<128x256xf32>
      %c2_28 = arith.constant 2 : index
      %c0_29 = arith.constant 0 : index
      %c0_30 = arith.constant 0 : index
      %47 = vector.load %arg12[%c2_28, %c0_29, %c0_30] : memref<4x128x1xf32, #tpu.memory_space<vmem>>, vector<1x128x1xf32>
      %48 = vector.shape_cast %47 : vector<1x128x1xf32> to vector<128x1xf32>
      %49 = vector.broadcast %48 : vector<128x1xf32> to vector<128x256xf32>
      %50 = arith.mulf %46, %49 : vector<128x256xf32>
      %51 = arith.addf %39, %50 : vector<128x256xf32>
      %c0_31 = arith.constant 0 : index
      %c384 = arith.constant 384 : index
      %52 = vector.load %arg9[%c0_31, %c384] : memref<128x512xf32, #tpu.memory_space<vmem>>, vector<128x128xf32>
      %cst_32 = arith.constant dense<0.000000e+00> : vector<128x256xf32>
      %53 = tpu.matmul %52, %5, %cst_32 {dimension_numbers = #tpu.dot_dimension_numbers<[1], [1], [0], [0], [0, 0, 1, 0], [], []>} : vector<128x128xf32>, vector<256x128xf32>, vector<128x256xf32> -> vector<128x256xf32>
      %c3 = arith.constant 3 : index
      %c0_33 = arith.constant 0 : index
      %c0_34 = arith.constant 0 : index
      %54 = vector.load %arg10[%c3, %c0_33, %c0_34] : memref<4x128x1xf32, #tpu.memory_space<vmem>>, vector<1x128x1xf32>
      %55 = vector.shape_cast %54 : vector<1x128x1xf32> to vector<128x1xf32>
      %56 = vector.broadcast %55 : vector<128x1xf32> to vector<128x256xf32>
      %57 = arith.subf %53, %56 : vector<128x256xf32>
      %58 = math.exp %57 : vector<128x256xf32>
      %c3_35 = arith.constant 3 : index
      %c0_36 = arith.constant 0 : index
      %c0_37 = arith.constant 0 : index
      %59 = vector.load %arg12[%c3_35, %c0_36, %c0_37] : memref<4x128x1xf32, #tpu.memory_space<vmem>>, vector<1x128x1xf32>
      %60 = vector.shape_cast %59 : vector<1x128x1xf32> to vector<128x1xf32>
      %61 = vector.broadcast %60 : vector<128x1xf32> to vector<128x256xf32>
      %62 = arith.mulf %58, %61 : vector<128x256xf32>
      %63 = arith.addf %51, %62 : vector<128x256xf32>
      %c0_38 = arith.constant 0 : index
      %c0_39 = arith.constant 0 : index
      %64 = vector.load %arg8[%c0_38, %c0_39] : memref<128x256xf32, #tpu.memory_space<vmem>>, vector<128x256xf32>
      tpu.vector_store %arg8[%c0_38, %c0_39], %63 {strides = array<i32>} : memref<128x256xf32, #tpu.memory_space<vmem>>, vector<128x256xf32>,
    } else {
    }
    return
  }
  func.func @transform_0(%arg0: i32, %arg1: i32, %arg2: i32) -> (i32, i32) {
    %c0_i32 = arith.constant 0 : i32
    %c0_i32_0 = arith.constant 0 : i32
    return %arg0, %c0_i32 : i32, i32
  }
  func.func @transform_1(%arg0: i32, %arg1: i32, %arg2: i32) -> (i32, i32) {
    %c0_i32 = arith.constant 0 : i32
    %c0_i32_0 = arith.constant 0 : i32
    %c0_i32_1 = arith.constant 0 : i32
    return %c0_i32, %c0_i32_0 : i32, i32
  }
  func.func @transform_2(%arg0: i32, %arg1: i32, %arg2: i32) -> (i32, i32) {
    %c0_i32 = arith.constant 0 : i32
    %c0_i32_0 = arith.constant 0 : i32
    %c0_i32_1 = arith.constant 0 : i32
    return %c0_i32, %c0_i32_0 : i32, i32
  }
  func.func @transform_3(%arg0: i32, %arg1: i32, %arg2: i32) -> (i32, i32) {
    %c0_i32 = arith.constant 0 : i32
    %c0_i32_0 = arith.constant 0 : i32
    %c0_i32_1 = arith.constant 0 : i32
    return %c0_i32, %c0_i32_0 : i32, i32
  }
  func.func @transform_4(%arg0: i32, %arg1: i32, %arg2: i32) -> (i32, i32) {
    %c0_i32 = arith.constant 0 : i32
    %c0_i32_0 = arith.constant 0 : i32
    return %arg2, %c0_i32 : i32, i32
  }
  func.func @transform_5(%arg0: i32, %arg1: i32, %arg2: i32) -> (i32, i32) {
    %0 = arith.muli %arg2, %arg1 : i32
    %c0_i32 = arith.constant 0 : i32
    return %arg0, %0 : i32, i32
  }
}

</mosaic_0001>

<llo_original>
// kernel: tpu_custom_call.1
$region0: #{tpu_custom_call.1}
  #allocation0 [shape = 'u32[]', space=smem, size = 0x4, offset = 0x4, fixed_abs, tag = 'smem constant byte address 0x4 - core index']
  #allocation1 [shape = 'u32[144,128]{1,0:T(1,128)}', space=vmem, size = 0x12000, scoped, tag = 'internal scratch']
  #allocation2 [shape = 'f32[128,512]{1,0:T(8,128)}', space=vmem, size = 0x40000, scoped, tag = 'scratch operand']
  #allocation3 [shape = 'f32[4,128,1]{2,1,0:T(8,128)}', space=vmem, size = 0x40000, scoped, tag = 'scratch operand']
  #allocation4 [shape = 'f32[4,128,1]{2,1,0:T(8,128)}', space=vmem, size = 0x40000, scoped, tag = 'scratch operand']
  #allocation5 [shape = 'f32[4,128,1]{2,1,0:T(8,128)}', space=vmem, size = 0x40000, scoped, tag = 'scratch operand']
  %s0 = inlined_call_operand.hbm [shape: f32[256,128], index: 0, kind: input, shape index: {}]
  %s1 = inlined_call_operand.hbm [shape: f32[512,128], index: 1, kind: input, shape index: {}]
  %s2 = inlined_call_operand.vmem [shape: f32[1,512], index: 2, kind: input, shape index: {}]
  %s3 = inlined_call_operand.vmem [shape: f32[4,128], index: 3, kind: input, shape index: {}]
  %s4 = inlined_call_operand.hbm [shape: f32[512,128], index: 4, kind: input, shape index: {}]
  %s5 = inlined_call_operand.hbm [shape: f32[256,512], index: 5, kind: output, shape index: {}]
  %s6 = sld [smem:[#allocation0]]
  $region81: #{tpu_custom_call.1} parent=0
    _
  %s8 = ssub.s32 1, %s6
  %s9 = scalar_select 0, %s8, %s6
  $region1: #{tpu_custom_call.1} parent=0
    #allocation6 [shape = 'u8[131072]{0}', space=vmem, size = 0x20000, scoped, tag = 'input window, operand 0']
    #allocation7 [shape = 's32[2]{0}', space=sflag, size = 0x8, scoped, tag = 'scoped memory for tpu_custom_call.1']
    #allocation8 [shape = 's32[2]{0}', space=sflag, size = 0x8, scoped, tag = 'scoped memory for tpu_custom_call.1']
    #allocation9 [shape = 'u8[262144]{0}', space=vmem, size = 0x40000, scoped, tag = 'input window, operand 1, single buffered']
    #allocation10 [shape = 's32[1]{0}', space=sflag, size = 0x4, scoped, tag = 'scoped memory for tpu_custom_call.1']
    #allocation11 [shape = 'u8[262144]{0}', space=vmem, size = 0x40000, scoped, tag = 'input window, operand 4']
    #allocation12 [shape = 'u8[262144]{0}', space=vmem, size = 0x40000, scoped, tag = 'output window, operand 0']
    %10 = vsyncpa [#allocation7], 0
    %s11 = scalar_lea.sflag [#allocation7], 1
    %12 = vsyncpa %s11, 0
    %13 = vsyncpa [#allocation10], 0
    %14 = vsyncpa [#allocation8], 0
    %s15 = scalar_lea.sflag [#allocation8], 1
    %16 = vsyncpa %s15, 0
    loop: start=0, step=1, limit=10
    $region2: #{tpu_custom_call.1} parent=1 // loop_pre_header
      _
    $region3: #{tpu_custom_call.1} parent=1 // loop_header
      %s18 = sphi 0, %s22
      %p19 = scmp.ge.s32.totalorder %s18, 10
      %s25 = sphi 0, %s44
      %s26 = sphi 0, %s40
      %s27 = sphi 0, %s36
      %s28 = sphi 0, %s25
      %s29 = sphi 0, %s26
      %s30 = sphi 0, %s27
      %s31 = sphi 0, %s28
      %s32 = sphi 0, %s29
      %s33 = sphi 0, %s30
      %s47 = sphi 0, %s49
      %s50 = sphi 0, %s47
      %s51 = sphi 0, %s50
      %s67 = sphi 0, %s51
      %s71 = sphi 0, %s71
      %s73 = sphi 0, %s71
      %s74 = sphi 0, %s73
      %s88 = sphi 0, %s74
      %s92 = sphi 0, %s92
      %s94 = sphi 0, %s92
      %s95 = sphi 0, %s94
      %s109 = sphi 0, %s95
      %s113 = sphi 0, %s113
      %s115 = sphi 0, %s113
      %s116 = sphi 0, %s115
      %s130 = sphi 0, %s116
      %s136 = sphi 0, %s138
      %s139 = sphi 0, %s136
      %s140 = sphi 0, %s139
      %s156 = sphi 0, %s140
      %s166 = sphi 0, %s168
      %s169 = sphi 0, %s166
      %s170 = sphi 0, %s169
      %s186 = sphi 0, %s170
    $region4: #{tpu_custom_call.1} parent=1 // loop_header_branch
      %21 = sbr.rel (%p19) target = $region8
    $region5: #{tpu_custom_call.1} parent=1 // loop_body
      %s23 = ssub.s32 %s18, 1
      %s24 = ssub.s32 %s18, 2
      %s34 = sadd.s32 1, %s27
      %p35 = scmp.ge.s32.totalorder %s34, 2
      %s36 = scalar_select %p35, 0, %s34
      %s37 = sadd.s32 1, %s26
      %s38 = scalar_select %p35, %s37, %s26
      %p39 = scmp.ge.s32.totalorder %s38, 2
      %s40 = scalar_select %p39, 0, %s38
      %s41 = sadd.s32 1, %s25
      %s42 = scalar_select %p39, %s41, %s25
      %p43 = scmp.ge.s32.totalorder %s42, 2
      %s44 = scalar_select %p43, 0, %s42
      %s45 = ssub.s32 %s25, %s44
      %p46 = scmp.eq.s32.totalorder %s45, 0
      %s48 = sadd.s32 %s47, 1
      %s49 = scalar_select %p46, %s47, %s48
      %p52 = pneg %p46
      %p53 = scmp.eq.s32.totalorder %s18, 7
      %p54 = por %p52, %p53
      %p55 = scmp.ne.s32.totalorder %s47, %s50
      %p56 = scmp.eq.s32.totalorder %s18, 0
      %p57 = por %p55, %p56
      %p58 = scmp.ne.s32.totalorder %s47, %s50
      %p59 = scmp.eq.s32.totalorder %s23, 7
      %p60 = por %p58, %p59
      %p61 = scmp.ne.s32.totalorder %s50, %s51
      %p62 = scmp.eq.s32.totalorder %s23, 0
      %p63 = por %p61, %p62
      %p64 = scmp.ne.s32.totalorder %s50, %s51
      %p65 = scmp.eq.s32.totalorder %s24, 7
      %p66 = por %p64, %p65
      %p68 = scmp.ne.s32.totalorder %s51, %s67
      %p69 = scmp.eq.s32.totalorder %s24, 0
      %p70 = por %p68, %p69
      %s72 = sadd.s32 %s71, 1
      %p75 = scmp.eq.s32.totalorder %s18, 7
      %p76 = scmp.ne.s32.totalorder %s71, %s73
      %p77 = scmp.eq.s32.totalorder %s18, 0
      %p78 = por %p76, %p77
      %p79 = scmp.ne.s32.totalorder %s71, %s73
      %p80 = scmp.eq.s32.totalorder %s23, 7
      %p81 = por %p79, %p80
      %p82 = scmp.ne.s32.totalorder %s73, %s74
      %p83 = scmp.eq.s32.totalorder %s23, 0
      %p84 = por %p82, %p83
      %p85 = scmp.ne.s32.totalorder %s73, %s74
      %p86 = scmp.eq.s32.totalorder %s24, 7
      %p87 = por %p85, %p86
      %p89 = scmp.ne.s32.totalorder %s74, %s88
      %p90 = scmp.eq.s32.totalorder %s24, 0
      %p91 = por %p89, %p90
      %s93 = sadd.s32 %s92, 1
      %p96 = scmp.eq.s32.totalorder %s18, 7
      %p97 = scmp.ne.s32.totalorder %s92, %s94
      %p98 = scmp.eq.s32.totalorder %s18, 0
      %p99 = por %p97, %p98
      %p100 = scmp.ne.s32.totalorder %s92, %s94
      %p101 = scmp.eq.s32.totalorder %s23, 7
      %p102 = por %p100, %p101
      %p103 = scmp.ne.s32.totalorder %s94, %s95
      %p104 = scmp.eq.s32.totalorder %s23, 0
      %p105 = por %p103, %p104
      %p106 = scmp.ne.s32.totalorder %s94, %s95
      %p107 = scmp.eq.s32.totalorder %s24, 7
      %p108 = por %p106, %p107
      %p110 = scmp.ne.s32.totalorder %s95, %s109
      %p111 = scmp.eq.s32.totalorder %s24, 0
      %p112 = por %p110, %p111
      %s114 = sadd.s32 %s113, 1
      %p117 = scmp.eq.s32.totalorder %s18, 7
      %p118 = scmp.ne.s32.totalorder %s113, %s115
      %p119 = scmp.eq.s32.totalorder %s18, 0
      %p120 = por %p118, %p119
      %p121 = scmp.ne.s32.totalorder %s113, %s115
      %p122 = scmp.eq.s32.totalorder %s23, 7
      %p123 = por %p121, %p122
      %p124 = scmp.ne.s32.totalorder %s115, %s116
      %p125 = scmp.eq.s32.totalorder %s23, 0
      %p126 = por %p124, %p125
      %p127 = scmp.ne.s32.totalorder %s115, %s116
      %p128 = scmp.eq.s32.totalorder %s24, 7
      %p129 = por %p127, %p128
      %p131 = scmp.ne.s32.totalorder %s116, %s130
      %p132 = scmp.eq.s32.totalorder %s24, 0
      %p133 = por %p131, %p132
      %s134 = ssub.s32 %s27, %s36
      %p135 = scmp.eq.s32.totalorder %s134, 0
      %s137 = sadd.s32 %s136, 1
      %s138 = scalar_select %p135, %s136, %s137
      %p141 = pneg %p135
      %p142 = scmp.eq.s32.totalorder %s18, 7
      %p143 = por %p141, %p142
      %p144 = scmp.ne.s32.totalorder %s136, %s139
      %p145 = scmp.eq.s32.totalorder %s18, 0
      %p146 = por %p144, %p145
      %p147 = scmp.ne.s32.totalorder %s136, %s139
      %p148 = scmp.eq.s32.totalorder %s23, 7
      %p149 = por %p147, %p148
      %p150 = scmp.ne.s32.totalorder %s139, %s140
      %p151 = scmp.eq.s32.totalorder %s23, 0
      %p152 = por %p150, %p151
      %p153 = scmp.ne.s32.totalorder %s139, %s140
      %p154 = scmp.eq.s32.totalorder %s24, 7
      %p155 = por %p153, %p154
      %p157 = scmp.ne.s32.totalorder %s140, %s156
      %p158 = scmp.eq.s32.totalorder %s24, 0
      %p159 = por %p157, %p158
      %s160 = smul.u32 %s27, %s26
      %s161 = smul.u32 %s36, %s40
      %s162 = ssub.s32 %s25, %s44
      %s163 = ssub.s32 %s160, %s161
      %s164 = sor.u32 %s162, %s163
      %p165 = scmp.eq.s32.totalorder %s164, 0
      %s167 = sadd.s32 %s166, 1
      %s168 = scalar_select %p165, %s166, %s167
      %p171 = pneg %p165
      %p172 = scmp.eq.s32.totalorder %s18, 7
      %p173 = por %p171, %p172
      %p174 = scmp.ne.s32.totalorder %s166, %s169
      %p175 = scmp.eq.s32.totalorder %s18, 0
      %p176 = por %p174, %p175
      %p177 = scmp.ne.s32.totalorder %s166, %s169
      %p178 = scmp.eq.s32.totalorder %s23, 7
      %p179 = por %p177, %p178
      %p180 = scmp.ne.s32.totalorder %s169, %s170
      %p181 = scmp.eq.s32.totalorder %s23, 0
      %p182 = por %p180, %p181
      %p183 = scmp.ne.s32.totalorder %s169, %s170
      %p184 = scmp.eq.s32.totalorder %s24, 7
      %p185 = por %p183, %p184
      %p187 = scmp.ne.s32.totalorder %s170, %s186
      %p188 = scmp.eq.s32.totalorder %s24, 0
      %p189 = por %p187, %p188
      %p190 = scmp.le.s32.totalorder 1, %s18
      %p191 = scmp.lt.s32.totalorder %s18, 9
      %p192 = pnand %p190, %p191
      %p193 = pneg %p192
      // Predicated region
      $region9: #{tpu_custom_call.1} parent=5 // pred_check
        _
      $region10: #{tpu_custom_call.1} parent=5 // pred_check_branch
        %195 = sbr.rel (%p192) target = $region12
      $region11: #{tpu_custom_call.1} parent=5 // pred_region
        %s196 = ssub.s32 %s18, 1
        // Predicated region
        $region13: #{tpu_custom_call.1} parent=11 // pred_check
          %p197 = pneg %p84
        $region14: #{tpu_custom_call.1} parent=11 // pred_check_branch
          %199 = sbr.rel (%p197) target = $region16
        $region15: #{tpu_custom_call.1} parent=11 // pred_region
          %s201 = ssub.s32 8192, 8192
          %202 = vsyncadd [#allocation10], %s201
          %s203 = sshll.u32 [#allocation9], 4
          %s204 = int_to_ptr.vmem [resolvable:$true] %s203
          %209 = dma.hbm_to_vmem [thread:$0]  %s1, 8192, %s204, [#allocation10], 128, 128, 8
        $region16: #{tpu_custom_call.1} parent=11 // pred_fallthru
          _
        // Predicated region
        $region17: #{tpu_custom_call.1} parent=11 // pred_check
          %p210 = pneg %p105
        $region18: #{tpu_custom_call.1} parent=11 // pred_check_branch
          %212 = sbr.rel (%p210) target = $region20
        $region19: #{tpu_custom_call.1} parent=11 // pred_region
          _
        $region20: #{tpu_custom_call.1} parent=11 // pred_fallthru
          _
        // Predicated region
        $region21: #{tpu_custom_call.1} parent=11 // pred_check
          %p213 = pneg %p126
        $region22: #{tpu_custom_call.1} parent=11 // pred_check_branch
          %215 = sbr.rel (%p213) target = $region24
        $region23: #{tpu_custom_call.1} parent=11 // pred_region
          _
        $region24: #{tpu_custom_call.1} parent=11 // pred_fallthru
          _
      $region12: #{tpu_custom_call.1} parent=5 // pred_fallthru
        _
      %p216 = scmp.lt.s32.totalorder %s18, 8
      // Predicated region
      $region25: #{tpu_custom_call.1} parent=5 // pred_check
        %p217 = pneg %p216
      $region26: #{tpu_custom_call.1} parent=5 // pred_check_branch
        %219 = sbr.rel (%p217) target = $region28
      $region27: #{tpu_custom_call.1} parent=5 // pred_region
        // Predicated region
        $region29: #{tpu_custom_call.1} parent=27 // pred_check
          %p220 = pneg %p57
        $region30: #{tpu_custom_call.1} parent=27 // pred_check_branch
          %222 = sbr.rel (%p220) target = $region32
        $region31: #{tpu_custom_call.1} parent=27 // pred_region
          %s223 = sand.u32 %s18, 1
          %s224 = scalar_lea.sflag [#allocation7], %s223
          %s225 = sand.u32 %s47, 1
          %s226 = smul.addr %s225, 128
          %s227 = scalar_lea.vmem [#allocation6], %s226
          %s228 = smul.u32 16, %s25
          %s230 = ssub.s32 2048, 2048
          %231 = vsyncadd %s224, %s230
          %s232 = smul.addr %s228, 128
          %s233 = scalar_lea.hbm %s0, %s232
          %s234 = sshll.u32 %s227, 4
          %s235 = int_to_ptr.vmem [resolvable:$true] %s234
          %240 = dma.hbm_to_vmem [thread:$0]  %s233, 2048, %s235, %s224, 128, 128, 8
        $region32: #{tpu_custom_call.1} parent=27 // pred_fallthru
          _
        // Predicated region
        $region33: #{tpu_custom_call.1} parent=27 // pred_check
          %p241 = pneg %p146
        $region34: #{tpu_custom_call.1} parent=27 // pred_check_branch
          %243 = sbr.rel (%p241) target = $region36
        $region35: #{tpu_custom_call.1} parent=27 // pred_region
          %s244 = sand.u32 %s18, 1
          %s245 = scalar_lea.sflag [#allocation7], %s244
          %s246 = sand.u32 %s136, 1
          %s247 = smul.addr %s246, 256
          %s248 = scalar_lea.vmem [#allocation11], %s247
          %s249 = smul.u32 32, %s27
          %s251 = ssub.s32 4096, 4096
          %252 = vsyncadd %s245, %s251
          %s253 = smul.addr %s249, 128
          %s254 = scalar_lea.hbm %s4, %s253
          %s255 = sshll.u32 %s248, 4
          %s256 = int_to_ptr.vmem [resolvable:$true] %s255
          %261 = dma.hbm_to_vmem [thread:$0]  %s254, 4096, %s256, %s245, 128, 128, 8
        $region36: #{tpu_custom_call.1} parent=27 // pred_fallthru
          _
      $region28: #{tpu_custom_call.1} parent=5 // pred_fallthru
        _
      %p262 = scmp.le.s32.totalorder 1, %s18
      %p263 = scmp.lt.s32.totalorder %s18, 9
      %p264 = pnand %p262, %p263
      %p265 = pneg %p264
      // Predicated region
      $region37: #{tpu_custom_call.1} parent=5 // pred_check
        _
      $region38: #{tpu_custom_call.1} parent=5 // pred_check_branch
        %267 = sbr.rel (%p264) target = $region40
      $region39: #{tpu_custom_call.1} parent=5 // pred_region
        %s268 = ssub.s32 %s18, 1
        %s269 = sand.u32 %s23, 1
        %s270 = scalar_lea.sflag [#allocation7], %s269
        %s271 = sand.u32 %s50, 1
        %s272 = smul.addr %s271, 128
        %s273 = scalar_lea.vmem [#allocation6], %s272
        // Predicated region
        $region41: #{tpu_custom_call.1} parent=39 // pred_check
          %p274 = pneg %p63
        $region42: #{tpu_custom_call.1} parent=39 // pred_check_branch
          %276 = sbr.rel (%p274) target = $region44
        $region43: #{tpu_custom_call.1} parent=39 // pred_region
          %277 = dma.done %s270, 2048
        $region44: #{tpu_custom_call.1} parent=39 // pred_fallthru
          _
        // Predicated region
        $region45: #{tpu_custom_call.1} parent=39 // pred_check
          %p278 = pneg %p84
        $region46: #{tpu_custom_call.1} parent=39 // pred_check_branch
          %280 = sbr.rel (%p278) target = $region48
        $region47: #{tpu_custom_call.1} parent=39 // pred_region
          %281 = dma.done [#allocation10], 8192
        $region48: #{tpu_custom_call.1} parent=39 // pred_fallthru
          _
        %s282 = sand.u32 %s23, 1
        %s283 = scalar_lea.sflag [#allocation7], %s282
        %s284 = sand.u32 %s139, 1
        %s285 = smul.addr %s284, 256
        %s286 = scalar_lea.vmem [#allocation11], %s285
        // Predicated region
        $region49: #{tpu_custom_call.1} parent=39 // pred_check
          %p287 = pneg %p152
        $region50: #{tpu_custom_call.1} parent=39 // pred_check_branch
          %289 = sbr.rel (%p287) target = $region52
        $region51: #{tpu_custom_call.1} parent=39 // pred_region
          %290 = dma.done %s283, 4096
        $region52: #{tpu_custom_call.1} parent=39 // pred_fallthru
          _
        %s291 = sand.u32 %s23, 1
        %s292 = scalar_lea.sflag [#allocation7], %s291
        %s293 = sand.u32 %s50, 1
        %s294 = smul.addr %s293, 128
        %s295 = scalar_lea.vmem [#allocation6], %s294
        %p296 = pneg %p63
        %p297 = pneg %p60
        %p298 = pneg %p84
        %p299 = pneg %p81
        %p300 = pneg %p105
        %p301 = pneg %p102
        %p302 = pneg %p126
        %p303 = pneg %p123
        %s304 = sand.u32 %s23, 1
        %s305 = scalar_lea.sflag [#allocation7], %s304
        %s306 = sand.u32 %s139, 1
        %s307 = smul.addr %s306, 256
        %s308 = scalar_lea.vmem [#allocation11], %s307
        %p309 = pneg %p152
        %p310 = pneg %p149
        %p311 = pneg %p182
        %p312 = pneg %p179
        %s313 = sand.u32 %s169, 1
        %s314 = scalar_lea.sflag [#allocation8], %s313
        %s315 = sand.u32 %s169, 1
        %s316 = smul.addr %s315, 256
        %s317 = scalar_lea.vmem [#allocation12], %s316
        %s318 = smul.u32 16, %s28
        %s319 = smul.u32 32, %s30
        %s320 = smul.u32 %s30, %s29
        %s321 = smul.u32 16, %s28
        %s322 = smul.u32 2, %s320
        %p323 = scmp.eq.s32.totalorder %s29, 0
        %p324 = scmp.eq.s32.totalorder %s30, 0
        %p325 = pnand %p323, %p324
        %p326 = pneg %p325
        // Predicated region
        $region53: #{tpu_custom_call.1} parent=39 // pred_check
          _
        $region54: #{tpu_custom_call.1} parent=39 // pred_check_branch
          %328 = sbr.rel (%p325) target = $region56
        $region55: #{tpu_custom_call.1} parent=39 // pred_region
          %v329 = vld [vmem:[%s273] sm:$0xff]
          %v330 = vld [vmem:[%s273 + $0x8] sm:$0xff]
          %v331 = vld [vmem:[%s273 + $0x10] sm:$0xff]
          %v332 = vld [vmem:[%s273 + $0x18] sm:$0xff]
          %v333 = vld [vmem:[%s273 + $0x20] sm:$0xff]
          %v334 = vld [vmem:[%s273 + $0x28] sm:$0xff]
          %v335 = vld [vmem:[%s273 + $0x30] sm:$0xff]
          %v336 = vld [vmem:[%s273 + $0x38] sm:$0xff]
          %v337 = vld [vmem:[%s273 + $0x40] sm:$0xff]
          %v338 = vld [vmem:[%s273 + $0x48] sm:$0xff]
          %v339 = vld [vmem:[%s273 + $0x50] sm:$0xff]
          %v340 = vld [vmem:[%s273 + $0x58] sm:$0xff]
          %v341 = vld [vmem:[%s273 + $0x60] sm:$0xff]
          %v342 = vld [vmem:[%s273 + $0x68] sm:$0xff]
          %v343 = vld [vmem:[%s273 + $0x70] sm:$0xff]
          %v344 = vld [vmem:[%s273 + $0x78] sm:$0xff]
          %v345 = vld [vmem:[#allocation9] sm:$0xff]
          %v346 = vld [vmem:[#allocation9 + $0x8] sm:$0xff]
          %v347 = vld [vmem:[#allocation9 + $0x10] sm:$0xff]
          %v348 = vld [vmem:[#allocation9 + $0x18] sm:$0xff]
          %v349 = vld [vmem:[#allocation9 + $0x20] sm:$0xff]
          %v350 = vld [vmem:[#allocation9 + $0x28] sm:$0xff]
          %v351 = vld [vmem:[#allocation9 + $0x30] sm:$0xff]
          %v352 = vld [vmem:[#allocation9 + $0x38] sm:$0xff]
          %v353 = vld [vmem:[#allocation9 + $0x40] sm:$0xff]
          %v354 = vld [vmem:[#allocation9 + $0x48] sm:$0xff]
          %v355 = vld [vmem:[#allocation9 + $0x50] sm:$0xff]
          %v356 = vld [vmem:[#allocation9 + $0x58] sm:$0xff]
          %v357 = vld [vmem:[#allocation9 + $0x60] sm:$0xff]
          %v358 = vld [vmem:[#allocation9 + $0x68] sm:$0xff]
          %v359 = vld [vmem:[#allocation9 + $0x70] sm:$0xff]
          %v360 = vld [vmem:[#allocation9 + $0x78] sm:$0xff]
          %v361 = vld [vmem:[#allocation9 + $0x80] sm:$0xff]
          %v362 = vld [vmem:[#allocation9 + $0x88] sm:$0xff]
          %v363 = vld [vmem:[#allocation9 + $0x90] sm:$0xff]
          %v364 = vld [vmem:[#allocation9 + $0x98] sm:$0xff]
          %v365 = vld [vmem:[#allocation9 + $0xa0] sm:$0xff]
          %v366 = vld [vmem:[#allocation9 + $0xa8] sm:$0xff]
          %v367 = vld [vmem:[#allocation9 + $0xb0] sm:$0xff]
          %v368 = vld [vmem:[#allocation9 + $0xb8] sm:$0xff]
          %v369 = vld [vmem:[#allocation9 + $0xc0] sm:$0xff]
          %v370 = vld [vmem:[#allocation9 + $0xc8] sm:$0xff]
          %v371 = vld [vmem:[#allocation9 + $0xd0] sm:$0xff]
          %v372 = vld [vmem:[#allocation9 + $0xd8] sm:$0xff]
          %v373 = vld [vmem:[#allocation9 + $0xe0] sm:$0xff]
          %v374 = vld [vmem:[#allocation9 + $0xe8] sm:$0xff]
          %v375 = vld [vmem:[#allocation9 + $0xf0] sm:$0xff]
          %v376 = vld [vmem:[#allocation9 + $0xf8] sm:$0xff]
          %v377 = vld [vmem:[#allocation9 + $0x100] sm:$0xff]
          %v378 = vld [vmem:[#allocation9 + $0x108] sm:$0xff]
          %v379 = vld [vmem:[#allocation9 + $0x110] sm:$0xff]
          %v380 = vld [vmem:[#allocation9 + $0x118] sm:$0xff]
          %v381 = vld [vmem:[#allocation9 + $0x120] sm:$0xff]
          %v382 = vld [vmem:[#allocation9 + $0x128] sm:$0xff]
          %v383 = vld [vmem:[#allocation9 + $0x130] sm:$0xff]
          %v384 = vld [vmem:[#allocation9 + $0x138] sm:$0xff]
          %v385 = vld [vmem:[#allocation9 + $0x140] sm:$0xff]
          %v386 = vld [vmem:[#allocation9 + $0x148] sm:$0xff]
          %v387 = vld [vmem:[#allocation9 + $0x150] sm:$0xff]
          %v388 = vld [vmem:[#allocation9 + $0x158] sm:$0xff]
          %v389 = vld [vmem:[#allocation9 + $0x160] sm:$0xff]
          %v390 = vld [vmem:[#allocation9 + $0x168] sm:$0xff]
          %v391 = vld [vmem:[#allocation9 + $0x170] sm:$0xff]
          %v392 = vld [vmem:[#allocation9 + $0x178] sm:$0xff]
          %v393 = vld [vmem:[#allocation9 + $0x180] sm:$0xff]
          %v394 = vld [vmem:[#allocation9 + $0x188] sm:$0xff]
          %v395 = vld [vmem:[#allocation9 + $0x190] sm:$0xff]
          %v396 = vld [vmem:[#allocation9 + $0x198] sm:$0xff]
          %v397 = vld [vmem:[#allocation9 + $0x1a0] sm:$0xff]
          %v398 = vld [vmem:[#allocation9 + $0x1a8] sm:$0xff]
          %v399 = vld [vmem:[#allocation9 + $0x1b0] sm:$0xff]
          %v400 = vld [vmem:[#allocation9 + $0x1b8] sm:$0xff]
          %v401 = vld [vmem:[#allocation9 + $0x1c0] sm:$0xff]
          %v402 = vld [vmem:[#allocation9 + $0x1c8] sm:$0xff]
          %v403 = vld [vmem:[#allocation9 + $0x1d0] sm:$0xff]
          %v404 = vld [vmem:[#allocation9 + $0x1d8] sm:$0xff]
          %v405 = vld [vmem:[#allocation9 + $0x1e0] sm:$0xff]
          %v406 = vld [vmem:[#allocation9 + $0x1e8] sm:$0xff]
          %v407 = vld [vmem:[#allocation9 + $0x1f0] sm:$0xff]
          %v408 = vld [vmem:[#allocation9 + $0x1f8] sm:$0xff]
          %v409 = vld [vmem:[%s2] sm:$0xf]
          %v411 = vlaneseq
          %v412 = vshrl.u32 %v411, 7
          %v413 = vsub.s32 0, %v412
          %v414 = vrot.slane %v409, %v413
          %v415 = vlaneseq
          %v416 = vshrl.u32 %v415, 7
          %v417 = vsub.s32 1, %v416
          %v418 = vrot.slane %v409, %v417
          %v419 = vlaneseq
          %v420 = vshrl.u32 %v419, 7
          %v421 = vsub.s32 2, %v420
          %v422 = vrot.slane %v409, %v421
          %v423 = vlaneseq
          %v424 = vshrl.u32 %v423, 7
          %v425 = vsub.s32 3, %v424
          %v426 = vrot.slane %v409, %v425
          %431 = vmatprep.subr.mxu0 0.0
          %432 = vmatpush1.xpose.msra.mxu0 %v345
          %433 = vmatprep.subr.mxu0 0.0
          %434 = vmatpush1.xpose.msra.mxu0 %v346
          %435 = vmatprep.subr.mxu0 0.0
          %436 = vmatpush1.xpose.msra.mxu0 %v347
          %437 = vmatprep.subr.mxu0 0.0
          %438 = vmatpush1.xpose.msra.mxu0 %v348
          %439 = vmatprep.subr.mxu0 0.0
          %440 = vmatpush1.xpose.msra.mxu0 %v349
          %441 = vmatprep.subr.mxu0 0.0
          %442 = vmatpush1.xpose.msra.mxu0 %v350
          %443 = vmatprep.subr.mxu0 0.0
          %444 = vmatpush1.xpose.msra.mxu0 %v351
          %445 = vmatprep.subr.mxu0 0.0
          %446 = vmatpush1.xpose.msra.mxu0 %v352
          %447 = vmatprep.subr.mxu0 0.0
          %448 = vmatpush1.xpose.msra.mxu0 %v353
          %449 = vmatprep.subr.mxu0 0.0
          %450 = vmatpush1.xpose.msra.mxu0 %v354
          %451 = vmatprep.subr.mxu0 0.0
          %452 = vmatpush1.xpose.msra.mxu0 %v355
          %453 = vmatprep.subr.mxu0 0.0
          %454 = vmatpush1.xpose.msra.mxu0 %v356
          %455 = vmatprep.subr.mxu0 0.0
          %456 = vmatpush1.xpose.msra.mxu0 %v357
          %457 = vmatprep.subr.mxu0 0.0
          %458 = vmatpush1.xpose.msra.mxu0 %v358
          %459 = vmatprep.subr.mxu0 0.0
          %460 = vmatpush1.xpose.msra.mxu0 %v359
          %461 = vmatprep.subr.mxu0 0.0
          %462 = vmatpush1.xpose.msra.mxu0 %v360
          %463 = vmatprep.subr.mxu0 0.0
          %464 = vmatpush1.xpose.msra.mxu0 %v361
          %465 = vmatprep.subr.mxu0 0.0
          %466 = vmatpush1.xpose.msra.mxu0 %v362
          %467 = vmatprep.subr.mxu0 0.0
          %468 = vmatpush1.xpose.msra.mxu0 %v363
          %469 = vmatprep.subr.mxu0 0.0
          %470 = vmatpush1.xpose.msra.mxu0 %v364
          %471 = vmatprep.subr.mxu0 0.0
          %472 = vmatpush1.xpose.msra.mxu0 %v365
          %473 = vmatprep.subr.mxu0 0.0
          %474 = vmatpush1.xpose.msra.mxu0 %v366
          %475 = vmatprep.subr.mxu0 0.0
          %476 = vmatpush1.xpose.msra.mxu0 %v367
          %477 = vmatprep.subr.mxu0 0.0
          %478 = vmatpush1.xpose.msra.mxu0 %v368
          %479 = vmatprep.subr.mxu0 0.0
          %480 = vmatpush1.xpose.msra.mxu0 %v369
          %481 = vmatprep.subr.mxu0 0.0
          %482 = vmatpush1.xpose.msra.mxu0 %v370
          %483 = vmatprep.subr.mxu0 0.0
          %484 = vmatpush1.xpose.msra.mxu0 %v371
          %485 = vmatprep.subr.mxu0 0.0
          %486 = vmatpush1.xpose.msra.mxu0 %v372
          %487 = vmatprep.subr.mxu0 0.0
          %488 = vmatpush1.xpose.msra.mxu0 %v373
          %489 = vmatprep.subr.mxu0 0.0
          %490 = vmatpush1.xpose.msra.mxu0 %v374
          %491 = vmatprep.subr.mxu0 0.0
          %492 = vmatpush1.xpose.msra.mxu0 %v375
          %493 = vmatprep.subr.mxu0 0.0
          %494 = vmatpush1.xpose.msra.mxu0 %v376
          %495 = vmatprep.mubr.f32.mxu0 0.0
          %496 = vmatmul.mubr.f32.gmra.mrb[0].mxu0 %v329
          %v497 = vpop.f32.mrb[0].mxu0
          %v498 = vadd.f32 %v414, %v497
          %v499 = vpop.f32.mrb[0].mxu0
          %v500 = vadd.f32 %v418, %v499
          %501 = vmatprep.mubr.f32.mxu0 0.0
          %502 = vmatmul.mubr.f32.gmra.mrb[0].mxu0 %v330
          %v503 = vpop.f32.mrb[0].mxu0
          %v504 = vadd.f32 %v414, %v503
          %v505 = vpop.f32.mrb[0].mxu0
          %v506 = vadd.f32 %v418, %v505
          %507 = vmatprep.mubr.f32.mxu0 0.0
          %508 = vmatmul.mubr.f32.gmra.mrb[0].mxu0 %v331
          %v509 = vpop.f32.mrb[0].mxu0
          %v510 = vadd.f32 %v414, %v509
          %v511 = vpop.f32.mrb[0].mxu0
          %v512 = vadd.f32 %v418, %v511
          %513 = vmatprep.mubr.f32.mxu0 0.0
          %514 = vmatmul.mubr.f32.gmra.mrb[0].mxu0 %v332
          %v515 = vpop.f32.mrb[0].mxu0
          %v516 = vadd.f32 %v414, %v515
          %v517 = vpop.f32.mrb[0].mxu0
          %v518 = vadd.f32 %v418, %v517
          %519 = vmatprep.mubr.f32.mxu0 0.0
          %520 = vmatmul.mubr.f32.gmra.mrb[0].mxu0 %v333
          %v521 = vpop.f32.mrb[0].mxu0
          %v522 = vadd.f32 %v414, %v521
          %v523 = vpop.f32.mrb[0].mxu0
          %v524 = vadd.f32 %v418, %v523
          %525 = vmatprep.mubr.f32.mxu0 0.0
          %526 = vmatmul.mubr.f32.gmra.mrb[0].mxu0 %v334
          %v527 = vpop.f32.mrb[0].mxu0
          %v528 = vadd.f32 %v414, %v527
          %v529 = vpop.f32.mrb[0].mxu0
          %v530 = vadd.f32 %v418, %v529
          %531 = vmatprep.mubr.f32.mxu0 0.0
          %532 = vmatmul.mubr.f32.gmra.mrb[0].mxu0 %v335
          %v533 = vpop.f32.mrb[0].mxu0
          %v534 = vadd.f32 %v414, %v533
          %v535 = vpop.f32.mrb[0].mxu0
          %v536 = vadd.f32 %v418, %v535
          %537 = vmatprep.mubr.f32.mxu0 0.0
          %538 = vmatmul.mubr.f32.gmra.mrb[0].mxu0 %v336
          %v539 = vpop.f32.mrb[0].mxu0
          %v540 = vadd.f32 %v414, %v539
          %v541 = vpop.f32.mrb[0].mxu0
          %v542 = vadd.f32 %v418, %v541
          %543 = vmatprep.mubr.f32.mxu0 0.0
          %544 = vmatmul.mubr.f32.gmra.mrb[0].mxu0 %v337
          %v545 = vpop.f32.mrb[0].mxu0
          %v546 = vadd.f32 %v414, %v545
          %v547 = vpop.f32.mrb[0].mxu0
          %v548 = vadd.f32 %v418, %v547
          %549 = vmatprep.mubr.f32.mxu0 0.0
          %550 = vmatmul.mubr.f32.gmra.mrb[0].mxu0 %v338
          %v551 = vpop.f32.mrb[0].mxu0
          %v552 = vadd.f32 %v414, %v551
          %v553 = vpop.f32.mrb[0].mxu0
          %v554 = vadd.f32 %v418, %v553
          %555 = vmatprep.mubr.f32.mxu0 0.0
          %556 = vmatmul.mubr.f32.gmra.mrb[0].mxu0 %v339
          %v557 = vpop.f32.mrb[0].mxu0
          %v558 = vadd.f32 %v414, %v557
          %v559 = vpop.f32.mrb[0].mxu0
          %v560 = vadd.f32 %v418, %v559
          %561 = vmatprep.mubr.f32.mxu0 0.0
          %562 = vmatmul.mubr.f32.gmra.mrb[0].mxu0 %v340
          %v563 = vpop.f32.mrb[0].mxu0
          %v564 = vadd.f32 %v414, %v563
          %v565 = vpop.f32.mrb[0].mxu0
          %v566 = vadd.f32 %v418, %v565
          %567 = vmatprep.mubr.f32.mxu0 0.0
          %568 = vmatmul.mubr.f32.gmra.mrb[0].mxu0 %v341
          %v569 = vpop.f32.mrb[0].mxu0
          %v570 = vadd.f32 %v414, %v569
          %v571 = vpop.f32.mrb[0].mxu0
          %v572 = vadd.f32 %v418, %v571
          %573 = vmatprep.mubr.f32.mxu0 0.0
          %574 = vmatmul.mubr.f32.gmra.mrb[0].mxu0 %v342
          %v575 = vpop.f32.mrb[0].mxu0
          %v576 = vadd.f32 %v414, %v575
          %v577 = vpop.f32.mrb[0].mxu0
          %v578 = vadd.f32 %v418, %v577
          %579 = vmatprep.mubr.f32.mxu0 0.0
          %580 = vmatmul.mubr.f32.gmra.mrb[0].mxu0 %v343
          %v581 = vpop.f32.mrb[0].mxu0
          %v582 = vadd.f32 %v414, %v581
          %v583 = vpop.f32.mrb[0].mxu0
          %v584 = vadd.f32 %v418, %v583
          %585 = vmatprep.mubr.f32.mxu0 0.0
          %586 = vmatmul.mubr.f32.gmra.mrb[0].mxu0 %v344
          %v587 = vpop.f32.mrb[0].mxu0
          %v588 = vadd.f32 %v414, %v587
          %v589 = vpop.f32.mrb[0].mxu0
          %v590 = vadd.f32 %v418, %v589
          %591 = vdwg.mxu0
          %592 = vmatprep.subr.mxu0 0.0
          %593 = vmatpush1.xpose.msra.mxu0 %v377
          %594 = vmatprep.subr.mxu0 0.0
          %595 = vmatpush1.xpose.msra.mxu0 %v378
          %596 = vmatprep.subr.mxu0 0.0
          %597 = vmatpush1.xpose.msra.mxu0 %v379
          %598 = vmatprep.subr.mxu0 0.0
          %599 = vmatpush1.xpose.msra.mxu0 %v380
          %600 = vmatprep.subr.mxu0 0.0
          %601 = vmatpush1.xpose.msra.mxu0 %v381
          %602 = vmatprep.subr.mxu0 0.0
          %603 = vmatpush1.xpose.msra.mxu0 %v382
          %604 = vmatprep.subr.mxu0 0.0
          %605 = vmatpush1.xpose.msra.mxu0 %v383
          %606 = vmatprep.subr.mxu0 0.0
          %607 = vmatpush1.xpose.msra.mxu0 %v384
          %608 = vmatprep.subr.mxu0 0.0
          %609 = vmatpush1.xpose.msra.mxu0 %v385
          %610 = vmatprep.subr.mxu0 0.0
          %611 = vmatpush1.xpose.msra.mxu0 %v386
          %612 = vmatprep.subr.mxu0 0.0
          %613 = vmatpush1.xpose.msra.mxu0 %v387
          %614 = vmatprep.subr.mxu0 0.0
          %615 = vmatpush1.xpose.msra.mxu0 %v388
          %616 = vmatprep.subr.mxu0 0.0
          %617 = vmatpush1.xpose.msra.mxu0 %v389
          %618 = vmatprep.subr.mxu0 0.0
          %619 = vmatpush1.xpose.msra.mxu0 %v390
          %620 = vmatprep.subr.mxu0 0.0
          %621 = vmatpush1.xpose.msra.mxu0 %v391
          %622 = vmatprep.subr.mxu0 0.0
          %623 = vmatpush1.xpose.msra.mxu0 %v392
          %624 = vmatprep.subr.mxu0 0.0
          %625 = vmatpush1.xpose.msra.mxu0 %v393
          %626 = vmatprep.subr.mxu0 0.0
          %627 = vmatpush1.xpose.msra.mxu0 %v394
          %628 = vmatprep.subr.mxu0 0.0
          %629 = vmatpush1.xpose.msra.mxu0 %v395
          %630 = vmatprep.subr.mxu0 0.0
          %631 = vmatpush1.xpose.msra.mxu0 %v396
          %632 = vmatprep.subr.mxu0 0.0
          %633 = vmatpush1.xpose.msra.mxu0 %v397
          %634 = vmatprep.subr.mxu0 0.0
          %635 = vmatpush1.xpose.msra.mxu0 %v398
          %636 = vmatprep.subr.mxu0 0.0
          %637 = vmatpush1.xpose.msra.mxu0 %v399
          %638 = vmatprep.subr.mxu0 0.0
          %639 = vmatpush1.xpose.msra.mxu0 %v400
          %640 = vmatprep.subr.mxu0 0.0
          %641 = vmatpush1.xpose.msra.mxu0 %v401
          %642 = vmatprep.subr.mxu0 0.0
          %643 = vmatpush1.xpose.msra.mxu0 %v402
          %644 = vmatprep.subr.mxu0 0.0
          %645 = vmatpush1.xpose.msra.mxu0 %v403
          %646 = vmatprep.subr.mxu0 0.0
          %647 = vmatpush1.xpose.msra.mxu0 %v404
          %648 = vmatprep.subr.mxu0 0.0
          %649 = vmatpush1.xpose.msra.mxu0 %v405
          %650 = vmatprep.subr.mxu0 0.0
          %651 = vmatpush1.xpose.msra.mxu0 %v406
          %652 = vmatprep.subr.mxu0 0.0
          %653 = vmatpush1.xpose.msra.mxu0 %v407
          %654 = vmatprep.subr.mxu0 0.0
          %655 = vmatpush1.xpose.msra.mxu0 %v408
          %656 = vmatprep.mubr.f32.mxu0 0.0
          %657 = vmatmul.mubr.f32.gmra.mrb[0].mxu0 %v329
          %v658 = vpop.f32.mrb[0].mxu0
          %v659 = vadd.f32 %v422, %v658
          %v660 = vpop.f32.mrb[0].mxu0
          %v661 = vadd.f32 %v426, %v660
          %662 = vmatprep.mubr.f32.mxu0 0.0
          %663 = vmatmul.mubr.f32.gmra.mrb[0].mxu0 %v330
          %v664 = vpop.f32.mrb[0].mxu0
          %v665 = vadd.f32 %v422, %v664
          %v666 = vpop.f32.mrb[0].mxu0
          %v667 = vadd.f32 %v426, %v666
          %668 = vmatprep.mubr.f32.mxu0 0.0
          %669 = vmatmul.mubr.f32.gmra.mrb[0].mxu0 %v331
          %v670 = vpop.f32.mrb[0].mxu0
          %v671 = vadd.f32 %v422, %v670
          %v672 = vpop.f32.mrb[0].mxu0
          %v673 = vadd.f32 %v426, %v672
          %674 = vmatprep.mubr.f32.mxu0 0.0
          %675 = vmatmul.mubr.f32.gmra.mrb[0].mxu0 %v332
          %v676 = vpop.f32.mrb[0].mxu0
          %v677 = vadd.f32 %v422, %v676
          %v678 = vpop.f32.mrb[0].mxu0
          %v679 = vadd.f32 %v426, %v678
          %680 = vmatprep.mubr.f32.mxu0 0.0
          %681 = vmatmul.mubr.f32.gmra.mrb[0].mxu0 %v333
          %v682 = vpop.f32.mrb[0].mxu0
          %v683 = vadd.f32 %v422, %v682
          %v684 = vpop.f32.mrb[0].mxu0
          %v685 = vadd.f32 %v426, %v684
          %686 = vmatprep.mubr.f32.mxu0 0.0
          %687 = vmatmul.mubr.f32.gmra.mrb[0].mxu0 %v334
          %v688 = vpop.f32.mrb[0].mxu0
          %v689 = vadd.f32 %v422, %v688
          %v690 = vpop.f32.mrb[0].mxu0
          %v691 = vadd.f32 %v426, %v690
          %692 = vmatprep.mubr.f32.mxu0 0.0
          %693 = vmatmul.mubr.f32.gmra.mrb[0].mxu0 %v335
          %v694 = vpop.f32.mrb[0].mxu0
          %v695 = vadd.f32 %v422, %v694
          %v696 = vpop.f32.mrb[0].mxu0
          %v697 = vadd.f32 %v426, %v696
          %698 = vmatprep.mubr.f32.mxu0 0.0
          %699 = vmatmul.mubr.f32.gmra.mrb[0].mxu0 %v336
          %v700 = vpop.f32.mrb[0].mxu0
          %v701 = vadd.f32 %v422, %v700
          %v702 = vpop.f32.mrb[0].mxu0
          %v703 = vadd.f32 %v426, %v702
          %704 = vmatprep.mubr.f32.mxu0 0.0
          %705 = vmatmul.mubr.f32.gmra.mrb[0].mxu0 %v337
          %v706 = vpop.f32.mrb[0].mxu0
          %v707 = vadd.f32 %v422, %v706
          %v708 = vpop.f32.mrb[0].mxu0
          %v709 = vadd.f32 %v426, %v708
          %710 = vmatprep.mubr.f32.mxu0 0.0
          %711 = vmatmul.mubr.f32.gmra.mrb[0].mxu0 %v338
          %v712 = vpop.f32.mrb[0].mxu0
          %v713 = vadd.f32 %v422, %v712
          %v714 = vpop.f32.mrb[0].mxu0
          %v715 = vadd.f32 %v426, %v714
          %716 = vmatprep.mubr.f32.mxu0 0.0
          %717 = vmatmul.mubr.f32.gmra.mrb[0].mxu0 %v339
          %v718 = vpop.f32.mrb[0].mxu0
          %v719 = vadd.f32 %v422, %v718
          %v720 = vpop.f32.mrb[0].mxu0
          %v721 = vadd.f32 %v426, %v720
          %722 = vmatprep.mubr.f32.mxu0 0.0
          %723 = vmatmul.mubr.f32.gmra.mrb[0].mxu0 %v340
          %v724 = vpop.f32.mrb[0].mxu0
          %v725 = vadd.f32 %v422, %v724
          %v726 = vpop.f32.mrb[0].mxu0
          %v727 = vadd.f32 %v426, %v726
          %728 = vmatprep.mubr.f32.mxu0 0.0
          %729 = vmatmul.mubr.f32.gmra.mrb[0].mxu0 %v341
          %v730 = vpop.f32.mrb[0].mxu0
          %v731 = vadd.f32 %v422, %v730
          %v732 = vpop.f32.mrb[0].mxu0
          %v733 = vadd.f32 %v426, %v732
          %734 = vmatprep.mubr.f32.mxu0 0.0
          %735 = vmatmul.mubr.f32.gmra.mrb[0].mxu0 %v342
          %v736 = vpop.f32.mrb[0].mxu0
          %v737 = vadd.f32 %v422, %v736
          %v738 = vpop.f32.mrb[0].mxu0
          %v739 = vadd.f32 %v426, %v738
          %740 = vmatprep.mubr.f32.mxu0 0.0
          %741 = vmatmul.mubr.f32.gmra.mrb[0].mxu0 %v343
          %v742 = vpop.f32.mrb[0].mxu0
          %v743 = vadd.f32 %v422, %v742
          %v744 = vpop.f32.mrb[0].mxu0
          %v745 = vadd.f32 %v426, %v744
          %746 = vmatprep.mubr.f32.mxu0 0.0
          %747 = vmatmul.mubr.f32.gmra.mrb[0].mxu0 %v344
          %v748 = vpop.f32.mrb[0].mxu0
          %v749 = vadd.f32 %v422, %v748
          %v750 = vpop.f32.mrb[0].mxu0
          %v751 = vadd.f32 %v426, %v750
          %752 = vdwg.mxu0
          %v753 = vtanh.pop %v498
          %v754 = vtanh.pop %v500
          %v755 = vtanh.pop %v659
          %v756 = vtanh.pop %v661
          %v757 = vtanh.pop %v504
          %v758 = vtanh.pop %v506
          %v759 = vtanh.pop %v665
          %v760 = vtanh.pop %v667
          %v761 = vtanh.pop %v510
          %v762 = vtanh.pop %v512
          %v763 = vtanh.pop %v671
          %v764 = vtanh.pop %v673
          %v765 = vtanh.pop %v516
          %v766 = vtanh.pop %v518
          %v767 = vtanh.pop %v677
          %v768 = vtanh.pop %v679
          %v769 = vtanh.pop %v522
          %v770 = vtanh.pop %v524
          %v771 = vtanh.pop %v683
          %v772 = vtanh.pop %v685
          %v773 = vtanh.pop %v528
          %v774 = vtanh.pop %v530
          %v775 = vtanh.pop %v689
          %v776 = vtanh.pop %v691
          %v777 = vtanh.pop %v534
          %v778 = vtanh.pop %v536
          %v779 = vtanh.pop %v695
          %v780 = vtanh.pop %v697
          %v781 = vtanh.pop %v540
          %v782 = vtanh.pop %v542
          %v783 = vtanh.pop %v701
          %v784 = vtanh.pop %v703
          %v785 = vtanh.pop %v546
          %v786 = vtanh.pop %v548
          %v787 = vtanh.pop %v707
          %v788 = vtanh.pop %v709
          %v789 = vtanh.pop %v552
          %v790 = vtanh.pop %v554
          %v791 = vtanh.pop %v713
          %v792 = vtanh.pop %v715
          %v793 = vtanh.pop %v558
          %v794 = vtanh.pop %v560
          %v795 = vtanh.pop %v719
          %v796 = vtanh.pop %v721
          %v797 = vtanh.pop %v564
          %v798 = vtanh.pop %v566
          %v799 = vtanh.pop %v725
          %v800 = vtanh.pop %v727
          %v801 = vtanh.pop %v570
          %v802 = vtanh.pop %v572
          %v803 = vtanh.pop %v731
          %v804 = vtanh.pop %v733
          %v805 = vtanh.pop %v576
          %v806 = vtanh.pop %v578
          %v807 = vtanh.pop %v737
          %v808 = vtanh.pop %v739
          %v809 = vtanh.pop %v582
          %v810 = vtanh.pop %v584
          %v811 = vtanh.pop %v743
          %v812 = vtanh.pop %v745
          %v813 = vtanh.pop %v588
          %v814 = vtanh.pop %v590
          %v815 = vtanh.pop %v749
          %v816 = vtanh.pop %v751
          %817 = vst [vmem:[#allocation2] sm:$0xff] %v753
          %818 = vst [vmem:[#allocation2 + $0x8] sm:$0xff] %v754
          %819 = vst [vmem:[#allocation2 + $0x10] sm:$0xff] %v755
          %820 = vst [vmem:[#allocation2 + $0x18] sm:$0xff] %v756
          %821 = vst [vmem:[#allocation2 + $0x20] sm:$0xff] %v757
          %822 = vst [vmem:[#allocation2 + $0x28] sm:$0xff] %v758
          %823 = vst [vmem:[#allocation2 + $0x30] sm:$0xff] %v759
          %824 = vst [vmem:[#allocation2 + $0x38] sm:$0xff] %v760
          %825 = vst [vmem:[#allocation2 + $0x40] sm:$0xff] %v761
          %826 = vst [vmem:[#allocation2 + $0x48] sm:$0xff] %v762
          %827 = vst [vmem:[#allocation2 + $0x50] sm:$0xff] %v763
          %828 = vst [vmem:[#allocation2 + $0x58] sm:$0xff] %v764
          %829 = vst [vmem:[#allocation2 + $0x60] sm:$0xff] %v765
          %830 = vst [vmem:[#allocation2 + $0x68] sm:$0xff] %v766
          %831 = vst [vmem:[#allocation2 + $0x70] sm:$0xff] %v767
          %832 = vst [vmem:[#allocation2 + $0x78] sm:$0xff] %v768
          %833 = vst [vmem:[#allocation2 + $0x80] sm:$0xff] %v769
          %834 = vst [vmem:[#allocation2 + $0x88] sm:$0xff] %v770
          %835 = vst [vmem:[#allocation2 + $0x90] sm:$0xff] %v771
          %836 = vst [vmem:[#allocation2 + $0x98] sm:$0xff] %v772
          %837 = vst [vmem:[#allocation2 + $0xa0] sm:$0xff] %v773
          %838 = vst [vmem:[#allocation2 + $0xa8] sm:$0xff] %v774
          %839 = vst [vmem:[#allocation2 + $0xb0] sm:$0xff] %v775
          %840 = vst [vmem:[#allocation2 + $0xb8] sm:$0xff] %v776
          %841 = vst [vmem:[#allocation2 + $0xc0] sm:$0xff] %v777
          %842 = vst [vmem:[#allocation2 + $0xc8] sm:$0xff] %v778
          %843 = vst [vmem:[#allocation2 + $0xd0] sm:$0xff] %v779
          %844 = vst [vmem:[#allocation2 + $0xd8] sm:$0xff] %v780
          %845 = vst [vmem:[#allocation2 + $0xe0] sm:$0xff] %v781
          %846 = vst [vmem:[#allocation2 + $0xe8] sm:$0xff] %v782
          %847 = vst [vmem:[#allocation2 + $0xf0] sm:$0xff] %v783
          %848 = vst [vmem:[#allocation2 + $0xf8] sm:$0xff] %v784
          %849 = vst [vmem:[#allocation2 + $0x100] sm:$0xff] %v785
          %850 = vst [vmem:[#allocation2 + $0x108] sm:$0xff] %v786
          %851 = vst [vmem:[#allocation2 + $0x110] sm:$0xff] %v787
          %852 = vst [vmem:[#allocation2 + $0x118] sm:$0xff] %v788
          %853 = vst [vmem:[#allocation2 + $0x120] sm:$0xff] %v789
          %854 = vst [vmem:[#allocation2 + $0x128] sm:$0xff] %v790
          %855 = vst [vmem:[#allocation2 + $0x130] sm:$0xff] %v791
          %856 = vst [vmem:[#allocation2 + $0x138] sm:$0xff] %v792
          %857 = vst [vmem:[#allocation2 + $0x140] sm:$0xff] %v793
          %858 = vst [vmem:[#allocation2 + $0x148] sm:$0xff] %v794
          %859 = vst [vmem:[#allocation2 + $0x150] sm:$0xff] %v795
          %860 = vst [vmem:[#allocation2 + $0x158] sm:$0xff] %v796
          %861 = vst [vmem:[#allocation2 + $0x160] sm:$0xff] %v797
          %862 = vst [vmem:[#allocation2 + $0x168] sm:$0xff] %v798
          %863 = vst [vmem:[#allocation2 + $0x170] sm:$0xff] %v799
          %864 = vst [vmem:[#allocation2 + $0x178] sm:$0xff] %v800
          %865 = vst [vmem:[#allocation2 + $0x180] sm:$0xff] %v801
          %866 = vst [vmem:[#allocation2 + $0x188] sm:$0xff] %v802
          %867 = vst [vmem:[#allocation2 + $0x190] sm:$0xff] %v803
          %868 = vst [vmem:[#allocation2 + $0x198] sm:$0xff] %v804
          %869 = vst [vmem:[#allocation2 + $0x1a0] sm:$0xff] %v805
          %870 = vst [vmem:[#allocation2 + $0x1a8] sm:$0xff] %v806
          %871 = vst [vmem:[#allocation2 + $0x1b0] sm:$0xff] %v807
          %872 = vst [vmem:[#allocation2 + $0x1b8] sm:$0xff] %v808
          %873 = vst [vmem:[#allocation2 + $0x1c0] sm:$0xff] %v809
          %874 = vst [vmem:[#allocation2 + $0x1c8] sm:$0xff] %v810
          %875 = vst [vmem:[#allocation2 + $0x1d0] sm:$0xff] %v811
          %876 = vst [vmem:[#allocation2 + $0x1d8] sm:$0xff] %v812
          %877 = vst [vmem:[#allocation2 + $0x1e0] sm:$0xff] %v813
          %878 = vst [vmem:[#allocation2 + $0x1e8] sm:$0xff] %v814
          %879 = vst [vmem:[#allocation2 + $0x1f0] sm:$0xff] %v815
          %880 = vst [vmem:[#allocation2 + $0x1f8] sm:$0xff] %v816
          %vm881 = vcmask 7168
          %882 = vst.msk [vmem:[#allocation3] sm:$0xff] %vm881, -inf
          %883 = vst.msk [vmem:[#allocation3 + $0x8] sm:$0xff] %vm881, -inf
          %884 = vst.msk [vmem:[#allocation3 + $0x10] sm:$0xff] %vm881, -inf
          %885 = vst.msk [vmem:[#allocation3 + $0x18] sm:$0xff] %vm881, -inf
          %886 = vst.msk [vmem:[#allocation3 + $0x20] sm:$0xff] %vm881, -inf
          %887 = vst.msk [vmem:[#allocation3 + $0x28] sm:$0xff] %vm881, -inf
          %888 = vst.msk [vmem:[#allocation3 + $0x30] sm:$0xff] %vm881, -inf
          %889 = vst.msk [vmem:[#allocation3 + $0x38] sm:$0xff] %vm881, -inf
          %890 = vst.msk [vmem:[#allocation3 + $0x40] sm:$0xff] %vm881, -inf
          %891 = vst.msk [vmem:[#allocation3 + $0x48] sm:$0xff] %vm881, -inf
          %892 = vst.msk [vmem:[#allocation3 + $0x50] sm:$0xff] %vm881, -inf
          %893 = vst.msk [vmem:[#allocation3 + $0x58] sm:$0xff] %vm881, -inf
          %894 = vst.msk [vmem:[#allocation3 + $0x60] sm:$0xff] %vm881, -inf
          %895 = vst.msk [vmem:[#allocation3 + $0x68] sm:$0xff] %vm881, -inf
          %896 = vst.msk [vmem:[#allocation3 + $0x70] sm:$0xff] %vm881, -inf
          %897 = vst.msk [vmem:[#allocation3 + $0x78] sm:$0xff] %vm881, -inf
          %898 = vst.msk [vmem:[#allocation3 + $0x80] sm:$0xff] %vm881, -inf
          %899 = vst.msk [vmem:[#allocation3 + $0x88] sm:$0xff] %vm881, -inf
          %900 = vst.msk [vmem:[#allocation3 + $0x90] sm:$0xff] %vm881, -inf
          %901 = vst.msk [vmem:[#allocation3 + $0x98] sm:$0xff] %vm881, -inf
          %902 = vst.msk [vmem:[#allocation3 + $0xa0] sm:$0xff] %vm881, -inf
          %903 = vst.msk [vmem:[#allocation3 + $0xa8] sm:$0xff] %vm881, -inf
          %904 = vst.msk [vmem:[#allocation3 + $0xb0] sm:$0xff] %vm881, -inf
          %905 = vst.msk [vmem:[#allocation3 + $0xb8] sm:$0xff] %vm881, -inf
          %906 = vst.msk [vmem:[#allocation3 + $0xc0] sm:$0xff] %vm881, -inf
          %907 = vst.msk [vmem:[#allocation3 + $0xc8] sm:$0xff] %vm881, -inf
          %908 = vst.msk [vmem:[#allocation3 + $0xd0] sm:$0xff] %vm881, -inf
          %909 = vst.msk [vmem:[#allocation3 + $0xd8] sm:$0xff] %vm881, -inf
          %910 = vst.msk [vmem:[#allocation3 + $0xe0] sm:$0xff] %vm881, -inf
          %911 = vst.msk [vmem:[#allocation3 + $0xe8] sm:$0xff] %vm881, -inf
          %912 = vst.msk [vmem:[#allocation3 + $0xf0] sm:$0xff] %vm881, -inf
          %913 = vst.msk [vmem:[#allocation3 + $0xf8] sm:$0xff] %vm881, -inf
          %914 = vst.msk [vmem:[#allocation3 + $0x100] sm:$0xff] %vm881, -inf
          %915 = vst.msk [vmem:[#allocation3 + $0x108] sm:$0xff] %vm881, -inf
          %916 = vst.msk [vmem:[#allocation3 + $0x110] sm:$0xff] %vm881, -inf
          %917 = vst.msk [vmem:[#allocation3 + $0x118] sm:$0xff] %vm881, -inf
          %918 = vst.msk [vmem:[#allocation3 + $0x120] sm:$0xff] %vm881, -inf
          %919 = vst.msk [vmem:[#allocation3 + $0x128] sm:$0xff] %vm881, -inf
          %920 = vst.msk [vmem:[#allocation3 + $0x130] sm:$0xff] %vm881, -inf
          %921 = vst.msk [vmem:[#allocation3 + $0x138] sm:$0xff] %vm881, -inf
          %922 = vst.msk [vmem:[#allocation3 + $0x140] sm:$0xff] %vm881, -inf
          %923 = vst.msk [vmem:[#allocation3 + $0x148] sm:$0xff] %vm881, -inf
          %924 = vst.msk [vmem:[#allocation3 + $0x150] sm:$0xff] %vm881, -inf
          %925 = vst.msk [vmem:[#allocation3 + $0x158] sm:$0xff] %vm881, -inf
          %926 = vst.msk [vmem:[#allocation3 + $0x160] sm:$0xff] %vm881, -inf
          %927 = vst.msk [vmem:[#allocation3 + $0x168] sm:$0xff] %vm881, -inf
          %928 = vst.msk [vmem:[#allocation3 + $0x170] sm:$0xff] %vm881, -inf
          %929 = vst.msk [vmem:[#allocation3 + $0x178] sm:$0xff] %vm881, -inf
          %930 = vst.msk [vmem:[#allocation3 + $0x180] sm:$0xff] %vm881, -inf
          %931 = vst.msk [vmem:[#allocation3 + $0x188] sm:$0xff] %vm881, -inf
          %932 = vst.msk [vmem:[#allocation3 + $0x190] sm:$0xff] %vm881, -inf
          %933 = vst.msk [vmem:[#allocation3 + $0x198] sm:$0xff] %vm881, -inf
          %934 = vst.msk [vmem:[#allocation3 + $0x1a0] sm:$0xff] %vm881, -inf
          %935 = vst.msk [vmem:[#allocation3 + $0x1a8] sm:$0xff] %vm881, -inf
          %936 = vst.msk [vmem:[#allocation3 + $0x1b0] sm:$0xff] %vm881, -inf
          %937 = vst.msk [vmem:[#allocation3 + $0x1b8] sm:$0xff] %vm881, -inf
          %938 = vst.msk [vmem:[#allocation3 + $0x1c0] sm:$0xff] %vm881, -inf
          %939 = vst.msk [vmem:[#allocation3 + $0x1c8] sm:$0xff] %vm881, -inf
          %940 = vst.msk [vmem:[#allocation3 + $0x1d0] sm:$0xff] %vm881, -inf
          %941 = vst.msk [vmem:[#allocation3 + $0x1d8] sm:$0xff] %vm881, -inf
          %942 = vst.msk [vmem:[#allocation3 + $0x1e0] sm:$0xff] %vm881, -inf
          %943 = vst.msk [vmem:[#allocation3 + $0x1e8] sm:$0xff] %vm881, -inf
          %944 = vst.msk [vmem:[#allocation3 + $0x1f0] sm:$0xff] %vm881, -inf
          %945 = vst.msk [vmem:[#allocation3 + $0x1f8] sm:$0xff] %vm881, -inf
          %946 = vst.msk [vmem:[#allocation4] sm:$0xff] %vm881, 0.0
          %947 = vst.msk [vmem:[#allocation4 + $0x8] sm:$0xff] %vm881, 0.0
          %948 = vst.msk [vmem:[#allocation4 + $0x10] sm:$0xff] %vm881, 0.0
          %949 = vst.msk [vmem:[#allocation4 + $0x18] sm:$0xff] %vm881, 0.0
          %950 = vst.msk [vmem:[#allocation4 + $0x20] sm:$0xff] %vm881, 0.0
          %951 = vst.msk [vmem:[#allocation4 + $0x28] sm:$0xff] %vm881, 0.0
          %952 = vst.msk [vmem:[#allocation4 + $0x30] sm:$0xff] %vm881, 0.0
          %953 = vst.msk [vmem:[#allocation4 + $0x38] sm:$0xff] %vm881, 0.0
          %954 = vst.msk [vmem:[#allocation4 + $0x40] sm:$0xff] %vm881, 0.0
          %955 = vst.msk [vmem:[#allocation4 + $0x48] sm:$0xff] %vm881, 0.0
          %956 = vst.msk [vmem:[#allocation4 + $0x50] sm:$0xff] %vm881, 0.0
          %957 = vst.msk [vmem:[#allocation4 + $0x58] sm:$0xff] %vm881, 0.0
          %958 = vst.msk [vmem:[#allocation4 + $0x60] sm:$0xff] %vm881, 0.0
          %959 = vst.msk [vmem:[#allocation4 + $0x68] sm:$0xff] %vm881, 0.0
          %960 = vst.msk [vmem:[#allocation4 + $0x70] sm:$0xff] %vm881, 0.0
          %961 = vst.msk [vmem:[#allocation4 + $0x78] sm:$0xff] %vm881, 0.0
          %962 = vst.msk [vmem:[#allocation4 + $0x80] sm:$0xff] %vm881, 0.0
          %963 = vst.msk [vmem:[#allocation4 + $0x88] sm:$0xff] %vm881, 0.0
          %964 = vst.msk [vmem:[#allocation4 + $0x90] sm:$0xff] %vm881, 0.0
          %965 = vst.msk [vmem:[#allocation4 + $0x98] sm:$0xff] %vm881, 0.0
          %966 = vst.msk [vmem:[#allocation4 + $0xa0] sm:$0xff] %vm881, 0.0
          %967 = vst.msk [vmem:[#allocation4 + $0xa8] sm:$0xff] %vm881, 0.0
          %968 = vst.msk [vmem:[#allocation4 + $0xb0] sm:$0xff] %vm881, 0.0
          %969 = vst.msk [vmem:[#allocation4 + $0xb8] sm:$0xff] %vm881, 0.0
          %970 = vst.msk [vmem:[#allocation4 + $0xc0] sm:$0xff] %vm881, 0.0
          %971 = vst.msk [vmem:[#allocation4 + $0xc8] sm:$0xff] %vm881, 0.0
          %972 = vst.msk [vmem:[#allocation4 + $0xd0] sm:$0xff] %vm881, 0.0
          %973 = vst.msk [vmem:[#allocation4 + $0xd8] sm:$0xff] %vm881, 0.0
          %974 = vst.msk [vmem:[#allocation4 + $0xe0] sm:$0xff] %vm881, 0.0
          %975 = vst.msk [vmem:[#allocation4 + $0xe8] sm:$0xff] %vm881, 0.0
          %976 = vst.msk [vmem:[#allocation4 + $0xf0] sm:$0xff] %vm881, 0.0
          %977 = vst.msk [vmem:[#allocation4 + $0xf8] sm:$0xff] %vm881, 0.0
          %978 = vst.msk [vmem:[#allocation4 + $0x100] sm:$0xff] %vm881, 0.0
          %979 = vst.msk [vmem:[#allocation4 + $0x108] sm:$0xff] %vm881, 0.0
          %980 = vst.msk [vmem:[#allocation4 + $0x110] sm:$0xff] %vm881, 0.0
          %981 = vst.msk [vmem:[#allocation4 + $0x118] sm:$0xff] %vm881, 0.0
          %982 = vst.msk [vmem:[#allocation4 + $0x120] sm:$0xff] %vm881, 0.0
          %983 = vst.msk [vmem:[#allocation4 + $0x128] sm:$0xff] %vm881, 0.0
          %984 = vst.msk [vmem:[#allocation4 + $0x130] sm:$0xff] %vm881, 0.0
          %985 = vst.msk [vmem:[#allocation4 + $0x138] sm:$0xff] %vm881, 0.0
          %986 = vst.msk [vmem:[#allocation4 + $0x140] sm:$0xff] %vm881, 0.0
          %987 = vst.msk [vmem:[#allocation4 + $0x148] sm:$0xff] %vm881, 0.0
          %988 = vst.msk [vmem:[#allocation4 + $0x150] sm:$0xff] %vm881, 0.0
          %989 = vst.msk [vmem:[#allocation4 + $0x158] sm:$0xff] %vm881, 0.0
          %990 = vst.msk [vmem:[#allocation4 + $0x160] sm:$0xff] %vm881, 0.0
          %991 = vst.msk [vmem:[#allocation4 + $0x168] sm:$0xff] %vm881, 0.0
          %992 = vst.msk [vmem:[#allocation4 + $0x170] sm:$0xff] %vm881, 0.0
          %993 = vst.msk [vmem:[#allocation4 + $0x178] sm:$0xff] %vm881, 0.0
          %994 = vst.msk [vmem:[#allocation4 + $0x180] sm:$0xff] %vm881, 0.0
          %995 = vst.msk [vmem:[#allocation4 + $0x188] sm:$0xff] %vm881, 0.0
          %996 = vst.msk [vmem:[#allocation4 + $0x190] sm:$0xff] %vm881, 0.0
          %997 = vst.msk [vmem:[#allocation4 + $0x198] sm:$0xff] %vm881, 0.0
          %998 = vst.msk [vmem:[#allocation4 + $0x1a0] sm:$0xff] %vm881, 0.0
          %999 = vst.msk [vmem:[#allocation4 + $0x1a8] sm:$0xff] %vm881, 0.0
          %1000 = vst.msk [vmem:[#allocation4 + $0x1b0] sm:$0xff] %vm881, 0.0
          %1001 = vst.msk [vmem:[#allocation4 + $0x1b8] sm:$0xff] %vm881, 0.0
          %1002 = vst.msk [vmem:[#allocation4 + $0x1c0] sm:$0xff] %vm881, 0.0
          %1003 = vst.msk [vmem:[#allocation4 + $0x1c8] sm:$0xff] %vm881, 0.0
          %1004 = vst.msk [vmem:[#allocation4 + $0x1d0] sm:$0xff] %vm881, 0.0
          %1005 = vst.msk [vmem:[#allocation4 + $0x1d8] sm:$0xff] %vm881, 0.0
          %1006 = vst.msk [vmem:[#allocation4 + $0x1e0] sm:$0xff] %vm881, 0.0
          %1007 = vst.msk [vmem:[#allocation4 + $0x1e8] sm:$0xff] %vm881, 0.0
          %1008 = vst.msk [vmem:[#allocation4 + $0x1f0] sm:$0xff] %vm881, 0.0
          %1009 = vst.msk [vmem:[#allocation4 + $0x1f8] sm:$0xff] %vm881, 0.0
        $region56: #{tpu_custom_call.1} parent=39 // pred_fallthru
          _
        %v1010 = vld [vmem:[%s286] sm:$0xff]
        %v1011 = vld [vmem:[%s286 + $0x8] sm:$0xff]
        %v1012 = vld [vmem:[%s286 + $0x10] sm:$0xff]
        %v1013 = vld [vmem:[%s286 + $0x18] sm:$0xff]
        %v1014 = vld [vmem:[%s286 + $0x20] sm:$0xff]
        %v1015 = vld [vmem:[%s286 + $0x28] sm:$0xff]
        %v1016 = vld [vmem:[%s286 + $0x30] sm:$0xff]
        %v1017 = vld [vmem:[%s286 + $0x38] sm:$0xff]
        %v1018 = vld [vmem:[%s286 + $0x40] sm:$0xff]
        %v1019 = vld [vmem:[%s286 + $0x48] sm:$0xff]
        %v1020 = vld [vmem:[%s286 + $0x50] sm:$0xff]
        %v1021 = vld [vmem:[%s286 + $0x58] sm:$0xff]
        %v1022 = vld [vmem:[%s286 + $0x60] sm:$0xff]
        %v1023 = vld [vmem:[%s286 + $0x68] sm:$0xff]
        %v1024 = vld [vmem:[%s286 + $0x70] sm:$0xff]
        %v1025 = vld [vmem:[%s286 + $0x78] sm:$0xff]
        %v1026 = vld [vmem:[%s286 + $0x80] sm:$0xff]
        %v1027 = vld [vmem:[%s286 + $0x88] sm:$0xff]
        %v1028 = vld [vmem:[%s286 + $0x90] sm:$0xff]
        %v1029 = vld [vmem:[%s286 + $0x98] sm:$0xff]
        %v1030 = vld [vmem:[%s286 + $0xa0] sm:$0xff]
        %v1031 = vld [vmem:[%s286 + $0xa8] sm:$0xff]
        %v1032 = vld [vmem:[%s286 + $0xb0] sm:$0xff]
        %v1033 = vld [vmem:[%s286 + $0xb8] sm:$0xff]
        %v1034 = vld [vmem:[%s286 + $0xc0] sm:$0xff]
        %v1035 = vld [vmem:[%s286 + $0xc8] sm:$0xff]
        %v1036 = vld [vmem:[%s286 + $0xd0] sm:$0xff]
        %v1037 = vld [vmem:[%s286 + $0xd8] sm:$0xff]
        %v1038 = vld [vmem:[%s286 + $0xe0] sm:$0xff]
        %v1039 = vld [vmem:[%s286 + $0xe8] sm:$0xff]
        %v1040 = vld [vmem:[%s286 + $0xf0] sm:$0xff]
        %v1041 = vld [vmem:[%s286 + $0xf8] sm:$0xff]
        // Predicated region
        $region57: #{tpu_custom_call.1} parent=39 // pred_check
          %p1042 = pneg %p323
        $region58: #{tpu_custom_call.1} parent=39 // pred_check_branch
          %1044 = sbr.rel (%p1042) target = $region60
        $region59: #{tpu_custom_call.1} parent=39 // pred_region
          %v1045 = vld [vmem:[#allocation2] sm:$0xff]
          %v1046 = vld [vmem:[#allocation2 + $0x20] sm:$0xff]
          %v1047 = vld [vmem:[#allocation2 + $0x40] sm:$0xff]
          %v1048 = vld [vmem:[#allocation2 + $0x60] sm:$0xff]
          %v1049 = vld [vmem:[#allocation2 + $0x80] sm:$0xff]
          %v1050 = vld [vmem:[#allocation2 + $0xa0] sm:$0xff]
          %v1051 = vld [vmem:[#allocation2 + $0xc0] sm:$0xff]
          %v1052 = vld [vmem:[#allocation2 + $0xe0] sm:$0xff]
          %v1053 = vld [vmem:[#allocation2 + $0x100] sm:$0xff]
          %v1054 = vld [vmem:[#allocation2 + $0x120] sm:$0xff]
          %v1055 = vld [vmem:[#allocation2 + $0x140] sm:$0xff]
          %v1056 = vld [vmem:[#allocation2 + $0x160] sm:$0xff]
          %v1057 = vld [vmem:[#allocation2 + $0x180] sm:$0xff]
          %v1058 = vld [vmem:[#allocation2 + $0x1a0] sm:$0xff]
          %v1059 = vld [vmem:[#allocation2 + $0x1c0] sm:$0xff]
          %v1060 = vld [vmem:[#allocation2 + $0x1e0] sm:$0xff]
          %1061 = vmatprep.subr.mxu0 0.0
          %1062 = vmatpush1.xpose.msra.mxu0 %v1010
          %1063 = vmatprep.subr.mxu0 0.0
          %1064 = vmatpush1.xpose.msra.mxu0 %v1011
          %1065 = vmatprep.subr.mxu0 0.0
          %1066 = vmatpush1.xpose.msra.mxu0 %v1012
          %1067 = vmatprep.subr.mxu0 0.0
          %1068 = vmatpush1.xpose.msra.mxu0 %v1013
          %1069 = vmatprep.subr.mxu0 0.0
          %1070 = vmatpush1.xpose.msra.mxu0 %v1014
          %1071 = vmatprep.subr.mxu0 0.0
          %1072 = vmatpush1.xpose.msra.mxu0 %v1015
          %1073 = vmatprep.subr.mxu0 0.0
          %1074 = vmatpush1.xpose.msra.mxu0 %v1016
          %1075 = vmatprep.subr.mxu0 0.0
          %1076 = vmatpush1.xpose.msra.mxu0 %v1017
          %1077 = vmatprep.subr.mxu0 0.0
          %1078 = vmatpush1.xpose.msra.mxu0 %v1018
          %1079 = vmatprep.subr.mxu0 0.0
          %1080 = vmatpush1.xpose.msra.mxu0 %v1019
          %1081 = vmatprep.subr.mxu0 0.0
          %1082 = vmatpush1.xpose.msra.mxu0 %v1020
          %1083 = vmatprep.subr.mxu0 0.0
          %1084 = vmatpush1.xpose.msra.mxu0 %v1021
          %1085 = vmatprep.subr.mxu0 0.0
          %1086 = vmatpush1.xpose.msra.mxu0 %v1022
          %1087 = vmatprep.subr.mxu0 0.0
          %1088 = vmatpush1.xpose.msra.mxu0 %v1023
          %1089 = vmatprep.subr.mxu0 0.0
          %1090 = vmatpush1.xpose.msra.mxu0 %v1024
          %1091 = vmatprep.subr.mxu0 0.0
          %1092 = vmatpush1.xpose.msra.mxu0 %v1025
          %1093 = vmatprep.subr.mxu0 0.0
          %1094 = vmatpush1.xpose.msra.mxu0 %v1026
          %1095 = vmatprep.subr.mxu0 0.0
          %1096 = vmatpush1.xpose.msra.mxu0 %v1027
          %1097 = vmatprep.subr.mxu0 0.0
          %1098 = vmatpush1.xpose.msra.mxu0 %v1028
          %1099 = vmatprep.subr.mxu0 0.0
          %1100 = vmatpush1.xpose.msra.mxu0 %v1029
          %1101 = vmatprep.subr.mxu0 0.0
          %1102 = vmatpush1.xpose.msra.mxu0 %v1030
          %1103 = vmatprep.subr.mxu0 0.0
          %1104 = vmatpush1.xpose.msra.mxu0 %v1031
          %1105 = vmatprep.subr.mxu0 0.0
          %1106 = vmatpush1.xpose.msra.mxu0 %v1032
          %1107 = vmatprep.subr.mxu0 0.0
          %1108 = vmatpush1.xpose.msra.mxu0 %v1033
          %1109 = vmatprep.subr.mxu0 0.0
          %1110 = vmatpush1.xpose.msra.mxu0 %v1034
          %1111 = vmatprep.subr.mxu0 0.0
          %1112 = vmatpush1.xpose.msra.mxu0 %v1035
          %1113 = vmatprep.subr.mxu0 0.0
          %1114 = vmatpush1.xpose.msra.mxu0 %v1036
          %1115 = vmatprep.subr.mxu0 0.0
          %1116 = vmatpush1.xpose.msra.mxu0 %v1037
          %1117 = vmatprep.subr.mxu0 0.0
          %1118 = vmatpush1.xpose.msra.mxu0 %v1038
          %1119 = vmatprep.subr.mxu0 0.0
          %1120 = vmatpush1.xpose.msra.mxu0 %v1039
          %1121 = vmatprep.subr.mxu0 0.0
          %1122 = vmatpush1.xpose.msra.mxu0 %v1040
          %1123 = vmatprep.subr.mxu0 0.0
          %1124 = vmatpush1.xpose.msra.mxu0 %v1041
          %1125 = vmatprep.mubr.f32.mxu0 0.0
          %1126 = vmatmul.mubr.f32.gmra.mrb[0].mxu0 %v1045
          %v1127 = vpop.f32.mrb[0].mxu0
          %v1128 = vadd.f32 0.0, %v1127
          %v1129 = vpop.f32.mrb[0].mxu0
          %v1130 = vadd.f32 0.0, %v1129
          %1131 = vmatprep.mubr.f32.mxu0 0.0
          %1132 = vmatmul.mubr.f32.gmra.mrb[0].mxu0 %v1046
          %v1133 = vpop.f32.mrb[0].mxu0
          %v1134 = vadd.f32 0.0, %v1133
          %v1135 = vpop.f32.mrb[0].mxu0
          %v1136 = vadd.f32 0.0, %v1135
          %1137 = vmatprep.mubr.f32.mxu0 0.0
          %1138 = vmatmul.mubr.f32.gmra.mrb[0].mxu0 %v1047
          %v1139 = vpop.f32.mrb[0].mxu0
          %v1140 = vadd.f32 0.0, %v1139
          %v1141 = vpop.f32.mrb[0].mxu0
          %v1142 = vadd.f32 0.0, %v1141
          %1143 = vmatprep.mubr.f32.mxu0 0.0
          %1144 = vmatmul.mubr.f32.gmra.mrb[0].mxu0 %v1048
          %v1145 = vpop.f32.mrb[0].mxu0
          %v1146 = vadd.f32 0.0, %v1145
          %v1147 = vpop.f32.mrb[0].mxu0
          %v1148 = vadd.f32 0.0, %v1147
          %1149 = vmatprep.mubr.f32.mxu0 0.0
          %1150 = vmatmul.mubr.f32.gmra.mrb[0].mxu0 %v1049
          %v1151 = vpop.f32.mrb[0].mxu0
          %v1152 = vadd.f32 0.0, %v1151
          %v1153 = vpop.f32.mrb[0].mxu0
          %v1154 = vadd.f32 0.0, %v1153
          %1155 = vmatprep.mubr.f32.mxu0 0.0
          %1156 = vmatmul.mubr.f32.gmra.mrb[0].mxu0 %v1050
          %v1157 = vpop.f32.mrb[0].mxu0
          %v1158 = vadd.f32 0.0, %v1157
          %v1159 = vpop.f32.mrb[0].mxu0
          %v1160 = vadd.f32 0.0, %v1159
          %1161 = vmatprep.mubr.f32.mxu0 0.0
          %1162 = vmatmul.mubr.f32.gmra.mrb[0].mxu0 %v1051
          %v1163 = vpop.f32.mrb[0].mxu0
          %v1164 = vadd.f32 0.0, %v1163
          %v1165 = vpop.f32.mrb[0].mxu0
          %v1166 = vadd.f32 0.0, %v1165
          %1167 = vmatprep.mubr.f32.mxu0 0.0
          %1168 = vmatmul.mubr.f32.gmra.mrb[0].mxu0 %v1052
          %v1169 = vpop.f32.mrb[0].mxu0
          %v1170 = vadd.f32 0.0, %v1169
          %v1171 = vpop.f32.mrb[0].mxu0
          %v1172 = vadd.f32 0.0, %v1171
          %1173 = vmatprep.mubr.f32.mxu0 0.0
          %1174 = vmatmul.mubr.f32.gmra.mrb[0].mxu0 %v1053
          %v1175 = vpop.f32.mrb[0].mxu0
          %v1176 = vadd.f32 0.0, %v1175
          %v1177 = vpop.f32.mrb[0].mxu0
          %v1178 = vadd.f32 0.0, %v1177
          %1179 = vmatprep.mubr.f32.mxu0 0.0
          %1180 = vmatmul.mubr.f32.gmra.mrb[0].mxu0 %v1054
          %v1181 = vpop.f32.mrb[0].mxu0
          %v1182 = vadd.f32 0.0, %v1181
          %v1183 = vpop.f32.mrb[0].mxu0
          %v1184 = vadd.f32 0.0, %v1183
          %1185 = vmatprep.mubr.f32.mxu0 0.0
          %1186 = vmatmul.mubr.f32.gmra.mrb[0].mxu0 %v1055
          %v1187 = vpop.f32.mrb[0].mxu0
          %v1188 = vadd.f32 0.0, %v1187
          %v1189 = vpop.f32.mrb[0].mxu0
          %v1190 = vadd.f32 0.0, %v1189
          %1191 = vmatprep.mubr.f32.mxu0 0.0
          %1192 = vmatmul.mubr.f32.gmra.mrb[0].mxu0 %v1056
          %v1193 = vpop.f32.mrb[0].mxu0
          %v1194 = vadd.f32 0.0, %v1193
          %v1195 = vpop.f32.mrb[0].mxu0
          %v1196 = vadd.f32 0.0, %v1195
          %1197 = vmatprep.mubr.f32.mxu0 0.0
          %1198 = vmatmul.mubr.f32.gmra.mrb[0].mxu0 %v1057
          %v1199 = vpop.f32.mrb[0].mxu0
          %v1200 = vadd.f32 0.0, %v1199
          %v1201 = vpop.f32.mrb[0].mxu0
          %v1202 = vadd.f32 0.0, %v1201
          %1203 = vmatprep.mubr.f32.mxu0 0.0
          %1204 = vmatmul.mubr.f32.gmra.mrb[0].mxu0 %v1058
          %v1205 = vpop.f32.mrb[0].mxu0
          %v1206 = vadd.f32 0.0, %v1205
          %v1207 = vpop.f32.mrb[0].mxu0
          %v1208 = vadd.f32 0.0, %v1207
          %1209 = vmatprep.mubr.f32.mxu0 0.0
          %1210 = vmatmul.mubr.f32.gmra.mrb[0].mxu0 %v1059
          %v1211 = vpop.f32.mrb[0].mxu0
          %v1212 = vadd.f32 0.0, %v1211
          %v1213 = vpop.f32.mrb[0].mxu0
          %v1214 = vadd.f32 0.0, %v1213
          %1215 = vmatprep.mubr.f32.mxu0 0.0
          %1216 = vmatmul.mubr.f32.gmra.mrb[0].mxu0 %v1060
          %v1217 = vpop.f32.mrb[0].mxu0
          %v1218 = vadd.f32 0.0, %v1217
          %v1219 = vpop.f32.mrb[0].mxu0
          %v1220 = vadd.f32 0.0, %v1219
          %1221 = vdwg.mxu0
          %v1222 = vld [vmem:[#allocation3] sm:$0xff]
          %v1223 = vld [vmem:[#allocation3 + $0x8] sm:$0xff]
          %v1224 = vld [vmem:[#allocation3 + $0x10] sm:$0xff]
          %v1225 = vld [vmem:[#allocation3 + $0x18] sm:$0xff]
          %v1226 = vld [vmem:[#allocation3 + $0x20] sm:$0xff]
          %v1227 = vld [vmem:[#allocation3 + $0x28] sm:$0xff]
          %v1228 = vld [vmem:[#allocation3 + $0x30] sm:$0xff]
          %v1229 = vld [vmem:[#allocation3 + $0x38] sm:$0xff]
          %v1230 = vld [vmem:[#allocation3 + $0x40] sm:$0xff]
          %v1231 = vld [vmem:[#allocation3 + $0x48] sm:$0xff]
          %v1232 = vld [vmem:[#allocation3 + $0x50] sm:$0xff]
          %v1233 = vld [vmem:[#allocation3 + $0x58] sm:$0xff]
          %v1234 = vld [vmem:[#allocation3 + $0x60] sm:$0xff]
          %v1235 = vld [vmem:[#allocation3 + $0x68] sm:$0xff]
          %v1236 = vld [vmem:[#allocation3 + $0x70] sm:$0xff]
          %v1237 = vld [vmem:[#allocation3 + $0x78] sm:$0xff]
          %v1238 = vmax.f32 %v1128, %v1130
          %1239 = vmax.xlane.f32.xlu0 %v1238
          %v1240 = vpop.xlane.xlu0 %1239
          %v1241 = vmax.f32 %v1134, %v1136
          %1242 = vmax.xlane.f32.xlu0 %v1241
          %v1243 = vpop.xlane.xlu0 %1242
          %v1244 = vmax.f32 %v1140, %v1142
          %1245 = vmax.xlane.f32.xlu0 %v1244
          %v1246 = vpop.xlane.xlu0 %1245
          %v1247 = vmax.f32 %v1146, %v1148
          %1248 = vmax.xlane.f32.xlu0 %v1247
          %v1249 = vpop.xlane.xlu0 %1248
          %v1250 = vmax.f32 %v1152, %v1154
          %1251 = vmax.xlane.f32.xlu0 %v1250
          %v1252 = vpop.xlane.xlu0 %1251
          %v1253 = vmax.f32 %v1158, %v1160
          %1254 = vmax.xlane.f32.xlu0 %v1253
          %v1255 = vpop.xlane.xlu0 %1254
          %v1256 = vmax.f32 %v1164, %v1166
          %1257 = vmax.xlane.f32.xlu0 %v1256
          %v1258 = vpop.xlane.xlu0 %1257
          %v1259 = vmax.f32 %v1170, %v1172
          %1260 = vmax.xlane.f32.xlu0 %v1259
          %v1261 = vpop.xlane.xlu0 %1260
          %v1262 = vmax.f32 %v1176, %v1178
          %1263 = vmax.xlane.f32.xlu0 %v1262
          %v1264 = vpop.xlane.xlu0 %1263
          %v1265 = vmax.f32 %v1182, %v1184
          %1266 = vmax.xlane.f32.xlu0 %v1265
          %v1267 = vpop.xlane.xlu0 %1266
          %v1268 = vmax.f32 %v1188, %v1190
          %1269 = vmax.xlane.f32.xlu0 %v1268
          %v1270 = vpop.xlane.xlu0 %1269
          %v1271 = vmax.f32 %v1194, %v1196
          %1272 = vmax.xlane.f32.xlu0 %v1271
          %v1273 = vpop.xlane.xlu0 %1272
          %v1274 = vmax.f32 %v1200, %v1202
          %1275 = vmax.xlane.f32.xlu0 %v1274
          %v1276 = vpop.xlane.xlu0 %1275
          %v1277 = vmax.f32 %v1206, %v1208
          %1278 = vmax.xlane.f32.xlu0 %v1277
          %v1279 = vpop.xlane.xlu0 %1278
          %v1280 = vmax.f32 %v1212, %v1214
          %1281 = vmax.xlane.f32.xlu0 %v1280
          %v1282 = vpop.xlane.xlu0 %1281
          %v1283 = vmax.f32 %v1218, %v1220
          %1284 = vmax.xlane.f32.xlu0 %v1283
          %v1285 = vpop.xlane.xlu0 %1284
          %v1286 = vmax.f32 %v1222, %v1240
          %v1287 = vmax.f32 %v1223, %v1243
          %v1288 = vmax.f32 %v1224, %v1246
          %v1289 = vmax.f32 %v1225, %v1249
          %v1290 = vmax.f32 %v1226, %v1252
          %v1291 = vmax.f32 %v1227, %v1255
          %v1292 = vmax.f32 %v1228, %v1258
          %v1293 = vmax.f32 %v1229, %v1261
          %v1294 = vmax.f32 %v1230, %v1264
          %v1295 = vmax.f32 %v1231, %v1267
          %v1296 = vmax.f32 %v1232, %v1270
          %v1297 = vmax.f32 %v1233, %v1273
          %v1298 = vmax.f32 %v1234, %v1276
          %v1299 = vmax.f32 %v1235, %v1279
          %v1300 = vmax.f32 %v1236, %v1282
          %v1301 = vmax.f32 %v1237, %v1285
          %1303 = vset.pattern.permute.xlu0 0
          %1304 = vperm.xlu0 %1303, %v1286
          %v1305 = vpop.permute.xlu0 %1304
          %1308 = vset.pattern.permute.xlu0 0
          %1309 = vperm.xlu0 %1308, %v1287
          %v1310 = vpop.permute.xlu0 %1309
          %1313 = vset.pattern.permute.xlu0 0
          %1314 = vperm.xlu0 %1313, %v1288
          %v1315 = vpop.permute.xlu0 %1314
          %1318 = vset.pattern.permute.xlu0 0
          %1319 = vperm.xlu0 %1318, %v1289
          %v1320 = vpop.permute.xlu0 %1319
          %1323 = vset.pattern.permute.xlu0 0
          %1324 = vperm.xlu0 %1323, %v1290
          %v1325 = vpop.permute.xlu0 %1324
          %1328 = vset.pattern.permute.xlu0 0
          %1329 = vperm.xlu0 %1328, %v1291
          %v1330 = vpop.permute.xlu0 %1329
          %1333 = vset.pattern.permute.xlu0 0
          %1334 = vperm.xlu0 %1333, %v1292
          %v1335 = vpop.permute.xlu0 %1334
          %1338 = vset.pattern.permute.xlu0 0
          %1339 = vperm.xlu0 %1338, %v1293
          %v1340 = vpop.permute.xlu0 %1339
          %1343 = vset.pattern.permute.xlu0 0
          %1344 = vperm.xlu0 %1343, %v1294
          %v1345 = vpop.permute.xlu0 %1344
          %1348 = vset.pattern.permute.xlu0 0
          %1349 = vperm.xlu0 %1348, %v1295
          %v1350 = vpop.permute.xlu0 %1349
          %1353 = vset.pattern.permute.xlu0 0
          %1354 = vperm.xlu0 %1353, %v1296
          %v1355 = vpop.permute.xlu0 %1354
          %1358 = vset.pattern.permute.xlu0 0
          %1359 = vperm.xlu0 %1358, %v1297
          %v1360 = vpop.permute.xlu0 %1359
          %1363 = vset.pattern.permute.xlu0 0
          %1364 = vperm.xlu0 %1363, %v1298
          %v1365 = vpop.permute.xlu0 %1364
          %1368 = vset.pattern.permute.xlu0 0
          %1369 = vperm.xlu0 %1368, %v1299
          %v1370 = vpop.permute.xlu0 %1369
          %1373 = vset.pattern.permute.xlu0 0
          %1374 = vperm.xlu0 %1373, %v1300
          %v1375 = vpop.permute.xlu0 %1374
          %1378 = vset.pattern.permute.xlu0 0
          %1379 = vperm.xlu0 %1378, %v1301
          %v1380 = vpop.permute.xlu0 %1379
          %v1382 = vsub.f32 %v1128, %v1305
          %v1383 = vsub.f32 %v1130, %v1305
          %v1384 = vsub.f32 %v1134, %v1310
          %v1385 = vsub.f32 %v1136, %v1310
          %v1386 = vsub.f32 %v1140, %v1315
          %v1387 = vsub.f32 %v1142, %v1315
          %v1388 = vsub.f32 %v1146, %v1320
          %v1389 = vsub.f32 %v1148, %v1320
          %v1390 = vsub.f32 %v1152, %v1325
          %v1391 = vsub.f32 %v1154, %v1325
          %v1392 = vsub.f32 %v1158, %v1330
          %v1393 = vsub.f32 %v1160, %v1330
          %v1394 = vsub.f32 %v1164, %v1335
          %v1395 = vsub.f32 %v1166, %v1335
          %v1396 = vsub.f32 %v1170, %v1340
          %v1397 = vsub.f32 %v1172, %v1340
          %v1398 = vsub.f32 %v1176, %v1345
          %v1399 = vsub.f32 %v1178, %v1345
          %v1400 = vsub.f32 %v1182, %v1350
          %v1401 = vsub.f32 %v1184, %v1350
          %v1402 = vsub.f32 %v1188, %v1355
          %v1403 = vsub.f32 %v1190, %v1355
          %v1404 = vsub.f32 %v1194, %v1360
          %v1405 = vsub.f32 %v1196, %v1360
          %v1406 = vsub.f32 %v1200, %v1365
          %v1407 = vsub.f32 %v1202, %v1365
          %v1408 = vsub.f32 %v1206, %v1370
          %v1409 = vsub.f32 %v1208, %v1370
          %v1410 = vsub.f32 %v1212, %v1375
          %v1411 = vsub.f32 %v1214, %v1375
          %v1412 = vsub.f32 %v1218, %v1380
          %v1413 = vsub.f32 %v1220, %v1380
          %v1414 = vmul.f32 %v1382, 1.442695
          %v1415 = vpow.pop %v1414
          %v1416 = vmul.f32 %v1383, 1.442695
          %v1417 = vpow.pop %v1416
          %v1418 = vmul.f32 %v1384, 1.442695
          %v1419 = vpow.pop %v1418
          %v1420 = vmul.f32 %v1385, 1.442695
          %v1421 = vpow.pop %v1420
          %v1422 = vmul.f32 %v1386, 1.442695
          %v1423 = vpow.pop %v1422
          %v1424 = vmul.f32 %v1387, 1.442695
          %v1425 = vpow.pop %v1424
          %v1426 = vmul.f32 %v1388, 1.442695
          %v1427 = vpow.pop %v1426
          %v1428 = vmul.f32 %v1389, 1.442695
          %v1429 = vpow.pop %v1428
          %v1430 = vmul.f32 %v1390, 1.442695
          %v1431 = vpow.pop %v1430
          %v1432 = vmul.f32 %v1391, 1.442695
          %v1433 = vpow.pop %v1432
          %v1434 = vmul.f32 %v1392, 1.442695
          %v1435 = vpow.pop %v1434
          %v1436 = vmul.f32 %v1393, 1.442695
          %v1437 = vpow.pop %v1436
          %v1438 = vmul.f32 %v1394, 1.442695
          %v1439 = vpow.pop %v1438
          %v1440 = vmul.f32 %v1395, 1.442695
          %v1441 = vpow.pop %v1440
          %v1442 = vmul.f32 %v1396, 1.442695
          %v1443 = vpow.pop %v1442
          %v1444 = vmul.f32 %v1397, 1.442695
          %v1445 = vpow.pop %v1444
          %v1446 = vmul.f32 %v1398, 1.442695
          %v1447 = vpow.pop %v1446
          %v1448 = vmul.f32 %v1399, 1.442695
          %v1449 = vpow.pop %v1448
          %v1450 = vmul.f32 %v1400, 1.442695
          %v1451 = vpow.pop %v1450
          %v1452 = vmul.f32 %v1401, 1.442695
          %v1453 = vpow.pop %v1452
          %v1454 = vmul.f32 %v1402, 1.442695
          %v1455 = vpow.pop %v1454
          %v1456 = vmul.f32 %v1403, 1.442695
          %v1457 = vpow.pop %v1456
          %v1458 = vmul.f32 %v1404, 1.442695
          %v1459 = vpow.pop %v1458
          %v1460 = vmul.f32 %v1405, 1.442695
          %v1461 = vpow.pop %v1460
          %v1462 = vmul.f32 %v1406, 1.442695
          %v1463 = vpow.pop %v1462
          %v1464 = vmul.f32 %v1407, 1.442695
          %v1465 = vpow.pop %v1464
          %v1466 = vmul.f32 %v1408, 1.442695
          %v1467 = vpow.pop %v1466
          %v1468 = vmul.f32 %v1409, 1.442695
          %v1469 = vpow.pop %v1468
          %v1470 = vmul.f32 %v1410, 1.442695
          %v1471 = vpow.pop %v1470
          %v1472 = vmul.f32 %v1411, 1.442695
          %v1473 = vpow.pop %v1472
          %v1474 = vmul.f32 %v1412, 1.442695
          %v1475 = vpow.pop %v1474
          %v1476 = vmul.f32 %v1413, 1.442695
          %v1477 = vpow.pop %v1476
          %v1478 = vld [vmem:[#allocation4] sm:$0xff]
          %v1479 = vld [vmem:[#allocation4 + $0x8] sm:$0xff]
          %v1480 = vld [vmem:[#allocation4 + $0x10] sm:$0xff]
          %v1481 = vld [vmem:[#allocation4 + $0x18] sm:$0xff]
          %v1482 = vld [vmem:[#allocation4 + $0x20] sm:$0xff]
          %v1483 = vld [vmem:[#allocation4 + $0x28] sm:$0xff]
          %v1484 = vld [vmem:[#allocation4 + $0x30] sm:$0xff]
          %v1485 = vld [vmem:[#allocation4 + $0x38] sm:$0xff]
          %v1486 = vld [vmem:[#allocation4 + $0x40] sm:$0xff]
          %v1487 = vld [vmem:[#allocation4 + $0x48] sm:$0xff]
          %v1488 = vld [vmem:[#allocation4 + $0x50] sm:$0xff]
          %v1489 = vld [vmem:[#allocation4 + $0x58] sm:$0xff]
          %v1490 = vld [vmem:[#allocation4 + $0x60] sm:$0xff]
          %v1491 = vld [vmem:[#allocation4 + $0x68] sm:$0xff]
          %v1492 = vld [vmem:[#allocation4 + $0x70] sm:$0xff]
          %v1493 = vld [vmem:[#allocation4 + $0x78] sm:$0xff]
          %v1494 = vsub.f32 %v1222, %v1286
          %v1495 = vsub.f32 %v1223, %v1287
          %v1496 = vsub.f32 %v1224, %v1288
          %v1497 = vsub.f32 %v1225, %v1289
          %v1498 = vsub.f32 %v1226, %v1290
          %v1499 = vsub.f32 %v1227, %v1291
          %v1500 = vsub.f32 %v1228, %v1292
          %v1501 = vsub.f32 %v1229, %v1293
          %v1502 = vsub.f32 %v1230, %v1294
          %v1503 = vsub.f32 %v1231, %v1295
          %v1504 = vsub.f32 %v1232, %v1296
          %v1505 = vsub.f32 %v1233, %v1297
          %v1506 = vsub.f32 %v1234, %v1298
          %v1507 = vsub.f32 %v1235, %v1299
          %v1508 = vsub.f32 %v1236, %v1300
          %v1509 = vsub.f32 %v1237, %v1301
          %v1510 = vmul.f32 %v1494, 1.442695
          %v1511 = vpow.pop %v1510
          %v1512 = vmul.f32 %v1495, 1.442695
          %v1513 = vpow.pop %v1512
          %v1514 = vmul.f32 %v1496, 1.442695
          %v1515 = vpow.pop %v1514
          %v1516 = vmul.f32 %v1497, 1.442695
          %v1517 = vpow.pop %v1516
          %v1518 = vmul.f32 %v1498, 1.442695
          %v1519 = vpow.pop %v1518
          %v1520 = vmul.f32 %v1499, 1.442695
          %v1521 = vpow.pop %v1520
          %v1522 = vmul.f32 %v1500, 1.442695
          %v1523 = vpow.pop %v1522
          %v1524 = vmul.f32 %v1501, 1.442695
          %v1525 = vpow.pop %v1524
          %v1526 = vmul.f32 %v1502, 1.442695
          %v1527 = vpow.pop %v1526
          %v1528 = vmul.f32 %v1503, 1.442695
          %v1529 = vpow.pop %v1528
          %v1530 = vmul.f32 %v1504, 1.442695
          %v1531 = vpow.pop %v1530
          %v1532 = vmul.f32 %v1505, 1.442695
          %v1533 = vpow.pop %v1532
          %v1534 = vmul.f32 %v1506, 1.442695
          %v1535 = vpow.pop %v1534
          %v1536 = vmul.f32 %v1507, 1.442695
          %v1537 = vpow.pop %v1536
          %v1538 = vmul.f32 %v1508, 1.442695
          %v1539 = vpow.pop %v1538
          %v1540 = vmul.f32 %v1509, 1.442695
          %v1541 = vpow.pop %v1540
          %v1542 = vmul.f32 %v1478, %v1511
          %v1543 = vmul.f32 %v1479, %v1513
          %v1544 = vmul.f32 %v1480, %v1515
          %v1545 = vmul.f32 %v1481, %v1517
          %v1546 = vmul.f32 %v1482, %v1519
          %v1547 = vmul.f32 %v1483, %v1521
          %v1548 = vmul.f32 %v1484, %v1523
          %v1549 = vmul.f32 %v1485, %v1525
          %v1550 = vmul.f32 %v1486, %v1527
          %v1551 = vmul.f32 %v1487, %v1529
          %v1552 = vmul.f32 %v1488, %v1531
          %v1553 = vmul.f32 %v1489, %v1533
          %v1554 = vmul.f32 %v1490, %v1535
          %v1555 = vmul.f32 %v1491, %v1537
          %v1556 = vmul.f32 %v1492, %v1539
          %v1557 = vmul.f32 %v1493, %v1541
          %v1558 = vadd.f32 %v1415, %v1417
          %1559 = vadd.xlane.f32.xlu0 %v1558
          %v1560 = vpop.xlane.xlu0 %1559
          %v1561 = vadd.f32 %v1419, %v1421
          %1562 = vadd.xlane.f32.xlu0 %v1561
          %v1563 = vpop.xlane.xlu0 %1562
          %v1564 = vadd.f32 %v1423, %v1425
          %1565 = vadd.xlane.f32.xlu0 %v1564
          %v1566 = vpop.xlane.xlu0 %1565
          %v1567 = vadd.f32 %v1427, %v1429
          %1568 = vadd.xlane.f32.xlu0 %v1567
          %v1569 = vpop.xlane.xlu0 %1568
          %v1570 = vadd.f32 %v1431, %v1433
          %1571 = vadd.xlane.f32.xlu0 %v1570
          %v1572 = vpop.xlane.xlu0 %1571
          %v1573 = vadd.f32 %v1435, %v1437
          %1574 = vadd.xlane.f32.xlu0 %v1573
          %v1575 = vpop.xlane.xlu0 %1574
          %v1576 = vadd.f32 %v1439, %v1441
          %1577 = vadd.xlane.f32.xlu0 %v1576
          %v1578 = vpop.xlane.xlu0 %1577
          %v1579 = vadd.f32 %v1443, %v1445
          %1580 = vadd.xlane.f32.xlu0 %v1579
          %v1581 = vpop.xlane.xlu0 %1580
          %v1582 = vadd.f32 %v1447, %v1449
          %1583 = vadd.xlane.f32.xlu0 %v1582
          %v1584 = vpop.xlane.xlu0 %1583
          %v1585 = vadd.f32 %v1451, %v1453
          %1586 = vadd.xlane.f32.xlu0 %v1585
          %v1587 = vpop.xlane.xlu0 %1586
          %v1588 = vadd.f32 %v1455, %v1457
          %1589 = vadd.xlane.f32.xlu0 %v1588
          %v1590 = vpop.xlane.xlu0 %1589
          %v1591 = vadd.f32 %v1459, %v1461
          %1592 = vadd.xlane.f32.xlu0 %v1591
          %v1593 = vpop.xlane.xlu0 %1592
          %v1594 = vadd.f32 %v1463, %v1465
          %1595 = vadd.xlane.f32.xlu0 %v1594
          %v1596 = vpop.xlane.xlu0 %1595
          %v1597 = vadd.f32 %v1467, %v1469
          %1598 = vadd.xlane.f32.xlu0 %v1597
          %v1599 = vpop.xlane.xlu0 %1598
          %v1600 = vadd.f32 %v1471, %v1473
          %1601 = vadd.xlane.f32.xlu0 %v1600
          %v1602 = vpop.xlane.xlu0 %1601
          %v1603 = vadd.f32 %v1475, %v1477
          %1604 = vadd.xlane.f32.xlu0 %v1603
          %v1605 = vpop.xlane.xlu0 %1604
          %v1606 = vadd.f32 %v1542, %v1560
          %v1607 = vadd.f32 %v1543, %v1563
          %v1608 = vadd.f32 %v1544, %v1566
          %v1609 = vadd.f32 %v1545, %v1569
          %v1610 = vadd.f32 %v1546, %v1572
          %v1611 = vadd.f32 %v1547, %v1575
          %v1612 = vadd.f32 %v1548, %v1578
          %v1613 = vadd.f32 %v1549, %v1581
          %v1614 = vadd.f32 %v1550, %v1584
          %v1615 = vadd.f32 %v1551, %v1587
          %v1616 = vadd.f32 %v1552, %v1590
          %v1617 = vadd.f32 %v1553, %v1593
          %v1618 = vadd.f32 %v1554, %v1596
          %v1619 = vadd.f32 %v1555, %v1599
          %v1620 = vadd.f32 %v1556, %v1602
          %v1621 = vadd.f32 %v1557, %v1605
          %vm1622 = vcmask 7168
          %1623 = vst.msk [vmem:[#allocation4] sm:$0xff] %vm1622, %v1606
          %1624 = vst.msk [vmem:[#allocation4 + $0x8] sm:$0xff] %vm1622, %v1607
          %1625 = vst.msk [vmem:[#allocation4 + $0x10] sm:$0xff] %vm1622, %v1608
          %1626 = vst.msk [vmem:[#allocation4 + $0x18] sm:$0xff] %vm1622, %v1609
          %1627 = vst.msk [vmem:[#allocation4 + $0x20] sm:$0xff] %vm1622, %v1610
          %1628 = vst.msk [vmem:[#allocation4 + $0x28] sm:$0xff] %vm1622, %v1611
          %1629 = vst.msk [vmem:[#allocation4 + $0x30] sm:$0xff] %vm1622, %v1612
          %1630 = vst.msk [vmem:[#allocation4 + $0x38] sm:$0xff] %vm1622, %v1613
          %1631 = vst.msk [vmem:[#allocation4 + $0x40] sm:$0xff] %vm1622, %v1614
          %1632 = vst.msk [vmem:[#allocation4 + $0x48] sm:$0xff] %vm1622, %v1615
          %1633 = vst.msk [vmem:[#allocation4 + $0x50] sm:$0xff] %vm1622, %v1616
          %1634 = vst.msk [vmem:[#allocation4 + $0x58] sm:$0xff] %vm1622, %v1617
          %1635 = vst.msk [vmem:[#allocation4 + $0x60] sm:$0xff] %vm1622, %v1618
          %1636 = vst.msk [vmem:[#allocation4 + $0x68] sm:$0xff] %vm1622, %v1619
          %1637 = vst.msk [vmem:[#allocation4 + $0x70] sm:$0xff] %vm1622, %v1620
          %1638 = vst.msk [vmem:[#allocation4 + $0x78] sm:$0xff] %vm1622, %v1621
          %1639 = vst.msk [vmem:[#allocation3] sm:$0xff] %vm1622, %v1286
          %1640 = vst.msk [vmem:[#allocation3 + $0x8] sm:$0xff] %vm1622, %v1287
          %1641 = vst.msk [vmem:[#allocation3 + $0x10] sm:$0xff] %vm1622, %v1288
          %1642 = vst.msk [vmem:[#allocation3 + $0x18] sm:$0xff] %vm1622, %v1289
          %1643 = vst.msk [vmem:[#allocation3 + $0x20] sm:$0xff] %vm1622, %v1290
          %1644 = vst.msk [vmem:[#allocation3 + $0x28] sm:$0xff] %vm1622, %v1291
          %1645 = vst.msk [vmem:[#allocation3 + $0x30] sm:$0xff] %vm1622, %v1292
          %1646 = vst.msk [vmem:[#allocation3 + $0x38] sm:$0xff] %vm1622, %v1293
          %1647 = vst.msk [vmem:[#allocation3 + $0x40] sm:$0xff] %vm1622, %v1294
          %1648 = vst.msk [vmem:[#allocation3 + $0x48] sm:$0xff] %vm1622, %v1295
          %1649 = vst.msk [vmem:[#allocation3 + $0x50] sm:$0xff] %vm1622, %v1296
          %1650 = vst.msk [vmem:[#allocation3 + $0x58] sm:$0xff] %vm1622, %v1297
          %1651 = vst.msk [vmem:[#allocation3 + $0x60] sm:$0xff] %vm1622, %v1298
          %1652 = vst.msk [vmem:[#allocation3 + $0x68] sm:$0xff] %vm1622, %v1299
          %1653 = vst.msk [vmem:[#allocation3 + $0x70] sm:$0xff] %vm1622, %v1300
          %1654 = vst.msk [vmem:[#allocation3 + $0x78] sm:$0xff] %vm1622, %v1301
          %v1655 = vld [vmem:[#allocation2 + $0x8] sm:$0xff]
          %v1656 = vld [vmem:[#allocation2 + $0x28] sm:$0xff]
          %v1657 = vld [vmem:[#allocation2 + $0x48] sm:$0xff]
          %v1658 = vld [vmem:[#allocation2 + $0x68] sm:$0xff]
          %v1659 = vld [vmem:[#allocation2 + $0x88] sm:$0xff]
          %v1660 = vld [vmem:[#allocation2 + $0xa8] sm:$0xff]
          %v1661 = vld [vmem:[#allocation2 + $0xc8] sm:$0xff]
          %v1662 = vld [vmem:[#allocation2 + $0xe8] sm:$0xff]
          %v1663 = vld [vmem:[#allocation2 + $0x108] sm:$0xff]
          %v1664 = vld [vmem:[#allocation2 + $0x128] sm:$0xff]
          %v1665 = vld [vmem:[#allocation2 + $0x148] sm:$0xff]
          %v1666 = vld [vmem:[#allocation2 + $0x168] sm:$0xff]
          %v1667 = vld [vmem:[#allocation2 + $0x188] sm:$0xff]
          %v1668 = vld [vmem:[#allocation2 + $0x1a8] sm:$0xff]
          %v1669 = vld [vmem:[#allocation2 + $0x1c8] sm:$0xff]
          %v1670 = vld [vmem:[#allocation2 + $0x1e8] sm:$0xff]
          %1671 = vmatprep.subr.mxu0 0.0
          %1672 = vmatpush1.xpose.msra.mxu0 %v1010
          %1673 = vmatprep.subr.mxu0 0.0
          %1674 = vmatpush1.xpose.msra.mxu0 %v1011
          %1675 = vmatprep.subr.mxu0 0.0
          %1676 = vmatpush1.xpose.msra.mxu0 %v1012
          %1677 = vmatprep.subr.mxu0 0.0
          %1678 = vmatpush1.xpose.msra.mxu0 %v1013
          %1679 = vmatprep.subr.mxu0 0.0
          %1680 = vmatpush1.xpose.msra.mxu0 %v1014
          %1681 = vmatprep.subr.mxu0 0.0
          %1682 = vmatpush1.xpose.msra.mxu0 %v1015
          %1683 = vmatprep.subr.mxu0 0.0
          %1684 = vmatpush1.xpose.msra.mxu0 %v1016
          %1685 = vmatprep.subr.mxu0 0.0
          %1686 = vmatpush1.xpose.msra.mxu0 %v1017
          %1687 = vmatprep.subr.mxu0 0.0
          %1688 = vmatpush1.xpose.msra.mxu0 %v1018
          %1689 = vmatprep.subr.mxu0 0.0
          %1690 = vmatpush1.xpose.msra.mxu0 %v1019
          %1691 = vmatprep.subr.mxu0 0.0
          %1692 = vmatpush1.xpose.msra.mxu0 %v1020
          %1693 = vmatprep.subr.mxu0 0.0
          %1694 = vmatpush1.xpose.msra.mxu0 %v1021
          %1695 = vmatprep.subr.mxu0 0.0
          %1696 = vmatpush1.xpose.msra.mxu0 %v1022
          %1697 = vmatprep.subr.mxu0 0.0
          %1698 = vmatpush1.xpose.msra.mxu0 %v1023
          %1699 = vmatprep.subr.mxu0 0.0
          %1700 = vmatpush1.xpose.msra.mxu0 %v1024
          %1701 = vmatprep.subr.mxu0 0.0
          %1702 = vmatpush1.xpose.msra.mxu0 %v1025
          %1703 = vmatprep.subr.mxu0 0.0
          %1704 = vmatpush1.xpose.msra.mxu0 %v1026
          %1705 = vmatprep.subr.mxu0 0.0
          %1706 = vmatpush1.xpose.msra.mxu0 %v1027
          %1707 = vmatprep.subr.mxu0 0.0
          %1708 = vmatpush1.xpose.msra.mxu0 %v1028
          %1709 = vmatprep.subr.mxu0 0.0
          %1710 = vmatpush1.xpose.msra.mxu0 %v1029
          %1711 = vmatprep.subr.mxu0 0.0
          %1712 = vmatpush1.xpose.msra.mxu0 %v1030
          %1713 = vmatprep.subr.mxu0 0.0
          %1714 = vmatpush1.xpose.msra.mxu0 %v1031
          %1715 = vmatprep.subr.mxu0 0.0
          %1716 = vmatpush1.xpose.msra.mxu0 %v1032
          %1717 = vmatprep.subr.mxu0 0.0
          %1718 = vmatpush1.xpose.msra.mxu0 %v1033
          %1719 = vmatprep.subr.mxu0 0.0
          %1720 = vmatpush1.xpose.msra.mxu0 %v1034
          %1721 = vmatprep.subr.mxu0 0.0
          %1722 = vmatpush1.xpose.msra.mxu0 %v1035
          %1723 = vmatprep.subr.mxu0 0.0
          %1724 = vmatpush1.xpose.msra.mxu0 %v1036
          %1725 = vmatprep.subr.mxu0 0.0
          %1726 = vmatpush1.xpose.msra.mxu0 %v1037
          %1727 = vmatprep.subr.mxu0 0.0
          %1728 = vmatpush1.xpose.msra.mxu0 %v1038
          %1729 = vmatprep.subr.mxu0 0.0
          %1730 = vmatpush1.xpose.msra.mxu0 %v1039
          %1731 = vmatprep.subr.mxu0 0.0
          %1732 = vmatpush1.xpose.msra.mxu0 %v1040
          %1733 = vmatprep.subr.mxu0 0.0
          %1734 = vmatpush1.xpose.msra.mxu0 %v1041
          %1735 = vmatprep.mubr.f32.mxu0 0.0
          %1736 = vmatmul.mubr.f32.gmra.mrb[0].mxu0 %v1655
          %v1737 = vpop.f32.mrb[0].mxu0
          %v1738 = vadd.f32 0.0, %v1737
          %v1739 = vpop.f32.mrb[0].mxu0
          %v1740 = vadd.f32 0.0, %v1739
          %1741 = vmatprep.mubr.f32.mxu0 0.0
          %1742 = vmatmul.mubr.f32.gmra.mrb[0].mxu0 %v1656
          %v1743 = vpop.f32.mrb[0].mxu0
          %v1744 = vadd.f32 0.0, %v1743
          %v1745 = vpop.f32.mrb[0].mxu0
          %v1746 = vadd.f32 0.0, %v1745
          %1747 = vmatprep.mubr.f32.mxu0 0.0
          %1748 = vmatmul.mubr.f32.gmra.mrb[0].mxu0 %v1657
          %v1749 = vpop.f32.mrb[0].mxu0
          %v1750 = vadd.f32 0.0, %v1749
          %v1751 = vpop.f32.mrb[0].mxu0
          %v1752 = vadd.f32 0.0, %v1751
          %1753 = vmatprep.mubr.f32.mxu0 0.0
          %1754 = vmatmul.mubr.f32.gmra.mrb[0].mxu0 %v1658
          %v1755 = vpop.f32.mrb[0].mxu0
          %v1756 = vadd.f32 0.0, %v1755
          %v1757 = vpop.f32.mrb[0].mxu0
          %v1758 = vadd.f32 0.0, %v1757
          %1759 = vmatprep.mubr.f32.mxu0 0.0
          %1760 = vmatmul.mubr.f32.gmra.mrb[0].mxu0 %v1659
          %v1761 = vpop.f32.mrb[0].mxu0
          %v1762 = vadd.f32 0.0, %v1761
          %v1763 = vpop.f32.mrb[0].mxu0
          %v1764 = vadd.f32 0.0, %v1763
          %1765 = vmatprep.mubr.f32.mxu0 0.0
          %1766 = vmatmul.mubr.f32.gmra.mrb[0].mxu0 %v1660
          %v1767 = vpop.f32.mrb[0].mxu0
          %v1768 = vadd.f32 0.0, %v1767
          %v1769 = vpop.f32.mrb[0].mxu0
          %v1770 = vadd.f32 0.0, %v1769
          %1771 = vmatprep.mubr.f32.mxu0 0.0
          %1772 = vmatmul.mubr.f32.gmra.mrb[0].mxu0 %v1661
          %v1773 = vpop.f32.mrb[0].mxu0
          %v1774 = vadd.f32 0.0, %v1773
          %v1775 = vpop.f32.mrb[0].mxu0
          %v1776 = vadd.f32 0.0, %v1775
          %1777 = vmatprep.mubr.f32.mxu0 0.0
          %1778 = vmatmul.mubr.f32.gmra.mrb[0].mxu0 %v1662
          %v1779 = vpop.f32.mrb[0].mxu0
          %v1780 = vadd.f32 0.0, %v1779
          %v1781 = vpop.f32.mrb[0].mxu0
          %v1782 = vadd.f32 0.0, %v1781
          %1783 = vmatprep.mubr.f32.mxu0 0.0
          %1784 = vmatmul.mubr.f32.gmra.mrb[0].mxu0 %v1663
          %v1785 = vpop.f32.mrb[0].mxu0
          %v1786 = vadd.f32 0.0, %v1785
          %v1787 = vpop.f32.mrb[0].mxu0
          %v1788 = vadd.f32 0.0, %v1787
          %1789 = vmatprep.mubr.f32.mxu0 0.0
          %1790 = vmatmul.mubr.f32.gmra.mrb[0].mxu0 %v1664
          %v1791 = vpop.f32.mrb[0].mxu0
          %v1792 = vadd.f32 0.0, %v1791
          %v1793 = vpop.f32.mrb[0].mxu0
          %v1794 = vadd.f32 0.0, %v1793
          %1795 = vmatprep.mubr.f32.mxu0 0.0
          %1796 = vmatmul.mubr.f32.gmra.mrb[0].mxu0 %v1665
          %v1797 = vpop.f32.mrb[0].mxu0
          %v1798 = vadd.f32 0.0, %v1797
          %v1799 = vpop.f32.mrb[0].mxu0
          %v1800 = vadd.f32 0.0, %v1799
          %1801 = vmatprep.mubr.f32.mxu0 0.0
          %1802 = vmatmul.mubr.f32.gmra.mrb[0].mxu0 %v1666
          %v1803 = vpop.f32.mrb[0].mxu0
          %v1804 = vadd.f32 0.0, %v1803
          %v1805 = vpop.f32.mrb[0].mxu0
          %v1806 = vadd.f32 0.0, %v1805
          %1807 = vmatprep.mubr.f32.mxu0 0.0
          %1808 = vmatmul.mubr.f32.gmra.mrb[0].mxu0 %v1667
          %v1809 = vpop.f32.mrb[0].mxu0
          %v1810 = vadd.f32 0.0, %v1809
          %v1811 = vpop.f32.mrb[0].mxu0
          %v1812 = vadd.f32 0.0, %v1811
          %1813 = vmatprep.mubr.f32.mxu0 0.0
          %1814 = vmatmul.mubr.f32.gmra.mrb[0].mxu0 %v1668
          %v1815 = vpop.f32.mrb[0].mxu0
          %v1816 = vadd.f32 0.0, %v1815
          %v1817 = vpop.f32.mrb[0].mxu0
          %v1818 = vadd.f32 0.0, %v1817
          %1819 = vmatprep.mubr.f32.mxu0 0.0
          %1820 = vmatmul.mubr.f32.gmra.mrb[0].mxu0 %v1669
          %v1821 = vpop.f32.mrb[0].mxu0
          %v1822 = vadd.f32 0.0, %v1821
          %v1823 = vpop.f32.mrb[0].mxu0
          %v1824 = vadd.f32 0.0, %v1823
          %1825 = vmatprep.mubr.f32.mxu0 0.0
          %1826 = vmatmul.mubr.f32.gmra.mrb[0].mxu0 %v1670
          %v1827 = vpop.f32.mrb[0].mxu0
          %v1828 = vadd.f32 0.0, %v1827
          %v1829 = vpop.f32.mrb[0].mxu0
          %v1830 = vadd.f32 0.0, %v1829
          %1831 = vdwg.mxu0
          %s1832 = scalar_lea.vmem [#allocation3], 128
          %v1833 = vld [vmem:[%s1832] sm:$0xff]
          %v1834 = vld [vmem:[%s1832 + $0x8] sm:$0xff]
          %v1835 = vld [vmem:[%s1832 + $0x10] sm:$0xff]
          %v1836 = vld [vmem:[%s1832 + $0x18] sm:$0xff]
          %v1837 = vld [vmem:[%s1832 + $0x20] sm:$0xff]
          %v1838 = vld [vmem:[%s1832 + $0x28] sm:$0xff]
          %v1839 = vld [vmem:[%s1832 + $0x30] sm:$0xff]
          %v1840 = vld [vmem:[%s1832 + $0x38] sm:$0xff]
          %v1841 = vld [vmem:[%s1832 + $0x40] sm:$0xff]
          %v1842 = vld [vmem:[%s1832 + $0x48] sm:$0xff]
          %v1843 = vld [vmem:[%s1832 + $0x50] sm:$0xff]
          %v1844 = vld [vmem:[%s1832 + $0x58] sm:$0xff]
          %v1845 = vld [vmem:[%s1832 + $0x60] sm:$0xff]
          %v1846 = vld [vmem:[%s1832 + $0x68] sm:$0xff]
          %v1847 = vld [vmem:[%s1832 + $0x70] sm:$0xff]
          %v1848 = vld [vmem:[%s1832 + $0x78] sm:$0xff]
          %v1849 = vmax.f32 %v1738, %v1740
          %1850 = vmax.xlane.f32.xlu0 %v1849
          %v1851 = vpop.xlane.xlu0 %1850
          %v1852 = vmax.f32 %v1744, %v1746
          %1853 = vmax.xlane.f32.xlu0 %v1852
          %v1854 = vpop.xlane.xlu0 %1853
          %v1855 = vmax.f32 %v1750, %v1752
          %1856 = vmax.xlane.f32.xlu0 %v1855
          %v1857 = vpop.xlane.xlu0 %1856
          %v1858 = vmax.f32 %v1756, %v1758
          %1859 = vmax.xlane.f32.xlu0 %v1858
          %v1860 = vpop.xlane.xlu0 %1859
          %v1861 = vmax.f32 %v1762, %v1764
          %1862 = vmax.xlane.f32.xlu0 %v1861
          %v1863 = vpop.xlane.xlu0 %1862
          %v1864 = vmax.f32 %v1768, %v1770
          %1865 = vmax.xlane.f32.xlu0 %v1864
          %v1866 = vpop.xlane.xlu0 %1865
          %v1867 = vmax.f32 %v1774, %v1776
          %1868 = vmax.xlane.f32.xlu0 %v1867
          %v1869 = vpop.xlane.xlu0 %1868
          %v1870 = vmax.f32 %v1780, %v1782
          %1871 = vmax.xlane.f32.xlu0 %v1870
          %v1872 = vpop.xlane.xlu0 %1871
          %v1873 = vmax.f32 %v1786, %v1788
          %1874 = vmax.xlane.f32.xlu0 %v1873
          %v1875 = vpop.xlane.xlu0 %1874
          %v1876 = vmax.f32 %v1792, %v1794
          %1877 = vmax.xlane.f32.xlu0 %v1876
          %v1878 = vpop.xlane.xlu0 %1877
          %v1879 = vmax.f32 %v1798, %v1800
          %1880 = vmax.xlane.f32.xlu0 %v1879
          %v1881 = vpop.xlane.xlu0 %1880
          %v1882 = vmax.f32 %v1804, %v1806
          %1883 = vmax.xlane.f32.xlu0 %v1882
          %v1884 = vpop.xlane.xlu0 %1883
          %v1885 = vmax.f32 %v1810, %v1812
          %1886 = vmax.xlane.f32.xlu0 %v1885
          %v1887 = vpop.xlane.xlu0 %1886
          %v1888 = vmax.f32 %v1816, %v1818
          %1889 = vmax.xlane.f32.xlu0 %v1888
          %v1890 = vpop.xlane.xlu0 %1889
          %v1891 = vmax.f32 %v1822, %v1824
          %1892 = vmax.xlane.f32.xlu0 %v1891
          %v1893 = vpop.xlane.xlu0 %1892
          %v1894 = vmax.f32 %v1828, %v1830
          %1895 = vmax.xlane.f32.xlu0 %v1894
          %v1896 = vpop.xlane.xlu0 %1895
          %v1897 = vmax.f32 %v1833, %v1851
          %v1898 = vmax.f32 %v1834, %v1854
          %v1899 = vmax.f32 %v1835, %v1857
          %v1900 = vmax.f32 %v1836, %v1860
          %v1901 = vmax.f32 %v1837, %v1863
          %v1902 = vmax.f32 %v1838, %v1866
          %v1903 = vmax.f32 %v1839, %v1869
          %v1904 = vmax.f32 %v1840, %v1872
          %v1905 = vmax.f32 %v1841, %v1875
          %v1906 = vmax.f32 %v1842, %v1878
          %v1907 = vmax.f32 %v1843, %v1881
          %v1908 = vmax.f32 %v1844, %v1884
          %v1909 = vmax.f32 %v1845, %v1887
          %v1910 = vmax.f32 %v1846, %v1890
          %v1911 = vmax.f32 %v1847, %v1893
          %v1912 = vmax.f32 %v1848, %v1896
          %1914 = vset.pattern.permute.xlu0 0
          %1915 = vperm.xlu0 %1914, %v1897
          %v1916 = vpop.permute.xlu0 %1915
          %1919 = vset.pattern.permute.xlu0 0
          %1920 = vperm.xlu0 %1919, %v1898
          %v1921 = vpop.permute.xlu0 %1920
          %1924 = vset.pattern.permute.xlu0 0
          %1925 = vperm.xlu0 %1924, %v1899
          %v1926 = vpop.permute.xlu0 %1925
          %1929 = vset.pattern.permute.xlu0 0
          %1930 = vperm.xlu0 %1929, %v1900
          %v1931 = vpop.permute.xlu0 %1930
          %1934 = vset.pattern.permute.xlu0 0
          %1935 = vperm.xlu0 %1934, %v1901
          %v1936 = vpop.permute.xlu0 %1935
          %1939 = vset.pattern.permute.xlu0 0
          %1940 = vperm.xlu0 %1939, %v1902
          %v1941 = vpop.permute.xlu0 %1940
          %1944 = vset.pattern.permute.xlu0 0
          %1945 = vperm.xlu0 %1944, %v1903
          %v1946 = vpop.permute.xlu0 %1945
          %1949 = vset.pattern.permute.xlu0 0
          %1950 = vperm.xlu0 %1949, %v1904
          %v1951 = vpop.permute.xlu0 %1950
          %1954 = vset.pattern.permute.xlu0 0
          %1955 = vperm.xlu0 %1954, %v1905
          %v1956 = vpop.permute.xlu0 %1955
          %1959 = vset.pattern.permute.xlu0 0
          %1960 = vperm.xlu0 %1959, %v1906
          %v1961 = vpop.permute.xlu0 %1960
          %1964 = vset.pattern.permute.xlu0 0
          %1965 = vperm.xlu0 %1964, %v1907
          %v1966 = vpop.permute.xlu0 %1965
          %1969 = vset.pattern.permute.xlu0 0
          %1970 = vperm.xlu0 %1969, %v1908
          %v1971 = vpop.permute.xlu0 %1970
          %1974 = vset.pattern.permute.xlu0 0
          %1975 = vperm.xlu0 %1974, %v1909
          %v1976 = vpop.permute.xlu0 %1975
          %1979 = vset.pattern.permute.xlu0 0
          %1980 = vperm.xlu0 %1979, %v1910
          %v1981 = vpop.permute.xlu0 %1980
          %1984 = vset.pattern.permute.xlu0 0
          %1985 = vperm.xlu0 %1984, %v1911
          %v1986 = vpop.permute.xlu0 %1985
          %1989 = vset.pattern.permute.xlu0 0
          %1990 = vperm.xlu0 %1989, %v1912
          %v1991 = vpop.permute.xlu0 %1990
          %v1993 = vsub.f32 %v1738, %v1916
          %v1994 = vsub.f32 %v1740, %v1916
          %v1995 = vsub.f32 %v1744, %v1921
          %v1996 = vsub.f32 %v1746, %v1921
          %v1997 = vsub.f32 %v1750, %v1926
          %v1998 = vsub.f32 %v1752, %v1926
          %v1999 = vsub.f32 %v1756, %v1931
          %v2000 = vsub.f32 %v1758, %v1931
          %v2001 = vsub.f32 %v1762, %v1936
          %v2002 = vsub.f32 %v1764, %v1936
          %v2003 = vsub.f32 %v1768, %v1941
          %v2004 = vsub.f32 %v1770, %v1941
          %v2005 = vsub.f32 %v1774, %v1946
          %v2006 = vsub.f32 %v1776, %v1946
          %v2007 = vsub.f32 %v1780, %v1951
          %v2008 = vsub.f32 %v1782, %v1951
          %v2009 = vsub.f32 %v1786, %v1956
          %v2010 = vsub.f32 %v1788, %v1956
          %v2011 = vsub.f32 %v1792, %v1961
          %v2012 = vsub.f32 %v1794, %v1961
          %v2013 = vsub.f32 %v1798, %v1966
          %v2014 = vsub.f32 %v1800, %v1966
          %v2015 = vsub.f32 %v1804, %v1971
          %v2016 = vsub.f32 %v1806, %v1971
          %v2017 = vsub.f32 %v1810, %v1976
          %v2018 = vsub.f32 %v1812, %v1976
          %v2019 = vsub.f32 %v1816, %v1981
          %v2020 = vsub.f32 %v1818, %v1981
          %v2021 = vsub.f32 %v1822, %v1986
          %v2022 = vsub.f32 %v1824, %v1986
          %v2023 = vsub.f32 %v1828, %v1991
          %v2024 = vsub.f32 %v1830, %v1991
          %v2025 = vmul.f32 %v1993, 1.442695
          %v2026 = vpow.pop %v2025
          %v2027 = vmul.f32 %v1994, 1.442695
          %v2028 = vpow.pop %v2027
          %v2029 = vmul.f32 %v1995, 1.442695
          %v2030 = vpow.pop %v2029
          %v2031 = vmul.f32 %v1996, 1.442695
          %v2032 = vpow.pop %v2031
          %v2033 = vmul.f32 %v1997, 1.442695
          %v2034 = vpow.pop %v2033
          %v2035 = vmul.f32 %v1998, 1.442695
          %v2036 = vpow.pop %v2035
          %v2037 = vmul.f32 %v1999, 1.442695
          %v2038 = vpow.pop %v2037
          %v2039 = vmul.f32 %v2000, 1.442695
          %v2040 = vpow.pop %v2039
          %v2041 = vmul.f32 %v2001, 1.442695
          %v2042 = vpow.pop %v2041
          %v2043 = vmul.f32 %v2002, 1.442695
          %v2044 = vpow.pop %v2043
          %v2045 = vmul.f32 %v2003, 1.442695
          %v2046 = vpow.pop %v2045
          %v2047 = vmul.f32 %v2004, 1.442695
          %v2048 = vpow.pop %v2047
          %v2049 = vmul.f32 %v2005, 1.442695
          %v2050 = vpow.pop %v2049
          %v2051 = vmul.f32 %v2006, 1.442695
          %v2052 = vpow.pop %v2051
          %v2053 = vmul.f32 %v2007, 1.442695
          %v2054 = vpow.pop %v2053
          %v2055 = vmul.f32 %v2008, 1.442695
          %v2056 = vpow.pop %v2055
          %v2057 = vmul.f32 %v2009, 1.442695
          %v2058 = vpow.pop %v2057
          %v2059 = vmul.f32 %v2010, 1.442695
          %v2060 = vpow.pop %v2059
          %v2061 = vmul.f32 %v2011, 1.442695
          %v2062 = vpow.pop %v2061
          %v2063 = vmul.f32 %v2012, 1.442695
          %v2064 = vpow.pop %v2063
          %v2065 = vmul.f32 %v2013, 1.442695
          %v2066 = vpow.pop %v2065
          %v2067 = vmul.f32 %v2014, 1.442695
          %v2068 = vpow.pop %v2067
          %v2069 = vmul.f32 %v2015, 1.442695
          %v2070 = vpow.pop %v2069
          %v2071 = vmul.f32 %v2016, 1.442695
          %v2072 = vpow.pop %v2071
          %v2073 = vmul.f32 %v2017, 1.442695
          %v2074 = vpow.pop %v2073
          %v2075 = vmul.f32 %v2018, 1.442695
          %v2076 = vpow.pop %v2075
          %v2077 = vmul.f32 %v2019, 1.442695
          %v2078 = vpow.pop %v2077
          %v2079 = vmul.f32 %v2020, 1.442695
          %v2080 = vpow.pop %v2079
          %v2081 = vmul.f32 %v2021, 1.442695
          %v2082 = vpow.pop %v2081
          %v2083 = vmul.f32 %v2022, 1.442695
          %v2084 = vpow.pop %v2083
          %v2085 = vmul.f32 %v2023, 1.442695
          %v2086 = vpow.pop %v2085
          %v2087 = vmul.f32 %v2024, 1.442695
          %v2088 = vpow.pop %v2087
          %s2089 = scalar_lea.vmem [#allocation4], 128
          %v2090 = vld [vmem:[%s2089] sm:$0xff]
          %v2091 = vld [vmem:[%s2089 + $0x8] sm:$0xff]
          %v2092 = vld [vmem:[%s2089 + $0x10] sm:$0xff]
          %v2093 = vld [vmem:[%s2089 + $0x18] sm:$0xff]
          %v2094 = vld [vmem:[%s2089 + $0x20] sm:$0xff]
          %v2095 = vld [vmem:[%s2089 + $0x28] sm:$0xff]
          %v2096 = vld [vmem:[%s2089 + $0x30] sm:$0xff]
          %v2097 = vld [vmem:[%s2089 + $0x38] sm:$0xff]
          %v2098 = vld [vmem:[%s2089 + $0x40] sm:$0xff]
          %v2099 = vld [vmem:[%s2089 + $0x48] sm:$0xff]
          %v2100 = vld [vmem:[%s2089 + $0x50] sm:$0xff]
          %v2101 = vld [vmem:[%s2089 + $0x58] sm:$0xff]
          %v2102 = vld [vmem:[%s2089 + $0x60] sm:$0xff]
          %v2103 = vld [vmem:[%s2089 + $0x68] sm:$0xff]
          %v2104 = vld [vmem:[%s2089 + $0x70] sm:$0xff]
          %v2105 = vld [vmem:[%s2089 + $0x78] sm:$0xff]
          %v2106 = vsub.f32 %v1833, %v1897
          %v2107 = vsub.f32 %v1834, %v1898
          %v2108 = vsub.f32 %v1835, %v1899
          %v2109 = vsub.f32 %v1836, %v1900
          %v2110 = vsub.f32 %v1837, %v1901
          %v2111 = vsub.f32 %v1838, %v1902
          %v2112 = vsub.f32 %v1839, %v1903
          %v2113 = vsub.f32 %v1840, %v1904
          %v2114 = vsub.f32 %v1841, %v1905
          %v2115 = vsub.f32 %v1842, %v1906
          %v2116 = vsub.f32 %v1843, %v1907
          %v2117 = vsub.f32 %v1844, %v1908
          %v2118 = vsub.f32 %v1845, %v1909
          %v2119 = vsub.f32 %v1846, %v1910
          %v2120 = vsub.f32 %v1847, %v1911
          %v2121 = vsub.f32 %v1848, %v1912
          %v2122 = vmul.f32 %v2106, 1.442695
          %v2123 = vpow.pop %v2122
          %v2124 = vmul.f32 %v2107, 1.442695
          %v2125 = vpow.pop %v2124
          %v2126 = vmul.f32 %v2108, 1.442695
          %v2127 = vpow.pop %v2126
          %v2128 = vmul.f32 %v2109, 1.442695
          %v2129 = vpow.pop %v2128
          %v2130 = vmul.f32 %v2110, 1.442695
          %v2131 = vpow.pop %v2130
          %v2132 = vmul.f32 %v2111, 1.442695
          %v2133 = vpow.pop %v2132
          %v2134 = vmul.f32 %v2112, 1.442695
          %v2135 = vpow.pop %v2134
          %v2136 = vmul.f32 %v2113, 1.442695
          %v2137 = vpow.pop %v2136
          %v2138 = vmul.f32 %v2114, 1.442695
          %v2139 = vpow.pop %v2138
          %v2140 = vmul.f32 %v2115, 1.442695
          %v2141 = vpow.pop %v2140
          %v2142 = vmul.f32 %v2116, 1.442695
          %v2143 = vpow.pop %v2142
          %v2144 = vmul.f32 %v2117, 1.442695
          %v2145 = vpow.pop %v2144
          %v2146 = vmul.f32 %v2118, 1.442695
          %v2147 = vpow.pop %v2146
          %v2148 = vmul.f32 %v2119, 1.442695
          %v2149 = vpow.pop %v2148
          %v2150 = vmul.f32 %v2120, 1.442695
          %v2151 = vpow.pop %v2150
          %v2152 = vmul.f32 %v2121, 1.442695
          %v2153 = vpow.pop %v2152
          %v2154 = vmul.f32 %v2090, %v2123
          %v2155 = vmul.f32 %v2091, %v2125
          %v2156 = vmul.f32 %v2092, %v2127
          %v2157 = vmul.f32 %v2093, %v2129
          %v2158 = vmul.f32 %v2094, %v2131
          %v2159 = vmul.f32 %v2095, %v2133
          %v2160 = vmul.f32 %v2096, %v2135
          %v2161 = vmul.f32 %v2097, %v2137
          %v2162 = vmul.f32 %v2098, %v2139
          %v2163 = vmul.f32 %v2099, %v2141
          %v2164 = vmul.f32 %v2100, %v2143
          %v2165 = vmul.f32 %v2101, %v2145
          %v2166 = vmul.f32 %v2102, %v2147
          %v2167 = vmul.f32 %v2103, %v2149
          %v2168 = vmul.f32 %v2104, %v2151
          %v2169 = vmul.f32 %v2105, %v2153
          %v2170 = vadd.f32 %v2026, %v2028
          %2171 = vadd.xlane.f32.xlu0 %v2170
          %v2172 = vpop.xlane.xlu0 %2171
          %v2173 = vadd.f32 %v2030, %v2032
          %2174 = vadd.xlane.f32.xlu0 %v2173
          %v2175 = vpop.xlane.xlu0 %2174
          %v2176 = vadd.f32 %v2034, %v2036
          %2177 = vadd.xlane.f32.xlu0 %v2176
          %v2178 = vpop.xlane.xlu0 %2177
          %v2179 = vadd.f32 %v2038, %v2040
          %2180 = vadd.xlane.f32.xlu0 %v2179
          %v2181 = vpop.xlane.xlu0 %2180
          %v2182 = vadd.f32 %v2042, %v2044
          %2183 = vadd.xlane.f32.xlu0 %v2182
          %v2184 = vpop.xlane.xlu0 %2183
          %v2185 = vadd.f32 %v2046, %v2048
          %2186 = vadd.xlane.f32.xlu0 %v2185
          %v2187 = vpop.xlane.xlu0 %2186
          %v2188 = vadd.f32 %v2050, %v2052
          %2189 = vadd.xlane.f32.xlu0 %v2188
          %v2190 = vpop.xlane.xlu0 %2189
          %v2191 = vadd.f32 %v2054, %v2056
          %2192 = vadd.xlane.f32.xlu0 %v2191
          %v2193 = vpop.xlane.xlu0 %2192
          %v2194 = vadd.f32 %v2058, %v2060
          %2195 = vadd.xlane.f32.xlu0 %v2194
          %v2196 = vpop.xlane.xlu0 %2195
          %v2197 = vadd.f32 %v2062, %v2064
          %2198 = vadd.xlane.f32.xlu0 %v2197
          %v2199 = vpop.xlane.xlu0 %2198
          %v2200 = vadd.f32 %v2066, %v2068
          %2201 = vadd.xlane.f32.xlu0 %v2200
          %v2202 = vpop.xlane.xlu0 %2201
          %v2203 = vadd.f32 %v2070, %v2072
          %2204 = vadd.xlane.f32.xlu0 %v2203
          %v2205 = vpop.xlane.xlu0 %2204
          %v2206 = vadd.f32 %v2074, %v2076
          %2207 = vadd.xlane.f32.xlu0 %v2206
          %v2208 = vpop.xlane.xlu0 %2207
          %v2209 = vadd.f32 %v2078, %v2080
          %2210 = vadd.xlane.f32.xlu0 %v2209
          %v2211 = vpop.xlane.xlu0 %2210
          %v2212 = vadd.f32 %v2082, %v2084
          %2213 = vadd.xlane.f32.xlu0 %v2212
          %v2214 = vpop.xlane.xlu0 %2213
          %v2215 = vadd.f32 %v2086, %v2088
          %2216 = vadd.xlane.f32.xlu0 %v2215
          %v2217 = vpop.xlane.xlu0 %2216
          %v2218 = vadd.f32 %v2154, %v2172
          %v2219 = vadd.f32 %v2155, %v2175
          %v2220 = vadd.f32 %v2156, %v2178
          %v2221 = vadd.f32 %v2157, %v2181
          %v2222 = vadd.f32 %v2158, %v2184
          %v2223 = vadd.f32 %v2159, %v2187
          %v2224 = vadd.f32 %v2160, %v2190
          %v2225 = vadd.f32 %v2161, %v2193
          %v2226 = vadd.f32 %v2162, %v2196
          %v2227 = vadd.f32 %v2163, %v2199
          %v2228 = vadd.f32 %v2164, %v2202
          %v2229 = vadd.f32 %v2165, %v2205
          %v2230 = vadd.f32 %v2166, %v2208
          %v2231 = vadd.f32 %v2167, %v2211
          %v2232 = vadd.f32 %v2168, %v2214
          %v2233 = vadd.f32 %v2169, %v2217
          %2234 = vst.msk [vmem:[%s2089] sm:$0xff] %vm1622, %v2218
          %2235 = vst.msk [vmem:[%s2089 + $0x8] sm:$0xff] %vm1622, %v2219
          %2236 = vst.msk [vmem:[%s2089 + $0x10] sm:$0xff] %vm1622, %v2220
          %2237 = vst.msk [vmem:[%s2089 + $0x18] sm:$0xff] %vm1622, %v2221
          %2238 = vst.msk [vmem:[%s2089 + $0x20] sm:$0xff] %vm1622, %v2222
          %2239 = vst.msk [vmem:[%s2089 + $0x28] sm:$0xff] %vm1622, %v2223
          %2240 = vst.msk [vmem:[%s2089 + $0x30] sm:$0xff] %vm1622, %v2224
          %2241 = vst.msk [vmem:[%s2089 + $0x38] sm:$0xff] %vm1622, %v2225
          %2242 = vst.msk [vmem:[%s2089 + $0x40] sm:$0xff] %vm1622, %v2226
          %2243 = vst.msk [vmem:[%s2089 + $0x48] sm:$0xff] %vm1622, %v2227
          %2244 = vst.msk [vmem:[%s2089 + $0x50] sm:$0xff] %vm1622, %v2228
          %2245 = vst.msk [vmem:[%s2089 + $0x58] sm:$0xff] %vm1622, %v2229
          %2246 = vst.msk [vmem:[%s2089 + $0x60] sm:$0xff] %vm1622, %v2230
          %2247 = vst.msk [vmem:[%s2089 + $0x68] sm:$0xff] %vm1622, %v2231
          %2248 = vst.msk [vmem:[%s2089 + $0x70] sm:$0xff] %vm1622, %v2232
          %2249 = vst.msk [vmem:[%s2089 + $0x78] sm:$0xff] %vm1622, %v2233
          %2250 = vst.msk [vmem:[%s1832] sm:$0xff] %vm1622, %v1897
          %2251 = vst.msk [vmem:[%s1832 + $0x8] sm:$0xff] %vm1622, %v1898
          %2252 = vst.msk [vmem:[%s1832 + $0x10] sm:$0xff] %vm1622, %v1899
          %2253 = vst.msk [vmem:[%s1832 + $0x18] sm:$0xff] %vm1622, %v1900
          %2254 = vst.msk [vmem:[%s1832 + $0x20] sm:$0xff] %vm1622, %v1901
          %2255 = vst.msk [vmem:[%s1832 + $0x28] sm:$0xff] %vm1622, %v1902
          %2256 = vst.msk [vmem:[%s1832 + $0x30] sm:$0xff] %vm1622, %v1903
          %2257 = vst.msk [vmem:[%s1832 + $0x38] sm:$0xff] %vm1622, %v1904
          %2258 = vst.msk [vmem:[%s1832 + $0x40] sm:$0xff] %vm1622, %v1905
          %2259 = vst.msk [vmem:[%s1832 + $0x48] sm:$0xff] %vm1622, %v1906
          %2260 = vst.msk [vmem:[%s1832 + $0x50] sm:$0xff] %vm1622, %v1907
          %2261 = vst.msk [vmem:[%s1832 + $0x58] sm:$0xff] %vm1622, %v1908
          %2262 = vst.msk [vmem:[%s1832 + $0x60] sm:$0xff] %vm1622, %v1909
          %2263 = vst.msk [vmem:[%s1832 + $0x68] sm:$0xff] %vm1622, %v1910
          %2264 = vst.msk [vmem:[%s1832 + $0x70] sm:$0xff] %vm1622, %v1911
          %2265 = vst.msk [vmem:[%s1832 + $0x78] sm:$0xff] %vm1622, %v1912
          %v2266 = vld [vmem:[#allocation2 + $0x10] sm:$0xff]
          %v2267 = vld [vmem:[#allocation2 + $0x30] sm:$0xff]
          %v2268 = vld [vmem:[#allocation2 + $0x50] sm:$0xff]
          %v2269 = vld [vmem:[#allocation2 + $0x70] sm:$0xff]
          %v2270 = vld [vmem:[#allocation2 + $0x90] sm:$0xff]
          %v2271 = vld [vmem:[#allocation2 + $0xb0] sm:$0xff]
          %v2272 = vld [vmem:[#allocation2 + $0xd0] sm:$0xff]
          %v2273 = vld [vmem:[#allocation2 + $0xf0] sm:$0xff]
          %v2274 = vld [vmem:[#allocation2 + $0x110] sm:$0xff]
          %v2275 = vld [vmem:[#allocation2 + $0x130] sm:$0xff]
          %v2276 = vld [vmem:[#allocation2 + $0x150] sm:$0xff]
          %v2277 = vld [vmem:[#allocation2 + $0x170] sm:$0xff]
          %v2278 = vld [vmem:[#allocation2 + $0x190] sm:$0xff]
          %v2279 = vld [vmem:[#allocation2 + $0x1b0] sm:$0xff]
          %v2280 = vld [vmem:[#allocation2 + $0x1d0] sm:$0xff]
          %v2281 = vld [vmem:[#allocation2 + $0x1f0] sm:$0xff]
          %2282 = vmatprep.subr.mxu0 0.0
          %2283 = vmatpush1.xpose.msra.mxu0 %v1010
          %2284 = vmatprep.subr.mxu0 0.0
          %2285 = vmatpush1.xpose.msra.mxu0 %v1011
          %2286 = vmatprep.subr.mxu0 0.0
          %2287 = vmatpush1.xpose.msra.mxu0 %v1012
          %2288 = vmatprep.subr.mxu0 0.0
          %2289 = vmatpush1.xpose.msra.mxu0 %v1013
          %2290 = vmatprep.subr.mxu0 0.0
          %2291 = vmatpush1.xpose.msra.mxu0 %v1014
          %2292 = vmatprep.subr.mxu0 0.0
          %2293 = vmatpush1.xpose.msra.mxu0 %v1015
          %2294 = vmatprep.subr.mxu0 0.0
          %2295 = vmatpush1.xpose.msra.mxu0 %v1016
          %2296 = vmatprep.subr.mxu0 0.0
          %2297 = vmatpush1.xpose.msra.mxu0 %v1017
          %2298 = vmatprep.subr.mxu0 0.0
          %2299 = vmatpush1.xpose.msra.mxu0 %v1018
          %2300 = vmatprep.subr.mxu0 0.0
          %2301 = vmatpush1.xpose.msra.mxu0 %v1019
          %2302 = vmatprep.subr.mxu0 0.0
          %2303 = vmatpush1.xpose.msra.mxu0 %v1020
          %2304 = vmatprep.subr.mxu0 0.0
          %2305 = vmatpush1.xpose.msra.mxu0 %v1021
          %2306 = vmatprep.subr.mxu0 0.0
          %2307 = vmatpush1.xpose.msra.mxu0 %v1022
          %2308 = vmatprep.subr.mxu0 0.0
          %2309 = vmatpush1.xpose.msra.mxu0 %v1023
          %2310 = vmatprep.subr.mxu0 0.0
          %2311 = vmatpush1.xpose.msra.mxu0 %v1024
          %2312 = vmatprep.subr.mxu0 0.0
          %2313 = vmatpush1.xpose.msra.mxu0 %v1025
          %2314 = vmatprep.subr.mxu0 0.0
          %2315 = vmatpush1.xpose.msra.mxu0 %v1026
          %2316 = vmatprep.subr.mxu0 0.0
          %2317 = vmatpush1.xpose.msra.mxu0 %v1027
          %2318 = vmatprep.subr.mxu0 0.0
          %2319 = vmatpush1.xpose.msra.mxu0 %v1028
          %2320 = vmatprep.subr.mxu0 0.0
          %2321 = vmatpush1.xpose.msra.mxu0 %v1029
          %2322 = vmatprep.subr.mxu0 0.0
          %2323 = vmatpush1.xpose.msra.mxu0 %v1030
          %2324 = vmatprep.subr.mxu0 0.0
          %2325 = vmatpush1.xpose.msra.mxu0 %v1031
          %2326 = vmatprep.subr.mxu0 0.0
          %2327 = vmatpush1.xpose.msra.mxu0 %v1032
          %2328 = vmatprep.subr.mxu0 0.0
          %2329 = vmatpush1.xpose.msra.mxu0 %v1033
          %2330 = vmatprep.subr.mxu0 0.0
          %2331 = vmatpush1.xpose.msra.mxu0 %v1034
          %2332 = vmatprep.subr.mxu0 0.0
          %2333 = vmatpush1.xpose.msra.mxu0 %v1035
          %2334 = vmatprep.subr.mxu0 0.0
          %2335 = vmatpush1.xpose.msra.mxu0 %v1036
          %2336 = vmatprep.subr.mxu0 0.0
          %2337 = vmatpush1.xpose.msra.mxu0 %v1037
          %2338 = vmatprep.subr.mxu0 0.0
          %2339 = vmatpush1.xpose.msra.mxu0 %v1038
          %2340 = vmatprep.subr.mxu0 0.0
          %2341 = vmatpush1.xpose.msra.mxu0 %v1039
          %2342 = vmatprep.subr.mxu0 0.0
          %2343 = vmatpush1.xpose.msra.mxu0 %v1040
          %2344 = vmatprep.subr.mxu0 0.0
          %2345 = vmatpush1.xpose.msra.mxu0 %v1041
          %2346 = vmatprep.mubr.f32.mxu0 0.0
          %2347 = vmatmul.mubr.f32.gmra.mrb[0].mxu0 %v2266
          %v2348 = vpop.f32.mrb[0].mxu0
          %v2349 = vadd.f32 0.0, %v2348
          %v2350 = vpop.f32.mrb[0].mxu0
          %v2351 = vadd.f32 0.0, %v2350
          %2352 = vmatprep.mubr.f32.mxu0 0.0
          %2353 = vmatmul.mubr.f32.gmra.mrb[0].mxu0 %v2267
          %v2354 = vpop.f32.mrb[0].mxu0
          %v2355 = vadd.f32 0.0, %v2354
          %v2356 = vpop.f32.mrb[0].mxu0
          %v2357 = vadd.f32 0.0, %v2356
          %2358 = vmatprep.mubr.f32.mxu0 0.0
          %2359 = vmatmul.mubr.f32.gmra.mrb[0].mxu0 %v2268
          %v2360 = vpop.f32.mrb[0].mxu0
          %v2361 = vadd.f32 0.0, %v2360
          %v2362 = vpop.f32.mrb[0].mxu0
          %v2363 = vadd.f32 0.0, %v2362
          %2364 = vmatprep.mubr.f32.mxu0 0.0
          %2365 = vmatmul.mubr.f32.gmra.mrb[0].mxu0 %v2269
          %v2366 = vpop.f32.mrb[0].mxu0
          %v2367 = vadd.f32 0.0, %v2366
          %v2368 = vpop.f32.mrb[0].mxu0
          %v2369 = vadd.f32 0.0, %v2368
          %2370 = vmatprep.mubr.f32.mxu0 0.0
          %2371 = vmatmul.mubr.f32.gmra.mrb[0].mxu0 %v2270
          %v2372 = vpop.f32.mrb[0].mxu0
          %v2373 = vadd.f32 0.0, %v2372
          %v2374 = vpop.f32.mrb[0].mxu0
          %v2375 = vadd.f32 0.0, %v2374
          %2376 = vmatprep.mubr.f32.mxu0 0.0
          %2377 = vmatmul.mubr.f32.gmra.mrb[0].mxu0 %v2271
          %v2378 = vpop.f32.mrb[0].mxu0
          %v2379 = vadd.f32 0.0, %v2378
          %v2380 = vpop.f32.mrb[0].mxu0
          %v2381 = vadd.f32 0.0, %v2380
          %2382 = vmatprep.mubr.f32.mxu0 0.0
          %2383 = vmatmul.mubr.f32.gmra.mrb[0].mxu0 %v2272
          %v2384 = vpop.f32.mrb[0].mxu0
          %v2385 = vadd.f32 0.0, %v2384
          %v2386 = vpop.f32.mrb[0].mxu0
          %v2387 = vadd.f32 0.0, %v2386
          %2388 = vmatprep.mubr.f32.mxu0 0.0
          %2389 = vmatmul.mubr.f32.gmra.mrb[0].mxu0 %v2273
          %v2390 = vpop.f32.mrb[0].mxu0
          %v2391 = vadd.f32 0.0, %v2390
          %v2392 = vpop.f32.mrb[0].mxu0
          %v2393 = vadd.f32 0.0, %v2392
          %2394 = vmatprep.mubr.f32.mxu0 0.0
          %2395 = vmatmul.mubr.f32.gmra.mrb[0].mxu0 %v2274
          %v2396 = vpop.f32.mrb[0].mxu0
          %v2397 = vadd.f32 0.0, %v2396
          %v2398 = vpop.f32.mrb[0].mxu0
          %v2399 = vadd.f32 0.0, %v2398
          %2400 = vmatprep.mubr.f32.mxu0 0.0
          %2401 = vmatmul.mubr.f32.gmra.mrb[0].mxu0 %v2275
          %v2402 = vpop.f32.mrb[0].mxu0
          %v2403 = vadd.f32 0.0, %v2402
          %v2404 = vpop.f32.mrb[0].mxu0
          %v2405 = vadd.f32 0.0, %v2404
          %2406 = vmatprep.mubr.f32.mxu0 0.0
          %2407 = vmatmul.mubr.f32.gmra.mrb[0].mxu0 %v2276
          %v2408 = vpop.f32.mrb[0].mxu0
          %v2409 = vadd.f32 0.0, %v2408
          %v2410 = vpop.f32.mrb[0].mxu0
          %v2411 = vadd.f32 0.0, %v2410
          %2412 = vmatprep.mubr.f32.mxu0 0.0
          %2413 = vmatmul.mubr.f32.gmra.mrb[0].mxu0 %v2277
          %v2414 = vpop.f32.mrb[0].mxu0
          %v2415 = vadd.f32 0.0, %v2414
          %v2416 = vpop.f32.mrb[0].mxu0
          %v2417 = vadd.f32 0.0, %v2416
          %2418 = vmatprep.mubr.f32.mxu0 0.0
          %2419 = vmatmul.mubr.f32.gmra.mrb[0].mxu0 %v2278
          %v2420 = vpop.f32.mrb[0].mxu0
          %v2421 = vadd.f32 0.0, %v2420
          %v2422 = vpop.f32.mrb[0].mxu0
          %v2423 = vadd.f32 0.0, %v2422
          %2424 = vmatprep.mubr.f32.mxu0 0.0
          %2425 = vmatmul.mubr.f32.gmra.mrb[0].mxu0 %v2279
          %v2426 = vpop.f32.mrb[0].mxu0
          %v2427 = vadd.f32 0.0, %v2426
          %v2428 = vpop.f32.mrb[0].mxu0
          %v2429 = vadd.f32 0.0, %v2428
          %2430 = vmatprep.mubr.f32.mxu0 0.0
          %2431 = vmatmul.mubr.f32.gmra.mrb[0].mxu0 %v2280
          %v2432 = vpop.f32.mrb[0].mxu0
          %v2433 = vadd.f32 0.0, %v2432
          %v2434 = vpop.f32.mrb[0].mxu0
          %v2435 = vadd.f32 0.0, %v2434
          %2436 = vmatprep.mubr.f32.mxu0 0.0
          %2437 = vmatmul.mubr.f32.gmra.mrb[0].mxu0 %v2281
          %v2438 = vpop.f32.mrb[0].mxu0
          %v2439 = vadd.f32 0.0, %v2438
          %v2440 = vpop.f32.mrb[0].mxu0
          %v2441 = vadd.f32 0.0, %v2440
          %2442 = vdwg.mxu0
          %s2443 = scalar_lea.vmem [#allocation3], 256
          %v2444 = vld [vmem:[%s2443] sm:$0xff]
          %v2445 = vld [vmem:[%s2443 + $0x8] sm:$0xff]
          %v2446 = vld [vmem:[%s2443 + $0x10] sm:$0xff]
          %v2447 = vld [vmem:[%s2443 + $0x18] sm:$0xff]
          %v2448 = vld [vmem:[%s2443 + $0x20] sm:$0xff]
          %v2449 = vld [vmem:[%s2443 + $0x28] sm:$0xff]
          %v2450 = vld [vmem:[%s2443 + $0x30] sm:$0xff]
          %v2451 = vld [vmem:[%s2443 + $0x38] sm:$0xff]
          %v2452 = vld [vmem:[%s2443 + $0x40] sm:$0xff]
          %v2453 = vld [vmem:[%s2443 + $0x48] sm:$0xff]
          %v2454 = vld [vmem:[%s2443 + $0x50] sm:$0xff]
          %v2455 = vld [vmem:[%s2443 + $0x58] sm:$0xff]
          %v2456 = vld [vmem:[%s2443 + $0x60] sm:$0xff]
          %v2457 = vld [vmem:[%s2443 + $0x68] sm:$0xff]
          %v2458 = vld [vmem:[%s2443 + $0x70] sm:$0xff]
          %v2459 = vld [vmem:[%s2443 + $0x78] sm:$0xff]
          %v2460 = vmax.f32 %v2349, %v2351
          %2461 = vmax.xlane.f32.xlu0 %v2460
          %v2462 = vpop.xlane.xlu0 %2461
          %v2463 = vmax.f32 %v2355, %v2357
          %2464 = vmax.xlane.f32.xlu0 %v2463
          %v2465 = vpop.xlane.xlu0 %2464
          %v2466 = vmax.f32 %v2361, %v2363
          %2467 = vmax.xlane.f32.xlu0 %v2466
          %v2468 = vpop.xlane.xlu0 %2467
          %v2469 = vmax.f32 %v2367, %v2369
          %2470 = vmax.xlane.f32.xlu0 %v2469
          %v2471 = vpop.xlane.xlu0 %2470
          %v2472 = vmax.f32 %v2373, %v2375
          %2473 = vmax.xlane.f32.xlu0 %v2472
          %v2474 = vpop.xlane.xlu0 %2473
          %v2475 = vmax.f32 %v2379, %v2381
          %2476 = vmax.xlane.f32.xlu0 %v2475
          %v2477 = vpop.xlane.xlu0 %2476
          %v2478 = vmax.f32 %v2385, %v2387
          %2479 = vmax.xlane.f32.xlu0 %v2478
          %v2480 = vpop.xlane.xlu0 %2479
          %v2481 = vmax.f32 %v2391, %v2393
          %2482 = vmax.xlane.f32.xlu0 %v2481
          %v2483 = vpop.xlane.xlu0 %2482
          %v2484 = vmax.f32 %v2397, %v2399
          %2485 = vmax.xlane.f32.xlu0 %v2484
          %v2486 = vpop.xlane.xlu0 %2485
          %v2487 = vmax.f32 %v2403, %v2405
          %2488 = vmax.xlane.f32.xlu0 %v2487
          %v2489 = vpop.xlane.xlu0 %2488
          %v2490 = vmax.f32 %v2409, %v2411
          %2491 = vmax.xlane.f32.xlu0 %v2490
          %v2492 = vpop.xlane.xlu0 %2491
          %v2493 = vmax.f32 %v2415, %v2417
          %2494 = vmax.xlane.f32.xlu0 %v2493
          %v2495 = vpop.xlane.xlu0 %2494
          %v2496 = vmax.f32 %v2421, %v2423
          %2497 = vmax.xlane.f32.xlu0 %v2496
          %v2498 = vpop.xlane.xlu0 %2497
          %v2499 = vmax.f32 %v2427, %v2429
          %2500 = vmax.xlane.f32.xlu0 %v2499
          %v2501 = vpop.xlane.xlu0 %2500
          %v2502 = vmax.f32 %v2433, %v2435
          %2503 = vmax.xlane.f32.xlu0 %v2502
          %v2504 = vpop.xlane.xlu0 %2503
          %v2505 = vmax.f32 %v2439, %v2441
          %2506 = vmax.xlane.f32.xlu0 %v2505
          %v2507 = vpop.xlane.xlu0 %2506
          %v2508 = vmax.f32 %v2444, %v2462
          %v2509 = vmax.f32 %v2445, %v2465
          %v2510 = vmax.f32 %v2446, %v2468
          %v2511 = vmax.f32 %v2447, %v2471
          %v2512 = vmax.f32 %v2448, %v2474
          %v2513 = vmax.f32 %v2449, %v2477
          %v2514 = vmax.f32 %v2450, %v2480
          %v2515 = vmax.f32 %v2451, %v2483
          %v2516 = vmax.f32 %v2452, %v2486
          %v2517 = vmax.f32 %v2453, %v2489
          %v2518 = vmax.f32 %v2454, %v2492
          %v2519 = vmax.f32 %v2455, %v2495
          %v2520 = vmax.f32 %v2456, %v2498
          %v2521 = vmax.f32 %v2457, %v2501
          %v2522 = vmax.f32 %v2458, %v2504
          %v2523 = vmax.f32 %v2459, %v2507
          %2525 = vset.pattern.permute.xlu0 0
          %2526 = vperm.xlu0 %2525, %v2508
          %v2527 = vpop.permute.xlu0 %2526
          %2530 = vset.pattern.permute.xlu0 0
          %2531 = vperm.xlu0 %2530, %v2509
          %v2532 = vpop.permute.xlu0 %2531
          %2535 = vset.pattern.permute.xlu0 0
          %2536 = vperm.xlu0 %2535, %v2510
          %v2537 = vpop.permute.xlu0 %2536
          %2540 = vset.pattern.permute.xlu0 0
          %2541 = vperm.xlu0 %2540, %v2511
          %v2542 = vpop.permute.xlu0 %2541
          %2545 = vset.pattern.permute.xlu0 0
          %2546 = vperm.xlu0 %2545, %v2512
          %v2547 = vpop.permute.xlu0 %2546
          %2550 = vset.pattern.permute.xlu0 0
          %2551 = vperm.xlu0 %2550, %v2513
          %v2552 = vpop.permute.xlu0 %2551
          %2555 = vset.pattern.permute.xlu0 0
          %2556 = vperm.xlu0 %2555, %v2514
          %v2557 = vpop.permute.xlu0 %2556
          %2560 = vset.pattern.permute.xlu0 0
          %2561 = vperm.xlu0 %2560, %v2515
          %v2562 = vpop.permute.xlu0 %2561
          %2565 = vset.pattern.permute.xlu0 0
          %2566 = vperm.xlu0 %2565, %v2516
          %v2567 = vpop.permute.xlu0 %2566
          %2570 = vset.pattern.permute.xlu0 0
          %2571 = vperm.xlu0 %2570, %v2517
          %v2572 = vpop.permute.xlu0 %2571
          %2575 = vset.pattern.permute.xlu0 0
          %2576 = vperm.xlu0 %2575, %v2518
          %v2577 = vpop.permute.xlu0 %2576
          %2580 = vset.pattern.permute.xlu0 0
          %2581 = vperm.xlu0 %2580, %v2519
          %v2582 = vpop.permute.xlu0 %2581
          %2585 = vset.pattern.permute.xlu0 0
          %2586 = vperm.xlu0 %2585, %v2520
          %v2587 = vpop.permute.xlu0 %2586
          %2590 = vset.pattern.permute.xlu0 0
          %2591 = vperm.xlu0 %2590, %v2521
          %v2592 = vpop.permute.xlu0 %2591
          %2595 = vset.pattern.permute.xlu0 0
          %2596 = vperm.xlu0 %2595, %v2522
          %v2597 = vpop.permute.xlu0 %2596
          %2600 = vset.pattern.permute.xlu0 0
          %2601 = vperm.xlu0 %2600, %v2523
          %v2602 = vpop.permute.xlu0 %2601
          %v2604 = vsub.f32 %v2349, %v2527
          %v2605 = vsub.f32 %v2351, %v2527
          %v2606 = vsub.f32 %v2355, %v2532
          %v2607 = vsub.f32 %v2357, %v2532
          %v2608 = vsub.f32 %v2361, %v2537
          %v2609 = vsub.f32 %v2363, %v2537
          %v2610 = vsub.f32 %v2367, %v2542
          %v2611 = vsub.f32 %v2369, %v2542
          %v2612 = vsub.f32 %v2373, %v2547
          %v2613 = vsub.f32 %v2375, %v2547
          %v2614 = vsub.f32 %v2379, %v2552
          %v2615 = vsub.f32 %v2381, %v2552
          %v2616 = vsub.f32 %v2385, %v2557
          %v2617 = vsub.f32 %v2387, %v2557
          %v2618 = vsub.f32 %v2391, %v2562
          %v2619 = vsub.f32 %v2393, %v2562
          %v2620 = vsub.f32 %v2397, %v2567
          %v2621 = vsub.f32 %v2399, %v2567
          %v2622 = vsub.f32 %v2403, %v2572
          %v2623 = vsub.f32 %v2405, %v2572
          %v2624 = vsub.f32 %v2409, %v2577
          %v2625 = vsub.f32 %v2411, %v2577
          %v2626 = vsub.f32 %v2415, %v2582
          %v2627 = vsub.f32 %v2417, %v2582
          %v2628 = vsub.f32 %v2421, %v2587
          %v2629 = vsub.f32 %v2423, %v2587
          %v2630 = vsub.f32 %v2427, %v2592
          %v2631 = vsub.f32 %v2429, %v2592
          %v2632 = vsub.f32 %v2433, %v2597
          %v2633 = vsub.f32 %v2435, %v2597
          %v2634 = vsub.f32 %v2439, %v2602
          %v2635 = vsub.f32 %v2441, %v2602
          %v2636 = vmul.f32 %v2604, 1.442695
          %v2637 = vpow.pop %v2636
          %v2638 = vmul.f32 %v2605, 1.442695
          %v2639 = vpow.pop %v2638
          %v2640 = vmul.f32 %v2606, 1.442695
          %v2641 = vpow.pop %v2640
          %v2642 = vmul.f32 %v2607, 1.442695
          %v2643 = vpow.pop %v2642
          %v2644 = vmul.f32 %v2608, 1.442695
          %v2645 = vpow.pop %v2644
          %v2646 = vmul.f32 %v2609, 1.442695
          %v2647 = vpow.pop %v2646
          %v2648 = vmul.f32 %v2610, 1.442695
          %v2649 = vpow.pop %v2648
          %v2650 = vmul.f32 %v2611, 1.442695
          %v2651 = vpow.pop %v2650
          %v2652 = vmul.f32 %v2612, 1.442695
          %v2653 = vpow.pop %v2652
          %v2654 = vmul.f32 %v2613, 1.442695
          %v2655 = vpow.pop %v2654
          %v2656 = vmul.f32 %v2614, 1.442695
          %v2657 = vpow.pop %v2656
          %v2658 = vmul.f32 %v2615, 1.442695
          %v2659 = vpow.pop %v2658
          %v2660 = vmul.f32 %v2616, 1.442695
          %v2661 = vpow.pop %v2660
          %v2662 = vmul.f32 %v2617, 1.442695
          %v2663 = vpow.pop %v2662
          %v2664 = vmul.f32 %v2618, 1.442695
          %v2665 = vpow.pop %v2664
          %v2666 = vmul.f32 %v2619, 1.442695
          %v2667 = vpow.pop %v2666
          %v2668 = vmul.f32 %v2620, 1.442695
          %v2669 = vpow.pop %v2668
          %v2670 = vmul.f32 %v2621, 1.442695
          %v2671 = vpow.pop %v2670
          %v2672 = vmul.f32 %v2622, 1.442695
          %v2673 = vpow.pop %v2672
          %v2674 = vmul.f32 %v2623, 1.442695
          %v2675 = vpow.pop %v2674
          %v2676 = vmul.f32 %v2624, 1.442695
          %v2677 = vpow.pop %v2676
          %v2678 = vmul.f32 %v2625, 1.442695
          %v2679 = vpow.pop %v2678
          %v2680 = vmul.f32 %v2626, 1.442695
          %v2681 = vpow.pop %v2680
          %v2682 = vmul.f32 %v2627, 1.442695
          %v2683 = vpow.pop %v2682
          %v2684 = vmul.f32 %v2628, 1.442695
          %v2685 = vpow.pop %v2684
          %v2686 = vmul.f32 %v2629, 1.442695
          %v2687 = vpow.pop %v2686
          %v2688 = vmul.f32 %v2630, 1.442695
          %v2689 = vpow.pop %v2688
          %v2690 = vmul.f32 %v2631, 1.442695
          %v2691 = vpow.pop %v2690
          %v2692 = vmul.f32 %v2632, 1.442695
          %v2693 = vpow.pop %v2692
          %v2694 = vmul.f32 %v2633, 1.442695
          %v2695 = vpow.pop %v2694
          %v2696 = vmul.f32 %v2634, 1.442695
          %v2697 = vpow.pop %v2696
          %v2698 = vmul.f32 %v2635, 1.442695
          %v2699 = vpow.pop %v2698
          %s2700 = scalar_lea.vmem [#allocation4], 256
          %v2701 = vld [vmem:[%s2700] sm:$0xff]
          %v2702 = vld [vmem:[%s2700 + $0x8] sm:$0xff]
          %v2703 = vld [vmem:[%s2700 + $0x10] sm:$0xff]
          %v2704 = vld [vmem:[%s2700 + $0x18] sm:$0xff]
          %v2705 = vld [vmem:[%s2700 + $0x20] sm:$0xff]
          %v2706 = vld [vmem:[%s2700 + $0x28] sm:$0xff]
          %v2707 = vld [vmem:[%s2700 + $0x30] sm:$0xff]
          %v2708 = vld [vmem:[%s2700 + $0x38] sm:$0xff]
          %v2709 = vld [vmem:[%s2700 + $0x40] sm:$0xff]
          %v2710 = vld [vmem:[%s2700 + $0x48] sm:$0xff]
          %v2711 = vld [vmem:[%s2700 + $0x50] sm:$0xff]
          %v2712 = vld [vmem:[%s2700 + $0x58] sm:$0xff]
          %v2713 = vld [vmem:[%s2700 + $0x60] sm:$0xff]
          %v2714 = vld [vmem:[%s2700 + $0x68] sm:$0xff]
          %v2715 = vld [vmem:[%s2700 + $0x70] sm:$0xff]
          %v2716 = vld [vmem:[%s2700 + $0x78] sm:$0xff]
          %v2717 = vsub.f32 %v2444, %v2508
          %v2718 = vsub.f32 %v2445, %v2509
          %v2719 = vsub.f32 %v2446, %v2510
          %v2720 = vsub.f32 %v2447, %v2511
          %v2721 = vsub.f32 %v2448, %v2512
          %v2722 = vsub.f32 %v2449, %v2513
          %v2723 = vsub.f32 %v2450, %v2514
          %v2724 = vsub.f32 %v2451, %v2515
          %v2725 = vsub.f32 %v2452, %v2516
          %v2726 = vsub.f32 %v2453, %v2517
          %v2727 = vsub.f32 %v2454, %v2518
          %v2728 = vsub.f32 %v2455, %v2519
          %v2729 = vsub.f32 %v2456, %v2520
          %v2730 = vsub.f32 %v2457, %v2521
          %v2731 = vsub.f32 %v2458, %v2522
          %v2732 = vsub.f32 %v2459, %v2523
          %v2733 = vmul.f32 %v2717, 1.442695
          %v2734 = vpow.pop %v2733
          %v2735 = vmul.f32 %v2718, 1.442695
          %v2736 = vpow.pop %v2735
          %v2737 = vmul.f32 %v2719, 1.442695
          %v2738 = vpow.pop %v2737
          %v2739 = vmul.f32 %v2720, 1.442695
          %v2740 = vpow.pop %v2739
          %v2741 = vmul.f32 %v2721, 1.442695
          %v2742 = vpow.pop %v2741
          %v2743 = vmul.f32 %v2722, 1.442695
          %v2744 = vpow.pop %v2743
          %v2745 = vmul.f32 %v2723, 1.442695
          %v2746 = vpow.pop %v2745
          %v2747 = vmul.f32 %v2724, 1.442695
          %v2748 = vpow.pop %v2747
          %v2749 = vmul.f32 %v2725, 1.442695
          %v2750 = vpow.pop %v2749
          %v2751 = vmul.f32 %v2726, 1.442695
          %v2752 = vpow.pop %v2751
          %v2753 = vmul.f32 %v2727, 1.442695
          %v2754 = vpow.pop %v2753
          %v2755 = vmul.f32 %v2728, 1.442695
          %v2756 = vpow.pop %v2755
          %v2757 = vmul.f32 %v2729, 1.442695
          %v2758 = vpow.pop %v2757
          %v2759 = vmul.f32 %v2730, 1.442695
          %v2760 = vpow.pop %v2759
          %v2761 = vmul.f32 %v2731, 1.442695
          %v2762 = vpow.pop %v2761
          %v2763 = vmul.f32 %v2732, 1.442695
          %v2764 = vpow.pop %v2763
          %v2765 = vmul.f32 %v2701, %v2734
          %v2766 = vmul.f32 %v2702, %v2736
          %v2767 = vmul.f32 %v2703, %v2738
          %v2768 = vmul.f32 %v2704, %v2740
          %v2769 = vmul.f32 %v2705, %v2742
          %v2770 = vmul.f32 %v2706, %v2744
          %v2771 = vmul.f32 %v2707, %v2746
          %v2772 = vmul.f32 %v2708, %v2748
          %v2773 = vmul.f32 %v2709, %v2750
          %v2774 = vmul.f32 %v2710, %v2752
          %v2775 = vmul.f32 %v2711, %v2754
          %v2776 = vmul.f32 %v2712, %v2756
          %v2777 = vmul.f32 %v2713, %v2758
          %v2778 = vmul.f32 %v2714, %v2760
          %v2779 = vmul.f32 %v2715, %v2762
          %v2780 = vmul.f32 %v2716, %v2764
          %v2781 = vadd.f32 %v2637, %v2639
          %2782 = vadd.xlane.f32.xlu0 %v2781
          %v2783 = vpop.xlane.xlu0 %2782
          %v2784 = vadd.f32 %v2641, %v2643
          %2785 = vadd.xlane.f32.xlu0 %v2784
          %v2786 = vpop.xlane.xlu0 %2785
          %v2787 = vadd.f32 %v2645, %v2647
          %2788 = vadd.xlane.f32.xlu0 %v2787
          %v2789 = vpop.xlane.xlu0 %2788
          %v2790 = vadd.f32 %v2649, %v2651
          %2791 = vadd.xlane.f32.xlu0 %v2790
          %v2792 = vpop.xlane.xlu0 %2791
          %v2793 = vadd.f32 %v2653, %v2655
          %2794 = vadd.xlane.f32.xlu0 %v2793
          %v2795 = vpop.xlane.xlu0 %2794
          %v2796 = vadd.f32 %v2657, %v2659
          %2797 = vadd.xlane.f32.xlu0 %v2796
          %v2798 = vpop.xlane.xlu0 %2797
          %v2799 = vadd.f32 %v2661, %v2663
          %2800 = vadd.xlane.f32.xlu0 %v2799
          %v2801 = vpop.xlane.xlu0 %2800
          %v2802 = vadd.f32 %v2665, %v2667
          %2803 = vadd.xlane.f32.xlu0 %v2802
          %v2804 = vpop.xlane.xlu0 %2803
          %v2805 = vadd.f32 %v2669, %v2671
          %2806 = vadd.xlane.f32.xlu0 %v2805
          %v2807 = vpop.xlane.xlu0 %2806
          %v2808 = vadd.f32 %v2673, %v2675
          %2809 = vadd.xlane.f32.xlu0 %v2808
          %v2810 = vpop.xlane.xlu0 %2809
          %v2811 = vadd.f32 %v2677, %v2679
          %2812 = vadd.xlane.f32.xlu0 %v2811
          %v2813 = vpop.xlane.xlu0 %2812
          %v2814 = vadd.f32 %v2681, %v2683
          %2815 = vadd.xlane.f32.xlu0 %v2814
          %v2816 = vpop.xlane.xlu0 %2815
          %v2817 = vadd.f32 %v2685, %v2687
          %2818 = vadd.xlane.f32.xlu0 %v2817
          %v2819 = vpop.xlane.xlu0 %2818
          %v2820 = vadd.f32 %v2689, %v2691
          %2821 = vadd.xlane.f32.xlu0 %v2820
          %v2822 = vpop.xlane.xlu0 %2821
          %v2823 = vadd.f32 %v2693, %v2695
          %2824 = vadd.xlane.f32.xlu0 %v2823
          %v2825 = vpop.xlane.xlu0 %2824
          %v2826 = vadd.f32 %v2697, %v2699
          %2827 = vadd.xlane.f32.xlu0 %v2826
          %v2828 = vpop.xlane.xlu0 %2827
          %v2829 = vadd.f32 %v2765, %v2783
          %v2830 = vadd.f32 %v2766, %v2786
          %v2831 = vadd.f32 %v2767, %v2789
          %v2832 = vadd.f32 %v2768, %v2792
          %v2833 = vadd.f32 %v2769, %v2795
          %v2834 = vadd.f32 %v2770, %v2798
          %v2835 = vadd.f32 %v2771, %v2801
          %v2836 = vadd.f32 %v2772, %v2804
          %v2837 = vadd.f32 %v2773, %v2807
          %v2838 = vadd.f32 %v2774, %v2810
          %v2839 = vadd.f32 %v2775, %v2813
          %v2840 = vadd.f32 %v2776, %v2816
          %v2841 = vadd.f32 %v2777, %v2819
          %v2842 = vadd.f32 %v2778, %v2822
          %v2843 = vadd.f32 %v2779, %v2825
          %v2844 = vadd.f32 %v2780, %v2828
          %2845 = vst.msk [vmem:[%s2700] sm:$0xff] %vm1622, %v2829
          %2846 = vst.msk [vmem:[%s2700 + $0x8] sm:$0xff] %vm1622, %v2830
          %2847 = vst.msk [vmem:[%s2700 + $0x10] sm:$0xff] %vm1622, %v2831
          %2848 = vst.msk [vmem:[%s2700 + $0x18] sm:$0xff] %vm1622, %v2832
          %2849 = vst.msk [vmem:[%s2700 + $0x20] sm:$0xff] %vm1622, %v2833
          %2850 = vst.msk [vmem:[%s2700 + $0x28] sm:$0xff] %vm1622, %v2834
          %2851 = vst.msk [vmem:[%s2700 + $0x30] sm:$0xff] %vm1622, %v2835
          %2852 = vst.msk [vmem:[%s2700 + $0x38] sm:$0xff] %vm1622, %v2836
          %2853 = vst.msk [vmem:[%s2700 + $0x40] sm:$0xff] %vm1622, %v2837
          %2854 = vst.msk [vmem:[%s2700 + $0x48] sm:$0xff] %vm1622, %v2838
          %2855 = vst.msk [vmem:[%s2700 + $0x50] sm:$0xff] %vm1622, %v2839
          %2856 = vst.msk [vmem:[%s2700 + $0x58] sm:$0xff] %vm1622, %v2840
          %2857 = vst.msk [vmem:[%s2700 + $0x60] sm:$0xff] %vm1622, %v2841
          %2858 = vst.msk [vmem:[%s2700 + $0x68] sm:$0xff] %vm1622, %v2842
          %2859 = vst.msk [vmem:[%s2700 + $0x70] sm:$0xff] %vm1622, %v2843
          %2860 = vst.msk [vmem:[%s2700 + $0x78] sm:$0xff] %vm1622, %v2844
          %2861 = vst.msk [vmem:[%s2443] sm:$0xff] %vm1622, %v2508
          %2862 = vst.msk [vmem:[%s2443 + $0x8] sm:$0xff] %vm1622, %v2509
          %2863 = vst.msk [vmem:[%s2443 + $0x10] sm:$0xff] %vm1622, %v2510
          %2864 = vst.msk [vmem:[%s2443 + $0x18] sm:$0xff] %vm1622, %v2511
          %2865 = vst.msk [vmem:[%s2443 + $0x20] sm:$0xff] %vm1622, %v2512
          %2866 = vst.msk [vmem:[%s2443 + $0x28] sm:$0xff] %vm1622, %v2513
          %2867 = vst.msk [vmem:[%s2443 + $0x30] sm:$0xff] %vm1622, %v2514
          %2868 = vst.msk [vmem:[%s2443 + $0x38] sm:$0xff] %vm1622, %v2515
          %2869 = vst.msk [vmem:[%s2443 + $0x40] sm:$0xff] %vm1622, %v2516
          %2870 = vst.msk [vmem:[%s2443 + $0x48] sm:$0xff] %vm1622, %v2517
          %2871 = vst.msk [vmem:[%s2443 + $0x50] sm:$0xff] %vm1622, %v2518
          %2872 = vst.msk [vmem:[%s2443 + $0x58] sm:$0xff] %vm1622, %v2519
          %2873 = vst.msk [vmem:[%s2443 + $0x60] sm:$0xff] %vm1622, %v2520
          %2874 = vst.msk [vmem:[%s2443 + $0x68] sm:$0xff] %vm1622, %v2521
          %2875 = vst.msk [vmem:[%s2443 + $0x70] sm:$0xff] %vm1622, %v2522
          %2876 = vst.msk [vmem:[%s2443 + $0x78] sm:$0xff] %vm1622, %v2523
          %v2877 = vld [vmem:[#allocation2 + $0x18] sm:$0xff]
          %v2878 = vld [vmem:[#allocation2 + $0x38] sm:$0xff]
          %v2879 = vld [vmem:[#allocation2 + $0x58] sm:$0xff]
          %v2880 = vld [vmem:[#allocation2 + $0x78] sm:$0xff]
          %v2881 = vld [vmem:[#allocation2 + $0x98] sm:$0xff]
          %v2882 = vld [vmem:[#allocation2 + $0xb8] sm:$0xff]
          %v2883 = vld [vmem:[#allocation2 + $0xd8] sm:$0xff]
          %v2884 = vld [vmem:[#allocation2 + $0xf8] sm:$0xff]
          %v2885 = vld [vmem:[#allocation2 + $0x118] sm:$0xff]
          %v2886 = vld [vmem:[#allocation2 + $0x138] sm:$0xff]
          %v2887 = vld [vmem:[#allocation2 + $0x158] sm:$0xff]
          %v2888 = vld [vmem:[#allocation2 + $0x178] sm:$0xff]
          %v2889 = vld [vmem:[#allocation2 + $0x198] sm:$0xff]
          %v2890 = vld [vmem:[#allocation2 + $0x1b8] sm:$0xff]
          %v2891 = vld [vmem:[#allocation2 + $0x1d8] sm:$0xff]
          %v2892 = vld [vmem:[#allocation2 + $0x1f8] sm:$0xff]
          %2893 = vmatprep.subr.mxu0 0.0
          %2894 = vmatpush1.xpose.msra.mxu0 %v1010
          %2895 = vmatprep.subr.mxu0 0.0
          %2896 = vmatpush1.xpose.msra.mxu0 %v1011
          %2897 = vmatprep.subr.mxu0 0.0
          %2898 = vmatpush1.xpose.msra.mxu0 %v1012
          %2899 = vmatprep.subr.mxu0 0.0
          %2900 = vmatpush1.xpose.msra.mxu0 %v1013
          %2901 = vmatprep.subr.mxu0 0.0
          %2902 = vmatpush1.xpose.msra.mxu0 %v1014
          %2903 = vmatprep.subr.mxu0 0.0
          %2904 = vmatpush1.xpose.msra.mxu0 %v1015
          %2905 = vmatprep.subr.mxu0 0.0
          %2906 = vmatpush1.xpose.msra.mxu0 %v1016
          %2907 = vmatprep.subr.mxu0 0.0
          %2908 = vmatpush1.xpose.msra.mxu0 %v1017
          %2909 = vmatprep.subr.mxu0 0.0
          %2910 = vmatpush1.xpose.msra.mxu0 %v1018
          %2911 = vmatprep.subr.mxu0 0.0
          %2912 = vmatpush1.xpose.msra.mxu0 %v1019
          %2913 = vmatprep.subr.mxu0 0.0
          %2914 = vmatpush1.xpose.msra.mxu0 %v1020
          %2915 = vmatprep.subr.mxu0 0.0
          %2916 = vmatpush1.xpose.msra.mxu0 %v1021
          %2917 = vmatprep.subr.mxu0 0.0
          %2918 = vmatpush1.xpose.msra.mxu0 %v1022
          %2919 = vmatprep.subr.mxu0 0.0
          %2920 = vmatpush1.xpose.msra.mxu0 %v1023
          %2921 = vmatprep.subr.mxu0 0.0
          %2922 = vmatpush1.xpose.msra.mxu0 %v1024
          %2923 = vmatprep.subr.mxu0 0.0
          %2924 = vmatpush1.xpose.msra.mxu0 %v1025
          %2925 = vmatprep.subr.mxu0 0.0
          %2926 = vmatpush1.xpose.msra.mxu0 %v1026
          %2927 = vmatprep.subr.mxu0 0.0
          %2928 = vmatpush1.xpose.msra.mxu0 %v1027
          %2929 = vmatprep.subr.mxu0 0.0
          %2930 = vmatpush1.xpose.msra.mxu0 %v1028
          %2931 = vmatprep.subr.mxu0 0.0
          %2932 = vmatpush1.xpose.msra.mxu0 %v1029
          %2933 = vmatprep.subr.mxu0 0.0
          %2934 = vmatpush1.xpose.msra.mxu0 %v1030
          %2935 = vmatprep.subr.mxu0 0.0
          %2936 = vmatpush1.xpose.msra.mxu0 %v1031
          %2937 = vmatprep.subr.mxu0 0.0
          %2938 = vmatpush1.xpose.msra.mxu0 %v1032
          %2939 = vmatprep.subr.mxu0 0.0
          %2940 = vmatpush1.xpose.msra.mxu0 %v1033
          %2941 = vmatprep.subr.mxu0 0.0
          %2942 = vmatpush1.xpose.msra.mxu0 %v1034
          %2943 = vmatprep.subr.mxu0 0.0
          %2944 = vmatpush1.xpose.msra.mxu0 %v1035
          %2945 = vmatprep.subr.mxu0 0.0
          %2946 = vmatpush1.xpose.msra.mxu0 %v1036
          %2947 = vmatprep.subr.mxu0 0.0
          %2948 = vmatpush1.xpose.msra.mxu0 %v1037
          %2949 = vmatprep.subr.mxu0 0.0
          %2950 = vmatpush1.xpose.msra.mxu0 %v1038
          %2951 = vmatprep.subr.mxu0 0.0
          %2952 = vmatpush1.xpose.msra.mxu0 %v1039
          %2953 = vmatprep.subr.mxu0 0.0
          %2954 = vmatpush1.xpose.msra.mxu0 %v1040
          %2955 = vmatprep.subr.mxu0 0.0
          %2956 = vmatpush1.xpose.msra.mxu0 %v1041
          %2957 = vmatprep.mubr.f32.mxu0 0.0
          %2958 = vmatmul.mubr.f32.gmra.mrb[0].mxu0 %v2877
          %v2959 = vpop.f32.mrb[0].mxu0
          %v2960 = vadd.f32 0.0, %v2959
          %v2961 = vpop.f32.mrb[0].mxu0
          %v2962 = vadd.f32 0.0, %v2961
          %2963 = vmatprep.mubr.f32.mxu0 0.0
          %2964 = vmatmul.mubr.f32.gmra.mrb[0].mxu0 %v2878
          %v2965 = vpop.f32.mrb[0].mxu0
          %v2966 = vadd.f32 0.0, %v2965
          %v2967 = vpop.f32.mrb[0].mxu0
          %v2968 = vadd.f32 0.0, %v2967
          %2969 = vmatprep.mubr.f32.mxu0 0.0
          %2970 = vmatmul.mubr.f32.gmra.mrb[0].mxu0 %v2879
          %v2971 = vpop.f32.mrb[0].mxu0
          %v2972 = vadd.f32 0.0, %v2971
          %v2973 = vpop.f32.mrb[0].mxu0
          %v2974 = vadd.f32 0.0, %v2973
          %2975 = vmatprep.mubr.f32.mxu0 0.0
          %2976 = vmatmul.mubr.f32.gmra.mrb[0].mxu0 %v2880
          %v2977 = vpop.f32.mrb[0].mxu0
          %v2978 = vadd.f32 0.0, %v2977
          %v2979 = vpop.f32.mrb[0].mxu0
          %v2980 = vadd.f32 0.0, %v2979
          %2981 = vmatprep.mubr.f32.mxu0 0.0
          %2982 = vmatmul.mubr.f32.gmra.mrb[0].mxu0 %v2881
          %v2983 = vpop.f32.mrb[0].mxu0
          %v2984 = vadd.f32 0.0, %v2983
          %v2985 = vpop.f32.mrb[0].mxu0
          %v2986 = vadd.f32 0.0, %v2985
          %2987 = vmatprep.mubr.f32.mxu0 0.0
          %2988 = vmatmul.mubr.f32.gmra.mrb[0].mxu0 %v2882
          %v2989 = vpop.f32.mrb[0].mxu0
          %v2990 = vadd.f32 0.0, %v2989
          %v2991 = vpop.f32.mrb[0].mxu0
          %v2992 = vadd.f32 0.0, %v2991
          %2993 = vmatprep.mubr.f32.mxu0 0.0
          %2994 = vmatmul.mubr.f32.gmra.mrb[0].mxu0 %v2883
          %v2995 = vpop.f32.mrb[0].mxu0
          %v2996 = vadd.f32 0.0, %v2995
          %v2997 = vpop.f32.mrb[0].mxu0
          %v2998 = vadd.f32 0.0, %v2997
          %2999 = vmatprep.mubr.f32.mxu0 0.0
          %3000 = vmatmul.mubr.f32.gmra.mrb[0].mxu0 %v2884
          %v3001 = vpop.f32.mrb[0].mxu0
          %v3002 = vadd.f32 0.0, %v3001
          %v3003 = vpop.f32.mrb[0].mxu0
          %v3004 = vadd.f32 0.0, %v3003
          %3005 = vmatprep.mubr.f32.mxu0 0.0
          %3006 = vmatmul.mubr.f32.gmra.mrb[0].mxu0 %v2885
          %v3007 = vpop.f32.mrb[0].mxu0
          %v3008 = vadd.f32 0.0, %v3007
          %v3009 = vpop.f32.mrb[0].mxu0
          %v3010 = vadd.f32 0.0, %v3009
          %3011 = vmatprep.mubr.f32.mxu0 0.0
          %3012 = vmatmul.mubr.f32.gmra.mrb[0].mxu0 %v2886
          %v3013 = vpop.f32.mrb[0].mxu0
          %v3014 = vadd.f32 0.0, %v3013
          %v3015 = vpop.f32.mrb[0].mxu0
          %v3016 = vadd.f32 0.0, %v3015
          %3017 = vmatprep.mubr.f32.mxu0 0.0
          %3018 = vmatmul.mubr.f32.gmra.mrb[0].mxu0 %v2887
          %v3019 = vpop.f32.mrb[0].mxu0
          %v3020 = vadd.f32 0.0, %v3019
          %v3021 = vpop.f32.mrb[0].mxu0
          %v3022 = vadd.f32 0.0, %v3021
          %3023 = vmatprep.mubr.f32.mxu0 0.0
          %3024 = vmatmul.mubr.f32.gmra.mrb[0].mxu0 %v2888
          %v3025 = vpop.f32.mrb[0].mxu0
          %v3026 = vadd.f32 0.0, %v3025
          %v3027 = vpop.f32.mrb[0].mxu0
          %v3028 = vadd.f32 0.0, %v3027
          %3029 = vmatprep.mubr.f32.mxu0 0.0
          %3030 = vmatmul.mubr.f32.gmra.mrb[0].mxu0 %v2889
          %v3031 = vpop.f32.mrb[0].mxu0
          %v3032 = vadd.f32 0.0, %v3031
          %v3033 = vpop.f32.mrb[0].mxu0
          %v3034 = vadd.f32 0.0, %v3033
          %3035 = vmatprep.mubr.f32.mxu0 0.0
          %3036 = vmatmul.mubr.f32.gmra.mrb[0].mxu0 %v2890
          %v3037 = vpop.f32.mrb[0].mxu0
          %v3038 = vadd.f32 0.0, %v3037
          %v3039 = vpop.f32.mrb[0].mxu0
          %v3040 = vadd.f32 0.0, %v3039
          %3041 = vmatprep.mubr.f32.mxu0 0.0
          %3042 = vmatmul.mubr.f32.gmra.mrb[0].mxu0 %v2891
          %v3043 = vpop.f32.mrb[0].mxu0
          %v3044 = vadd.f32 0.0, %v3043
          %v3045 = vpop.f32.mrb[0].mxu0
          %v3046 = vadd.f32 0.0, %v3045
          %3047 = vmatprep.mubr.f32.mxu0 0.0
          %3048 = vmatmul.mubr.f32.gmra.mrb[0].mxu0 %v2892
          %v3049 = vpop.f32.mrb[0].mxu0
          %v3050 = vadd.f32 0.0, %v3049
          %v3051 = vpop.f32.mrb[0].mxu0
          %v3052 = vadd.f32 0.0, %v3051
          %3053 = vdwg.mxu0
          %s3054 = scalar_lea.vmem [#allocation3], 384
          %v3055 = vld [vmem:[%s3054] sm:$0xff]
          %v3056 = vld [vmem:[%s3054 + $0x8] sm:$0xff]
          %v3057 = vld [vmem:[%s3054 + $0x10] sm:$0xff]
          %v3058 = vld [vmem:[%s3054 + $0x18] sm:$0xff]
          %v3059 = vld [vmem:[%s3054 + $0x20] sm:$0xff]
          %v3060 = vld [vmem:[%s3054 + $0x28] sm:$0xff]
          %v3061 = vld [vmem:[%s3054 + $0x30] sm:$0xff]
          %v3062 = vld [vmem:[%s3054 + $0x38] sm:$0xff]
          %v3063 = vld [vmem:[%s3054 + $0x40] sm:$0xff]
          %v3064 = vld [vmem:[%s3054 + $0x48] sm:$0xff]
          %v3065 = vld [vmem:[%s3054 + $0x50] sm:$0xff]
          %v3066 = vld [vmem:[%s3054 + $0x58] sm:$0xff]
          %v3067 = vld [vmem:[%s3054 + $0x60] sm:$0xff]
          %v3068 = vld [vmem:[%s3054 + $0x68] sm:$0xff]
          %v3069 = vld [vmem:[%s3054 + $0x70] sm:$0xff]
          %v3070 = vld [vmem:[%s3054 + $0x78] sm:$0xff]
          %v3071 = vmax.f32 %v2960, %v2962
          %3072 = vmax.xlane.f32.xlu0 %v3071
          %v3073 = vpop.xlane.xlu0 %3072
          %v3074 = vmax.f32 %v2966, %v2968
          %3075 = vmax.xlane.f32.xlu0 %v3074
          %v3076 = vpop.xlane.xlu0 %3075
          %v3077 = vmax.f32 %v2972, %v2974
          %3078 = vmax.xlane.f32.xlu0 %v3077
          %v3079 = vpop.xlane.xlu0 %3078
          %v3080 = vmax.f32 %v2978, %v2980
          %3081 = vmax.xlane.f32.xlu0 %v3080
          %v3082 = vpop.xlane.xlu0 %3081
          %v3083 = vmax.f32 %v2984, %v2986
          %3084 = vmax.xlane.f32.xlu0 %v3083
          %v3085 = vpop.xlane.xlu0 %3084
          %v3086 = vmax.f32 %v2990, %v2992
          %3087 = vmax.xlane.f32.xlu0 %v3086
          %v3088 = vpop.xlane.xlu0 %3087
          %v3089 = vmax.f32 %v2996, %v2998
          %3090 = vmax.xlane.f32.xlu0 %v3089
          %v3091 = vpop.xlane.xlu0 %3090
          %v3092 = vmax.f32 %v3002, %v3004
          %3093 = vmax.xlane.f32.xlu0 %v3092
          %v3094 = vpop.xlane.xlu0 %3093
          %v3095 = vmax.f32 %v3008, %v3010
          %3096 = vmax.xlane.f32.xlu0 %v3095
          %v3097 = vpop.xlane.xlu0 %3096
          %v3098 = vmax.f32 %v3014, %v3016
          %3099 = vmax.xlane.f32.xlu0 %v3098
          %v3100 = vpop.xlane.xlu0 %3099
          %v3101 = vmax.f32 %v3020, %v3022
          %3102 = vmax.xlane.f32.xlu0 %v3101
          %v3103 = vpop.xlane.xlu0 %3102
          %v3104 = vmax.f32 %v3026, %v3028
          %3105 = vmax.xlane.f32.xlu0 %v3104
          %v3106 = vpop.xlane.xlu0 %3105
          %v3107 = vmax.f32 %v3032, %v3034
          %3108 = vmax.xlane.f32.xlu0 %v3107
          %v3109 = vpop.xlane.xlu0 %3108
          %v3110 = vmax.f32 %v3038, %v3040
          %3111 = vmax.xlane.f32.xlu0 %v3110
          %v3112 = vpop.xlane.xlu0 %3111
          %v3113 = vmax.f32 %v3044, %v3046
          %3114 = vmax.xlane.f32.xlu0 %v3113
          %v3115 = vpop.xlane.xlu0 %3114
          %v3116 = vmax.f32 %v3050, %v3052
          %3117 = vmax.xlane.f32.xlu0 %v3116
          %v3118 = vpop.xlane.xlu0 %3117
          %v3119 = vmax.f32 %v3055, %v3073
          %v3120 = vmax.f32 %v3056, %v3076
          %v3121 = vmax.f32 %v3057, %v3079
          %v3122 = vmax.f32 %v3058, %v3082
          %v3123 = vmax.f32 %v3059, %v3085
          %v3124 = vmax.f32 %v3060, %v3088
          %v3125 = vmax.f32 %v3061, %v3091
          %v3126 = vmax.f32 %v3062, %v3094
          %v3127 = vmax.f32 %v3063, %v3097
          %v3128 = vmax.f32 %v3064, %v3100
          %v3129 = vmax.f32 %v3065, %v3103
          %v3130 = vmax.f32 %v3066, %v3106
          %v3131 = vmax.f32 %v3067, %v3109
          %v3132 = vmax.f32 %v3068, %v3112
          %v3133 = vmax.f32 %v3069, %v3115
          %v3134 = vmax.f32 %v3070, %v3118
          %3136 = vset.pattern.permute.xlu0 0
          %3137 = vperm.xlu0 %3136, %v3119
          %v3138 = vpop.permute.xlu0 %3137
          %3141 = vset.pattern.permute.xlu0 0
          %3142 = vperm.xlu0 %3141, %v3120
          %v3143 = vpop.permute.xlu0 %3142
          %3146 = vset.pattern.permute.xlu0 0
          %3147 = vperm.xlu0 %3146, %v3121
          %v3148 = vpop.permute.xlu0 %3147
          %3151 = vset.pattern.permute.xlu0 0
          %3152 = vperm.xlu0 %3151, %v3122
          %v3153 = vpop.permute.xlu0 %3152
          %3156 = vset.pattern.permute.xlu0 0
          %3157 = vperm.xlu0 %3156, %v3123
          %v3158 = vpop.permute.xlu0 %3157
          %3161 = vset.pattern.permute.xlu0 0
          %3162 = vperm.xlu0 %3161, %v3124
          %v3163 = vpop.permute.xlu0 %3162
          %3166 = vset.pattern.permute.xlu0 0
          %3167 = vperm.xlu0 %3166, %v3125
          %v3168 = vpop.permute.xlu0 %3167
          %3171 = vset.pattern.permute.xlu0 0
          %3172 = vperm.xlu0 %3171, %v3126
          %v3173 = vpop.permute.xlu0 %3172
          %3176 = vset.pattern.permute.xlu0 0
          %3177 = vperm.xlu0 %3176, %v3127
          %v3178 = vpop.permute.xlu0 %3177
          %3181 = vset.pattern.permute.xlu0 0
          %3182 = vperm.xlu0 %3181, %v3128
          %v3183 = vpop.permute.xlu0 %3182
          %3186 = vset.pattern.permute.xlu0 0
          %3187 = vperm.xlu0 %3186, %v3129
          %v3188 = vpop.permute.xlu0 %3187
          %3191 = vset.pattern.permute.xlu0 0
          %3192 = vperm.xlu0 %3191, %v3130
          %v3193 = vpop.permute.xlu0 %3192
          %3196 = vset.pattern.permute.xlu0 0
          %3197 = vperm.xlu0 %3196, %v3131
          %v3198 = vpop.permute.xlu0 %3197
          %3201 = vset.pattern.permute.xlu0 0
          %3202 = vperm.xlu0 %3201, %v3132
          %v3203 = vpop.permute.xlu0 %3202
          %3206 = vset.pattern.permute.xlu0 0
          %3207 = vperm.xlu0 %3206, %v3133
          %v3208 = vpop.permute.xlu0 %3207
          %3211 = vset.pattern.permute.xlu0 0
          %3212 = vperm.xlu0 %3211, %v3134
          %v3213 = vpop.permute.xlu0 %3212
          %v3215 = vsub.f32 %v2960, %v3138
          %v3216 = vsub.f32 %v2962, %v3138
          %v3217 = vsub.f32 %v2966, %v3143
          %v3218 = vsub.f32 %v2968, %v3143
          %v3219 = vsub.f32 %v2972, %v3148
          %v3220 = vsub.f32 %v2974, %v3148
          %v3221 = vsub.f32 %v2978, %v3153
          %v3222 = vsub.f32 %v2980, %v3153
          %v3223 = vsub.f32 %v2984, %v3158
          %v3224 = vsub.f32 %v2986, %v3158
          %v3225 = vsub.f32 %v2990, %v3163
          %v3226 = vsub.f32 %v2992, %v3163
          %v3227 = vsub.f32 %v2996, %v3168
          %v3228 = vsub.f32 %v2998, %v3168
          %v3229 = vsub.f32 %v3002, %v3173
          %v3230 = vsub.f32 %v3004, %v3173
          %v3231 = vsub.f32 %v3008, %v3178
          %v3232 = vsub.f32 %v3010, %v3178
          %v3233 = vsub.f32 %v3014, %v3183
          %v3234 = vsub.f32 %v3016, %v3183
          %v3235 = vsub.f32 %v3020, %v3188
          %v3236 = vsub.f32 %v3022, %v3188
          %v3237 = vsub.f32 %v3026, %v3193
          %v3238 = vsub.f32 %v3028, %v3193
          %v3239 = vsub.f32 %v3032, %v3198
          %v3240 = vsub.f32 %v3034, %v3198
          %v3241 = vsub.f32 %v3038, %v3203
          %v3242 = vsub.f32 %v3040, %v3203
          %v3243 = vsub.f32 %v3044, %v3208
          %v3244 = vsub.f32 %v3046, %v3208
          %v3245 = vsub.f32 %v3050, %v3213
          %v3246 = vsub.f32 %v3052, %v3213
          %v3247 = vmul.f32 %v3215, 1.442695
          %v3248 = vpow.pop %v3247
          %v3249 = vmul.f32 %v3216, 1.442695
          %v3250 = vpow.pop %v3249
          %v3251 = vmul.f32 %v3217, 1.442695
          %v3252 = vpow.pop %v3251
          %v3253 = vmul.f32 %v3218, 1.442695
          %v3254 = vpow.pop %v3253
          %v3255 = vmul.f32 %v3219, 1.442695
          %v3256 = vpow.pop %v3255
          %v3257 = vmul.f32 %v3220, 1.442695
          %v3258 = vpow.pop %v3257
          %v3259 = vmul.f32 %v3221, 1.442695
          %v3260 = vpow.pop %v3259
          %v3261 = vmul.f32 %v3222, 1.442695
          %v3262 = vpow.pop %v3261
          %v3263 = vmul.f32 %v3223, 1.442695
          %v3264 = vpow.pop %v3263
          %v3265 = vmul.f32 %v3224, 1.442695
          %v3266 = vpow.pop %v3265
          %v3267 = vmul.f32 %v3225, 1.442695
          %v3268 = vpow.pop %v3267
          %v3269 = vmul.f32 %v3226, 1.442695
          %v3270 = vpow.pop %v3269
          %v3271 = vmul.f32 %v3227, 1.442695
          %v3272 = vpow.pop %v3271
          %v3273 = vmul.f32 %v3228, 1.442695
          %v3274 = vpow.pop %v3273
          %v3275 = vmul.f32 %v3229, 1.442695
          %v3276 = vpow.pop %v3275
          %v3277 = vmul.f32 %v3230, 1.442695
          %v3278 = vpow.pop %v3277
          %v3279 = vmul.f32 %v3231, 1.442695
          %v3280 = vpow.pop %v3279
          %v3281 = vmul.f32 %v3232, 1.442695
          %v3282 = vpow.pop %v3281
          %v3283 = vmul.f32 %v3233, 1.442695
          %v3284 = vpow.pop %v3283
          %v3285 = vmul.f32 %v3234, 1.442695
          %v3286 = vpow.pop %v3285
          %v3287 = vmul.f32 %v3235, 1.442695
          %v3288 = vpow.pop %v3287
          %v3289 = vmul.f32 %v3236, 1.442695
          %v3290 = vpow.pop %v3289
          %v3291 = vmul.f32 %v3237, 1.442695
          %v3292 = vpow.pop %v3291
          %v3293 = vmul.f32 %v3238, 1.442695
          %v3294 = vpow.pop %v3293
          %v3295 = vmul.f32 %v3239, 1.442695
          %v3296 = vpow.pop %v3295
          %v3297 = vmul.f32 %v3240, 1.442695
          %v3298 = vpow.pop %v3297
          %v3299 = vmul.f32 %v3241, 1.442695
          %v3300 = vpow.pop %v3299
          %v3301 = vmul.f32 %v3242, 1.442695
          %v3302 = vpow.pop %v3301
          %v3303 = vmul.f32 %v3243, 1.442695
          %v3304 = vpow.pop %v3303
          %v3305 = vmul.f32 %v3244, 1.442695
          %v3306 = vpow.pop %v3305
          %v3307 = vmul.f32 %v3245, 1.442695
          %v3308 = vpow.pop %v3307
          %v3309 = vmul.f32 %v3246, 1.442695
          %v3310 = vpow.pop %v3309
          %s3311 = scalar_lea.vmem [#allocation4], 384
          %v3312 = vld [vmem:[%s3311] sm:$0xff]
          %v3313 = vld [vmem:[%s3311 + $0x8] sm:$0xff]
          %v3314 = vld [vmem:[%s3311 + $0x10] sm:$0xff]
          %v3315 = vld [vmem:[%s3311 + $0x18] sm:$0xff]
          %v3316 = vld [vmem:[%s3311 + $0x20] sm:$0xff]
          %v3317 = vld [vmem:[%s3311 + $0x28] sm:$0xff]
          %v3318 = vld [vmem:[%s3311 + $0x30] sm:$0xff]
          %v3319 = vld [vmem:[%s3311 + $0x38] sm:$0xff]
          %v3320 = vld [vmem:[%s3311 + $0x40] sm:$0xff]
          %v3321 = vld [vmem:[%s3311 + $0x48] sm:$0xff]
          %v3322 = vld [vmem:[%s3311 + $0x50] sm:$0xff]
          %v3323 = vld [vmem:[%s3311 + $0x58] sm:$0xff]
          %v3324 = vld [vmem:[%s3311 + $0x60] sm:$0xff]
          %v3325 = vld [vmem:[%s3311 + $0x68] sm:$0xff]
          %v3326 = vld [vmem:[%s3311 + $0x70] sm:$0xff]
          %v3327 = vld [vmem:[%s3311 + $0x78] sm:$0xff]
          %v3328 = vsub.f32 %v3055, %v3119
          %v3329 = vsub.f32 %v3056, %v3120
          %v3330 = vsub.f32 %v3057, %v3121
          %v3331 = vsub.f32 %v3058, %v3122
          %v3332 = vsub.f32 %v3059, %v3123
          %v3333 = vsub.f32 %v3060, %v3124
          %v3334 = vsub.f32 %v3061, %v3125
          %v3335 = vsub.f32 %v3062, %v3126
          %v3336 = vsub.f32 %v3063, %v3127
          %v3337 = vsub.f32 %v3064, %v3128
          %v3338 = vsub.f32 %v3065, %v3129
          %v3339 = vsub.f32 %v3066, %v3130
          %v3340 = vsub.f32 %v3067, %v3131
          %v3341 = vsub.f32 %v3068, %v3132
          %v3342 = vsub.f32 %v3069, %v3133
          %v3343 = vsub.f32 %v3070, %v3134
          %v3344 = vmul.f32 %v3328, 1.442695
          %v3345 = vpow.pop %v3344
          %v3346 = vmul.f32 %v3329, 1.442695
          %v3347 = vpow.pop %v3346
          %v3348 = vmul.f32 %v3330, 1.442695
          %v3349 = vpow.pop %v3348
          %v3350 = vmul.f32 %v3331, 1.442695
          %v3351 = vpow.pop %v3350
          %v3352 = vmul.f32 %v3332, 1.442695
          %v3353 = vpow.pop %v3352
          %v3354 = vmul.f32 %v3333, 1.442695
          %v3355 = vpow.pop %v3354
          %v3356 = vmul.f32 %v3334, 1.442695
          %v3357 = vpow.pop %v3356
          %v3358 = vmul.f32 %v3335, 1.442695
          %v3359 = vpow.pop %v3358
          %v3360 = vmul.f32 %v3336, 1.442695
          %v3361 = vpow.pop %v3360
          %v3362 = vmul.f32 %v3337, 1.442695
          %v3363 = vpow.pop %v3362
          %v3364 = vmul.f32 %v3338, 1.442695
          %v3365 = vpow.pop %v3364
          %v3366 = vmul.f32 %v3339, 1.442695
          %v3367 = vpow.pop %v3366
          %v3368 = vmul.f32 %v3340, 1.442695
          %v3369 = vpow.pop %v3368
          %v3370 = vmul.f32 %v3341, 1.442695
          %v3371 = vpow.pop %v3370
          %v3372 = vmul.f32 %v3342, 1.442695
          %v3373 = vpow.pop %v3372
          %v3374 = vmul.f32 %v3343, 1.442695
          %v3375 = vpow.pop %v3374
          %v3376 = vmul.f32 %v3312, %v3345
          %v3377 = vmul.f32 %v3313, %v3347
          %v3378 = vmul.f32 %v3314, %v3349
          %v3379 = vmul.f32 %v3315, %v3351
          %v3380 = vmul.f32 %v3316, %v3353
          %v3381 = vmul.f32 %v3317, %v3355
          %v3382 = vmul.f32 %v3318, %v3357
          %v3383 = vmul.f32 %v3319, %v3359
          %v3384 = vmul.f32 %v3320, %v3361
          %v3385 = vmul.f32 %v3321, %v3363
          %v3386 = vmul.f32 %v3322, %v3365
          %v3387 = vmul.f32 %v3323, %v3367
          %v3388 = vmul.f32 %v3324, %v3369
          %v3389 = vmul.f32 %v3325, %v3371
          %v3390 = vmul.f32 %v3326, %v3373
          %v3391 = vmul.f32 %v3327, %v3375
          %v3392 = vadd.f32 %v3248, %v3250
          %3393 = vadd.xlane.f32.xlu0 %v3392
          %v3394 = vpop.xlane.xlu0 %3393
          %v3395 = vadd.f32 %v3252, %v3254
          %3396 = vadd.xlane.f32.xlu0 %v3395
          %v3397 = vpop.xlane.xlu0 %3396
          %v3398 = vadd.f32 %v3256, %v3258
          %3399 = vadd.xlane.f32.xlu0 %v3398
          %v3400 = vpop.xlane.xlu0 %3399
          %v3401 = vadd.f32 %v3260, %v3262
          %3402 = vadd.xlane.f32.xlu0 %v3401
          %v3403 = vpop.xlane.xlu0 %3402
          %v3404 = vadd.f32 %v3264, %v3266
          %3405 = vadd.xlane.f32.xlu0 %v3404
          %v3406 = vpop.xlane.xlu0 %3405
          %v3407 = vadd.f32 %v3268, %v3270
          %3408 = vadd.xlane.f32.xlu0 %v3407
          %v3409 = vpop.xlane.xlu0 %3408
          %v3410 = vadd.f32 %v3272, %v3274
          %3411 = vadd.xlane.f32.xlu0 %v3410
          %v3412 = vpop.xlane.xlu0 %3411
          %v3413 = vadd.f32 %v3276, %v3278
          %3414 = vadd.xlane.f32.xlu0 %v3413
          %v3415 = vpop.xlane.xlu0 %3414
          %v3416 = vadd.f32 %v3280, %v3282
          %3417 = vadd.xlane.f32.xlu0 %v3416
          %v3418 = vpop.xlane.xlu0 %3417
          %v3419 = vadd.f32 %v3284, %v3286
          %3420 = vadd.xlane.f32.xlu0 %v3419
          %v3421 = vpop.xlane.xlu0 %3420
          %v3422 = vadd.f32 %v3288, %v3290
          %3423 = vadd.xlane.f32.xlu0 %v3422
          %v3424 = vpop.xlane.xlu0 %3423
          %v3425 = vadd.f32 %v3292, %v3294
          %3426 = vadd.xlane.f32.xlu0 %v3425
          %v3427 = vpop.xlane.xlu0 %3426
          %v3428 = vadd.f32 %v3296, %v3298
          %3429 = vadd.xlane.f32.xlu0 %v3428
          %v3430 = vpop.xlane.xlu0 %3429
          %v3431 = vadd.f32 %v3300, %v3302
          %3432 = vadd.xlane.f32.xlu0 %v3431
          %v3433 = vpop.xlane.xlu0 %3432
          %v3434 = vadd.f32 %v3304, %v3306
          %3435 = vadd.xlane.f32.xlu0 %v3434
          %v3436 = vpop.xlane.xlu0 %3435
          %v3437 = vadd.f32 %v3308, %v3310
          %3438 = vadd.xlane.f32.xlu0 %v3437
          %v3439 = vpop.xlane.xlu0 %3438
          %v3440 = vadd.f32 %v3376, %v3394
          %v3441 = vadd.f32 %v3377, %v3397
          %v3442 = vadd.f32 %v3378, %v3400
          %v3443 = vadd.f32 %v3379, %v3403
          %v3444 = vadd.f32 %v3380, %v3406
          %v3445 = vadd.f32 %v3381, %v3409
          %v3446 = vadd.f32 %v3382, %v3412
          %v3447 = vadd.f32 %v3383, %v3415
          %v3448 = vadd.f32 %v3384, %v3418
          %v3449 = vadd.f32 %v3385, %v3421
          %v3450 = vadd.f32 %v3386, %v3424
          %v3451 = vadd.f32 %v3387, %v3427
          %v3452 = vadd.f32 %v3388, %v3430
          %v3453 = vadd.f32 %v3389, %v3433
          %v3454 = vadd.f32 %v3390, %v3436
          %v3455 = vadd.f32 %v3391, %v3439
          %3456 = vst.msk [vmem:[%s3311] sm:$0xff] %vm1622, %v3440
          %3457 = vst.msk [vmem:[%s3311 + $0x8] sm:$0xff] %vm1622, %v3441
          %3458 = vst.msk [vmem:[%s3311 + $0x10] sm:$0xff] %vm1622, %v3442
          %3459 = vst.msk [vmem:[%s3311 + $0x18] sm:$0xff] %vm1622, %v3443
          %3460 = vst.msk [vmem:[%s3311 + $0x20] sm:$0xff] %vm1622, %v3444
          %3461 = vst.msk [vmem:[%s3311 + $0x28] sm:$0xff] %vm1622, %v3445
          %3462 = vst.msk [vmem:[%s3311 + $0x30] sm:$0xff] %vm1622, %v3446
          %3463 = vst.msk [vmem:[%s3311 + $0x38] sm:$0xff] %vm1622, %v3447
          %3464 = vst.msk [vmem:[%s3311 + $0x40] sm:$0xff] %vm1622, %v3448
          %3465 = vst.msk [vmem:[%s3311 + $0x48] sm:$0xff] %vm1622, %v3449
          %3466 = vst.msk [vmem:[%s3311 + $0x50] sm:$0xff] %vm1622, %v3450
          %3467 = vst.msk [vmem:[%s3311 + $0x58] sm:$0xff] %vm1622, %v3451
          %3468 = vst.msk [vmem:[%s3311 + $0x60] sm:$0xff] %vm1622, %v3452
          %3469 = vst.msk [vmem:[%s3311 + $0x68] sm:$0xff] %vm1622, %v3453
          %3470 = vst.msk [vmem:[%s3311 + $0x70] sm:$0xff] %vm1622, %v3454
          %3471 = vst.msk [vmem:[%s3311 + $0x78] sm:$0xff] %vm1622, %v3455
          %3472 = vst.msk [vmem:[%s3054] sm:$0xff] %vm1622, %v3119
          %3473 = vst.msk [vmem:[%s3054 + $0x8] sm:$0xff] %vm1622, %v3120
          %3474 = vst.msk [vmem:[%s3054 + $0x10] sm:$0xff] %vm1622, %v3121
          %3475 = vst.msk [vmem:[%s3054 + $0x18] sm:$0xff] %vm1622, %v3122
          %3476 = vst.msk [vmem:[%s3054 + $0x20] sm:$0xff] %vm1622, %v3123
          %3477 = vst.msk [vmem:[%s3054 + $0x28] sm:$0xff] %vm1622, %v3124
          %3478 = vst.msk [vmem:[%s3054 + $0x30] sm:$0xff] %vm1622, %v3125
          %3479 = vst.msk [vmem:[%s3054 + $0x38] sm:$0xff] %vm1622, %v3126
          %3480 = vst.msk [vmem:[%s3054 + $0x40] sm:$0xff] %vm1622, %v3127
          %3481 = vst.msk [vmem:[%s3054 + $0x48] sm:$0xff] %vm1622, %v3128
          %3482 = vst.msk [vmem:[%s3054 + $0x50] sm:$0xff] %vm1622, %v3129
          %3483 = vst.msk [vmem:[%s3054 + $0x58] sm:$0xff] %vm1622, %v3130
          %3484 = vst.msk [vmem:[%s3054 + $0x60] sm:$0xff] %vm1622, %v3131
          %3485 = vst.msk [vmem:[%s3054 + $0x68] sm:$0xff] %vm1622, %v3132
          %3486 = vst.msk [vmem:[%s3054 + $0x70] sm:$0xff] %vm1622, %v3133
          %3487 = vst.msk [vmem:[%s3054 + $0x78] sm:$0xff] %vm1622, %v3134
        $region60: #{tpu_custom_call.1} parent=39 // pred_fallthru
          _
        %p3488 = scmp.eq.s32.totalorder %s29, 1
        %p3489 = pnand %p3488, %p324
        %p3490 = pneg %p3489
        // Predicated region
        $region61: #{tpu_custom_call.1} parent=39 // pred_check
          _
        $region62: #{tpu_custom_call.1} parent=39 // pred_check_branch
          %3492 = sbr.rel (%p3489) target = $region64
        $region63: #{tpu_custom_call.1} parent=39 // pred_region
          %v3493 = vld [vmem:[%s273] sm:$0xff]
          %v3494 = vld [vmem:[%s273 + $0x8] sm:$0xff]
          %v3495 = vld [vmem:[%s273 + $0x10] sm:$0xff]
          %v3496 = vld [vmem:[%s273 + $0x18] sm:$0xff]
          %v3497 = vld [vmem:[%s273 + $0x20] sm:$0xff]
          %v3498 = vld [vmem:[%s273 + $0x28] sm:$0xff]
          %v3499 = vld [vmem:[%s273 + $0x30] sm:$0xff]
          %v3500 = vld [vmem:[%s273 + $0x38] sm:$0xff]
          %v3501 = vld [vmem:[%s273 + $0x40] sm:$0xff]
          %v3502 = vld [vmem:[%s273 + $0x48] sm:$0xff]
          %v3503 = vld [vmem:[%s273 + $0x50] sm:$0xff]
          %v3504 = vld [vmem:[%s273 + $0x58] sm:$0xff]
          %v3505 = vld [vmem:[%s273 + $0x60] sm:$0xff]
          %v3506 = vld [vmem:[%s273 + $0x68] sm:$0xff]
          %v3507 = vld [vmem:[%s273 + $0x70] sm:$0xff]
          %v3508 = vld [vmem:[%s273 + $0x78] sm:$0xff]
          %v3509 = vld [vmem:[%s3] sm:$0xf]
          %3510 = vmatprep.subr.mxu0 0.0
          %3511 = vmatpush1.xpose.msra.mxu0 %v3509
          %3512 = vmatprep.subr.mxu0 0.0
          %3513 = vmatpush1.xpose.msra.mxu0 0.0
          %3514 = vmatprep.subr.mxu0 0.0
          %3515 = vmatpush1.xpose.msra.mxu0 0.0
          %3516 = vmatprep.subr.mxu0 0.0
          %3517 = vmatpush1.xpose.msra.mxu0 0.0
          %3518 = vmatprep.subr.mxu0 0.0
          %3519 = vmatpush1.xpose.msra.mxu0 0.0
          %3520 = vmatprep.subr.mxu0 0.0
          %3521 = vmatpush1.xpose.msra.mxu0 0.0
          %3522 = vmatprep.subr.mxu0 0.0
          %3523 = vmatpush1.xpose.msra.mxu0 0.0
          %3524 = vmatprep.subr.mxu0 0.0
          %3525 = vmatpush1.xpose.msra.mxu0 0.0
          %3526 = vmatprep.subr.mxu0 0.0
          %3527 = vmatpush1.xpose.msra.mxu0 0.0
          %3528 = vmatprep.subr.mxu0 0.0
          %3529 = vmatpush1.xpose.msra.mxu0 0.0
          %3530 = vmatprep.subr.mxu0 0.0
          %3531 = vmatpush1.xpose.msra.mxu0 0.0
          %3532 = vmatprep.subr.mxu0 0.0
          %3533 = vmatpush1.xpose.msra.mxu0 0.0
          %3534 = vmatprep.subr.mxu0 0.0
          %3535 = vmatpush1.xpose.msra.mxu0 0.0
          %3536 = vmatprep.subr.mxu0 0.0
          %3537 = vmatpush1.xpose.msra.mxu0 0.0
          %3538 = vmatprep.subr.mxu0 0.0
          %3539 = vmatpush1.xpose.msra.mxu0 0.0
          %3540 = vmatprep.subr.mxu0 0.0
          %3541 = vmatpush1.xpose.msra.mxu0 0.0
          %3542 = vmatprep.subr.mxu0 0.0
          %3543 = vmatpush1.xpose.msra.mxu0 0.0
          %3544 = vmatprep.subr.mxu0 0.0
          %3545 = vmatpush1.xpose.msra.mxu0 0.0
          %3546 = vmatprep.subr.mxu0 0.0
          %3547 = vmatpush1.xpose.msra.mxu0 0.0
          %3548 = vmatprep.subr.mxu0 0.0
          %3549 = vmatpush1.xpose.msra.mxu0 0.0
          %3550 = vmatprep.subr.mxu0 0.0
          %3551 = vmatpush1.xpose.msra.mxu0 0.0
          %3552 = vmatprep.subr.mxu0 0.0
          %3553 = vmatpush1.xpose.msra.mxu0 0.0
          %3554 = vmatprep.subr.mxu0 0.0
          %3555 = vmatpush1.xpose.msra.mxu0 0.0
          %3556 = vmatprep.subr.mxu0 0.0
          %3557 = vmatpush1.xpose.msra.mxu0 0.0
          %3558 = vmatprep.subr.mxu0 0.0
          %3559 = vmatpush1.xpose.msra.mxu0 0.0
          %3560 = vmatprep.subr.mxu0 0.0
          %3561 = vmatpush1.xpose.msra.mxu0 0.0
          %3562 = vmatprep.subr.mxu0 0.0
          %3563 = vmatpush1.xpose.msra.mxu0 0.0
          %3564 = vmatprep.subr.mxu0 0.0
          %3565 = vmatpush1.xpose.msra.mxu0 0.0
          %3566 = vmatprep.subr.mxu0 0.0
          %3567 = vmatpush1.xpose.msra.mxu0 0.0
          %3568 = vmatprep.subr.mxu0 0.0
          %3569 = vmatpush1.xpose.msra.mxu0 0.0
          %3570 = vmatprep.subr.mxu0 0.0
          %3571 = vmatpush1.xpose.msra.mxu0 0.0
          %3572 = vmatprep.subr.mxu0 0.0
          %3573 = vmatpush1.xpose.msra.mxu0 0.0
          %3574 = vmatprep.mubr.f32.mxu0 0.0
          %3575 = vmatmul.mubr.f32.gmra.mrb[0].mxu0 %v3493
          %v3576 = vpop.f32.mrb[0].mxu0
          %v3577 = vadd.f32 0.0, %v3576
          %v3578 = vpop.f32.mrb[0].mxu0
          %3579 = vmatprep.mubr.f32.mxu0 0.0
          %3580 = vmatmul.mubr.f32.gmra.mrb[0].mxu0 %v3494
          %v3581 = vpop.f32.mrb[0].mxu0
          %v3582 = vadd.f32 0.0, %v3581
          %v3583 = vpop.f32.mrb[0].mxu0
          %3584 = vmatprep.mubr.f32.mxu0 0.0
          %3585 = vmatmul.mubr.f32.gmra.mrb[0].mxu0 %v3495
          %v3586 = vpop.f32.mrb[0].mxu0
          %v3587 = vadd.f32 0.0, %v3586
          %v3588 = vpop.f32.mrb[0].mxu0
          %3589 = vmatprep.mubr.f32.mxu0 0.0
          %3590 = vmatmul.mubr.f32.gmra.mrb[0].mxu0 %v3496
          %v3591 = vpop.f32.mrb[0].mxu0
          %v3592 = vadd.f32 0.0, %v3591
          %v3593 = vpop.f32.mrb[0].mxu0
          %3594 = vmatprep.mubr.f32.mxu0 0.0
          %3595 = vmatmul.mubr.f32.gmra.mrb[0].mxu0 %v3497
          %v3596 = vpop.f32.mrb[0].mxu0
          %v3597 = vadd.f32 0.0, %v3596
          %v3598 = vpop.f32.mrb[0].mxu0
          %3599 = vmatprep.mubr.f32.mxu0 0.0
          %3600 = vmatmul.mubr.f32.gmra.mrb[0].mxu0 %v3498
          %v3601 = vpop.f32.mrb[0].mxu0
          %v3602 = vadd.f32 0.0, %v3601
          %v3603 = vpop.f32.mrb[0].mxu0
          %3604 = vmatprep.mubr.f32.mxu0 0.0
          %3605 = vmatmul.mubr.f32.gmra.mrb[0].mxu0 %v3499
          %v3606 = vpop.f32.mrb[0].mxu0
          %v3607 = vadd.f32 0.0, %v3606
          %v3608 = vpop.f32.mrb[0].mxu0
          %3609 = vmatprep.mubr.f32.mxu0 0.0
          %3610 = vmatmul.mubr.f32.gmra.mrb[0].mxu0 %v3500
          %v3611 = vpop.f32.mrb[0].mxu0
          %v3612 = vadd.f32 0.0, %v3611
          %v3613 = vpop.f32.mrb[0].mxu0
          %3614 = vmatprep.mubr.f32.mxu0 0.0
          %3615 = vmatmul.mubr.f32.gmra.mrb[0].mxu0 %v3501
          %v3616 = vpop.f32.mrb[0].mxu0
          %v3617 = vadd.f32 0.0, %v3616
          %v3618 = vpop.f32.mrb[0].mxu0
          %3619 = vmatprep.mubr.f32.mxu0 0.0
          %3620 = vmatmul.mubr.f32.gmra.mrb[0].mxu0 %v3502
          %v3621 = vpop.f32.mrb[0].mxu0
          %v3622 = vadd.f32 0.0, %v3621
          %v3623 = vpop.f32.mrb[0].mxu0
          %3624 = vmatprep.mubr.f32.mxu0 0.0
          %3625 = vmatmul.mubr.f32.gmra.mrb[0].mxu0 %v3503
          %v3626 = vpop.f32.mrb[0].mxu0
          %v3627 = vadd.f32 0.0, %v3626
          %v3628 = vpop.f32.mrb[0].mxu0
          %3629 = vmatprep.mubr.f32.mxu0 0.0
          %3630 = vmatmul.mubr.f32.gmra.mrb[0].mxu0 %v3504
          %v3631 = vpop.f32.mrb[0].mxu0
          %v3632 = vadd.f32 0.0, %v3631
          %v3633 = vpop.f32.mrb[0].mxu0
          %3634 = vmatprep.mubr.f32.mxu0 0.0
          %3635 = vmatmul.mubr.f32.gmra.mrb[0].mxu0 %v3505
          %v3636 = vpop.f32.mrb[0].mxu0
          %v3637 = vadd.f32 0.0, %v3636
          %v3638 = vpop.f32.mrb[0].mxu0
          %3639 = vmatprep.mubr.f32.mxu0 0.0
          %3640 = vmatmul.mubr.f32.gmra.mrb[0].mxu0 %v3506
          %v3641 = vpop.f32.mrb[0].mxu0
          %v3642 = vadd.f32 0.0, %v3641
          %v3643 = vpop.f32.mrb[0].mxu0
          %3644 = vmatprep.mubr.f32.mxu0 0.0
          %3645 = vmatmul.mubr.f32.gmra.mrb[0].mxu0 %v3507
          %v3646 = vpop.f32.mrb[0].mxu0
          %v3647 = vadd.f32 0.0, %v3646
          %v3648 = vpop.f32.mrb[0].mxu0
          %3649 = vmatprep.mubr.f32.mxu0 0.0
          %3650 = vmatmul.mubr.f32.gmra.mrb[0].mxu0 %v3508
          %v3651 = vpop.f32.mrb[0].mxu0
          %v3652 = vadd.f32 0.0, %v3651
          %v3653 = vpop.f32.mrb[0].mxu0
          %3654 = vdwg.mxu0
          %vm3655 = vcmask 31744
          %v3656 = vsel %vm3655, %v3577, -inf
          %3657 = vmax.xlane.f32.xlu0 %v3656
          %v3658 = vpop.xlane.xlu0 %3657
          %v3659 = vsel %vm3655, %v3582, -inf
          %3660 = vmax.xlane.f32.xlu0 %v3659
          %v3661 = vpop.xlane.xlu0 %3660
          %v3662 = vsel %vm3655, %v3587, -inf
          %3663 = vmax.xlane.f32.xlu0 %v3662
          %v3664 = vpop.xlane.xlu0 %3663
          %v3665 = vsel %vm3655, %v3592, -inf
          %3666 = vmax.xlane.f32.xlu0 %v3665
          %v3667 = vpop.xlane.xlu0 %3666
          %v3668 = vsel %vm3655, %v3597, -inf
          %3669 = vmax.xlane.f32.xlu0 %v3668
          %v3670 = vpop.xlane.xlu0 %3669
          %v3671 = vsel %vm3655, %v3602, -inf
          %3672 = vmax.xlane.f32.xlu0 %v3671
          %v3673 = vpop.xlane.xlu0 %3672
          %v3674 = vsel %vm3655, %v3607, -inf
          %3675 = vmax.xlane.f32.xlu0 %v3674
          %v3676 = vpop.xlane.xlu0 %3675
          %v3677 = vsel %vm3655, %v3612, -inf
          %3678 = vmax.xlane.f32.xlu0 %v3677
          %v3679 = vpop.xlane.xlu0 %3678
          %v3680 = vsel %vm3655, %v3617, -inf
          %3681 = vmax.xlane.f32.xlu0 %v3680
          %v3682 = vpop.xlane.xlu0 %3681
          %v3683 = vsel %vm3655, %v3622, -inf
          %3684 = vmax.xlane.f32.xlu0 %v3683
          %v3685 = vpop.xlane.xlu0 %3684
          %v3686 = vsel %vm3655, %v3627, -inf
          %3687 = vmax.xlane.f32.xlu0 %v3686
          %v3688 = vpop.xlane.xlu0 %3687
          %v3689 = vsel %vm3655, %v3632, -inf
          %3690 = vmax.xlane.f32.xlu0 %v3689
          %v3691 = vpop.xlane.xlu0 %3690
          %v3692 = vsel %vm3655, %v3637, -inf
          %3693 = vmax.xlane.f32.xlu0 %v3692
          %v3694 = vpop.xlane.xlu0 %3693
          %v3695 = vsel %vm3655, %v3642, -inf
          %3696 = vmax.xlane.f32.xlu0 %v3695
          %v3697 = vpop.xlane.xlu0 %3696
          %v3698 = vsel %vm3655, %v3647, -inf
          %3699 = vmax.xlane.f32.xlu0 %v3698
          %v3700 = vpop.xlane.xlu0 %3699
          %v3701 = vsel %vm3655, %v3652, -inf
          %3702 = vmax.xlane.f32.xlu0 %v3701
          %v3703 = vpop.xlane.xlu0 %3702
          %v3704 = vsub.f32 %v3577, %v3658
          %v3705 = vsub.f32 %v3582, %v3661
          %v3706 = vsub.f32 %v3587, %v3664
          %v3707 = vsub.f32 %v3592, %v3667
          %v3708 = vsub.f32 %v3597, %v3670
          %v3709 = vsub.f32 %v3602, %v3673
          %v3710 = vsub.f32 %v3607, %v3676
          %v3711 = vsub.f32 %v3612, %v3679
          %v3712 = vsub.f32 %v3617, %v3682
          %v3713 = vsub.f32 %v3622, %v3685
          %v3714 = vsub.f32 %v3627, %v3688
          %v3715 = vsub.f32 %v3632, %v3691
          %v3716 = vsub.f32 %v3637, %v3694
          %v3717 = vsub.f32 %v3642, %v3697
          %v3718 = vsub.f32 %v3647, %v3700
          %v3719 = vsub.f32 %v3652, %v3703
          %v3720 = vmul.f32 %v3704, 1.442695
          %v3721 = vpow.pop %v3720
          %v3722 = vmul.f32 %v3705, 1.442695
          %v3723 = vpow.pop %v3722
          %v3724 = vmul.f32 %v3706, 1.442695
          %v3725 = vpow.pop %v3724
          %v3726 = vmul.f32 %v3707, 1.442695
          %v3727 = vpow.pop %v3726
          %v3728 = vmul.f32 %v3708, 1.442695
          %v3729 = vpow.pop %v3728
          %v3730 = vmul.f32 %v3709, 1.442695
          %v3731 = vpow.pop %v3730
          %v3732 = vmul.f32 %v3710, 1.442695
          %v3733 = vpow.pop %v3732
          %v3734 = vmul.f32 %v3711, 1.442695
          %v3735 = vpow.pop %v3734
          %v3736 = vmul.f32 %v3712, 1.442695
          %v3737 = vpow.pop %v3736
          %v3738 = vmul.f32 %v3713, 1.442695
          %v3739 = vpow.pop %v3738
          %v3740 = vmul.f32 %v3714, 1.442695
          %v3741 = vpow.pop %v3740
          %v3742 = vmul.f32 %v3715, 1.442695
          %v3743 = vpow.pop %v3742
          %v3744 = vmul.f32 %v3716, 1.442695
          %v3745 = vpow.pop %v3744
          %v3746 = vmul.f32 %v3717, 1.442695
          %v3747 = vpow.pop %v3746
          %v3748 = vmul.f32 %v3718, 1.442695
          %v3749 = vpow.pop %v3748
          %v3750 = vmul.f32 %v3719, 1.442695
          %v3751 = vpow.pop %v3750
          %v3752 = vsel %vm3655, %v3721, 0.0
          %3753 = vadd.xlane.f32.xlu0 %v3752
          %v3754 = vpop.xlane.xlu0 %3753
          %v3755 = vsel %vm3655, %v3723, 0.0
          %3756 = vadd.xlane.f32.xlu0 %v3755
          %v3757 = vpop.xlane.xlu0 %3756
          %v3758 = vsel %vm3655, %v3725, 0.0
          %3759 = vadd.xlane.f32.xlu0 %v3758
          %v3760 = vpop.xlane.xlu0 %3759
          %v3761 = vsel %vm3655, %v3727, 0.0
          %3762 = vadd.xlane.f32.xlu0 %v3761
          %v3763 = vpop.xlane.xlu0 %3762
          %v3764 = vsel %vm3655, %v3729, 0.0
          %3765 = vadd.xlane.f32.xlu0 %v3764
          %v3766 = vpop.xlane.xlu0 %3765
          %v3767 = vsel %vm3655, %v3731, 0.0
          %3768 = vadd.xlane.f32.xlu0 %v3767
          %v3769 = vpop.xlane.xlu0 %3768
          %v3770 = vsel %vm3655, %v3733, 0.0
          %3771 = vadd.xlane.f32.xlu0 %v3770
          %v3772 = vpop.xlane.xlu0 %3771
          %v3773 = vsel %vm3655, %v3735, 0.0
          %3774 = vadd.xlane.f32.xlu0 %v3773
          %v3775 = vpop.xlane.xlu0 %3774
          %v3776 = vsel %vm3655, %v3737, 0.0
          %3777 = vadd.xlane.f32.xlu0 %v3776
          %v3778 = vpop.xlane.xlu0 %3777
          %v3779 = vsel %vm3655, %v3739, 0.0
          %3780 = vadd.xlane.f32.xlu0 %v3779
          %v3781 = vpop.xlane.xlu0 %3780
          %v3782 = vsel %vm3655, %v3741, 0.0
          %3783 = vadd.xlane.f32.xlu0 %v3782
          %v3784 = vpop.xlane.xlu0 %3783
          %v3785 = vsel %vm3655, %v3743, 0.0
          %3786 = vadd.xlane.f32.xlu0 %v3785
          %v3787 = vpop.xlane.xlu0 %3786
          %v3788 = vsel %vm3655, %v3745, 0.0
          %3789 = vadd.xlane.f32.xlu0 %v3788
          %v3790 = vpop.xlane.xlu0 %3789
          %v3791 = vsel %vm3655, %v3747, 0.0
          %3792 = vadd.xlane.f32.xlu0 %v3791
          %v3793 = vpop.xlane.xlu0 %3792
          %v3794 = vsel %vm3655, %v3749, 0.0
          %3795 = vadd.xlane.f32.xlu0 %v3794
          %v3796 = vpop.xlane.xlu0 %3795
          %v3797 = vsel %vm3655, %v3751, 0.0
          %3798 = vadd.xlane.f32.xlu0 %v3797
          %v3799 = vpop.xlane.xlu0 %3798
          %v3800 = vrcp.pop %v3754
          %v3801 = vmul.f32 %v3721, %v3800
          %v3802 = vrcp.pop %v3757
          %v3803 = vmul.f32 %v3723, %v3802
          %v3804 = vrcp.pop %v3760
          %v3805 = vmul.f32 %v3725, %v3804
          %v3806 = vrcp.pop %v3763
          %v3807 = vmul.f32 %v3727, %v3806
          %v3808 = vrcp.pop %v3766
          %v3809 = vmul.f32 %v3729, %v3808
          %v3810 = vrcp.pop %v3769
          %v3811 = vmul.f32 %v3731, %v3810
          %v3812 = vrcp.pop %v3772
          %v3813 = vmul.f32 %v3733, %v3812
          %v3814 = vrcp.pop %v3775
          %v3815 = vmul.f32 %v3735, %v3814
          %v3816 = vrcp.pop %v3778
          %v3817 = vmul.f32 %v3737, %v3816
          %v3818 = vrcp.pop %v3781
          %v3819 = vmul.f32 %v3739, %v3818
          %v3820 = vrcp.pop %v3784
          %v3821 = vmul.f32 %v3741, %v3820
          %v3822 = vrcp.pop %v3787
          %v3823 = vmul.f32 %v3743, %v3822
          %v3824 = vrcp.pop %v3790
          %v3825 = vmul.f32 %v3745, %v3824
          %v3826 = vrcp.pop %v3793
          %v3827 = vmul.f32 %v3747, %v3826
          %v3828 = vrcp.pop %v3796
          %v3829 = vmul.f32 %v3749, %v3828
          %v3830 = vrcp.pop %v3799
          %v3831 = vmul.f32 %v3751, %v3830
          %v3832 = vld [vmem:[#allocation4] sm:$0xff]
          %v3833 = vld [vmem:[#allocation4 + $0x8] sm:$0xff]
          %v3834 = vld [vmem:[#allocation4 + $0x10] sm:$0xff]
          %v3835 = vld [vmem:[#allocation4 + $0x18] sm:$0xff]
          %v3836 = vld [vmem:[#allocation4 + $0x20] sm:$0xff]
          %v3837 = vld [vmem:[#allocation4 + $0x28] sm:$0xff]
          %v3838 = vld [vmem:[#allocation4 + $0x30] sm:$0xff]
          %v3839 = vld [vmem:[#allocation4 + $0x38] sm:$0xff]
          %v3840 = vld [vmem:[#allocation4 + $0x40] sm:$0xff]
          %v3841 = vld [vmem:[#allocation4 + $0x48] sm:$0xff]
          %v3842 = vld [vmem:[#allocation4 + $0x50] sm:$0xff]
          %v3843 = vld [vmem:[#allocation4 + $0x58] sm:$0xff]
          %v3844 = vld [vmem:[#allocation4 + $0x60] sm:$0xff]
          %v3845 = vld [vmem:[#allocation4 + $0x68] sm:$0xff]
          %v3846 = vld [vmem:[#allocation4 + $0x70] sm:$0xff]
          %v3847 = vld [vmem:[#allocation4 + $0x78] sm:$0xff]
          %v3848 = vrcp.pop %v3832
          %v3849 = vmul.f32 %v3801, %v3848
          %v3850 = vrcp.pop %v3833
          %v3851 = vmul.f32 %v3803, %v3850
          %v3852 = vrcp.pop %v3834
          %v3853 = vmul.f32 %v3805, %v3852
          %v3854 = vrcp.pop %v3835
          %v3855 = vmul.f32 %v3807, %v3854
          %v3856 = vrcp.pop %v3836
          %v3857 = vmul.f32 %v3809, %v3856
          %v3858 = vrcp.pop %v3837
          %v3859 = vmul.f32 %v3811, %v3858
          %v3860 = vrcp.pop %v3838
          %v3861 = vmul.f32 %v3813, %v3860
          %v3862 = vrcp.pop %v3839
          %v3863 = vmul.f32 %v3815, %v3862
          %v3864 = vrcp.pop %v3840
          %v3865 = vmul.f32 %v3817, %v3864
          %v3866 = vrcp.pop %v3841
          %v3867 = vmul.f32 %v3819, %v3866
          %v3868 = vrcp.pop %v3842
          %v3869 = vmul.f32 %v3821, %v3868
          %v3870 = vrcp.pop %v3843
          %v3871 = vmul.f32 %v3823, %v3870
          %v3872 = vrcp.pop %v3844
          %v3873 = vmul.f32 %v3825, %v3872
          %v3874 = vrcp.pop %v3845
          %v3875 = vmul.f32 %v3827, %v3874
          %v3876 = vrcp.pop %v3846
          %v3877 = vmul.f32 %v3829, %v3876
          %v3878 = vrcp.pop %v3847
          %v3879 = vmul.f32 %v3831, %v3878
          %vm3880 = vcmask 7168
          %3881 = vst.msk [vmem:[#allocation5] sm:$0xff] %vm3880, %v3849
          %3882 = vst.msk [vmem:[#allocation5 + $0x8] sm:$0xff] %vm3880, %v3851
          %3883 = vst.msk [vmem:[#allocation5 + $0x10] sm:$0xff] %vm3880, %v3853
          %3884 = vst.msk [vmem:[#allocation5 + $0x18] sm:$0xff] %vm3880, %v3855
          %3885 = vst.msk [vmem:[#allocation5 + $0x20] sm:$0xff] %vm3880, %v3857
          %3886 = vst.msk [vmem:[#allocation5 + $0x28] sm:$0xff] %vm3880, %v3859
          %3887 = vst.msk [vmem:[#allocation5 + $0x30] sm:$0xff] %vm3880, %v3861
          %3888 = vst.msk [vmem:[#allocation5 + $0x38] sm:$0xff] %vm3880, %v3863
          %3889 = vst.msk [vmem:[#allocation5 + $0x40] sm:$0xff] %vm3880, %v3865
          %3890 = vst.msk [vmem:[#allocation5 + $0x48] sm:$0xff] %vm3880, %v3867
          %3891 = vst.msk [vmem:[#allocation5 + $0x50] sm:$0xff] %vm3880, %v3869
          %3892 = vst.msk [vmem:[#allocation5 + $0x58] sm:$0xff] %vm3880, %v3871
          %3893 = vst.msk [vmem:[#allocation5 + $0x60] sm:$0xff] %vm3880, %v3873
          %3894 = vst.msk [vmem:[#allocation5 + $0x68] sm:$0xff] %vm3880, %v3875
          %3895 = vst.msk [vmem:[#allocation5 + $0x70] sm:$0xff] %vm3880, %v3877
          %3896 = vst.msk [vmem:[#allocation5 + $0x78] sm:$0xff] %vm3880, %v3879
          %s3897 = scalar_lea.vmem [#allocation4], 128
          %v3898 = vld [vmem:[%s3897] sm:$0xff]
          %v3899 = vld [vmem:[%s3897 + $0x8] sm:$0xff]
          %v3900 = vld [vmem:[%s3897 + $0x10] sm:$0xff]
          %v3901 = vld [vmem:[%s3897 + $0x18] sm:$0xff]
          %v3902 = vld [vmem:[%s3897 + $0x20] sm:$0xff]
          %v3903 = vld [vmem:[%s3897 + $0x28] sm:$0xff]
          %v3904 = vld [vmem:[%s3897 + $0x30] sm:$0xff]
          %v3905 = vld [vmem:[%s3897 + $0x38] sm:$0xff]
          %v3906 = vld [vmem:[%s3897 + $0x40] sm:$0xff]
          %v3907 = vld [vmem:[%s3897 + $0x48] sm:$0xff]
          %v3908 = vld [vmem:[%s3897 + $0x50] sm:$0xff]
          %v3909 = vld [vmem:[%s3897 + $0x58] sm:$0xff]
          %v3910 = vld [vmem:[%s3897 + $0x60] sm:$0xff]
          %v3911 = vld [vmem:[%s3897 + $0x68] sm:$0xff]
          %v3912 = vld [vmem:[%s3897 + $0x70] sm:$0xff]
          %v3913 = vld [vmem:[%s3897 + $0x78] sm:$0xff]
          %3930 = vrot.lane.b32.xlu0 %v3898, 1
          %v3931 = vpop.permute.xlu0 %3930
          %3932 = vrot.lane.b32.xlu0 %v3899, 1
          %v3933 = vpop.permute.xlu0 %3932
          %3934 = vrot.lane.b32.xlu0 %v3900, 1
          %v3935 = vpop.permute.xlu0 %3934
          %3936 = vrot.lane.b32.xlu0 %v3901, 1
          %v3937 = vpop.permute.xlu0 %3936
          %3938 = vrot.lane.b32.xlu0 %v3902, 1
          %v3939 = vpop.permute.xlu0 %3938
          %3940 = vrot.lane.b32.xlu0 %v3903, 1
          %v3941 = vpop.permute.xlu0 %3940
          %3942 = vrot.lane.b32.xlu0 %v3904, 1
          %v3943 = vpop.permute.xlu0 %3942
          %3944 = vrot.lane.b32.xlu0 %v3905, 1
          %v3945 = vpop.permute.xlu0 %3944
          %3946 = vrot.lane.b32.xlu0 %v3906, 1
          %v3947 = vpop.permute.xlu0 %3946
          %3948 = vrot.lane.b32.xlu0 %v3907, 1
          %v3949 = vpop.permute.xlu0 %3948
          %3950 = vrot.lane.b32.xlu0 %v3908, 1
          %v3951 = vpop.permute.xlu0 %3950
          %3952 = vrot.lane.b32.xlu0 %v3909, 1
          %v3953 = vpop.permute.xlu0 %3952
          %3954 = vrot.lane.b32.xlu0 %v3910, 1
          %v3955 = vpop.permute.xlu0 %3954
          %3956 = vrot.lane.b32.xlu0 %v3911, 1
          %v3957 = vpop.permute.xlu0 %3956
          %3958 = vrot.lane.b32.xlu0 %v3912, 1
          %v3959 = vpop.permute.xlu0 %3958
          %3960 = vrot.lane.b32.xlu0 %v3913, 1
          %v3961 = vpop.permute.xlu0 %3960
          %v3978 = vrcp.pop %v3931
          %v3979 = vmul.f32 %v3801, %v3978
          %v3980 = vrcp.pop %v3933
          %v3981 = vmul.f32 %v3803, %v3980
          %v3982 = vrcp.pop %v3935
          %v3983 = vmul.f32 %v3805, %v3982
          %v3984 = vrcp.pop %v3937
          %v3985 = vmul.f32 %v3807, %v3984
          %v3986 = vrcp.pop %v3939
          %v3987 = vmul.f32 %v3809, %v3986
          %v3988 = vrcp.pop %v3941
          %v3989 = vmul.f32 %v3811, %v3988
          %v3990 = vrcp.pop %v3943
          %v3991 = vmul.f32 %v3813, %v3990
          %v3992 = vrcp.pop %v3945
          %v3993 = vmul.f32 %v3815, %v3992
          %v3994 = vrcp.pop %v3947
          %v3995 = vmul.f32 %v3817, %v3994
          %v3996 = vrcp.pop %v3949
          %v3997 = vmul.f32 %v3819, %v3996
          %v3998 = vrcp.pop %v3951
          %v3999 = vmul.f32 %v3821, %v3998
          %v4000 = vrcp.pop %v3953
          %v4001 = vmul.f32 %v3823, %v4000
          %v4002 = vrcp.pop %v3955
          %v4003 = vmul.f32 %v3825, %v4002
          %v4004 = vrcp.pop %v3957
          %v4005 = vmul.f32 %v3827, %v4004
          %v4006 = vrcp.pop %v3959
          %v4007 = vmul.f32 %v3829, %v4006
          %v4008 = vrcp.pop %v3961
          %v4009 = vmul.f32 %v3831, %v4008
          %4026 = vrot.lane.b32.xlu0 %v3979, 127
          %v4027 = vpop.permute.xlu0 %4026
          %4028 = vrot.lane.b32.xlu0 %v3981, 127
          %v4029 = vpop.permute.xlu0 %4028
          %4030 = vrot.lane.b32.xlu0 %v3983, 127
          %v4031 = vpop.permute.xlu0 %4030
          %4032 = vrot.lane.b32.xlu0 %v3985, 127
          %v4033 = vpop.permute.xlu0 %4032
          %4034 = vrot.lane.b32.xlu0 %v3987, 127
          %v4035 = vpop.permute.xlu0 %4034
          %4036 = vrot.lane.b32.xlu0 %v3989, 127
          %v4037 = vpop.permute.xlu0 %4036
          %4038 = vrot.lane.b32.xlu0 %v3991, 127
          %v4039 = vpop.permute.xlu0 %4038
          %4040 = vrot.lane.b32.xlu0 %v3993, 127
          %v4041 = vpop.permute.xlu0 %4040
          %4042 = vrot.lane.b32.xlu0 %v3995, 127
          %v4043 = vpop.permute.xlu0 %4042
          %4044 = vrot.lane.b32.xlu0 %v3997, 127
          %v4045 = vpop.permute.xlu0 %4044
          %4046 = vrot.lane.b32.xlu0 %v3999, 127
          %v4047 = vpop.permute.xlu0 %4046
          %4048 = vrot.lane.b32.xlu0 %v4001, 127
          %v4049 = vpop.permute.xlu0 %4048
          %4050 = vrot.lane.b32.xlu0 %v4003, 127
          %v4051 = vpop.permute.xlu0 %4050
          %4052 = vrot.lane.b32.xlu0 %v4005, 127
          %v4053 = vpop.permute.xlu0 %4052
          %4054 = vrot.lane.b32.xlu0 %v4007, 127
          %v4055 = vpop.permute.xlu0 %4054
          %4056 = vrot.lane.b32.xlu0 %v4009, 127
          %v4057 = vpop.permute.xlu0 %4056
          %s4074 = scalar_lea.vmem [#allocation5], 128
          %4075 = vst.msk [vmem:[%s4074] sm:$0xff] %vm3880, %v4027
          %4076 = vst.msk [vmem:[%s4074 + $0x8] sm:$0xff] %vm3880, %v4029
          %4077 = vst.msk [vmem:[%s4074 + $0x10] sm:$0xff] %vm3880, %v4031
          %4078 = vst.msk [vmem:[%s4074 + $0x18] sm:$0xff] %vm3880, %v4033
          %4079 = vst.msk [vmem:[%s4074 + $0x20] sm:$0xff] %vm3880, %v4035
          %4080 = vst.msk [vmem:[%s4074 + $0x28] sm:$0xff] %vm3880, %v4037
          %4081 = vst.msk [vmem:[%s4074 + $0x30] sm:$0xff] %vm3880, %v4039
          %4082 = vst.msk [vmem:[%s4074 + $0x38] sm:$0xff] %vm3880, %v4041
          %4083 = vst.msk [vmem:[%s4074 + $0x40] sm:$0xff] %vm3880, %v4043
          %4084 = vst.msk [vmem:[%s4074 + $0x48] sm:$0xff] %vm3880, %v4045
          %4085 = vst.msk [vmem:[%s4074 + $0x50] sm:$0xff] %vm3880, %v4047
          %4086 = vst.msk [vmem:[%s4074 + $0x58] sm:$0xff] %vm3880, %v4049
          %4087 = vst.msk [vmem:[%s4074 + $0x60] sm:$0xff] %vm3880, %v4051
          %4088 = vst.msk [vmem:[%s4074 + $0x68] sm:$0xff] %vm3880, %v4053
          %4089 = vst.msk [vmem:[%s4074 + $0x70] sm:$0xff] %vm3880, %v4055
          %4090 = vst.msk [vmem:[%s4074 + $0x78] sm:$0xff] %vm3880, %v4057
          %s4091 = scalar_lea.vmem [#allocation4], 256
          %v4092 = vld [vmem:[%s4091] sm:$0xff]
          %v4093 = vld [vmem:[%s4091 + $0x8] sm:$0xff]
          %v4094 = vld [vmem:[%s4091 + $0x10] sm:$0xff]
          %v4095 = vld [vmem:[%s4091 + $0x18] sm:$0xff]
          %v4096 = vld [vmem:[%s4091 + $0x20] sm:$0xff]
          %v4097 = vld [vmem:[%s4091 + $0x28] sm:$0xff]
          %v4098 = vld [vmem:[%s4091 + $0x30] sm:$0xff]
          %v4099 = vld [vmem:[%s4091 + $0x38] sm:$0xff]
          %v4100 = vld [vmem:[%s4091 + $0x40] sm:$0xff]
          %v4101 = vld [vmem:[%s4091 + $0x48] sm:$0xff]
          %v4102 = vld [vmem:[%s4091 + $0x50] sm:$0xff]
          %v4103 = vld [vmem:[%s4091 + $0x58] sm:$0xff]
          %v4104 = vld [vmem:[%s4091 + $0x60] sm:$0xff]
          %v4105 = vld [vmem:[%s4091 + $0x68] sm:$0xff]
          %v4106 = vld [vmem:[%s4091 + $0x70] sm:$0xff]
          %v4107 = vld [vmem:[%s4091 + $0x78] sm:$0xff]
          %4124 = vrot.lane.b32.xlu0 %v4092, 2
          %v4125 = vpop.permute.xlu0 %4124
          %4126 = vrot.lane.b32.xlu0 %v4093, 2
          %v4127 = vpop.permute.xlu0 %4126
          %4128 = vrot.lane.b32.xlu0 %v4094, 2
          %v4129 = vpop.permute.xlu0 %4128
          %4130 = vrot.lane.b32.xlu0 %v4095, 2
          %v4131 = vpop.permute.xlu0 %4130
          %4132 = vrot.lane.b32.xlu0 %v4096, 2
          %v4133 = vpop.permute.xlu0 %4132
          %4134 = vrot.lane.b32.xlu0 %v4097, 2
          %v4135 = vpop.permute.xlu0 %4134
          %4136 = vrot.lane.b32.xlu0 %v4098, 2
          %v4137 = vpop.permute.xlu0 %4136
          %4138 = vrot.lane.b32.xlu0 %v4099, 2
          %v4139 = vpop.permute.xlu0 %4138
          %4140 = vrot.lane.b32.xlu0 %v4100, 2
          %v4141 = vpop.permute.xlu0 %4140
          %4142 = vrot.lane.b32.xlu0 %v4101, 2
          %v4143 = vpop.permute.xlu0 %4142
          %4144 = vrot.lane.b32.xlu0 %v4102, 2
          %v4145 = vpop.permute.xlu0 %4144
          %4146 = vrot.lane.b32.xlu0 %v4103, 2
          %v4147 = vpop.permute.xlu0 %4146
          %4148 = vrot.lane.b32.xlu0 %v4104, 2
          %v4149 = vpop.permute.xlu0 %4148
          %4150 = vrot.lane.b32.xlu0 %v4105, 2
          %v4151 = vpop.permute.xlu0 %4150
          %4152 = vrot.lane.b32.xlu0 %v4106, 2
          %v4153 = vpop.permute.xlu0 %4152
          %4154 = vrot.lane.b32.xlu0 %v4107, 2
          %v4155 = vpop.permute.xlu0 %4154
          %v4172 = vrcp.pop %v4125
          %v4173 = vmul.f32 %v3801, %v4172
          %v4174 = vrcp.pop %v4127
          %v4175 = vmul.f32 %v3803, %v4174
          %v4176 = vrcp.pop %v4129
          %v4177 = vmul.f32 %v3805, %v4176
          %v4178 = vrcp.pop %v4131
          %v4179 = vmul.f32 %v3807, %v4178
          %v4180 = vrcp.pop %v4133
          %v4181 = vmul.f32 %v3809, %v4180
          %v4182 = vrcp.pop %v4135
          %v4183 = vmul.f32 %v3811, %v4182
          %v4184 = vrcp.pop %v4137
          %v4185 = vmul.f32 %v3813, %v4184
          %v4186 = vrcp.pop %v4139
          %v4187 = vmul.f32 %v3815, %v4186
          %v4188 = vrcp.pop %v4141
          %v4189 = vmul.f32 %v3817, %v4188
          %v4190 = vrcp.pop %v4143
          %v4191 = vmul.f32 %v3819, %v4190
          %v4192 = vrcp.pop %v4145
          %v4193 = vmul.f32 %v3821, %v4192
          %v4194 = vrcp.pop %v4147
          %v4195 = vmul.f32 %v3823, %v4194
          %v4196 = vrcp.pop %v4149
          %v4197 = vmul.f32 %v3825, %v4196
          %v4198 = vrcp.pop %v4151
          %v4199 = vmul.f32 %v3827, %v4198
          %v4200 = vrcp.pop %v4153
          %v4201 = vmul.f32 %v3829, %v4200
          %v4202 = vrcp.pop %v4155
          %v4203 = vmul.f32 %v3831, %v4202
          %4220 = vrot.lane.b32.xlu0 %v4173, 126
          %v4221 = vpop.permute.xlu0 %4220
          %4222 = vrot.lane.b32.xlu0 %v4175, 126
          %v4223 = vpop.permute.xlu0 %4222
          %4224 = vrot.lane.b32.xlu0 %v4177, 126
          %v4225 = vpop.permute.xlu0 %4224
          %4226 = vrot.lane.b32.xlu0 %v4179, 126
          %v4227 = vpop.permute.xlu0 %4226
          %4228 = vrot.lane.b32.xlu0 %v4181, 126
          %v4229 = vpop.permute.xlu0 %4228
          %4230 = vrot.lane.b32.xlu0 %v4183, 126
          %v4231 = vpop.permute.xlu0 %4230
          %4232 = vrot.lane.b32.xlu0 %v4185, 126
          %v4233 = vpop.permute.xlu0 %4232
          %4234 = vrot.lane.b32.xlu0 %v4187, 126
          %v4235 = vpop.permute.xlu0 %4234
          %4236 = vrot.lane.b32.xlu0 %v4189, 126
          %v4237 = vpop.permute.xlu0 %4236
          %4238 = vrot.lane.b32.xlu0 %v4191, 126
          %v4239 = vpop.permute.xlu0 %4238
          %4240 = vrot.lane.b32.xlu0 %v4193, 126
          %v4241 = vpop.permute.xlu0 %4240
          %4242 = vrot.lane.b32.xlu0 %v4195, 126
          %v4243 = vpop.permute.xlu0 %4242
          %4244 = vrot.lane.b32.xlu0 %v4197, 126
          %v4245 = vpop.permute.xlu0 %4244
          %4246 = vrot.lane.b32.xlu0 %v4199, 126
          %v4247 = vpop.permute.xlu0 %4246
          %4248 = vrot.lane.b32.xlu0 %v4201, 126
          %v4249 = vpop.permute.xlu0 %4248
          %4250 = vrot.lane.b32.xlu0 %v4203, 126
          %v4251 = vpop.permute.xlu0 %4250
          %s4268 = scalar_lea.vmem [#allocation5], 256
          %4269 = vst.msk [vmem:[%s4268] sm:$0xff] %vm3880, %v4221
          %4270 = vst.msk [vmem:[%s4268 + $0x8] sm:$0xff] %vm3880, %v4223
          %4271 = vst.msk [vmem:[%s4268 + $0x10] sm:$0xff] %vm3880, %v4225
          %4272 = vst.msk [vmem:[%s4268 + $0x18] sm:$0xff] %vm3880, %v4227
          %4273 = vst.msk [vmem:[%s4268 + $0x20] sm:$0xff] %vm3880, %v4229
          %4274 = vst.msk [vmem:[%s4268 + $0x28] sm:$0xff] %vm3880, %v4231
          %4275 = vst.msk [vmem:[%s4268 + $0x30] sm:$0xff] %vm3880, %v4233
          %4276 = vst.msk [vmem:[%s4268 + $0x38] sm:$0xff] %vm3880, %v4235
          %4277 = vst.msk [vmem:[%s4268 + $0x40] sm:$0xff] %vm3880, %v4237
          %4278 = vst.msk [vmem:[%s4268 + $0x48] sm:$0xff] %vm3880, %v4239
          %4279 = vst.msk [vmem:[%s4268 + $0x50] sm:$0xff] %vm3880, %v4241
          %4280 = vst.msk [vmem:[%s4268 + $0x58] sm:$0xff] %vm3880, %v4243
          %4281 = vst.msk [vmem:[%s4268 + $0x60] sm:$0xff] %vm3880, %v4245
          %4282 = vst.msk [vmem:[%s4268 + $0x68] sm:$0xff] %vm3880, %v4247
          %4283 = vst.msk [vmem:[%s4268 + $0x70] sm:$0xff] %vm3880, %v4249
          %4284 = vst.msk [vmem:[%s4268 + $0x78] sm:$0xff] %vm3880, %v4251
          %s4285 = scalar_lea.vmem [#allocation4], 384
          %v4286 = vld [vmem:[%s4285] sm:$0xff]
          %v4287 = vld [vmem:[%s4285 + $0x8] sm:$0xff]
          %v4288 = vld [vmem:[%s4285 + $0x10] sm:$0xff]
          %v4289 = vld [vmem:[%s4285 + $0x18] sm:$0xff]
          %v4290 = vld [vmem:[%s4285 + $0x20] sm:$0xff]
          %v4291 = vld [vmem:[%s4285 + $0x28] sm:$0xff]
          %v4292 = vld [vmem:[%s4285 + $0x30] sm:$0xff]
          %v4293 = vld [vmem:[%s4285 + $0x38] sm:$0xff]
          %v4294 = vld [vmem:[%s4285 + $0x40] sm:$0xff]
          %v4295 = vld [vmem:[%s4285 + $0x48] sm:$0xff]
          %v4296 = vld [vmem:[%s4285 + $0x50] sm:$0xff]
          %v4297 = vld [vmem:[%s4285 + $0x58] sm:$0xff]
          %v4298 = vld [vmem:[%s4285 + $0x60] sm:$0xff]
          %v4299 = vld [vmem:[%s4285 + $0x68] sm:$0xff]
          %v4300 = vld [vmem:[%s4285 + $0x70] sm:$0xff]
          %v4301 = vld [vmem:[%s4285 + $0x78] sm:$0xff]
          %4318 = vrot.lane.b32.xlu0 %v4286, 3
          %v4319 = vpop.permute.xlu0 %4318
          %4320 = vrot.lane.b32.xlu0 %v4287, 3
          %v4321 = vpop.permute.xlu0 %4320
          %4322 = vrot.lane.b32.xlu0 %v4288, 3
          %v4323 = vpop.permute.xlu0 %4322
          %4324 = vrot.lane.b32.xlu0 %v4289, 3
          %v4325 = vpop.permute.xlu0 %4324
          %4326 = vrot.lane.b32.xlu0 %v4290, 3
          %v4327 = vpop.permute.xlu0 %4326
          %4328 = vrot.lane.b32.xlu0 %v4291, 3
          %v4329 = vpop.permute.xlu0 %4328
          %4330 = vrot.lane.b32.xlu0 %v4292, 3
          %v4331 = vpop.permute.xlu0 %4330
          %4332 = vrot.lane.b32.xlu0 %v4293, 3
          %v4333 = vpop.permute.xlu0 %4332
          %4334 = vrot.lane.b32.xlu0 %v4294, 3
          %v4335 = vpop.permute.xlu0 %4334
          %4336 = vrot.lane.b32.xlu0 %v4295, 3
          %v4337 = vpop.permute.xlu0 %4336
          %4338 = vrot.lane.b32.xlu0 %v4296, 3
          %v4339 = vpop.permute.xlu0 %4338
          %4340 = vrot.lane.b32.xlu0 %v4297, 3
          %v4341 = vpop.permute.xlu0 %4340
          %4342 = vrot.lane.b32.xlu0 %v4298, 3
          %v4343 = vpop.permute.xlu0 %4342
          %4344 = vrot.lane.b32.xlu0 %v4299, 3
          %v4345 = vpop.permute.xlu0 %4344
          %4346 = vrot.lane.b32.xlu0 %v4300, 3
          %v4347 = vpop.permute.xlu0 %4346
          %4348 = vrot.lane.b32.xlu0 %v4301, 3
          %v4349 = vpop.permute.xlu0 %4348
          %v4366 = vrcp.pop %v4319
          %v4367 = vmul.f32 %v3801, %v4366
          %v4368 = vrcp.pop %v4321
          %v4369 = vmul.f32 %v3803, %v4368
          %v4370 = vrcp.pop %v4323
          %v4371 = vmul.f32 %v3805, %v4370
          %v4372 = vrcp.pop %v4325
          %v4373 = vmul.f32 %v3807, %v4372
          %v4374 = vrcp.pop %v4327
          %v4375 = vmul.f32 %v3809, %v4374
          %v4376 = vrcp.pop %v4329
          %v4377 = vmul.f32 %v3811, %v4376
          %v4378 = vrcp.pop %v4331
          %v4379 = vmul.f32 %v3813, %v4378
          %v4380 = vrcp.pop %v4333
          %v4381 = vmul.f32 %v3815, %v4380
          %v4382 = vrcp.pop %v4335
          %v4383 = vmul.f32 %v3817, %v4382
          %v4384 = vrcp.pop %v4337
          %v4385 = vmul.f32 %v3819, %v4384
          %v4386 = vrcp.pop %v4339
          %v4387 = vmul.f32 %v3821, %v4386
          %v4388 = vrcp.pop %v4341
          %v4389 = vmul.f32 %v3823, %v4388
          %v4390 = vrcp.pop %v4343
          %v4391 = vmul.f32 %v3825, %v4390
          %v4392 = vrcp.pop %v4345
          %v4393 = vmul.f32 %v3827, %v4392
          %v4394 = vrcp.pop %v4347
          %v4395 = vmul.f32 %v3829, %v4394
          %v4396 = vrcp.pop %v4349
          %v4397 = vmul.f32 %v3831, %v4396
          %4414 = vrot.lane.b32.xlu0 %v4367, 125
          %v4415 = vpop.permute.xlu0 %4414
          %4416 = vrot.lane.b32.xlu0 %v4369, 125
          %v4417 = vpop.permute.xlu0 %4416
          %4418 = vrot.lane.b32.xlu0 %v4371, 125
          %v4419 = vpop.permute.xlu0 %4418
          %4420 = vrot.lane.b32.xlu0 %v4373, 125
          %v4421 = vpop.permute.xlu0 %4420
          %4422 = vrot.lane.b32.xlu0 %v4375, 125
          %v4423 = vpop.permute.xlu0 %4422
          %4424 = vrot.lane.b32.xlu0 %v4377, 125
          %v4425 = vpop.permute.xlu0 %4424
          %4426 = vrot.lane.b32.xlu0 %v4379, 125
          %v4427 = vpop.permute.xlu0 %4426
          %4428 = vrot.lane.b32.xlu0 %v4381, 125
          %v4429 = vpop.permute.xlu0 %4428
          %4430 = vrot.lane.b32.xlu0 %v4383, 125
          %v4431 = vpop.permute.xlu0 %4430
          %4432 = vrot.lane.b32.xlu0 %v4385, 125
          %v4433 = vpop.permute.xlu0 %4432
          %4434 = vrot.lane.b32.xlu0 %v4387, 125
          %v4435 = vpop.permute.xlu0 %4434
          %4436 = vrot.lane.b32.xlu0 %v4389, 125
          %v4437 = vpop.permute.xlu0 %4436
          %4438 = vrot.lane.b32.xlu0 %v4391, 125
          %v4439 = vpop.permute.xlu0 %4438
          %4440 = vrot.lane.b32.xlu0 %v4393, 125
          %v4441 = vpop.permute.xlu0 %4440
          %4442 = vrot.lane.b32.xlu0 %v4395, 125
          %v4443 = vpop.permute.xlu0 %4442
          %4444 = vrot.lane.b32.xlu0 %v4397, 125
          %v4445 = vpop.permute.xlu0 %4444
          %s4462 = scalar_lea.vmem [#allocation5], 384
          %4463 = vst.msk [vmem:[%s4462] sm:$0xff] %vm3880, %v4415
          %4464 = vst.msk [vmem:[%s4462 + $0x8] sm:$0xff] %vm3880, %v4417
          %4465 = vst.msk [vmem:[%s4462 + $0x10] sm:$0xff] %vm3880, %v4419
          %4466 = vst.msk [vmem:[%s4462 + $0x18] sm:$0xff] %vm3880, %v4421
          %4467 = vst.msk [vmem:[%s4462 + $0x20] sm:$0xff] %vm3880, %v4423
          %4468 = vst.msk [vmem:[%s4462 + $0x28] sm:$0xff] %vm3880, %v4425
          %4469 = vst.msk [vmem:[%s4462 + $0x30] sm:$0xff] %vm3880, %v4427
          %4470 = vst.msk [vmem:[%s4462 + $0x38] sm:$0xff] %vm3880, %v4429
          %4471 = vst.msk [vmem:[%s4462 + $0x40] sm:$0xff] %vm3880, %v4431
          %4472 = vst.msk [vmem:[%s4462 + $0x48] sm:$0xff] %vm3880, %v4433
          %4473 = vst.msk [vmem:[%s4462 + $0x50] sm:$0xff] %vm3880, %v4435
          %4474 = vst.msk [vmem:[%s4462 + $0x58] sm:$0xff] %vm3880, %v4437
          %4475 = vst.msk [vmem:[%s4462 + $0x60] sm:$0xff] %vm3880, %v4439
          %4476 = vst.msk [vmem:[%s4462 + $0x68] sm:$0xff] %vm3880, %v4441
          %4477 = vst.msk [vmem:[%s4462 + $0x70] sm:$0xff] %vm3880, %v4443
          %4478 = vst.msk [vmem:[%s4462 + $0x78] sm:$0xff] %vm3880, %v4445
        $region64: #{tpu_custom_call.1} parent=39 // pred_fallthru
          _
        // Predicated region
        $region65: #{tpu_custom_call.1} parent=39 // pred_check
          %p4479 = pneg %p3488
        $region66: #{tpu_custom_call.1} parent=39 // pred_check_branch
          %4481 = sbr.rel (%p4479) target = $region68
        $region67: #{tpu_custom_call.1} parent=39 // pred_region
          %v4482 = vld [vmem:[#allocation2] sm:$0xff]
          %v4483 = vld [vmem:[#allocation2 + $0x20] sm:$0xff]
          %v4484 = vld [vmem:[#allocation2 + $0x40] sm:$0xff]
          %v4485 = vld [vmem:[#allocation2 + $0x60] sm:$0xff]
          %v4486 = vld [vmem:[#allocation2 + $0x80] sm:$0xff]
          %v4487 = vld [vmem:[#allocation2 + $0xa0] sm:$0xff]
          %v4488 = vld [vmem:[#allocation2 + $0xc0] sm:$0xff]
          %v4489 = vld [vmem:[#allocation2 + $0xe0] sm:$0xff]
          %v4490 = vld [vmem:[#allocation2 + $0x100] sm:$0xff]
          %v4491 = vld [vmem:[#allocation2 + $0x120] sm:$0xff]
          %v4492 = vld [vmem:[#allocation2 + $0x140] sm:$0xff]
          %v4493 = vld [vmem:[#allocation2 + $0x160] sm:$0xff]
          %v4494 = vld [vmem:[#allocation2 + $0x180] sm:$0xff]
          %v4495 = vld [vmem:[#allocation2 + $0x1a0] sm:$0xff]
          %v4496 = vld [vmem:[#allocation2 + $0x1c0] sm:$0xff]
          %v4497 = vld [vmem:[#allocation2 + $0x1e0] sm:$0xff]
          %4498 = vmatprep.subr.mxu0 0.0
          %4499 = vmatpush1.xpose.msra.mxu0 %v1010
          %4500 = vmatprep.subr.mxu0 0.0
          %4501 = vmatpush1.xpose.msra.mxu0 %v1011
          %4502 = vmatprep.subr.mxu0 0.0
          %4503 = vmatpush1.xpose.msra.mxu0 %v1012
          %4504 = vmatprep.subr.mxu0 0.0
          %4505 = vmatpush1.xpose.msra.mxu0 %v1013
          %4506 = vmatprep.subr.mxu0 0.0
          %4507 = vmatpush1.xpose.msra.mxu0 %v1014
          %4508 = vmatprep.subr.mxu0 0.0
          %4509 = vmatpush1.xpose.msra.mxu0 %v1015
          %4510 = vmatprep.subr.mxu0 0.0
          %4511 = vmatpush1.xpose.msra.mxu0 %v1016
          %4512 = vmatprep.subr.mxu0 0.0
          %4513 = vmatpush1.xpose.msra.mxu0 %v1017
          %4514 = vmatprep.subr.mxu0 0.0
          %4515 = vmatpush1.xpose.msra.mxu0 %v1018
          %4516 = vmatprep.subr.mxu0 0.0
          %4517 = vmatpush1.xpose.msra.mxu0 %v1019
          %4518 = vmatprep.subr.mxu0 0.0
          %4519 = vmatpush1.xpose.msra.mxu0 %v1020
          %4520 = vmatprep.subr.mxu0 0.0
          %4521 = vmatpush1.xpose.msra.mxu0 %v1021
          %4522 = vmatprep.subr.mxu0 0.0
          %4523 = vmatpush1.xpose.msra.mxu0 %v1022
          %4524 = vmatprep.subr.mxu0 0.0
          %4525 = vmatpush1.xpose.msra.mxu0 %v1023
          %4526 = vmatprep.subr.mxu0 0.0
          %4527 = vmatpush1.xpose.msra.mxu0 %v1024
          %4528 = vmatprep.subr.mxu0 0.0
          %4529 = vmatpush1.xpose.msra.mxu0 %v1025
          %4530 = vmatprep.subr.mxu0 0.0
          %4531 = vmatpush1.xpose.msra.mxu0 %v1026
          %4532 = vmatprep.subr.mxu0 0.0
          %4533 = vmatpush1.xpose.msra.mxu0 %v1027
          %4534 = vmatprep.subr.mxu0 0.0
          %4535 = vmatpush1.xpose.msra.mxu0 %v1028
          %4536 = vmatprep.subr.mxu0 0.0
          %4537 = vmatpush1.xpose.msra.mxu0 %v1029
          %4538 = vmatprep.subr.mxu0 0.0
          %4539 = vmatpush1.xpose.msra.mxu0 %v1030
          %4540 = vmatprep.subr.mxu0 0.0
          %4541 = vmatpush1.xpose.msra.mxu0 %v1031
          %4542 = vmatprep.subr.mxu0 0.0
          %4543 = vmatpush1.xpose.msra.mxu0 %v1032
          %4544 = vmatprep.subr.mxu0 0.0
          %4545 = vmatpush1.xpose.msra.mxu0 %v1033
          %4546 = vmatprep.subr.mxu0 0.0
          %4547 = vmatpush1.xpose.msra.mxu0 %v1034
          %4548 = vmatprep.subr.mxu0 0.0
          %4549 = vmatpush1.xpose.msra.mxu0 %v1035
          %4550 = vmatprep.subr.mxu0 0.0
          %4551 = vmatpush1.xpose.msra.mxu0 %v1036
          %4552 = vmatprep.subr.mxu0 0.0
          %4553 = vmatpush1.xpose.msra.mxu0 %v1037
          %4554 = vmatprep.subr.mxu0 0.0
          %4555 = vmatpush1.xpose.msra.mxu0 %v1038
          %4556 = vmatprep.subr.mxu0 0.0
          %4557 = vmatpush1.xpose.msra.mxu0 %v1039
          %4558 = vmatprep.subr.mxu0 0.0
          %4559 = vmatpush1.xpose.msra.mxu0 %v1040
          %4560 = vmatprep.subr.mxu0 0.0
          %4561 = vmatpush1.xpose.msra.mxu0 %v1041
          %4562 = vmatprep.mubr.f32.mxu0 0.0
          %4563 = vmatmul.mubr.f32.gmra.mrb[0].mxu0 %v4482
          %v4564 = vpop.f32.mrb[0].mxu0
          %v4565 = vadd.f32 0.0, %v4564
          %v4566 = vpop.f32.mrb[0].mxu0
          %v4567 = vadd.f32 0.0, %v4566
          %4568 = vmatprep.mubr.f32.mxu0 0.0
          %4569 = vmatmul.mubr.f32.gmra.mrb[0].mxu0 %v4483
          %v4570 = vpop.f32.mrb[0].mxu0
          %v4571 = vadd.f32 0.0, %v4570
          %v4572 = vpop.f32.mrb[0].mxu0
          %v4573 = vadd.f32 0.0, %v4572
          %4574 = vmatprep.mubr.f32.mxu0 0.0
          %4575 = vmatmul.mubr.f32.gmra.mrb[0].mxu0 %v4484
          %v4576 = vpop.f32.mrb[0].mxu0
          %v4577 = vadd.f32 0.0, %v4576
          %v4578 = vpop.f32.mrb[0].mxu0
          %v4579 = vadd.f32 0.0, %v4578
          %4580 = vmatprep.mubr.f32.mxu0 0.0
          %4581 = vmatmul.mubr.f32.gmra.mrb[0].mxu0 %v4485
          %v4582 = vpop.f32.mrb[0].mxu0
          %v4583 = vadd.f32 0.0, %v4582
          %v4584 = vpop.f32.mrb[0].mxu0
          %v4585 = vadd.f32 0.0, %v4584
          %4586 = vmatprep.mubr.f32.mxu0 0.0
          %4587 = vmatmul.mubr.f32.gmra.mrb[0].mxu0 %v4486
          %v4588 = vpop.f32.mrb[0].mxu0
          %v4589 = vadd.f32 0.0, %v4588
          %v4590 = vpop.f32.mrb[0].mxu0
          %v4591 = vadd.f32 0.0, %v4590
          %4592 = vmatprep.mubr.f32.mxu0 0.0
          %4593 = vmatmul.mubr.f32.gmra.mrb[0].mxu0 %v4487
          %v4594 = vpop.f32.mrb[0].mxu0
          %v4595 = vadd.f32 0.0, %v4594
          %v4596 = vpop.f32.mrb[0].mxu0
          %v4597 = vadd.f32 0.0, %v4596
          %4598 = vmatprep.mubr.f32.mxu0 0.0
          %4599 = vmatmul.mubr.f32.gmra.mrb[0].mxu0 %v4488
          %v4600 = vpop.f32.mrb[0].mxu0
          %v4601 = vadd.f32 0.0, %v4600
          %v4602 = vpop.f32.mrb[0].mxu0
          %v4603 = vadd.f32 0.0, %v4602
          %4604 = vmatprep.mubr.f32.mxu0 0.0
          %4605 = vmatmul.mubr.f32.gmra.mrb[0].mxu0 %v4489
          %v4606 = vpop.f32.mrb[0].mxu0
          %v4607 = vadd.f32 0.0, %v4606
          %v4608 = vpop.f32.mrb[0].mxu0
          %v4609 = vadd.f32 0.0, %v4608
          %4610 = vmatprep.mubr.f32.mxu0 0.0
          %4611 = vmatmul.mubr.f32.gmra.mrb[0].mxu0 %v4490
          %v4612 = vpop.f32.mrb[0].mxu0
          %v4613 = vadd.f32 0.0, %v4612
          %v4614 = vpop.f32.mrb[0].mxu0
          %v4615 = vadd.f32 0.0, %v4614
          %4616 = vmatprep.mubr.f32.mxu0 0.0
          %4617 = vmatmul.mubr.f32.gmra.mrb[0].mxu0 %v4491
          %v4618 = vpop.f32.mrb[0].mxu0
          %v4619 = vadd.f32 0.0, %v4618
          %v4620 = vpop.f32.mrb[0].mxu0
          %v4621 = vadd.f32 0.0, %v4620
          %4622 = vmatprep.mubr.f32.mxu0 0.0
          %4623 = vmatmul.mubr.f32.gmra.mrb[0].mxu0 %v4492
          %v4624 = vpop.f32.mrb[0].mxu0
          %v4625 = vadd.f32 0.0, %v4624
          %v4626 = vpop.f32.mrb[0].mxu0
          %v4627 = vadd.f32 0.0, %v4626
          %4628 = vmatprep.mubr.f32.mxu0 0.0
          %4629 = vmatmul.mubr.f32.gmra.mrb[0].mxu0 %v4493
          %v4630 = vpop.f32.mrb[0].mxu0
          %v4631 = vadd.f32 0.0, %v4630
          %v4632 = vpop.f32.mrb[0].mxu0
          %v4633 = vadd.f32 0.0, %v4632
          %4634 = vmatprep.mubr.f32.mxu0 0.0
          %4635 = vmatmul.mubr.f32.gmra.mrb[0].mxu0 %v4494
          %v4636 = vpop.f32.mrb[0].mxu0
          %v4637 = vadd.f32 0.0, %v4636
          %v4638 = vpop.f32.mrb[0].mxu0
          %v4639 = vadd.f32 0.0, %v4638
          %4640 = vmatprep.mubr.f32.mxu0 0.0
          %4641 = vmatmul.mubr.f32.gmra.mrb[0].mxu0 %v4495
          %v4642 = vpop.f32.mrb[0].mxu0
          %v4643 = vadd.f32 0.0, %v4642
          %v4644 = vpop.f32.mrb[0].mxu0
          %v4645 = vadd.f32 0.0, %v4644
          %4646 = vmatprep.mubr.f32.mxu0 0.0
          %4647 = vmatmul.mubr.f32.gmra.mrb[0].mxu0 %v4496
          %v4648 = vpop.f32.mrb[0].mxu0
          %v4649 = vadd.f32 0.0, %v4648
          %v4650 = vpop.f32.mrb[0].mxu0
          %v4651 = vadd.f32 0.0, %v4650
          %4652 = vmatprep.mubr.f32.mxu0 0.0
          %4653 = vmatmul.mubr.f32.gmra.mrb[0].mxu0 %v4497
          %v4654 = vpop.f32.mrb[0].mxu0
          %v4655 = vadd.f32 0.0, %v4654
          %v4656 = vpop.f32.mrb[0].mxu0
          %v4657 = vadd.f32 0.0, %v4656
          %4658 = vdwg.mxu0
          %v4659 = vld [vmem:[#allocation3] sm:$0xff]
          %v4660 = vld [vmem:[#allocation3 + $0x8] sm:$0xff]
          %v4661 = vld [vmem:[#allocation3 + $0x10] sm:$0xff]
          %v4662 = vld [vmem:[#allocation3 + $0x18] sm:$0xff]
          %v4663 = vld [vmem:[#allocation3 + $0x20] sm:$0xff]
          %v4664 = vld [vmem:[#allocation3 + $0x28] sm:$0xff]
          %v4665 = vld [vmem:[#allocation3 + $0x30] sm:$0xff]
          %v4666 = vld [vmem:[#allocation3 + $0x38] sm:$0xff]
          %v4667 = vld [vmem:[#allocation3 + $0x40] sm:$0xff]
          %v4668 = vld [vmem:[#allocation3 + $0x48] sm:$0xff]
          %v4669 = vld [vmem:[#allocation3 + $0x50] sm:$0xff]
          %v4670 = vld [vmem:[#allocation3 + $0x58] sm:$0xff]
          %v4671 = vld [vmem:[#allocation3 + $0x60] sm:$0xff]
          %v4672 = vld [vmem:[#allocation3 + $0x68] sm:$0xff]
          %v4673 = vld [vmem:[#allocation3 + $0x70] sm:$0xff]
          %v4674 = vld [vmem:[#allocation3 + $0x78] sm:$0xff]
          %4676 = vset.pattern.permute.xlu0 0
          %4677 = vperm.xlu0 %4676, %v4659
          %v4678 = vpop.permute.xlu0 %4677
          %4681 = vset.pattern.permute.xlu0 0
          %4682 = vperm.xlu0 %4681, %v4660
          %v4683 = vpop.permute.xlu0 %4682
          %4686 = vset.pattern.permute.xlu0 0
          %4687 = vperm.xlu0 %4686, %v4661
          %v4688 = vpop.permute.xlu0 %4687
          %4691 = vset.pattern.permute.xlu0 0
          %4692 = vperm.xlu0 %4691, %v4662
          %v4693 = vpop.permute.xlu0 %4692
          %4696 = vset.pattern.permute.xlu0 0
          %4697 = vperm.xlu0 %4696, %v4663
          %v4698 = vpop.permute.xlu0 %4697
          %4701 = vset.pattern.permute.xlu0 0
          %4702 = vperm.xlu0 %4701, %v4664
          %v4703 = vpop.permute.xlu0 %4702
          %4706 = vset.pattern.permute.xlu0 0
          %4707 = vperm.xlu0 %4706, %v4665
          %v4708 = vpop.permute.xlu0 %4707
          %4711 = vset.pattern.permute.xlu0 0
          %4712 = vperm.xlu0 %4711, %v4666
          %v4713 = vpop.permute.xlu0 %4712
          %4716 = vset.pattern.permute.xlu0 0
          %4717 = vperm.xlu0 %4716, %v4667
          %v4718 = vpop.permute.xlu0 %4717
          %4721 = vset.pattern.permute.xlu0 0
          %4722 = vperm.xlu0 %4721, %v4668
          %v4723 = vpop.permute.xlu0 %4722
          %4726 = vset.pattern.permute.xlu0 0
          %4727 = vperm.xlu0 %4726, %v4669
          %v4728 = vpop.permute.xlu0 %4727
          %4731 = vset.pattern.permute.xlu0 0
          %4732 = vperm.xlu0 %4731, %v4670
          %v4733 = vpop.permute.xlu0 %4732
          %4736 = vset.pattern.permute.xlu0 0
          %4737 = vperm.xlu0 %4736, %v4671
          %v4738 = vpop.permute.xlu0 %4737
          %4741 = vset.pattern.permute.xlu0 0
          %4742 = vperm.xlu0 %4741, %v4672
          %v4743 = vpop.permute.xlu0 %4742
          %4746 = vset.pattern.permute.xlu0 0
          %4747 = vperm.xlu0 %4746, %v4673
          %v4748 = vpop.permute.xlu0 %4747
          %4751 = vset.pattern.permute.xlu0 0
          %4752 = vperm.xlu0 %4751, %v4674
          %v4753 = vpop.permute.xlu0 %4752
          %v4755 = vsub.f32 %v4565, %v4678
          %v4756 = vsub.f32 %v4567, %v4678
          %v4757 = vsub.f32 %v4571, %v4683
          %v4758 = vsub.f32 %v4573, %v4683
          %v4759 = vsub.f32 %v4577, %v4688
          %v4760 = vsub.f32 %v4579, %v4688
          %v4761 = vsub.f32 %v4583, %v4693
          %v4762 = vsub.f32 %v4585, %v4693
          %v4763 = vsub.f32 %v4589, %v4698
          %v4764 = vsub.f32 %v4591, %v4698
          %v4765 = vsub.f32 %v4595, %v4703
          %v4766 = vsub.f32 %v4597, %v4703
          %v4767 = vsub.f32 %v4601, %v4708
          %v4768 = vsub.f32 %v4603, %v4708
          %v4769 = vsub.f32 %v4607, %v4713
          %v4770 = vsub.f32 %v4609, %v4713
          %v4771 = vsub.f32 %v4613, %v4718
          %v4772 = vsub.f32 %v4615, %v4718
          %v4773 = vsub.f32 %v4619, %v4723
          %v4774 = vsub.f32 %v4621, %v4723
          %v4775 = vsub.f32 %v4625, %v4728
          %v4776 = vsub.f32 %v4627, %v4728
          %v4777 = vsub.f32 %v4631, %v4733
          %v4778 = vsub.f32 %v4633, %v4733
          %v4779 = vsub.f32 %v4637, %v4738
          %v4780 = vsub.f32 %v4639, %v4738
          %v4781 = vsub.f32 %v4643, %v4743
          %v4782 = vsub.f32 %v4645, %v4743
          %v4783 = vsub.f32 %v4649, %v4748
          %v4784 = vsub.f32 %v4651, %v4748
          %v4785 = vsub.f32 %v4655, %v4753
          %v4786 = vsub.f32 %v4657, %v4753
          %v4787 = vmul.f32 %v4755, 1.442695
          %v4788 = vpow.pop %v4787
          %v4789 = vmul.f32 %v4756, 1.442695
          %v4790 = vpow.pop %v4789
          %v4791 = vmul.f32 %v4757, 1.442695
          %v4792 = vpow.pop %v4791
          %v4793 = vmul.f32 %v4758, 1.442695
          %v4794 = vpow.pop %v4793
          %v4795 = vmul.f32 %v4759, 1.442695
          %v4796 = vpow.pop %v4795
          %v4797 = vmul.f32 %v4760, 1.442695
          %v4798 = vpow.pop %v4797
          %v4799 = vmul.f32 %v4761, 1.442695
          %v4800 = vpow.pop %v4799
          %v4801 = vmul.f32 %v4762, 1.442695
          %v4802 = vpow.pop %v4801
          %v4803 = vmul.f32 %v4763, 1.442695
          %v4804 = vpow.pop %v4803
          %v4805 = vmul.f32 %v4764, 1.442695
          %v4806 = vpow.pop %v4805
          %v4807 = vmul.f32 %v4765, 1.442695
          %v4808 = vpow.pop %v4807
          %v4809 = vmul.f32 %v4766, 1.442695
          %v4810 = vpow.pop %v4809
          %v4811 = vmul.f32 %v4767, 1.442695
          %v4812 = vpow.pop %v4811
          %v4813 = vmul.f32 %v4768, 1.442695
          %v4814 = vpow.pop %v4813
          %v4815 = vmul.f32 %v4769, 1.442695
          %v4816 = vpow.pop %v4815
          %v4817 = vmul.f32 %v4770, 1.442695
          %v4818 = vpow.pop %v4817
          %v4819 = vmul.f32 %v4771, 1.442695
          %v4820 = vpow.pop %v4819
          %v4821 = vmul.f32 %v4772, 1.442695
          %v4822 = vpow.pop %v4821
          %v4823 = vmul.f32 %v4773, 1.442695
          %v4824 = vpow.pop %v4823
          %v4825 = vmul.f32 %v4774, 1.442695
          %v4826 = vpow.pop %v4825
          %v4827 = vmul.f32 %v4775, 1.442695
          %v4828 = vpow.pop %v4827
          %v4829 = vmul.f32 %v4776, 1.442695
          %v4830 = vpow.pop %v4829
          %v4831 = vmul.f32 %v4777, 1.442695
          %v4832 = vpow.pop %v4831
          %v4833 = vmul.f32 %v4778, 1.442695
          %v4834 = vpow.pop %v4833
          %v4835 = vmul.f32 %v4779, 1.442695
          %v4836 = vpow.pop %v4835
          %v4837 = vmul.f32 %v4780, 1.442695
          %v4838 = vpow.pop %v4837
          %v4839 = vmul.f32 %v4781, 1.442695
          %v4840 = vpow.pop %v4839
          %v4841 = vmul.f32 %v4782, 1.442695
          %v4842 = vpow.pop %v4841
          %v4843 = vmul.f32 %v4783, 1.442695
          %v4844 = vpow.pop %v4843
          %v4845 = vmul.f32 %v4784, 1.442695
          %v4846 = vpow.pop %v4845
          %v4847 = vmul.f32 %v4785, 1.442695
          %v4848 = vpow.pop %v4847
          %v4849 = vmul.f32 %v4786, 1.442695
          %v4850 = vpow.pop %v4849
          %v4851 = vld [vmem:[#allocation5] sm:$0xff]
          %v4852 = vld [vmem:[#allocation5 + $0x8] sm:$0xff]
          %v4853 = vld [vmem:[#allocation5 + $0x10] sm:$0xff]
          %v4854 = vld [vmem:[#allocation5 + $0x18] sm:$0xff]
          %v4855 = vld [vmem:[#allocation5 + $0x20] sm:$0xff]
          %v4856 = vld [vmem:[#allocation5 + $0x28] sm:$0xff]
          %v4857 = vld [vmem:[#allocation5 + $0x30] sm:$0xff]
          %v4858 = vld [vmem:[#allocation5 + $0x38] sm:$0xff]
          %v4859 = vld [vmem:[#allocation5 + $0x40] sm:$0xff]
          %v4860 = vld [vmem:[#allocation5 + $0x48] sm:$0xff]
          %v4861 = vld [vmem:[#allocation5 + $0x50] sm:$0xff]
          %v4862 = vld [vmem:[#allocation5 + $0x58] sm:$0xff]
          %v4863 = vld [vmem:[#allocation5 + $0x60] sm:$0xff]
          %v4864 = vld [vmem:[#allocation5 + $0x68] sm:$0xff]
          %v4865 = vld [vmem:[#allocation5 + $0x70] sm:$0xff]
          %v4866 = vld [vmem:[#allocation5 + $0x78] sm:$0xff]
          %4868 = vset.pattern.permute.xlu0 0
          %4869 = vperm.xlu0 %4868, %v4851
          %v4870 = vpop.permute.xlu0 %4869
          %4873 = vset.pattern.permute.xlu0 0
          %4874 = vperm.xlu0 %4873, %v4852
          %v4875 = vpop.permute.xlu0 %4874
          %4878 = vset.pattern.permute.xlu0 0
          %4879 = vperm.xlu0 %4878, %v4853
          %v4880 = vpop.permute.xlu0 %4879
          %4883 = vset.pattern.permute.xlu0 0
          %4884 = vperm.xlu0 %4883, %v4854
          %v4885 = vpop.permute.xlu0 %4884
          %4888 = vset.pattern.permute.xlu0 0
          %4889 = vperm.xlu0 %4888, %v4855
          %v4890 = vpop.permute.xlu0 %4889
          %4893 = vset.pattern.permute.xlu0 0
          %4894 = vperm.xlu0 %4893, %v4856
          %v4895 = vpop.permute.xlu0 %4894
          %4898 = vset.pattern.permute.xlu0 0
          %4899 = vperm.xlu0 %4898, %v4857
          %v4900 = vpop.permute.xlu0 %4899
          %4903 = vset.pattern.permute.xlu0 0
          %4904 = vperm.xlu0 %4903, %v4858
          %v4905 = vpop.permute.xlu0 %4904
          %4908 = vset.pattern.permute.xlu0 0
          %4909 = vperm.xlu0 %4908, %v4859
          %v4910 = vpop.permute.xlu0 %4909
          %4913 = vset.pattern.permute.xlu0 0
          %4914 = vperm.xlu0 %4913, %v4860
          %v4915 = vpop.permute.xlu0 %4914
          %4918 = vset.pattern.permute.xlu0 0
          %4919 = vperm.xlu0 %4918, %v4861
          %v4920 = vpop.permute.xlu0 %4919
          %4923 = vset.pattern.permute.xlu0 0
          %4924 = vperm.xlu0 %4923, %v4862
          %v4925 = vpop.permute.xlu0 %4924
          %4928 = vset.pattern.permute.xlu0 0
          %4929 = vperm.xlu0 %4928, %v4863
          %v4930 = vpop.permute.xlu0 %4929
          %4933 = vset.pattern.permute.xlu0 0
          %4934 = vperm.xlu0 %4933, %v4864
          %v4935 = vpop.permute.xlu0 %4934
          %4938 = vset.pattern.permute.xlu0 0
          %4939 = vperm.xlu0 %4938, %v4865
          %v4940 = vpop.permute.xlu0 %4939
          %4943 = vset.pattern.permute.xlu0 0
          %4944 = vperm.xlu0 %4943, %v4866
          %v4945 = vpop.permute.xlu0 %4944
          %v4947 = vmul.f32 %v4788, %v4870
          %v4948 = vmul.f32 %v4790, %v4870
          %v4949 = vmul.f32 %v4792, %v4875
          %v4950 = vmul.f32 %v4794, %v4875
          %v4951 = vmul.f32 %v4796, %v4880
          %v4952 = vmul.f32 %v4798, %v4880
          %v4953 = vmul.f32 %v4800, %v4885
          %v4954 = vmul.f32 %v4802, %v4885
          %v4955 = vmul.f32 %v4804, %v4890
          %v4956 = vmul.f32 %v4806, %v4890
          %v4957 = vmul.f32 %v4808, %v4895
          %v4958 = vmul.f32 %v4810, %v4895
          %v4959 = vmul.f32 %v4812, %v4900
          %v4960 = vmul.f32 %v4814, %v4900
          %v4961 = vmul.f32 %v4816, %v4905
          %v4962 = vmul.f32 %v4818, %v4905
          %v4963 = vmul.f32 %v4820, %v4910
          %v4964 = vmul.f32 %v4822, %v4910
          %v4965 = vmul.f32 %v4824, %v4915
          %v4966 = vmul.f32 %v4826, %v4915
          %v4967 = vmul.f32 %v4828, %v4920
          %v4968 = vmul.f32 %v4830, %v4920
          %v4969 = vmul.f32 %v4832, %v4925
          %v4970 = vmul.f32 %v4834, %v4925
          %v4971 = vmul.f32 %v4836, %v4930
          %v4972 = vmul.f32 %v4838, %v4930
          %v4973 = vmul.f32 %v4840, %v4935
          %v4974 = vmul.f32 %v4842, %v4935
          %v4975 = vmul.f32 %v4844, %v4940
          %v4976 = vmul.f32 %v4846, %v4940
          %v4977 = vmul.f32 %v4848, %v4945
          %v4978 = vmul.f32 %v4850, %v4945
          %v4979 = vld [vmem:[#allocation2 + $0x8] sm:$0xff]
          %v4980 = vld [vmem:[#allocation2 + $0x28] sm:$0xff]
          %v4981 = vld [vmem:[#allocation2 + $0x48] sm:$0xff]
          %v4982 = vld [vmem:[#allocation2 + $0x68] sm:$0xff]
          %v4983 = vld [vmem:[#allocation2 + $0x88] sm:$0xff]
          %v4984 = vld [vmem:[#allocation2 + $0xa8] sm:$0xff]
          %v4985 = vld [vmem:[#allocation2 + $0xc8] sm:$0xff]
          %v4986 = vld [vmem:[#allocation2 + $0xe8] sm:$0xff]
          %v4987 = vld [vmem:[#allocation2 + $0x108] sm:$0xff]
          %v4988 = vld [vmem:[#allocation2 + $0x128] sm:$0xff]
          %v4989 = vld [vmem:[#allocation2 + $0x148] sm:$0xff]
          %v4990 = vld [vmem:[#allocation2 + $0x168] sm:$0xff]
          %v4991 = vld [vmem:[#allocation2 + $0x188] sm:$0xff]
          %v4992 = vld [vmem:[#allocation2 + $0x1a8] sm:$0xff]
          %v4993 = vld [vmem:[#allocation2 + $0x1c8] sm:$0xff]
          %v4994 = vld [vmem:[#allocation2 + $0x1e8] sm:$0xff]
          %4995 = vmatprep.subr.mxu0 0.0
          %4996 = vmatpush1.xpose.msra.mxu0 %v1010
          %4997 = vmatprep.subr.mxu0 0.0
          %4998 = vmatpush1.xpose.msra.mxu0 %v1011
          %4999 = vmatprep.subr.mxu0 0.0
          %5000 = vmatpush1.xpose.msra.mxu0 %v1012
          %5001 = vmatprep.subr.mxu0 0.0
          %5002 = vmatpush1.xpose.msra.mxu0 %v1013
          %5003 = vmatprep.subr.mxu0 0.0
          %5004 = vmatpush1.xpose.msra.mxu0 %v1014
          %5005 = vmatprep.subr.mxu0 0.0
          %5006 = vmatpush1.xpose.msra.mxu0 %v1015
          %5007 = vmatprep.subr.mxu0 0.0
          %5008 = vmatpush1.xpose.msra.mxu0 %v1016
          %5009 = vmatprep.subr.mxu0 0.0
          %5010 = vmatpush1.xpose.msra.mxu0 %v1017
          %5011 = vmatprep.subr.mxu0 0.0
          %5012 = vmatpush1.xpose.msra.mxu0 %v1018
          %5013 = vmatprep.subr.mxu0 0.0
          %5014 = vmatpush1.xpose.msra.mxu0 %v1019
          %5015 = vmatprep.subr.mxu0 0.0
          %5016 = vmatpush1.xpose.msra.mxu0 %v1020
          %5017 = vmatprep.subr.mxu0 0.0
          %5018 = vmatpush1.xpose.msra.mxu0 %v1021
          %5019 = vmatprep.subr.mxu0 0.0
          %5020 = vmatpush1.xpose.msra.mxu0 %v1022
          %5021 = vmatprep.subr.mxu0 0.0
          %5022 = vmatpush1.xpose.msra.mxu0 %v1023
          %5023 = vmatprep.subr.mxu0 0.0
          %5024 = vmatpush1.xpose.msra.mxu0 %v1024
          %5025 = vmatprep.subr.mxu0 0.0
          %5026 = vmatpush1.xpose.msra.mxu0 %v1025
          %5027 = vmatprep.subr.mxu0 0.0
          %5028 = vmatpush1.xpose.msra.mxu0 %v1026
          %5029 = vmatprep.subr.mxu0 0.0
          %5030 = vmatpush1.xpose.msra.mxu0 %v1027
          %5031 = vmatprep.subr.mxu0 0.0
          %5032 = vmatpush1.xpose.msra.mxu0 %v1028
          %5033 = vmatprep.subr.mxu0 0.0
          %5034 = vmatpush1.xpose.msra.mxu0 %v1029
          %5035 = vmatprep.subr.mxu0 0.0
          %5036 = vmatpush1.xpose.msra.mxu0 %v1030
          %5037 = vmatprep.subr.mxu0 0.0
          %5038 = vmatpush1.xpose.msra.mxu0 %v1031
          %5039 = vmatprep.subr.mxu0 0.0
          %5040 = vmatpush1.xpose.msra.mxu0 %v1032
          %5041 = vmatprep.subr.mxu0 0.0
          %5042 = vmatpush1.xpose.msra.mxu0 %v1033
          %5043 = vmatprep.subr.mxu0 0.0
          %5044 = vmatpush1.xpose.msra.mxu0 %v1034
          %5045 = vmatprep.subr.mxu0 0.0
          %5046 = vmatpush1.xpose.msra.mxu0 %v1035
          %5047 = vmatprep.subr.mxu0 0.0
          %5048 = vmatpush1.xpose.msra.mxu0 %v1036
          %5049 = vmatprep.subr.mxu0 0.0
          %5050 = vmatpush1.xpose.msra.mxu0 %v1037
          %5051 = vmatprep.subr.mxu0 0.0
          %5052 = vmatpush1.xpose.msra.mxu0 %v1038
          %5053 = vmatprep.subr.mxu0 0.0
          %5054 = vmatpush1.xpose.msra.mxu0 %v1039
          %5055 = vmatprep.subr.mxu0 0.0
          %5056 = vmatpush1.xpose.msra.mxu0 %v1040
          %5057 = vmatprep.subr.mxu0 0.0
          %5058 = vmatpush1.xpose.msra.mxu0 %v1041
          %5059 = vmatprep.mubr.f32.mxu0 0.0
          %5060 = vmatmul.mubr.f32.gmra.mrb[0].mxu0 %v4979
          %v5061 = vpop.f32.mrb[0].mxu0
          %v5062 = vadd.f32 0.0, %v5061
          %v5063 = vpop.f32.mrb[0].mxu0
          %v5064 = vadd.f32 0.0, %v5063
          %5065 = vmatprep.mubr.f32.mxu0 0.0
          %5066 = vmatmul.mubr.f32.gmra.mrb[0].mxu0 %v4980
          %v5067 = vpop.f32.mrb[0].mxu0
          %v5068 = vadd.f32 0.0, %v5067
          %v5069 = vpop.f32.mrb[0].mxu0
          %v5070 = vadd.f32 0.0, %v5069
          %5071 = vmatprep.mubr.f32.mxu0 0.0
          %5072 = vmatmul.mubr.f32.gmra.mrb[0].mxu0 %v4981
          %v5073 = vpop.f32.mrb[0].mxu0
          %v5074 = vadd.f32 0.0, %v5073
          %v5075 = vpop.f32.mrb[0].mxu0
          %v5076 = vadd.f32 0.0, %v5075
          %5077 = vmatprep.mubr.f32.mxu0 0.0
          %5078 = vmatmul.mubr.f32.gmra.mrb[0].mxu0 %v4982
          %v5079 = vpop.f32.mrb[0].mxu0
          %v5080 = vadd.f32 0.0, %v5079
          %v5081 = vpop.f32.mrb[0].mxu0
          %v5082 = vadd.f32 0.0, %v5081
          %5083 = vmatprep.mubr.f32.mxu0 0.0
          %5084 = vmatmul.mubr.f32.gmra.mrb[0].mxu0 %v4983
          %v5085 = vpop.f32.mrb[0].mxu0
          %v5086 = vadd.f32 0.0, %v5085
          %v5087 = vpop.f32.mrb[0].mxu0
          %v5088 = vadd.f32 0.0, %v5087
          %5089 = vmatprep.mubr.f32.mxu0 0.0
          %5090 = vmatmul.mubr.f32.gmra.mrb[0].mxu0 %v4984
          %v5091 = vpop.f32.mrb[0].mxu0
          %v5092 = vadd.f32 0.0, %v5091
          %v5093 = vpop.f32.mrb[0].mxu0
          %v5094 = vadd.f32 0.0, %v5093
          %5095 = vmatprep.mubr.f32.mxu0 0.0
          %5096 = vmatmul.mubr.f32.gmra.mrb[0].mxu0 %v4985
          %v5097 = vpop.f32.mrb[0].mxu0
          %v5098 = vadd.f32 0.0, %v5097
          %v5099 = vpop.f32.mrb[0].mxu0
          %v5100 = vadd.f32 0.0, %v5099
          %5101 = vmatprep.mubr.f32.mxu0 0.0
          %5102 = vmatmul.mubr.f32.gmra.mrb[0].mxu0 %v4986
          %v5103 = vpop.f32.mrb[0].mxu0
          %v5104 = vadd.f32 0.0, %v5103
          %v5105 = vpop.f32.mrb[0].mxu0
          %v5106 = vadd.f32 0.0, %v5105
          %5107 = vmatprep.mubr.f32.mxu0 0.0
          %5108 = vmatmul.mubr.f32.gmra.mrb[0].mxu0 %v4987
          %v5109 = vpop.f32.mrb[0].mxu0
          %v5110 = vadd.f32 0.0, %v5109
          %v5111 = vpop.f32.mrb[0].mxu0
          %v5112 = vadd.f32 0.0, %v5111
          %5113 = vmatprep.mubr.f32.mxu0 0.0
          %5114 = vmatmul.mubr.f32.gmra.mrb[0].mxu0 %v4988
          %v5115 = vpop.f32.mrb[0].mxu0
          %v5116 = vadd.f32 0.0, %v5115
          %v5117 = vpop.f32.mrb[0].mxu0
          %v5118 = vadd.f32 0.0, %v5117
          %5119 = vmatprep.mubr.f32.mxu0 0.0
          %5120 = vmatmul.mubr.f32.gmra.mrb[0].mxu0 %v4989
          %v5121 = vpop.f32.mrb[0].mxu0
          %v5122 = vadd.f32 0.0, %v5121
          %v5123 = vpop.f32.mrb[0].mxu0
          %v5124 = vadd.f32 0.0, %v5123
          %5125 = vmatprep.mubr.f32.mxu0 0.0
          %5126 = vmatmul.mubr.f32.gmra.mrb[0].mxu0 %v4990
          %v5127 = vpop.f32.mrb[0].mxu0
          %v5128 = vadd.f32 0.0, %v5127
          %v5129 = vpop.f32.mrb[0].mxu0
          %v5130 = vadd.f32 0.0, %v5129
          %5131 = vmatprep.mubr.f32.mxu0 0.0
          %5132 = vmatmul.mubr.f32.gmra.mrb[0].mxu0 %v4991
          %v5133 = vpop.f32.mrb[0].mxu0
          %v5134 = vadd.f32 0.0, %v5133
          %v5135 = vpop.f32.mrb[0].mxu0
          %v5136 = vadd.f32 0.0, %v5135
          %5137 = vmatprep.mubr.f32.mxu0 0.0
          %5138 = vmatmul.mubr.f32.gmra.mrb[0].mxu0 %v4992
          %v5139 = vpop.f32.mrb[0].mxu0
          %v5140 = vadd.f32 0.0, %v5139
          %v5141 = vpop.f32.mrb[0].mxu0
          %v5142 = vadd.f32 0.0, %v5141
          %5143 = vmatprep.mubr.f32.mxu0 0.0
          %5144 = vmatmul.mubr.f32.gmra.mrb[0].mxu0 %v4993
          %v5145 = vpop.f32.mrb[0].mxu0
          %v5146 = vadd.f32 0.0, %v5145
          %v5147 = vpop.f32.mrb[0].mxu0
          %v5148 = vadd.f32 0.0, %v5147
          %5149 = vmatprep.mubr.f32.mxu0 0.0
          %5150 = vmatmul.mubr.f32.gmra.mrb[0].mxu0 %v4994
          %v5151 = vpop.f32.mrb[0].mxu0
          %v5152 = vadd.f32 0.0, %v5151
          %v5153 = vpop.f32.mrb[0].mxu0
          %v5154 = vadd.f32 0.0, %v5153
          %5155 = vdwg.mxu0
          %s5156 = scalar_lea.vmem [#allocation3], 128
          %v5157 = vld [vmem:[%s5156] sm:$0xff]
          %v5158 = vld [vmem:[%s5156 + $0x8] sm:$0xff]
          %v5159 = vld [vmem:[%s5156 + $0x10] sm:$0xff]
          %v5160 = vld [vmem:[%s5156 + $0x18] sm:$0xff]
          %v5161 = vld [vmem:[%s5156 + $0x20] sm:$0xff]
          %v5162 = vld [vmem:[%s5156 + $0x28] sm:$0xff]
          %v5163 = vld [vmem:[%s5156 + $0x30] sm:$0xff]
          %v5164 = vld [vmem:[%s5156 + $0x38] sm:$0xff]
          %v5165 = vld [vmem:[%s5156 + $0x40] sm:$0xff]
          %v5166 = vld [vmem:[%s5156 + $0x48] sm:$0xff]
          %v5167 = vld [vmem:[%s5156 + $0x50] sm:$0xff]
          %v5168 = vld [vmem:[%s5156 + $0x58] sm:$0xff]
          %v5169 = vld [vmem:[%s5156 + $0x60] sm:$0xff]
          %v5170 = vld [vmem:[%s5156 + $0x68] sm:$0xff]
          %v5171 = vld [vmem:[%s5156 + $0x70] sm:$0xff]
          %v5172 = vld [vmem:[%s5156 + $0x78] sm:$0xff]
          %5174 = vset.pattern.permute.xlu0 0
          %5175 = vperm.xlu0 %5174, %v5157
          %v5176 = vpop.permute.xlu0 %5175
          %5179 = vset.pattern.permute.xlu0 0
          %5180 = vperm.xlu0 %5179, %v5158
          %v5181 = vpop.permute.xlu0 %5180
          %5184 = vset.pattern.permute.xlu0 0
          %5185 = vperm.xlu0 %5184, %v5159
          %v5186 = vpop.permute.xlu0 %5185
          %5189 = vset.pattern.permute.xlu0 0
          %5190 = vperm.xlu0 %5189, %v5160
          %v5191 = vpop.permute.xlu0 %5190
          %5194 = vset.pattern.permute.xlu0 0
          %5195 = vperm.xlu0 %5194, %v5161
          %v5196 = vpop.permute.xlu0 %5195
          %5199 = vset.pattern.permute.xlu0 0
          %5200 = vperm.xlu0 %5199, %v5162
          %v5201 = vpop.permute.xlu0 %5200
          %5204 = vset.pattern.permute.xlu0 0
          %5205 = vperm.xlu0 %5204, %v5163
          %v5206 = vpop.permute.xlu0 %5205
          %5209 = vset.pattern.permute.xlu0 0
          %5210 = vperm.xlu0 %5209, %v5164
          %v5211 = vpop.permute.xlu0 %5210
          %5214 = vset.pattern.permute.xlu0 0
          %5215 = vperm.xlu0 %5214, %v5165
          %v5216 = vpop.permute.xlu0 %5215
          %5219 = vset.pattern.permute.xlu0 0
          %5220 = vperm.xlu0 %5219, %v5166
          %v5221 = vpop.permute.xlu0 %5220
          %5224 = vset.pattern.permute.xlu0 0
          %5225 = vperm.xlu0 %5224, %v5167
          %v5226 = vpop.permute.xlu0 %5225
          %5229 = vset.pattern.permute.xlu0 0
          %5230 = vperm.xlu0 %5229, %v5168
          %v5231 = vpop.permute.xlu0 %5230
          %5234 = vset.pattern.permute.xlu0 0
          %5235 = vperm.xlu0 %5234, %v5169
          %v5236 = vpop.permute.xlu0 %5235
          %5239 = vset.pattern.permute.xlu0 0
          %5240 = vperm.xlu0 %5239, %v5170
          %v5241 = vpop.permute.xlu0 %5240
          %5244 = vset.pattern.permute.xlu0 0
          %5245 = vperm.xlu0 %5244, %v5171
          %v5246 = vpop.permute.xlu0 %5245
          %5249 = vset.pattern.permute.xlu0 0
          %5250 = vperm.xlu0 %5249, %v5172
          %v5251 = vpop.permute.xlu0 %5250
          %v5253 = vsub.f32 %v5062, %v5176
          %v5254 = vsub.f32 %v5064, %v5176
          %v5255 = vsub.f32 %v5068, %v5181
          %v5256 = vsub.f32 %v5070, %v5181
          %v5257 = vsub.f32 %v5074, %v5186
          %v5258 = vsub.f32 %v5076, %v5186
          %v5259 = vsub.f32 %v5080, %v5191
          %v5260 = vsub.f32 %v5082, %v5191
          %v5261 = vsub.f32 %v5086, %v5196
          %v5262 = vsub.f32 %v5088, %v5196
          %v5263 = vsub.f32 %v5092, %v5201
          %v5264 = vsub.f32 %v5094, %v5201
          %v5265 = vsub.f32 %v5098, %v5206
          %v5266 = vsub.f32 %v5100, %v5206
          %v5267 = vsub.f32 %v5104, %v5211
          %v5268 = vsub.f32 %v5106, %v5211
          %v5269 = vsub.f32 %v5110, %v5216
          %v5270 = vsub.f32 %v5112, %v5216
          %v5271 = vsub.f32 %v5116, %v5221
          %v5272 = vsub.f32 %v5118, %v5221
          %v5273 = vsub.f32 %v5122, %v5226
          %v5274 = vsub.f32 %v5124, %v5226
          %v5275 = vsub.f32 %v5128, %v5231
          %v5276 = vsub.f32 %v5130, %v5231
          %v5277 = vsub.f32 %v5134, %v5236
          %v5278 = vsub.f32 %v5136, %v5236
          %v5279 = vsub.f32 %v5140, %v5241
          %v5280 = vsub.f32 %v5142, %v5241
          %v5281 = vsub.f32 %v5146, %v5246
          %v5282 = vsub.f32 %v5148, %v5246
          %v5283 = vsub.f32 %v5152, %v5251
          %v5284 = vsub.f32 %v5154, %v5251
          %v5285 = vmul.f32 %v5253, 1.442695
          %v5286 = vpow.pop %v5285
          %v5287 = vmul.f32 %v5254, 1.442695
          %v5288 = vpow.pop %v5287
          %v5289 = vmul.f32 %v5255, 1.442695
          %v5290 = vpow.pop %v5289
          %v5291 = vmul.f32 %v5256, 1.442695
          %v5292 = vpow.pop %v5291
          %v5293 = vmul.f32 %v5257, 1.442695
          %v5294 = vpow.pop %v5293
          %v5295 = vmul.f32 %v5258, 1.442695
          %v5296 = vpow.pop %v5295
          %v5297 = vmul.f32 %v5259, 1.442695
          %v5298 = vpow.pop %v5297
          %v5299 = vmul.f32 %v5260, 1.442695
          %v5300 = vpow.pop %v5299
          %v5301 = vmul.f32 %v5261, 1.442695
          %v5302 = vpow.pop %v5301
          %v5303 = vmul.f32 %v5262, 1.442695
          %v5304 = vpow.pop %v5303
          %v5305 = vmul.f32 %v5263, 1.442695
          %v5306 = vpow.pop %v5305
          %v5307 = vmul.f32 %v5264, 1.442695
          %v5308 = vpow.pop %v5307
          %v5309 = vmul.f32 %v5265, 1.442695
          %v5310 = vpow.pop %v5309
          %v5311 = vmul.f32 %v5266, 1.442695
          %v5312 = vpow.pop %v5311
          %v5313 = vmul.f32 %v5267, 1.442695
          %v5314 = vpow.pop %v5313
          %v5315 = vmul.f32 %v5268, 1.442695
          %v5316 = vpow.pop %v5315
          %v5317 = vmul.f32 %v5269, 1.442695
          %v5318 = vpow.pop %v5317
          %v5319 = vmul.f32 %v5270, 1.442695
          %v5320 = vpow.pop %v5319
          %v5321 = vmul.f32 %v5271, 1.442695
          %v5322 = vpow.pop %v5321
          %v5323 = vmul.f32 %v5272, 1.442695
          %v5324 = vpow.pop %v5323
          %v5325 = vmul.f32 %v5273, 1.442695
          %v5326 = vpow.pop %v5325
          %v5327 = vmul.f32 %v5274, 1.442695
          %v5328 = vpow.pop %v5327
          %v5329 = vmul.f32 %v5275, 1.442695
          %v5330 = vpow.pop %v5329
          %v5331 = vmul.f32 %v5276, 1.442695
          %v5332 = vpow.pop %v5331
          %v5333 = vmul.f32 %v5277, 1.442695
          %v5334 = vpow.pop %v5333
          %v5335 = vmul.f32 %v5278, 1.442695
          %v5336 = vpow.pop %v5335
          %v5337 = vmul.f32 %v5279, 1.442695
          %v5338 = vpow.pop %v5337
          %v5339 = vmul.f32 %v5280, 1.442695
          %v5340 = vpow.pop %v5339
          %v5341 = vmul.f32 %v5281, 1.442695
          %v5342 = vpow.pop %v5341
          %v5343 = vmul.f32 %v5282, 1.442695
          %v5344 = vpow.pop %v5343
          %v5345 = vmul.f32 %v5283, 1.442695
          %v5346 = vpow.pop %v5345
          %v5347 = vmul.f32 %v5284, 1.442695
          %v5348 = vpow.pop %v5347
          %s5349 = scalar_lea.vmem [#allocation5], 128
          %v5350 = vld [vmem:[%s5349] sm:$0xff]
          %v5351 = vld [vmem:[%s5349 + $0x8] sm:$0xff]
          %v5352 = vld [vmem:[%s5349 + $0x10] sm:$0xff]
          %v5353 = vld [vmem:[%s5349 + $0x18] sm:$0xff]
          %v5354 = vld [vmem:[%s5349 + $0x20] sm:$0xff]
          %v5355 = vld [vmem:[%s5349 + $0x28] sm:$0xff]
          %v5356 = vld [vmem:[%s5349 + $0x30] sm:$0xff]
          %v5357 = vld [vmem:[%s5349 + $0x38] sm:$0xff]
          %v5358 = vld [vmem:[%s5349 + $0x40] sm:$0xff]
          %v5359 = vld [vmem:[%s5349 + $0x48] sm:$0xff]
          %v5360 = vld [vmem:[%s5349 + $0x50] sm:$0xff]
          %v5361 = vld [vmem:[%s5349 + $0x58] sm:$0xff]
          %v5362 = vld [vmem:[%s5349 + $0x60] sm:$0xff]
          %v5363 = vld [vmem:[%s5349 + $0x68] sm:$0xff]
          %v5364 = vld [vmem:[%s5349 + $0x70] sm:$0xff]
          %v5365 = vld [vmem:[%s5349 + $0x78] sm:$0xff]
          %5367 = vset.pattern.permute.xlu0 0
          %5368 = vperm.xlu0 %5367, %v5350
          %v5369 = vpop.permute.xlu0 %5368
          %5372 = vset.pattern.permute.xlu0 0
          %5373 = vperm.xlu0 %5372, %v5351
          %v5374 = vpop.permute.xlu0 %5373
          %5377 = vset.pattern.permute.xlu0 0
          %5378 = vperm.xlu0 %5377, %v5352
          %v5379 = vpop.permute.xlu0 %5378
          %5382 = vset.pattern.permute.xlu0 0
          %5383 = vperm.xlu0 %5382, %v5353
          %v5384 = vpop.permute.xlu0 %5383
          %5387 = vset.pattern.permute.xlu0 0
          %5388 = vperm.xlu0 %5387, %v5354
          %v5389 = vpop.permute.xlu0 %5388
          %5392 = vset.pattern.permute.xlu0 0
          %5393 = vperm.xlu0 %5392, %v5355
          %v5394 = vpop.permute.xlu0 %5393
          %5397 = vset.pattern.permute.xlu0 0
          %5398 = vperm.xlu0 %5397, %v5356
          %v5399 = vpop.permute.xlu0 %5398
          %5402 = vset.pattern.permute.xlu0 0
          %5403 = vperm.xlu0 %5402, %v5357
          %v5404 = vpop.permute.xlu0 %5403
          %5407 = vset.pattern.permute.xlu0 0
          %5408 = vperm.xlu0 %5407, %v5358
          %v5409 = vpop.permute.xlu0 %5408
          %5412 = vset.pattern.permute.xlu0 0
          %5413 = vperm.xlu0 %5412, %v5359
          %v5414 = vpop.permute.xlu0 %5413
          %5417 = vset.pattern.permute.xlu0 0
          %5418 = vperm.xlu0 %5417, %v5360
          %v5419 = vpop.permute.xlu0 %5418
          %5422 = vset.pattern.permute.xlu0 0
          %5423 = vperm.xlu0 %5422, %v5361
          %v5424 = vpop.permute.xlu0 %5423
          %5427 = vset.pattern.permute.xlu0 0
          %5428 = vperm.xlu0 %5427, %v5362
          %v5429 = vpop.permute.xlu0 %5428
          %5432 = vset.pattern.permute.xlu0 0
          %5433 = vperm.xlu0 %5432, %v5363
          %v5434 = vpop.permute.xlu0 %5433
          %5437 = vset.pattern.permute.xlu0 0
          %5438 = vperm.xlu0 %5437, %v5364
          %v5439 = vpop.permute.xlu0 %5438
          %5442 = vset.pattern.permute.xlu0 0
          %5443 = vperm.xlu0 %5442, %v5365
          %v5444 = vpop.permute.xlu0 %5443
          %v5446 = vmul.f32 %v5286, %v5369
          %v5447 = vmul.f32 %v5288, %v5369
          %v5448 = vmul.f32 %v5290, %v5374
          %v5449 = vmul.f32 %v5292, %v5374
          %v5450 = vmul.f32 %v5294, %v5379
          %v5451 = vmul.f32 %v5296, %v5379
          %v5452 = vmul.f32 %v5298, %v5384
          %v5453 = vmul.f32 %v5300, %v5384
          %v5454 = vmul.f32 %v5302, %v5389
          %v5455 = vmul.f32 %v5304, %v5389
          %v5456 = vmul.f32 %v5306, %v5394
          %v5457 = vmul.f32 %v5308, %v5394
          %v5458 = vmul.f32 %v5310, %v5399
          %v5459 = vmul.f32 %v5312, %v5399
          %v5460 = vmul.f32 %v5314, %v5404
          %v5461 = vmul.f32 %v5316, %v5404
          %v5462 = vmul.f32 %v5318, %v5409
          %v5463 = vmul.f32 %v5320, %v5409
          %v5464 = vmul.f32 %v5322, %v5414
          %v5465 = vmul.f32 %v5324, %v5414
          %v5466 = vmul.f32 %v5326, %v5419
          %v5467 = vmul.f32 %v5328, %v5419
          %v5468 = vmul.f32 %v5330, %v5424
          %v5469 = vmul.f32 %v5332, %v5424
          %v5470 = vmul.f32 %v5334, %v5429
          %v5471 = vmul.f32 %v5336, %v5429
          %v5472 = vmul.f32 %v5338, %v5434
          %v5473 = vmul.f32 %v5340, %v5434
          %v5474 = vmul.f32 %v5342, %v5439
          %v5475 = vmul.f32 %v5344, %v5439
          %v5476 = vmul.f32 %v5346, %v5444
          %v5477 = vmul.f32 %v5348, %v5444
          %v5478 = vadd.f32 %v4947, %v5446
          %v5479 = vadd.f32 %v4948, %v5447
          %v5480 = vadd.f32 %v4949, %v5448
          %v5481 = vadd.f32 %v4950, %v5449
          %v5482 = vadd.f32 %v4951, %v5450
          %v5483 = vadd.f32 %v4952, %v5451
          %v5484 = vadd.f32 %v4953, %v5452
          %v5485 = vadd.f32 %v4954, %v5453
          %v5486 = vadd.f32 %v4955, %v5454
          %v5487 = vadd.f32 %v4956, %v5455
          %v5488 = vadd.f32 %v4957, %v5456
          %v5489 = vadd.f32 %v4958, %v5457
          %v5490 = vadd.f32 %v4959, %v5458
          %v5491 = vadd.f32 %v4960, %v5459
          %v5492 = vadd.f32 %v4961, %v5460
          %v5493 = vadd.f32 %v4962, %v5461
          %v5494 = vadd.f32 %v4963, %v5462
          %v5495 = vadd.f32 %v4964, %v5463
          %v5496 = vadd.f32 %v4965, %v5464
          %v5497 = vadd.f32 %v4966, %v5465
          %v5498 = vadd.f32 %v4967, %v5466
          %v5499 = vadd.f32 %v4968, %v5467
          %v5500 = vadd.f32 %v4969, %v5468
          %v5501 = vadd.f32 %v4970, %v5469
          %v5502 = vadd.f32 %v4971, %v5470
          %v5503 = vadd.f32 %v4972, %v5471
          %v5504 = vadd.f32 %v4973, %v5472
          %v5505 = vadd.f32 %v4974, %v5473
          %v5506 = vadd.f32 %v4975, %v5474
          %v5507 = vadd.f32 %v4976, %v5475
          %v5508 = vadd.f32 %v4977, %v5476
          %v5509 = vadd.f32 %v4978, %v5477
          %v5510 = vld [vmem:[#allocation2 + $0x10] sm:$0xff]
          %v5511 = vld [vmem:[#allocation2 + $0x30] sm:$0xff]
          %v5512 = vld [vmem:[#allocation2 + $0x50] sm:$0xff]
          %v5513 = vld [vmem:[#allocation2 + $0x70] sm:$0xff]
          %v5514 = vld [vmem:[#allocation2 + $0x90] sm:$0xff]
          %v5515 = vld [vmem:[#allocation2 + $0xb0] sm:$0xff]
          %v5516 = vld [vmem:[#allocation2 + $0xd0] sm:$0xff]
          %v5517 = vld [vmem:[#allocation2 + $0xf0] sm:$0xff]
          %v5518 = vld [vmem:[#allocation2 + $0x110] sm:$0xff]
          %v5519 = vld [vmem:[#allocation2 + $0x130] sm:$0xff]
          %v5520 = vld [vmem:[#allocation2 + $0x150] sm:$0xff]
          %v5521 = vld [vmem:[#allocation2 + $0x170] sm:$0xff]
          %v5522 = vld [vmem:[#allocation2 + $0x190] sm:$0xff]
          %v5523 = vld [vmem:[#allocation2 + $0x1b0] sm:$0xff]
          %v5524 = vld [vmem:[#allocation2 + $0x1d0] sm:$0xff]
          %v5525 = vld [vmem:[#allocation2 + $0x1f0] sm:$0xff]
          %5526 = vmatprep.subr.mxu0 0.0
          %5527 = vmatpush1.xpose.msra.mxu0 %v1010
          %5528 = vmatprep.subr.mxu0 0.0
          %5529 = vmatpush1.xpose.msra.mxu0 %v1011
          %5530 = vmatprep.subr.mxu0 0.0
          %5531 = vmatpush1.xpose.msra.mxu0 %v1012
          %5532 = vmatprep.subr.mxu0 0.0
          %5533 = vmatpush1.xpose.msra.mxu0 %v1013
          %5534 = vmatprep.subr.mxu0 0.0
          %5535 = vmatpush1.xpose.msra.mxu0 %v1014
          %5536 = vmatprep.subr.mxu0 0.0
          %5537 = vmatpush1.xpose.msra.mxu0 %v1015
          %5538 = vmatprep.subr.mxu0 0.0
          %5539 = vmatpush1.xpose.msra.mxu0 %v1016
          %5540 = vmatprep.subr.mxu0 0.0
          %5541 = vmatpush1.xpose.msra.mxu0 %v1017
          %5542 = vmatprep.subr.mxu0 0.0
          %5543 = vmatpush1.xpose.msra.mxu0 %v1018
          %5544 = vmatprep.subr.mxu0 0.0
          %5545 = vmatpush1.xpose.msra.mxu0 %v1019
          %5546 = vmatprep.subr.mxu0 0.0
          %5547 = vmatpush1.xpose.msra.mxu0 %v1020
          %5548 = vmatprep.subr.mxu0 0.0
          %5549 = vmatpush1.xpose.msra.mxu0 %v1021
          %5550 = vmatprep.subr.mxu0 0.0
          %5551 = vmatpush1.xpose.msra.mxu0 %v1022
          %5552 = vmatprep.subr.mxu0 0.0
          %5553 = vmatpush1.xpose.msra.mxu0 %v1023
          %5554 = vmatprep.subr.mxu0 0.0
          %5555 = vmatpush1.xpose.msra.mxu0 %v1024
          %5556 = vmatprep.subr.mxu0 0.0
          %5557 = vmatpush1.xpose.msra.mxu0 %v1025
          %5558 = vmatprep.subr.mxu0 0.0
          %5559 = vmatpush1.xpose.msra.mxu0 %v1026
          %5560 = vmatprep.subr.mxu0 0.0
          %5561 = vmatpush1.xpose.msra.mxu0 %v1027
          %5562 = vmatprep.subr.mxu0 0.0
          %5563 = vmatpush1.xpose.msra.mxu0 %v1028
          %5564 = vmatprep.subr.mxu0 0.0
          %5565 = vmatpush1.xpose.msra.mxu0 %v1029
          %5566 = vmatprep.subr.mxu0 0.0
          %5567 = vmatpush1.xpose.msra.mxu0 %v1030
          %5568 = vmatprep.subr.mxu0 0.0
          %5569 = vmatpush1.xpose.msra.mxu0 %v1031
          %5570 = vmatprep.subr.mxu0 0.0
          %5571 = vmatpush1.xpose.msra.mxu0 %v1032
          %5572 = vmatprep.subr.mxu0 0.0
          %5573 = vmatpush1.xpose.msra.mxu0 %v1033
          %5574 = vmatprep.subr.mxu0 0.0
          %5575 = vmatpush1.xpose.msra.mxu0 %v1034
          %5576 = vmatprep.subr.mxu0 0.0
          %5577 = vmatpush1.xpose.msra.mxu0 %v1035
          %5578 = vmatprep.subr.mxu0 0.0
          %5579 = vmatpush1.xpose.msra.mxu0 %v1036
          %5580 = vmatprep.subr.mxu0 0.0
          %5581 = vmatpush1.xpose.msra.mxu0 %v1037
          %5582 = vmatprep.subr.mxu0 0.0
          %5583 = vmatpush1.xpose.msra.mxu0 %v1038
          %5584 = vmatprep.subr.mxu0 0.0
          %5585 = vmatpush1.xpose.msra.mxu0 %v1039
          %5586 = vmatprep.subr.mxu0 0.0
          %5587 = vmatpush1.xpose.msra.mxu0 %v1040
          %5588 = vmatprep.subr.mxu0 0.0
          %5589 = vmatpush1.xpose.msra.mxu0 %v1041
          %5590 = vmatprep.mubr.f32.mxu0 0.0
          %5591 = vmatmul.mubr.f32.gmra.mrb[0].mxu0 %v5510
          %v5592 = vpop.f32.mrb[0].mxu0
          %v5593 = vadd.f32 0.0, %v5592
          %v5594 = vpop.f32.mrb[0].mxu0
          %v5595 = vadd.f32 0.0, %v5594
          %5596 = vmatprep.mubr.f32.mxu0 0.0
          %5597 = vmatmul.mubr.f32.gmra.mrb[0].mxu0 %v5511
          %v5598 = vpop.f32.mrb[0].mxu0
          %v5599 = vadd.f32 0.0, %v5598
          %v5600 = vpop.f32.mrb[0].mxu0
          %v5601 = vadd.f32 0.0, %v5600
          %5602 = vmatprep.mubr.f32.mxu0 0.0
          %5603 = vmatmul.mubr.f32.gmra.mrb[0].mxu0 %v5512
          %v5604 = vpop.f32.mrb[0].mxu0
          %v5605 = vadd.f32 0.0, %v5604
          %v5606 = vpop.f32.mrb[0].mxu0
          %v5607 = vadd.f32 0.0, %v5606
          %5608 = vmatprep.mubr.f32.mxu0 0.0
          %5609 = vmatmul.mubr.f32.gmra.mrb[0].mxu0 %v5513
          %v5610 = vpop.f32.mrb[0].mxu0
          %v5611 = vadd.f32 0.0, %v5610
          %v5612 = vpop.f32.mrb[0].mxu0
          %v5613 = vadd.f32 0.0, %v5612
          %5614 = vmatprep.mubr.f32.mxu0 0.0
          %5615 = vmatmul.mubr.f32.gmra.mrb[0].mxu0 %v5514
          %v5616 = vpop.f32.mrb[0].mxu0
          %v5617 = vadd.f32 0.0, %v5616
          %v5618 = vpop.f32.mrb[0].mxu0
          %v5619 = vadd.f32 0.0, %v5618
          %5620 = vmatprep.mubr.f32.mxu0 0.0
          %5621 = vmatmul.mubr.f32.gmra.mrb[0].mxu0 %v5515
          %v5622 = vpop.f32.mrb[0].mxu0
          %v5623 = vadd.f32 0.0, %v5622
          %v5624 = vpop.f32.mrb[0].mxu0
          %v5625 = vadd.f32 0.0, %v5624
          %5626 = vmatprep.mubr.f32.mxu0 0.0
          %5627 = vmatmul.mubr.f32.gmra.mrb[0].mxu0 %v5516
          %v5628 = vpop.f32.mrb[0].mxu0
          %v5629 = vadd.f32 0.0, %v5628
          %v5630 = vpop.f32.mrb[0].mxu0
          %v5631 = vadd.f32 0.0, %v5630
          %5632 = vmatprep.mubr.f32.mxu0 0.0
          %5633 = vmatmul.mubr.f32.gmra.mrb[0].mxu0 %v5517
          %v5634 = vpop.f32.mrb[0].mxu0
          %v5635 = vadd.f32 0.0, %v5634
          %v5636 = vpop.f32.mrb[0].mxu0
          %v5637 = vadd.f32 0.0, %v5636
          %5638 = vmatprep.mubr.f32.mxu0 0.0
          %5639 = vmatmul.mubr.f32.gmra.mrb[0].mxu0 %v5518
          %v5640 = vpop.f32.mrb[0].mxu0
          %v5641 = vadd.f32 0.0, %v5640
          %v5642 = vpop.f32.mrb[0].mxu0
          %v5643 = vadd.f32 0.0, %v5642
          %5644 = vmatprep.mubr.f32.mxu0 0.0
          %5645 = vmatmul.mubr.f32.gmra.mrb[0].mxu0 %v5519
          %v5646 = vpop.f32.mrb[0].mxu0
          %v5647 = vadd.f32 0.0, %v5646
          %v5648 = vpop.f32.mrb[0].mxu0
          %v5649 = vadd.f32 0.0, %v5648
          %5650 = vmatprep.mubr.f32.mxu0 0.0
          %5651 = vmatmul.mubr.f32.gmra.mrb[0].mxu0 %v5520
          %v5652 = vpop.f32.mrb[0].mxu0
          %v5653 = vadd.f32 0.0, %v5652
          %v5654 = vpop.f32.mrb[0].mxu0
          %v5655 = vadd.f32 0.0, %v5654
          %5656 = vmatprep.mubr.f32.mxu0 0.0
          %5657 = vmatmul.mubr.f32.gmra.mrb[0].mxu0 %v5521
          %v5658 = vpop.f32.mrb[0].mxu0
          %v5659 = vadd.f32 0.0, %v5658
          %v5660 = vpop.f32.mrb[0].mxu0
          %v5661 = vadd.f32 0.0, %v5660
          %5662 = vmatprep.mubr.f32.mxu0 0.0
          %5663 = vmatmul.mubr.f32.gmra.mrb[0].mxu0 %v5522
          %v5664 = vpop.f32.mrb[0].mxu0
          %v5665 = vadd.f32 0.0, %v5664
          %v5666 = vpop.f32.mrb[0].mxu0
          %v5667 = vadd.f32 0.0, %v5666
          %5668 = vmatprep.mubr.f32.mxu0 0.0
          %5669 = vmatmul.mubr.f32.gmra.mrb[0].mxu0 %v5523
          %v5670 = vpop.f32.mrb[0].mxu0
          %v5671 = vadd.f32 0.0, %v5670
          %v5672 = vpop.f32.mrb[0].mxu0
          %v5673 = vadd.f32 0.0, %v5672
          %5674 = vmatprep.mubr.f32.mxu0 0.0
          %5675 = vmatmul.mubr.f32.gmra.mrb[0].mxu0 %v5524
          %v5676 = vpop.f32.mrb[0].mxu0
          %v5677 = vadd.f32 0.0, %v5676
          %v5678 = vpop.f32.mrb[0].mxu0
          %v5679 = vadd.f32 0.0, %v5678
          %5680 = vmatprep.mubr.f32.mxu0 0.0
          %5681 = vmatmul.mubr.f32.gmra.mrb[0].mxu0 %v5525
          %v5682 = vpop.f32.mrb[0].mxu0
          %v5683 = vadd.f32 0.0, %v5682
          %v5684 = vpop.f32.mrb[0].mxu0
          %v5685 = vadd.f32 0.0, %v5684
          %5686 = vdwg.mxu0
          %s5687 = scalar_lea.vmem [#allocation3], 256
          %v5688 = vld [vmem:[%s5687] sm:$0xff]
          %v5689 = vld [vmem:[%s5687 + $0x8] sm:$0xff]
          %v5690 = vld [vmem:[%s5687 + $0x10] sm:$0xff]
          %v5691 = vld [vmem:[%s5687 + $0x18] sm:$0xff]
          %v5692 = vld [vmem:[%s5687 + $0x20] sm:$0xff]
          %v5693 = vld [vmem:[%s5687 + $0x28] sm:$0xff]
          %v5694 = vld [vmem:[%s5687 + $0x30] sm:$0xff]
          %v5695 = vld [vmem:[%s5687 + $0x38] sm:$0xff]
          %v5696 = vld [vmem:[%s5687 + $0x40] sm:$0xff]
          %v5697 = vld [vmem:[%s5687 + $0x48] sm:$0xff]
          %v5698 = vld [vmem:[%s5687 + $0x50] sm:$0xff]
          %v5699 = vld [vmem:[%s5687 + $0x58] sm:$0xff]
          %v5700 = vld [vmem:[%s5687 + $0x60] sm:$0xff]
          %v5701 = vld [vmem:[%s5687 + $0x68] sm:$0xff]
          %v5702 = vld [vmem:[%s5687 + $0x70] sm:$0xff]
          %v5703 = vld [vmem:[%s5687 + $0x78] sm:$0xff]
          %5705 = vset.pattern.permute.xlu0 0
          %5706 = vperm.xlu0 %5705, %v5688
          %v5707 = vpop.permute.xlu0 %5706
          %5710 = vset.pattern.permute.xlu0 0
          %5711 = vperm.xlu0 %5710, %v5689
          %v5712 = vpop.permute.xlu0 %5711
          %5715 = vset.pattern.permute.xlu0 0
          %5716 = vperm.xlu0 %5715, %v5690
          %v5717 = vpop.permute.xlu0 %5716
          %5720 = vset.pattern.permute.xlu0 0
          %5721 = vperm.xlu0 %5720, %v5691
          %v5722 = vpop.permute.xlu0 %5721
          %5725 = vset.pattern.permute.xlu0 0
          %5726 = vperm.xlu0 %5725, %v5692
          %v5727 = vpop.permute.xlu0 %5726
          %5730 = vset.pattern.permute.xlu0 0
          %5731 = vperm.xlu0 %5730, %v5693
          %v5732 = vpop.permute.xlu0 %5731
          %5735 = vset.pattern.permute.xlu0 0
          %5736 = vperm.xlu0 %5735, %v5694
          %v5737 = vpop.permute.xlu0 %5736
          %5740 = vset.pattern.permute.xlu0 0
          %5741 = vperm.xlu0 %5740, %v5695
          %v5742 = vpop.permute.xlu0 %5741
          %5745 = vset.pattern.permute.xlu0 0
          %5746 = vperm.xlu0 %5745, %v5696
          %v5747 = vpop.permute.xlu0 %5746
          %5750 = vset.pattern.permute.xlu0 0
          %5751 = vperm.xlu0 %5750, %v5697
          %v5752 = vpop.permute.xlu0 %5751
          %5755 = vset.pattern.permute.xlu0 0
          %5756 = vperm.xlu0 %5755, %v5698
          %v5757 = vpop.permute.xlu0 %5756
          %5760 = vset.pattern.permute.xlu0 0
          %5761 = vperm.xlu0 %5760, %v5699
          %v5762 = vpop.permute.xlu0 %5761
          %5765 = vset.pattern.permute.xlu0 0
          %5766 = vperm.xlu0 %5765, %v5700
          %v5767 = vpop.permute.xlu0 %5766
          %5770 = vset.pattern.permute.xlu0 0
          %5771 = vperm.xlu0 %5770, %v5701
          %v5772 = vpop.permute.xlu0 %5771
          %5775 = vset.pattern.permute.xlu0 0
          %5776 = vperm.xlu0 %5775, %v5702
          %v5777 = vpop.permute.xlu0 %5776
          %5780 = vset.pattern.permute.xlu0 0
          %5781 = vperm.xlu0 %5780, %v5703
          %v5782 = vpop.permute.xlu0 %5781
          %v5784 = vsub.f32 %v5593, %v5707
          %v5785 = vsub.f32 %v5595, %v5707
          %v5786 = vsub.f32 %v5599, %v5712
          %v5787 = vsub.f32 %v5601, %v5712
          %v5788 = vsub.f32 %v5605, %v5717
          %v5789 = vsub.f32 %v5607, %v5717
          %v5790 = vsub.f32 %v5611, %v5722
          %v5791 = vsub.f32 %v5613, %v5722
          %v5792 = vsub.f32 %v5617, %v5727
          %v5793 = vsub.f32 %v5619, %v5727
          %v5794 = vsub.f32 %v5623, %v5732
          %v5795 = vsub.f32 %v5625, %v5732
          %v5796 = vsub.f32 %v5629, %v5737
          %v5797 = vsub.f32 %v5631, %v5737
          %v5798 = vsub.f32 %v5635, %v5742
          %v5799 = vsub.f32 %v5637, %v5742
          %v5800 = vsub.f32 %v5641, %v5747
          %v5801 = vsub.f32 %v5643, %v5747
          %v5802 = vsub.f32 %v5647, %v5752
          %v5803 = vsub.f32 %v5649, %v5752
          %v5804 = vsub.f32 %v5653, %v5757
          %v5805 = vsub.f32 %v5655, %v5757
          %v5806 = vsub.f32 %v5659, %v5762
          %v5807 = vsub.f32 %v5661, %v5762
          %v5808 = vsub.f32 %v5665, %v5767
          %v5809 = vsub.f32 %v5667, %v5767
          %v5810 = vsub.f32 %v5671, %v5772
          %v5811 = vsub.f32 %v5673, %v5772
          %v5812 = vsub.f32 %v5677, %v5777
          %v5813 = vsub.f32 %v5679, %v5777
          %v5814 = vsub.f32 %v5683, %v5782
          %v5815 = vsub.f32 %v5685, %v5782
          %v5816 = vmul.f32 %v5784, 1.442695
          %v5817 = vpow.pop %v5816
          %v5818 = vmul.f32 %v5785, 1.442695
          %v5819 = vpow.pop %v5818
          %v5820 = vmul.f32 %v5786, 1.442695
          %v5821 = vpow.pop %v5820
          %v5822 = vmul.f32 %v5787, 1.442695
          %v5823 = vpow.pop %v5822
          %v5824 = vmul.f32 %v5788, 1.442695
          %v5825 = vpow.pop %v5824
          %v5826 = vmul.f32 %v5789, 1.442695
          %v5827 = vpow.pop %v5826
          %v5828 = vmul.f32 %v5790, 1.442695
          %v5829 = vpow.pop %v5828
          %v5830 = vmul.f32 %v5791, 1.442695
          %v5831 = vpow.pop %v5830
          %v5832 = vmul.f32 %v5792, 1.442695
          %v5833 = vpow.pop %v5832
          %v5834 = vmul.f32 %v5793, 1.442695
          %v5835 = vpow.pop %v5834
          %v5836 = vmul.f32 %v5794, 1.442695
          %v5837 = vpow.pop %v5836
          %v5838 = vmul.f32 %v5795, 1.442695
          %v5839 = vpow.pop %v5838
          %v5840 = vmul.f32 %v5796, 1.442695
          %v5841 = vpow.pop %v5840
          %v5842 = vmul.f32 %v5797, 1.442695
          %v5843 = vpow.pop %v5842
          %v5844 = vmul.f32 %v5798, 1.442695
          %v5845 = vpow.pop %v5844
          %v5846 = vmul.f32 %v5799, 1.442695
          %v5847 = vpow.pop %v5846
          %v5848 = vmul.f32 %v5800, 1.442695
          %v5849 = vpow.pop %v5848
          %v5850 = vmul.f32 %v5801, 1.442695
          %v5851 = vpow.pop %v5850
          %v5852 = vmul.f32 %v5802, 1.442695
          %v5853 = vpow.pop %v5852
          %v5854 = vmul.f32 %v5803, 1.442695
          %v5855 = vpow.pop %v5854
          %v5856 = vmul.f32 %v5804, 1.442695
          %v5857 = vpow.pop %v5856
          %v5858 = vmul.f32 %v5805, 1.442695
          %v5859 = vpow.pop %v5858
          %v5860 = vmul.f32 %v5806, 1.442695
          %v5861 = vpow.pop %v5860
          %v5862 = vmul.f32 %v5807, 1.442695
          %v5863 = vpow.pop %v5862
          %v5864 = vmul.f32 %v5808, 1.442695
          %v5865 = vpow.pop %v5864
          %v5866 = vmul.f32 %v5809, 1.442695
          %v5867 = vpow.pop %v5866
          %v5868 = vmul.f32 %v5810, 1.442695
          %v5869 = vpow.pop %v5868
          %v5870 = vmul.f32 %v5811, 1.442695
          %v5871 = vpow.pop %v5870
          %v5872 = vmul.f32 %v5812, 1.442695
          %v5873 = vpow.pop %v5872
          %v5874 = vmul.f32 %v5813, 1.442695
          %v5875 = vpow.pop %v5874
          %v5876 = vmul.f32 %v5814, 1.442695
          %v5877 = vpow.pop %v5876
          %v5878 = vmul.f32 %v5815, 1.442695
          %v5879 = vpow.pop %v5878
          %s5880 = scalar_lea.vmem [#allocation5], 256
          %v5881 = vld [vmem:[%s5880] sm:$0xff]
          %v5882 = vld [vmem:[%s5880 + $0x8] sm:$0xff]
          %v5883 = vld [vmem:[%s5880 + $0x10] sm:$0xff]
          %v5884 = vld [vmem:[%s5880 + $0x18] sm:$0xff]
          %v5885 = vld [vmem:[%s5880 + $0x20] sm:$0xff]
          %v5886 = vld [vmem:[%s5880 + $0x28] sm:$0xff]
          %v5887 = vld [vmem:[%s5880 + $0x30] sm:$0xff]
          %v5888 = vld [vmem:[%s5880 + $0x38] sm:$0xff]
          %v5889 = vld [vmem:[%s5880 + $0x40] sm:$0xff]
          %v5890 = vld [vmem:[%s5880 + $0x48] sm:$0xff]
          %v5891 = vld [vmem:[%s5880 + $0x50] sm:$0xff]
          %v5892 = vld [vmem:[%s5880 + $0x58] sm:$0xff]
          %v5893 = vld [vmem:[%s5880 + $0x60] sm:$0xff]
          %v5894 = vld [vmem:[%s5880 + $0x68] sm:$0xff]
          %v5895 = vld [vmem:[%s5880 + $0x70] sm:$0xff]
          %v5896 = vld [vmem:[%s5880 + $0x78] sm:$0xff]
          %5898 = vset.pattern.permute.xlu0 0
          %5899 = vperm.xlu0 %5898, %v5881
          %v5900 = vpop.permute.xlu0 %5899
          %5903 = vset.pattern.permute.xlu0 0
          %5904 = vperm.xlu0 %5903, %v5882
          %v5905 = vpop.permute.xlu0 %5904
          %5908 = vset.pattern.permute.xlu0 0
          %5909 = vperm.xlu0 %5908, %v5883
          %v5910 = vpop.permute.xlu0 %5909
          %5913 = vset.pattern.permute.xlu0 0
          %5914 = vperm.xlu0 %5913, %v5884
          %v5915 = vpop.permute.xlu0 %5914
          %5918 = vset.pattern.permute.xlu0 0
          %5919 = vperm.xlu0 %5918, %v5885
          %v5920 = vpop.permute.xlu0 %5919
          %5923 = vset.pattern.permute.xlu0 0
          %5924 = vperm.xlu0 %5923, %v5886
          %v5925 = vpop.permute.xlu0 %5924
          %5928 = vset.pattern.permute.xlu0 0
          %5929 = vperm.xlu0 %5928, %v5887
          %v5930 = vpop.permute.xlu0 %5929
          %5933 = vset.pattern.permute.xlu0 0
          %5934 = vperm.xlu0 %5933, %v5888
          %v5935 = vpop.permute.xlu0 %5934
          %5938 = vset.pattern.permute.xlu0 0
          %5939 = vperm.xlu0 %5938, %v5889
          %v5940 = vpop.permute.xlu0 %5939
          %5943 = vset.pattern.permute.xlu0 0
          %5944 = vperm.xlu0 %5943, %v5890
          %v5945 = vpop.permute.xlu0 %5944
          %5948 = vset.pattern.permute.xlu0 0
          %5949 = vperm.xlu0 %5948, %v5891
          %v5950 = vpop.permute.xlu0 %5949
          %5953 = vset.pattern.permute.xlu0 0
          %5954 = vperm.xlu0 %5953, %v5892
          %v5955 = vpop.permute.xlu0 %5954
          %5958 = vset.pattern.permute.xlu0 0
          %5959 = vperm.xlu0 %5958, %v5893
          %v5960 = vpop.permute.xlu0 %5959
          %5963 = vset.pattern.permute.xlu0 0
          %5964 = vperm.xlu0 %5963, %v5894
          %v5965 = vpop.permute.xlu0 %5964
          %5968 = vset.pattern.permute.xlu0 0
          %5969 = vperm.xlu0 %5968, %v5895
          %v5970 = vpop.permute.xlu0 %5969
          %5973 = vset.pattern.permute.xlu0 0
          %5974 = vperm.xlu0 %5973, %v5896
          %v5975 = vpop.permute.xlu0 %5974
          %v5977 = vmul.f32 %v5817, %v5900
          %v5978 = vmul.f32 %v5819, %v5900
          %v5979 = vmul.f32 %v5821, %v5905
          %v5980 = vmul.f32 %v5823, %v5905
          %v5981 = vmul.f32 %v5825, %v5910
          %v5982 = vmul.f32 %v5827, %v5910
          %v5983 = vmul.f32 %v5829, %v5915
          %v5984 = vmul.f32 %v5831, %v5915
          %v5985 = vmul.f32 %v5833, %v5920
          %v5986 = vmul.f32 %v5835, %v5920
          %v5987 = vmul.f32 %v5837, %v5925
          %v5988 = vmul.f32 %v5839, %v5925
          %v5989 = vmul.f32 %v5841, %v5930
          %v5990 = vmul.f32 %v5843, %v5930
          %v5991 = vmul.f32 %v5845, %v5935
          %v5992 = vmul.f32 %v5847, %v5935
          %v5993 = vmul.f32 %v5849, %v5940
          %v5994 = vmul.f32 %v5851, %v5940
          %v5995 = vmul.f32 %v5853, %v5945
          %v5996 = vmul.f32 %v5855, %v5945
          %v5997 = vmul.f32 %v5857, %v5950
          %v5998 = vmul.f32 %v5859, %v5950
          %v5999 = vmul.f32 %v5861, %v5955
          %v6000 = vmul.f32 %v5863, %v5955
          %v6001 = vmul.f32 %v5865, %v5960
          %v6002 = vmul.f32 %v5867, %v5960
          %v6003 = vmul.f32 %v5869, %v5965
          %v6004 = vmul.f32 %v5871, %v5965
          %v6005 = vmul.f32 %v5873, %v5970
          %v6006 = vmul.f32 %v5875, %v5970
          %v6007 = vmul.f32 %v5877, %v5975
          %v6008 = vmul.f32 %v5879, %v5975
          %v6009 = vadd.f32 %v5478, %v5977
          %v6010 = vadd.f32 %v5479, %v5978
          %v6011 = vadd.f32 %v5480, %v5979
          %v6012 = vadd.f32 %v5481, %v5980
          %v6013 = vadd.f32 %v5482, %v5981
          %v6014 = vadd.f32 %v5483, %v5982
          %v6015 = vadd.f32 %v5484, %v5983
          %v6016 = vadd.f32 %v5485, %v5984
          %v6017 = vadd.f32 %v5486, %v5985
          %v6018 = vadd.f32 %v5487, %v5986
          %v6019 = vadd.f32 %v5488, %v5987
          %v6020 = vadd.f32 %v5489, %v5988
          %v6021 = vadd.f32 %v5490, %v5989
          %v6022 = vadd.f32 %v5491, %v5990
          %v6023 = vadd.f32 %v5492, %v5991
          %v6024 = vadd.f32 %v5493, %v5992
          %v6025 = vadd.f32 %v5494, %v5993
          %v6026 = vadd.f32 %v5495, %v5994
          %v6027 = vadd.f32 %v5496, %v5995
          %v6028 = vadd.f32 %v5497, %v5996
          %v6029 = vadd.f32 %v5498, %v5997
          %v6030 = vadd.f32 %v5499, %v5998
          %v6031 = vadd.f32 %v5500, %v5999
          %v6032 = vadd.f32 %v5501, %v6000
          %v6033 = vadd.f32 %v5502, %v6001
          %v6034 = vadd.f32 %v5503, %v6002
          %v6035 = vadd.f32 %v5504, %v6003
          %v6036 = vadd.f32 %v5505, %v6004
          %v6037 = vadd.f32 %v5506, %v6005
          %v6038 = vadd.f32 %v5507, %v6006
          %v6039 = vadd.f32 %v5508, %v6007
          %v6040 = vadd.f32 %v5509, %v6008
          %v6041 = vld [vmem:[#allocation2 + $0x18] sm:$0xff]
          %v6042 = vld [vmem:[#allocation2 + $0x38] sm:$0xff]
          %v6043 = vld [vmem:[#allocation2 + $0x58] sm:$0xff]
          %v6044 = vld [vmem:[#allocation2 + $0x78] sm:$0xff]
          %v6045 = vld [vmem:[#allocation2 + $0x98] sm:$0xff]
          %v6046 = vld [vmem:[#allocation2 + $0xb8] sm:$0xff]
          %v6047 = vld [vmem:[#allocation2 + $0xd8] sm:$0xff]
          %v6048 = vld [vmem:[#allocation2 + $0xf8] sm:$0xff]
          %v6049 = vld [vmem:[#allocation2 + $0x118] sm:$0xff]
          %v6050 = vld [vmem:[#allocation2 + $0x138] sm:$0xff]
          %v6051 = vld [vmem:[#allocation2 + $0x158] sm:$0xff]
          %v6052 = vld [vmem:[#allocation2 + $0x178] sm:$0xff]
          %v6053 = vld [vmem:[#allocation2 + $0x198] sm:$0xff]
          %v6054 = vld [vmem:[#allocation2 + $0x1b8] sm:$0xff]
          %v6055 = vld [vmem:[#allocation2 + $0x1d8] sm:$0xff]
          %v6056 = vld [vmem:[#allocation2 + $0x1f8] sm:$0xff]
          %6057 = vmatprep.subr.mxu0 0.0
          %6058 = vmatpush1.xpose.msra.mxu0 %v1010
          %6059 = vmatprep.subr.mxu0 0.0
          %6060 = vmatpush1.xpose.msra.mxu0 %v1011
          %6061 = vmatprep.subr.mxu0 0.0
          %6062 = vmatpush1.xpose.msra.mxu0 %v1012
          %6063 = vmatprep.subr.mxu0 0.0
          %6064 = vmatpush1.xpose.msra.mxu0 %v1013
          %6065 = vmatprep.subr.mxu0 0.0
          %6066 = vmatpush1.xpose.msra.mxu0 %v1014
          %6067 = vmatprep.subr.mxu0 0.0
          %6068 = vmatpush1.xpose.msra.mxu0 %v1015
          %6069 = vmatprep.subr.mxu0 0.0
          %6070 = vmatpush1.xpose.msra.mxu0 %v1016
          %6071 = vmatprep.subr.mxu0 0.0
          %6072 = vmatpush1.xpose.msra.mxu0 %v1017
          %6073 = vmatprep.subr.mxu0 0.0
          %6074 = vmatpush1.xpose.msra.mxu0 %v1018
          %6075 = vmatprep.subr.mxu0 0.0
          %6076 = vmatpush1.xpose.msra.mxu0 %v1019
          %6077 = vmatprep.subr.mxu0 0.0
          %6078 = vmatpush1.xpose.msra.mxu0 %v1020
          %6079 = vmatprep.subr.mxu0 0.0
          %6080 = vmatpush1.xpose.msra.mxu0 %v1021
          %6081 = vmatprep.subr.mxu0 0.0
          %6082 = vmatpush1.xpose.msra.mxu0 %v1022
          %6083 = vmatprep.subr.mxu0 0.0
          %6084 = vmatpush1.xpose.msra.mxu0 %v1023
          %6085 = vmatprep.subr.mxu0 0.0
          %6086 = vmatpush1.xpose.msra.mxu0 %v1024
          %6087 = vmatprep.subr.mxu0 0.0
          %6088 = vmatpush1.xpose.msra.mxu0 %v1025
          %6089 = vmatprep.subr.mxu0 0.0
          %6090 = vmatpush1.xpose.msra.mxu0 %v1026
          %6091 = vmatprep.subr.mxu0 0.0
          %6092 = vmatpush1.xpose.msra.mxu0 %v1027
          %6093 = vmatprep.subr.mxu0 0.0
          %6094 = vmatpush1.xpose.msra.mxu0 %v1028
          %6095 = vmatprep.subr.mxu0 0.0
          %6096 = vmatpush1.xpose.msra.mxu0 %v1029
          %6097 = vmatprep.subr.mxu0 0.0
          %6098 = vmatpush1.xpose.msra.mxu0 %v1030
          %6099 = vmatprep.subr.mxu0 0.0
          %6100 = vmatpush1.xpose.msra.mxu0 %v1031
          %6101 = vmatprep.subr.mxu0 0.0
          %6102 = vmatpush1.xpose.msra.mxu0 %v1032
          %6103 = vmatprep.subr.mxu0 0.0
          %6104 = vmatpush1.xpose.msra.mxu0 %v1033
          %6105 = vmatprep.subr.mxu0 0.0
          %6106 = vmatpush1.xpose.msra.mxu0 %v1034
          %6107 = vmatprep.subr.mxu0 0.0
          %6108 = vmatpush1.xpose.msra.mxu0 %v1035
          %6109 = vmatprep.subr.mxu0 0.0
          %6110 = vmatpush1.xpose.msra.mxu0 %v1036
          %6111 = vmatprep.subr.mxu0 0.0
          %6112 = vmatpush1.xpose.msra.mxu0 %v1037
          %6113 = vmatprep.subr.mxu0 0.0
          %6114 = vmatpush1.xpose.msra.mxu0 %v1038
          %6115 = vmatprep.subr.mxu0 0.0
          %6116 = vmatpush1.xpose.msra.mxu0 %v1039
          %6117 = vmatprep.subr.mxu0 0.0
          %6118 = vmatpush1.xpose.msra.mxu0 %v1040
          %6119 = vmatprep.subr.mxu0 0.0
          %6120 = vmatpush1.xpose.msra.mxu0 %v1041
          %6121 = vmatprep.mubr.f32.mxu0 0.0
          %6122 = vmatmul.mubr.f32.gmra.mrb[0].mxu0 %v6041
          %v6123 = vpop.f32.mrb[0].mxu0
          %v6124 = vadd.f32 0.0, %v6123
          %v6125 = vpop.f32.mrb[0].mxu0
          %v6126 = vadd.f32 0.0, %v6125
          %6127 = vmatprep.mubr.f32.mxu0 0.0
          %6128 = vmatmul.mubr.f32.gmra.mrb[0].mxu0 %v6042
          %v6129 = vpop.f32.mrb[0].mxu0
          %v6130 = vadd.f32 0.0, %v6129
          %v6131 = vpop.f32.mrb[0].mxu0
          %v6132 = vadd.f32 0.0, %v6131
          %6133 = vmatprep.mubr.f32.mxu0 0.0
          %6134 = vmatmul.mubr.f32.gmra.mrb[0].mxu0 %v6043
          %v6135 = vpop.f32.mrb[0].mxu0
          %v6136 = vadd.f32 0.0, %v6135
          %v6137 = vpop.f32.mrb[0].mxu0
          %v6138 = vadd.f32 0.0, %v6137
          %6139 = vmatprep.mubr.f32.mxu0 0.0
          %6140 = vmatmul.mubr.f32.gmra.mrb[0].mxu0 %v6044
          %v6141 = vpop.f32.mrb[0].mxu0
          %v6142 = vadd.f32 0.0, %v6141
          %v6143 = vpop.f32.mrb[0].mxu0
          %v6144 = vadd.f32 0.0, %v6143
          %6145 = vmatprep.mubr.f32.mxu0 0.0
          %6146 = vmatmul.mubr.f32.gmra.mrb[0].mxu0 %v6045
          %v6147 = vpop.f32.mrb[0].mxu0
          %v6148 = vadd.f32 0.0, %v6147
          %v6149 = vpop.f32.mrb[0].mxu0
          %v6150 = vadd.f32 0.0, %v6149
          %6151 = vmatprep.mubr.f32.mxu0 0.0
          %6152 = vmatmul.mubr.f32.gmra.mrb[0].mxu0 %v6046
          %v6153 = vpop.f32.mrb[0].mxu0
          %v6154 = vadd.f32 0.0, %v6153
          %v6155 = vpop.f32.mrb[0].mxu0
          %v6156 = vadd.f32 0.0, %v6155
          %6157 = vmatprep.mubr.f32.mxu0 0.0
          %6158 = vmatmul.mubr.f32.gmra.mrb[0].mxu0 %v6047
          %v6159 = vpop.f32.mrb[0].mxu0
          %v6160 = vadd.f32 0.0, %v6159
          %v6161 = vpop.f32.mrb[0].mxu0
          %v6162 = vadd.f32 0.0, %v6161
          %6163 = vmatprep.mubr.f32.mxu0 0.0
          %6164 = vmatmul.mubr.f32.gmra.mrb[0].mxu0 %v6048
          %v6165 = vpop.f32.mrb[0].mxu0
          %v6166 = vadd.f32 0.0, %v6165
          %v6167 = vpop.f32.mrb[0].mxu0
          %v6168 = vadd.f32 0.0, %v6167
          %6169 = vmatprep.mubr.f32.mxu0 0.0
          %6170 = vmatmul.mubr.f32.gmra.mrb[0].mxu0 %v6049
          %v6171 = vpop.f32.mrb[0].mxu0
          %v6172 = vadd.f32 0.0, %v6171
          %v6173 = vpop.f32.mrb[0].mxu0
          %v6174 = vadd.f32 0.0, %v6173
          %6175 = vmatprep.mubr.f32.mxu0 0.0
          %6176 = vmatmul.mubr.f32.gmra.mrb[0].mxu0 %v6050
          %v6177 = vpop.f32.mrb[0].mxu0
          %v6178 = vadd.f32 0.0, %v6177
          %v6179 = vpop.f32.mrb[0].mxu0
          %v6180 = vadd.f32 0.0, %v6179
          %6181 = vmatprep.mubr.f32.mxu0 0.0
          %6182 = vmatmul.mubr.f32.gmra.mrb[0].mxu0 %v6051
          %v6183 = vpop.f32.mrb[0].mxu0
          %v6184 = vadd.f32 0.0, %v6183
          %v6185 = vpop.f32.mrb[0].mxu0
          %v6186 = vadd.f32 0.0, %v6185
          %6187 = vmatprep.mubr.f32.mxu0 0.0
          %6188 = vmatmul.mubr.f32.gmra.mrb[0].mxu0 %v6052
          %v6189 = vpop.f32.mrb[0].mxu0
          %v6190 = vadd.f32 0.0, %v6189
          %v6191 = vpop.f32.mrb[0].mxu0
          %v6192 = vadd.f32 0.0, %v6191
          %6193 = vmatprep.mubr.f32.mxu0 0.0
          %6194 = vmatmul.mubr.f32.gmra.mrb[0].mxu0 %v6053
          %v6195 = vpop.f32.mrb[0].mxu0
          %v6196 = vadd.f32 0.0, %v6195
          %v6197 = vpop.f32.mrb[0].mxu0
          %v6198 = vadd.f32 0.0, %v6197
          %6199 = vmatprep.mubr.f32.mxu0 0.0
          %6200 = vmatmul.mubr.f32.gmra.mrb[0].mxu0 %v6054
          %v6201 = vpop.f32.mrb[0].mxu0
          %v6202 = vadd.f32 0.0, %v6201
          %v6203 = vpop.f32.mrb[0].mxu0
          %v6204 = vadd.f32 0.0, %v6203
          %6205 = vmatprep.mubr.f32.mxu0 0.0
          %6206 = vmatmul.mubr.f32.gmra.mrb[0].mxu0 %v6055
          %v6207 = vpop.f32.mrb[0].mxu0
          %v6208 = vadd.f32 0.0, %v6207
          %v6209 = vpop.f32.mrb[0].mxu0
          %v6210 = vadd.f32 0.0, %v6209
          %6211 = vmatprep.mubr.f32.mxu0 0.0
          %6212 = vmatmul.mubr.f32.gmra.mrb[0].mxu0 %v6056
          %v6213 = vpop.f32.mrb[0].mxu0
          %v6214 = vadd.f32 0.0, %v6213
          %v6215 = vpop.f32.mrb[0].mxu0
          %v6216 = vadd.f32 0.0, %v6215
          %6217 = vdwg.mxu0
          %s6218 = scalar_lea.vmem [#allocation3], 384
          %v6219 = vld [vmem:[%s6218] sm:$0xff]
          %v6220 = vld [vmem:[%s6218 + $0x8] sm:$0xff]
          %v6221 = vld [vmem:[%s6218 + $0x10] sm:$0xff]
          %v6222 = vld [vmem:[%s6218 + $0x18] sm:$0xff]
          %v6223 = vld [vmem:[%s6218 + $0x20] sm:$0xff]
          %v6224 = vld [vmem:[%s6218 + $0x28] sm:$0xff]
          %v6225 = vld [vmem:[%s6218 + $0x30] sm:$0xff]
          %v6226 = vld [vmem:[%s6218 + $0x38] sm:$0xff]
          %v6227 = vld [vmem:[%s6218 + $0x40] sm:$0xff]
          %v6228 = vld [vmem:[%s6218 + $0x48] sm:$0xff]
          %v6229 = vld [vmem:[%s6218 + $0x50] sm:$0xff]
          %v6230 = vld [vmem:[%s6218 + $0x58] sm:$0xff]
          %v6231 = vld [vmem:[%s6218 + $0x60] sm:$0xff]
          %v6232 = vld [vmem:[%s6218 + $0x68] sm:$0xff]
          %v6233 = vld [vmem:[%s6218 + $0x70] sm:$0xff]
          %v6234 = vld [vmem:[%s6218 + $0x78] sm:$0xff]
          %6236 = vset.pattern.permute.xlu0 0
          %6237 = vperm.xlu0 %6236, %v6219
          %v6238 = vpop.permute.xlu0 %6237
          %6241 = vset.pattern.permute.xlu0 0
          %6242 = vperm.xlu0 %6241, %v6220
          %v6243 = vpop.permute.xlu0 %6242
          %6246 = vset.pattern.permute.xlu0 0
          %6247 = vperm.xlu0 %6246, %v6221
          %v6248 = vpop.permute.xlu0 %6247
          %6251 = vset.pattern.permute.xlu0 0
          %6252 = vperm.xlu0 %6251, %v6222
          %v6253 = vpop.permute.xlu0 %6252
          %6256 = vset.pattern.permute.xlu0 0
          %6257 = vperm.xlu0 %6256, %v6223
          %v6258 = vpop.permute.xlu0 %6257
          %6261 = vset.pattern.permute.xlu0 0
          %6262 = vperm.xlu0 %6261, %v6224
          %v6263 = vpop.permute.xlu0 %6262
          %6266 = vset.pattern.permute.xlu0 0
          %6267 = vperm.xlu0 %6266, %v6225
          %v6268 = vpop.permute.xlu0 %6267
          %6271 = vset.pattern.permute.xlu0 0
          %6272 = vperm.xlu0 %6271, %v6226
          %v6273 = vpop.permute.xlu0 %6272
          %6276 = vset.pattern.permute.xlu0 0
          %6277 = vperm.xlu0 %6276, %v6227
          %v6278 = vpop.permute.xlu0 %6277
          %6281 = vset.pattern.permute.xlu0 0
          %6282 = vperm.xlu0 %6281, %v6228
          %v6283 = vpop.permute.xlu0 %6282
          %6286 = vset.pattern.permute.xlu0 0
          %6287 = vperm.xlu0 %6286, %v6229
          %v6288 = vpop.permute.xlu0 %6287
          %6291 = vset.pattern.permute.xlu0 0
          %6292 = vperm.xlu0 %6291, %v6230
          %v6293 = vpop.permute.xlu0 %6292
          %6296 = vset.pattern.permute.xlu0 0
          %6297 = vperm.xlu0 %6296, %v6231
          %v6298 = vpop.permute.xlu0 %6297
          %6301 = vset.pattern.permute.xlu0 0
          %6302 = vperm.xlu0 %6301, %v6232
          %v6303 = vpop.permute.xlu0 %6302
          %6306 = vset.pattern.permute.xlu0 0
          %6307 = vperm.xlu0 %6306, %v6233
          %v6308 = vpop.permute.xlu0 %6307
          %6311 = vset.pattern.permute.xlu0 0
          %6312 = vperm.xlu0 %6311, %v6234
          %v6313 = vpop.permute.xlu0 %6312
          %v6315 = vsub.f32 %v6124, %v6238
          %v6316 = vsub.f32 %v6126, %v6238
          %v6317 = vsub.f32 %v6130, %v6243
          %v6318 = vsub.f32 %v6132, %v6243
          %v6319 = vsub.f32 %v6136, %v6248
          %v6320 = vsub.f32 %v6138, %v6248
          %v6321 = vsub.f32 %v6142, %v6253
          %v6322 = vsub.f32 %v6144, %v6253
          %v6323 = vsub.f32 %v6148, %v6258
          %v6324 = vsub.f32 %v6150, %v6258
          %v6325 = vsub.f32 %v6154, %v6263
          %v6326 = vsub.f32 %v6156, %v6263
          %v6327 = vsub.f32 %v6160, %v6268
          %v6328 = vsub.f32 %v6162, %v6268
          %v6329 = vsub.f32 %v6166, %v6273
          %v6330 = vsub.f32 %v6168, %v6273
          %v6331 = vsub.f32 %v6172, %v6278
          %v6332 = vsub.f32 %v6174, %v6278
          %v6333 = vsub.f32 %v6178, %v6283
          %v6334 = vsub.f32 %v6180, %v6283
          %v6335 = vsub.f32 %v6184, %v6288
          %v6336 = vsub.f32 %v6186, %v6288
          %v6337 = vsub.f32 %v6190, %v6293
          %v6338 = vsub.f32 %v6192, %v6293
          %v6339 = vsub.f32 %v6196, %v6298
          %v6340 = vsub.f32 %v6198, %v6298
          %v6341 = vsub.f32 %v6202, %v6303
          %v6342 = vsub.f32 %v6204, %v6303
          %v6343 = vsub.f32 %v6208, %v6308
          %v6344 = vsub.f32 %v6210, %v6308
          %v6345 = vsub.f32 %v6214, %v6313
          %v6346 = vsub.f32 %v6216, %v6313
          %v6347 = vmul.f32 %v6315, 1.442695
          %v6348 = vpow.pop %v6347
          %v6349 = vmul.f32 %v6316, 1.442695
          %v6350 = vpow.pop %v6349
          %v6351 = vmul.f32 %v6317, 1.442695
          %v6352 = vpow.pop %v6351
          %v6353 = vmul.f32 %v6318, 1.442695
          %v6354 = vpow.pop %v6353
          %v6355 = vmul.f32 %v6319, 1.442695
          %v6356 = vpow.pop %v6355
          %v6357 = vmul.f32 %v6320, 1.442695
          %v6358 = vpow.pop %v6357
          %v6359 = vmul.f32 %v6321, 1.442695
          %v6360 = vpow.pop %v6359
          %v6361 = vmul.f32 %v6322, 1.442695
          %v6362 = vpow.pop %v6361
          %v6363 = vmul.f32 %v6323, 1.442695
          %v6364 = vpow.pop %v6363
          %v6365 = vmul.f32 %v6324, 1.442695
          %v6366 = vpow.pop %v6365
          %v6367 = vmul.f32 %v6325, 1.442695
          %v6368 = vpow.pop %v6367
          %v6369 = vmul.f32 %v6326, 1.442695
          %v6370 = vpow.pop %v6369
          %v6371 = vmul.f32 %v6327, 1.442695
          %v6372 = vpow.pop %v6371
          %v6373 = vmul.f32 %v6328, 1.442695
          %v6374 = vpow.pop %v6373
          %v6375 = vmul.f32 %v6329, 1.442695
          %v6376 = vpow.pop %v6375
          %v6377 = vmul.f32 %v6330, 1.442695
          %v6378 = vpow.pop %v6377
          %v6379 = vmul.f32 %v6331, 1.442695
          %v6380 = vpow.pop %v6379
          %v6381 = vmul.f32 %v6332, 1.442695
          %v6382 = vpow.pop %v6381
          %v6383 = vmul.f32 %v6333, 1.442695
          %v6384 = vpow.pop %v6383
          %v6385 = vmul.f32 %v6334, 1.442695
          %v6386 = vpow.pop %v6385
          %v6387 = vmul.f32 %v6335, 1.442695
          %v6388 = vpow.pop %v6387
          %v6389 = vmul.f32 %v6336, 1.442695
          %v6390 = vpow.pop %v6389
          %v6391 = vmul.f32 %v6337, 1.442695
          %v6392 = vpow.pop %v6391
          %v6393 = vmul.f32 %v6338, 1.442695
          %v6394 = vpow.pop %v6393
          %v6395 = vmul.f32 %v6339, 1.442695
          %v6396 = vpow.pop %v6395
          %v6397 = vmul.f32 %v6340, 1.442695
          %v6398 = vpow.pop %v6397
          %v6399 = vmul.f32 %v6341, 1.442695
          %v6400 = vpow.pop %v6399
          %v6401 = vmul.f32 %v6342, 1.442695
          %v6402 = vpow.pop %v6401
          %v6403 = vmul.f32 %v6343, 1.442695
          %v6404 = vpow.pop %v6403
          %v6405 = vmul.f32 %v6344, 1.442695
          %v6406 = vpow.pop %v6405
          %v6407 = vmul.f32 %v6345, 1.442695
          %v6408 = vpow.pop %v6407
          %v6409 = vmul.f32 %v6346, 1.442695
          %v6410 = vpow.pop %v6409
          %s6411 = scalar_lea.vmem [#allocation5], 384
          %v6412 = vld [vmem:[%s6411] sm:$0xff]
          %v6413 = vld [vmem:[%s6411 + $0x8] sm:$0xff]
          %v6414 = vld [vmem:[%s6411 + $0x10] sm:$0xff]
          %v6415 = vld [vmem:[%s6411 + $0x18] sm:$0xff]
          %v6416 = vld [vmem:[%s6411 + $0x20] sm:$0xff]
          %v6417 = vld [vmem:[%s6411 + $0x28] sm:$0xff]
          %v6418 = vld [vmem:[%s6411 + $0x30] sm:$0xff]
          %v6419 = vld [vmem:[%s6411 + $0x38] sm:$0xff]
          %v6420 = vld [vmem:[%s6411 + $0x40] sm:$0xff]
          %v6421 = vld [vmem:[%s6411 + $0x48] sm:$0xff]
          %v6422 = vld [vmem:[%s6411 + $0x50] sm:$0xff]
          %v6423 = vld [vmem:[%s6411 + $0x58] sm:$0xff]
          %v6424 = vld [vmem:[%s6411 + $0x60] sm:$0xff]
          %v6425 = vld [vmem:[%s6411 + $0x68] sm:$0xff]
          %v6426 = vld [vmem:[%s6411 + $0x70] sm:$0xff]
          %v6427 = vld [vmem:[%s6411 + $0x78] sm:$0xff]
          %6429 = vset.pattern.permute.xlu0 0
          %6430 = vperm.xlu0 %6429, %v6412
          %v6431 = vpop.permute.xlu0 %6430
          %6434 = vset.pattern.permute.xlu0 0
          %6435 = vperm.xlu0 %6434, %v6413
          %v6436 = vpop.permute.xlu0 %6435
          %6439 = vset.pattern.permute.xlu0 0
          %6440 = vperm.xlu0 %6439, %v6414
          %v6441 = vpop.permute.xlu0 %6440
          %6444 = vset.pattern.permute.xlu0 0
          %6445 = vperm.xlu0 %6444, %v6415
          %v6446 = vpop.permute.xlu0 %6445
          %6449 = vset.pattern.permute.xlu0 0
          %6450 = vperm.xlu0 %6449, %v6416
          %v6451 = vpop.permute.xlu0 %6450
          %6454 = vset.pattern.permute.xlu0 0
          %6455 = vperm.xlu0 %6454, %v6417
          %v6456 = vpop.permute.xlu0 %6455
          %6459 = vset.pattern.permute.xlu0 0
          %6460 = vperm.xlu0 %6459, %v6418
          %v6461 = vpop.permute.xlu0 %6460
          %6464 = vset.pattern.permute.xlu0 0
          %6465 = vperm.xlu0 %6464, %v6419
          %v6466 = vpop.permute.xlu0 %6465
          %6469 = vset.pattern.permute.xlu0 0
          %6470 = vperm.xlu0 %6469, %v6420
          %v6471 = vpop.permute.xlu0 %6470
          %6474 = vset.pattern.permute.xlu0 0
          %6475 = vperm.xlu0 %6474, %v6421
          %v6476 = vpop.permute.xlu0 %6475
          %6479 = vset.pattern.permute.xlu0 0
          %6480 = vperm.xlu0 %6479, %v6422
          %v6481 = vpop.permute.xlu0 %6480
          %6484 = vset.pattern.permute.xlu0 0
          %6485 = vperm.xlu0 %6484, %v6423
          %v6486 = vpop.permute.xlu0 %6485
          %6489 = vset.pattern.permute.xlu0 0
          %6490 = vperm.xlu0 %6489, %v6424
          %v6491 = vpop.permute.xlu0 %6490
          %6494 = vset.pattern.permute.xlu0 0
          %6495 = vperm.xlu0 %6494, %v6425
          %v6496 = vpop.permute.xlu0 %6495
          %6499 = vset.pattern.permute.xlu0 0
          %6500 = vperm.xlu0 %6499, %v6426
          %v6501 = vpop.permute.xlu0 %6500
          %6504 = vset.pattern.permute.xlu0 0
          %6505 = vperm.xlu0 %6504, %v6427
          %v6506 = vpop.permute.xlu0 %6505
          %v6508 = vmul.f32 %v6348, %v6431
          %v6509 = vmul.f32 %v6350, %v6431
          %v6510 = vmul.f32 %v6352, %v6436
          %v6511 = vmul.f32 %v6354, %v6436
          %v6512 = vmul.f32 %v6356, %v6441
          %v6513 = vmul.f32 %v6358, %v6441
          %v6514 = vmul.f32 %v6360, %v6446
          %v6515 = vmul.f32 %v6362, %v6446
          %v6516 = vmul.f32 %v6364, %v6451
          %v6517 = vmul.f32 %v6366, %v6451
          %v6518 = vmul.f32 %v6368, %v6456
          %v6519 = vmul.f32 %v6370, %v6456
          %v6520 = vmul.f32 %v6372, %v6461
          %v6521 = vmul.f32 %v6374, %v6461
          %v6522 = vmul.f32 %v6376, %v6466
          %v6523 = vmul.f32 %v6378, %v6466
          %v6524 = vmul.f32 %v6380, %v6471
          %v6525 = vmul.f32 %v6382, %v6471
          %v6526 = vmul.f32 %v6384, %v6476
          %v6527 = vmul.f32 %v6386, %v6476
          %v6528 = vmul.f32 %v6388, %v6481
          %v6529 = vmul.f32 %v6390, %v6481
          %v6530 = vmul.f32 %v6392, %v6486
          %v6531 = vmul.f32 %v6394, %v6486
          %v6532 = vmul.f32 %v6396, %v6491
          %v6533 = vmul.f32 %v6398, %v6491
          %v6534 = vmul.f32 %v6400, %v6496
          %v6535 = vmul.f32 %v6402, %v6496
          %v6536 = vmul.f32 %v6404, %v6501
          %v6537 = vmul.f32 %v6406, %v6501
          %v6538 = vmul.f32 %v6408, %v6506
          %v6539 = vmul.f32 %v6410, %v6506
          %v6540 = vadd.f32 %v6009, %v6508
          %v6541 = vadd.f32 %v6010, %v6509
          %v6542 = vadd.f32 %v6011, %v6510
          %v6543 = vadd.f32 %v6012, %v6511
          %v6544 = vadd.f32 %v6013, %v6512
          %v6545 = vadd.f32 %v6014, %v6513
          %v6546 = vadd.f32 %v6015, %v6514
          %v6547 = vadd.f32 %v6016, %v6515
          %v6548 = vadd.f32 %v6017, %v6516
          %v6549 = vadd.f32 %v6018, %v6517
          %v6550 = vadd.f32 %v6019, %v6518
          %v6551 = vadd.f32 %v6020, %v6519
          %v6552 = vadd.f32 %v6021, %v6520
          %v6553 = vadd.f32 %v6022, %v6521
          %v6554 = vadd.f32 %v6023, %v6522
          %v6555 = vadd.f32 %v6024, %v6523
          %v6556 = vadd.f32 %v6025, %v6524
          %v6557 = vadd.f32 %v6026, %v6525
          %v6558 = vadd.f32 %v6027, %v6526
          %v6559 = vadd.f32 %v6028, %v6527
          %v6560 = vadd.f32 %v6029, %v6528
          %v6561 = vadd.f32 %v6030, %v6529
          %v6562 = vadd.f32 %v6031, %v6530
          %v6563 = vadd.f32 %v6032, %v6531
          %v6564 = vadd.f32 %v6033, %v6532
          %v6565 = vadd.f32 %v6034, %v6533
          %v6566 = vadd.f32 %v6035, %v6534
          %v6567 = vadd.f32 %v6036, %v6535
          %v6568 = vadd.f32 %v6037, %v6536
          %v6569 = vadd.f32 %v6038, %v6537
          %v6570 = vadd.f32 %v6039, %v6538
          %v6571 = vadd.f32 %v6040, %v6539
          %6572 = vst [vmem:[%s317] sm:$0xff] %v6540
          %6573 = vst [vmem:[%s317 + $0x8] sm:$0xff] %v6541
          %6574 = vst [vmem:[%s317 + $0x10] sm:$0xff] %v6542
          %6575 = vst [vmem:[%s317 + $0x18] sm:$0xff] %v6543
          %6576 = vst [vmem:[%s317 + $0x20] sm:$0xff] %v6544
          %6577 = vst [vmem:[%s317 + $0x28] sm:$0xff] %v6545
          %6578 = vst [vmem:[%s317 + $0x30] sm:$0xff] %v6546
          %6579 = vst [vmem:[%s317 + $0x38] sm:$0xff] %v6547
          %6580 = vst [vmem:[%s317 + $0x40] sm:$0xff] %v6548
          %6581 = vst [vmem:[%s317 + $0x48] sm:$0xff] %v6549
          %6582 = vst [vmem:[%s317 + $0x50] sm:$0xff] %v6550
          %6583 = vst [vmem:[%s317 + $0x58] sm:$0xff] %v6551
          %6584 = vst [vmem:[%s317 + $0x60] sm:$0xff] %v6552
          %6585 = vst [vmem:[%s317 + $0x68] sm:$0xff] %v6553
          %6586 = vst [vmem:[%s317 + $0x70] sm:$0xff] %v6554
          %6587 = vst [vmem:[%s317 + $0x78] sm:$0xff] %v6555
          %6588 = vst [vmem:[%s317 + $0x80] sm:$0xff] %v6556
          %6589 = vst [vmem:[%s317 + $0x88] sm:$0xff] %v6557
          %6590 = vst [vmem:[%s317 + $0x90] sm:$0xff] %v6558
          %6591 = vst [vmem:[%s317 + $0x98] sm:$0xff] %v6559
          %6592 = vst [vmem:[%s317 + $0xa0] sm:$0xff] %v6560
          %6593 = vst [vmem:[%s317 + $0xa8] sm:$0xff] %v6561
          %6594 = vst [vmem:[%s317 + $0xb0] sm:$0xff] %v6562
          %6595 = vst [vmem:[%s317 + $0xb8] sm:$0xff] %v6563
          %6596 = vst [vmem:[%s317 + $0xc0] sm:$0xff] %v6564
          %6597 = vst [vmem:[%s317 + $0xc8] sm:$0xff] %v6565
          %6598 = vst [vmem:[%s317 + $0xd0] sm:$0xff] %v6566
          %6599 = vst [vmem:[%s317 + $0xd8] sm:$0xff] %v6567
          %6600 = vst [vmem:[%s317 + $0xe0] sm:$0xff] %v6568
          %6601 = vst [vmem:[%s317 + $0xe8] sm:$0xff] %v6569
          %6602 = vst [vmem:[%s317 + $0xf0] sm:$0xff] %v6570
          %6603 = vst [vmem:[%s317 + $0xf8] sm:$0xff] %v6571
        $region68: #{tpu_custom_call.1} parent=39 // pred_fallthru
          _
        %s6604 = sand.u32 %s169, 1
        %s6605 = scalar_lea.sflag [#allocation8], %s6604
        %s6606 = sand.u32 %s169, 1
        %s6607 = smul.addr %s6606, 256
        %s6608 = scalar_lea.vmem [#allocation12], %s6607
        // Predicated region
        $region69: #{tpu_custom_call.1} parent=39 // pred_check
          %p6609 = pneg %p179
        $region70: #{tpu_custom_call.1} parent=39 // pred_check_branch
          %6611 = sbr.rel (%p6609) target = $region72
        $region71: #{tpu_custom_call.1} parent=39 // pred_region
          %s6612 = smul.u32 %s30, %s29
          %s6613 = smul.u32 16, %s28
          %s6614 = smul.u32 2, %s6612
          %s6616 = ssub.s32 4096, 4096
          %6617 = vsyncadd %s6605, %s6616
          %s6618 = smul.addr %s6613, 4
          %s6619 = sadd.s32 %s6614, %s6618
          %s6620 = smul.addr %s6619, 128
          %s6621 = scalar_lea.hbm %s5, %s6620
          %s6622 = sshll.u32 %s6608, 4
          %s6623 = int_to_ptr.vmem [resolvable:$true] %s6622
          %6628 = dma.vmem_to_hbm [thread:$0]  %s6623, 4096, %s6621, %s6605, 256, 512, 16
        $region72: #{tpu_custom_call.1} parent=39 // pred_fallthru
          _
      $region40: #{tpu_custom_call.1} parent=5 // pred_fallthru
        _
      %p6629 = scmp.le.s32.totalorder 2, %s18
      // Predicated region
      $region73: #{tpu_custom_call.1} parent=5 // pred_check
        %p6630 = pneg %p6629
      $region74: #{tpu_custom_call.1} parent=5 // pred_check_branch
        %6632 = sbr.rel (%p6630) target = $region76
      $region75: #{tpu_custom_call.1} parent=5 // pred_region
        %s6633 = ssub.s32 %s18, 2
        // Predicated region
        $region77: #{tpu_custom_call.1} parent=75 // pred_check
          %p6634 = pneg %p185
        $region78: #{tpu_custom_call.1} parent=75 // pred_check_branch
          %6636 = sbr.rel (%p6634) target = $region80
        $region79: #{tpu_custom_call.1} parent=75 // pred_region
          %s6637 = sand.u32 %s170, 1
          %s6638 = scalar_lea.sflag [#allocation8], %s6637
          %s6639 = sand.u32 %s170, 1
          %s6640 = smul.addr %s6639, 256
          %s6641 = scalar_lea.vmem [#allocation12], %s6640
          %6642 = dma.done %s6638, 4096
        $region80: #{tpu_custom_call.1} parent=75 // pred_fallthru
          _
      $region76: #{tpu_custom_call.1} parent=5 // pred_fallthru
        _
    $region6: #{tpu_custom_call.1} parent=1 // loop_footer
      %s22 = sadd.s32 1, %s18
    $region7: #{tpu_custom_call.1} parent=1 // loop_footer_branch
      %17 = sbr.rel target = $region3
    $region8: #{tpu_custom_call.1} parent=1 // loop_exit
      _
    %6643 = vsyncpa [#allocation7], 1
    %s6644 = scalar_lea.sflag [#allocation7], 1
    %6645 = vsyncpa %s6644, 1
    %6646 = vsyncpa [#allocation10], 1
    %6647 = vsyncpa [#allocation8], 1
    %s6648 = scalar_lea.sflag [#allocation8], 1
    %6649 = vsyncpa %s6648, 1

</llo_original>
